<compile_context>
chip_gen: v5e
topology: v5e:2x2
jax: 0.10.0
libtpu: 0.0.40
codegen_flags: <defaults>
</compile_context>

<pallas_src>
import functools
import math

import jax
import jax.numpy as jnp
import numpy as np
from jax.experimental import pallas as pl
from jax.experimental.pallas import tpu as pltpu

EPS = 1e-6

# Per-layer weight ordering shared by the host-side stacker and the kernel.
BLOCK_KEYS = ("ln1_w", "ln1_b", "qkv_w", "qkv_b", "proj_w", "proj_b",
              "ln2_w", "ln2_b", "fc1_w", "fc1_b", "fc2_w", "fc2_b")


# ------------------------------ kernel helpers -------------------------------

def _layer_norm(x, g, b):
    # torch.nn.LayerNorm(eps=1e-6): biased variance over the last dim.
    mu = jnp.mean(x, axis=-1, keepdims=True)
    xc = x - mu
    var = jnp.mean(xc * xc, axis=-1, keepdims=True)
    return xc * jax.lax.rsqrt(var + EPS) * g + b


def _transformer_block(x, w, attn_bias, num_heads, scale):
    """timm Block on a row-batched (R, D) tile (R = N * seq_len).

    Cross-batch attention is suppressed with the block-diagonal additive bias.
    """
    (ln1w, ln1b, qkvw, qkvb, projw, projb,
     ln2w, ln2b, fc1w, fc1b, fc2w, fc2b) = w
    R, D = x.shape
    hd = D // num_heads

    h = _layer_norm(x, ln1w, ln1b)
    # Fused QKV projection, head-major columns: one (R, D) x (D, 3D) matmul.
    qkv = jnp.dot(h, qkvw, preferred_element_type=jnp.float32) + qkvb      # (R, 3D)

    acc = None
    for i in range(num_heads):                                             # static
        blk = qkv[:, i * 3 * hd:(i + 1) * 3 * hd]       # one contiguous head slice
        qh = blk[:, :hd]
        kh = blk[:, hd:2 * hd]
        vh = blk[:, 2 * hd:]
        att = jax.lax.dot_general(qh, kh, (((1,), (1,)), ((), ())),
                                  preferred_element_type=jnp.float32) * scale
        att = att + attn_bias                           # block-diagonal batch mask
        att = att - jnp.max(att, axis=-1, keepdims=True)
        att = jnp.exp(att)
        att = att / jnp.sum(att, axis=-1, keepdims=True)   # exact softmax
        oh = jnp.dot(att, vh, preferred_element_type=jnp.float32)          # (R, hd)
        # Per-head slice of the output projection (pre-split host-side);
        # accumulation == concat(heads) @ Wproj, but keeps D-lane-wide outputs.
        po = jnp.dot(oh, projw[i], preferred_element_type=jnp.float32)     # (R, D)
        acc = po if acc is None else acc + po
    x = x + acc + projb                                                    # residual

    h2 = _layer_norm(x, ln2w, ln2b)
    h2 = jnp.dot(h2, fc1w, preferred_element_type=jnp.float32) + fc1b
    h2 = 0.5 * h2 * (1.0 + jax.lax.erf(h2 * 0.7071067811865476))           # exact GELU
    h2 = jnp.dot(h2, fc2w, preferred_element_type=jnp.float32) + fc2b
    return x + h2


# ------------------------------ the fused kernel ------------------------------

def remasker_kernel(
        # SMEM scalar tables
        vals_s, ids_keep, ids_restore,
        # VMEM tensors
        target, mask_v, nask_v,
        embed_w, embed_b, cls_tok, pos_emb, mask_tok, dec_pos,
        enc_bias, dec_bias,
        ln1_w, ln1_b, qkv_w, qkv_b, proj_w, proj_b,
        ln2_w, ln2_b, fc1_w, fc1_b, fc2_w, fc2_b,
        enc_nw, enc_nb, dew, deb,
        dec_nw, dec_nb, predw, predb,
        # outputs
        pred_ref, loss_ref,
        # scratch
        buf_e, buf_d,
        *, N, L, keep, enc_depth, dec_depth, num_heads, scale):
    bw = (ln1_w, ln1_b, qkv_w, qkv_b, proj_w, proj_b,
          ln2_w, ln2_b, fc1_w, fc1_b, fc2_w, fc2_b)
    Se = keep + 1                      # encoder sequence length (cls + kept)
    Sd = L + 1                         # decoder sequence length (cls + all)

    # ---- stage 1: MaskEmbed + pos-embed + masking gather + cls concat -------
    ew = embed_w[...]                                   # hoisted (1, D) reads
    eb = embed_b[...]
    cls_row = cls_tok[...] + pos_emb[0:1, :]
    for n in range(N):                                  # static (N=2)
        buf_e[pl.ds(n * Se, 1), :] = cls_row
        for j in range(keep):                           # static (keep=4)
            idx = ids_keep[n, j]                        # SMEM i32 scalar
            v = vals_s[n, idx]                          # SMEM f32 scalar (gather)
            buf_e[pl.ds(n * Se + 1 + j, 1), :] = (
                v * ew + eb + pos_emb[pl.ds(idx + 1, 1), :])

    # ---- stage 2: encoder blocks + norm + decoder_embed (row-batched) -------
    x = buf_e[...]                                      # (N*Se, D)
    eb_bias = enc_bias[...]
    for l in range(enc_depth):                          # static; weights read once
        w = tuple(r[l] for r in bw)
        x = _transformer_block(x, w, eb_bias, num_heads, scale)
    x = _layer_norm(x, enc_nw[...], enc_nb[...])
    x = jnp.dot(x, dew[...], preferred_element_type=jnp.float32) + deb[...]
    buf_e[...] = x                                      # hold for dynamic reads

    # ---- stage 3: decoder input (un-shuffle + mask tokens + dec pos) --------
    mt = mask_tok[...]
    for n in range(N):
        buf_d[pl.ds(n * Sd, 1), :] = (buf_e[pl.ds(n * Se, 1), :]
                                      + dec_pos[0:1, :])
        for i in range(L):                              # static (L=8)
            r = ids_restore[n, i]                       # SMEM i32 scalar
            rc = jnp.minimum(r, keep - 1)               # clamp: never OOB
            row = buf_e[pl.ds(n * Se + 1 + rc, 1), :]   # dynamic row read
            sel = (r < keep).astype(jnp.float32)
            row = sel * row + (1.0 - sel) * mt          # select mask token
            buf_d[pl.ds(n * Sd + 1 + i, 1), :] = row + dec_pos[pl.ds(1 + i, 1), :]

    # ---- stage 4: decoder blocks + norm (row-batched) ------------------------
    y = buf_d[...]                                      # (N*Sd, D)
    db_bias = dec_bias[...]
    for l in range(dec_depth):
        w = tuple(r[enc_depth + l] for r in bw)
        y = _transformer_block(y, w, db_bias, num_heads, scale)
    y = _layer_norm(y, dec_nw[...], dec_nb[...])

    # ---- stage 5: prediction head (lane-major) + masked MSE loss -------------
    pw = predw[...]                                     # (1, D)
    rows = []
    for n in range(N):
        yn = y[n * Sd + 1:n * Sd + 1 + L, :]            # drop cls row, (L, D)
        # (1, D) x (L, D)^T -> (1, L): lane-major pred row for batch n.
        rows.append(jax.lax.dot_general(pw, yn, (((1,), (1,)), ((), ())),
                                        preferred_element_type=jnp.float32))
    p = jnp.concatenate(rows, axis=0) + predb[...]      # (N, L)
    p = jnp.tanh(p) * 0.5 + 0.5
    pred_ref[...] = p

    d = p - target[...]
    l2 = d * d
    m = mask_v[...]
    nk = nask_v[...]
    # Same as PyTorch: (loss*mask).sum()/mask.sum() + (loss*nask).sum()/nask.sum()
    loss_ref[0, 0] = (jnp.sum(l2 * m) / jnp.sum(m)
                      + jnp.sum(l2 * nk) / jnp.sum(nk))


# ------------------------------ call wrapper ----------------------------------

def _block_diag_bias(n, s):
    """Additive attention bias: 0 within a batch element, -1e9 across."""
    ids = np.repeat(np.arange(n), s)
    bias = np.where(ids[:, None] == ids[None, :], 0.0, -1e9).astype(np.float32)
    return jnp.asarray(bias)


def remasker_call(params, vals, ids_keep, ids_restore, mask, nask, *,
                  num_heads, keep, enc_depth, dec_depth):
    N, L = vals.shape
    D = params["pos_embed"].shape[-1]
    hd = D // num_heads
    Se, Sd = keep + 1, L + 1

    kernel = functools.partial(
        remasker_kernel, N=N, L=L, keep=keep, enc_depth=enc_depth,
        dec_depth=dec_depth, num_heads=num_heads, scale=float(hd) ** -0.5)

    stack = params["blk_stack"]
    inputs = ([vals, ids_keep, ids_restore,                 # SMEM tables
               vals, mask, nask,                            # VMEM loss tensors
               params["embed_w"], params["embed_b"], params["cls_token"],
               params["pos_embed"], params["mask_token"], params["dec_pos_embed"],
               _block_diag_bias(N, Se), _block_diag_bias(N, Sd)]
              + [stack[k] for k in BLOCK_KEYS]
              + [params["enc_norm_w"], params["enc_norm_b"],
                 params["dec_embed_w"], params["dec_embed_b"],
                 params["dec_norm_w"], params["dec_norm_b"],
                 params["pred_w"], params["pred_b"]])

    smem = pl.BlockSpec(memory_space=pltpu.MemorySpace.SMEM)
    vmem = pl.BlockSpec(memory_space=pltpu.MemorySpace.VMEM)
    in_specs = [smem] * 3 + [vmem] * (len(inputs) - 3)

    # VMEM budget derived from the actual resident footprint (plus headroom),
    # clamped to the v7x scoped ceiling.
    foot = sum(int(np.prod(a.shape)) * jnp.dtype(a.dtype).itemsize for a in inputs)
    foot += (N * Se + N * Sd) * D * 4 + (N * L + 1) * 4
    vmem_limit = int(min(64 * 2 ** 20, max(16 * 2 ** 20, 4 * foot)))

    pred, loss = pl.pallas_call(
        kernel,
        out_shape=(jax.ShapeDtypeStruct((N, L), jnp.float32),
                   jax.ShapeDtypeStruct((1, 1), jnp.float32)),
        in_specs=in_specs,
        out_specs=(vmem, smem),
        scratch_shapes=[pltpu.VMEM((N * Se, D), jnp.float32),   # encoder rows
                        pltpu.VMEM((N * Sd, D), jnp.float32)],  # decoder rows
        compiler_params=pltpu.CompilerParams(vmem_limit_bytes=vmem_limit),
    )(*inputs)
    return pred, loss[0, 0]


# ------------------------------ parameter init --------------------------------

def get_1d_sincos_pos_embed(embed_dim, length, cls_token=False):
    pos = np.arange(length, dtype=np.float64)
    omega = np.arange(embed_dim // 2, dtype=np.float64) / (embed_dim / 2.0)
    omega = 1.0 / 10000 ** omega
    out = np.einsum("l,d->ld", pos, omega)
    emb = np.concatenate([np.sin(out), np.cos(out)], axis=1)
    if cls_token:
        emb = np.concatenate([np.zeros([1, embed_dim]), emb], axis=0)
    return emb.astype(np.float32)


def _xavier(key, fan_in, fan_out, shape):
    limit = math.sqrt(6.0 / (fan_in + fan_out))
    return jax.random.uniform(key, shape, jnp.float32, -limit, limit)


def _qkv_head_major_perm(D, H):
    # Columns reordered from [Q | K | V] to per-head [(q_i, k_i, v_i)] blocks.
    hd = D // H
    perm = []
    for i in range(H):
        perm += list(range(i * hd, (i + 1) * hd))
        perm += list(range(D + i * hd, D + (i + 1) * hd))
        perm += list(range(2 * D + i * hd, 2 * D + (i + 1) * hd))
    return np.asarray(perm, dtype=np.int32)


def init_block_params(key, D, H, mlp_ratio):
    hd = D // H
    Dm = int(D * mlp_ratio)
    k = jax.random.split(key, 4)
    perm = _qkv_head_major_perm(D, H)
    qkv_w = _xavier(k[0], D, 3 * D, (D, 3 * D))[:, perm]          # head-major cols
    qkv_b = jnp.zeros((1, 3 * D), jnp.float32)[:, perm]           # nn.Linear bias=0
    return dict(
        ln1_w=jnp.ones((1, D), jnp.float32), ln1_b=jnp.zeros((1, D), jnp.float32),
        qkv_w=qkv_w, qkv_b=qkv_b,
        proj_w=_xavier(k[1], D, D, (D, D)).reshape(H, hd, D),     # pre-split per head
        proj_b=jnp.zeros((1, D), jnp.float32),
        ln2_w=jnp.ones((1, D), jnp.float32), ln2_b=jnp.zeros((1, D), jnp.float32),
        fc1_w=_xavier(k[2], D, Dm, (D, Dm)), fc1_b=jnp.zeros((1, Dm), jnp.float32),
        fc2_w=_xavier(k[3], Dm, D, (Dm, D)), fc2_b=jnp.zeros((1, D), jnp.float32),
    )


def init_params(key, L, D, depth, dec_depth, H, mlp_ratio):
    keys = jax.random.split(key, depth + dec_depth + 6)
    pos = jnp.asarray(get_1d_sincos_pos_embed(D, L, cls_token=True))   # (L+1, D)
    enc_blocks = [init_block_params(keys[6 + i], D, H, mlp_ratio)
                  for i in range(depth)]
    dec_blocks = [init_block_params(keys[6 + depth + i], D, H, mlp_ratio)
                  for i in range(dec_depth)]
    blocks = enc_blocks + dec_blocks
    # Encoder + decoder blocks stacked along one leading axis so a single fused
    # kernel can index every layer statically (weights read once per layer).
    blk_stack = {k: jnp.stack([b[k] for b in blocks], axis=0) for k in BLOCK_KEYS}
    return dict(
        embed_w=_xavier(keys[0], 1, D, (1, D)),              # Conv1d(1, D, 1) weight
        embed_b=jax.random.uniform(keys[1], (1, D), jnp.float32, -1.0, 1.0),
        cls_token=0.02 * jax.random.normal(keys[2], (1, D), jnp.float32),
        mask_token=0.02 * jax.random.normal(keys[3], (1, D), jnp.float32),
        pos_embed=pos,
        dec_pos_embed=pos,
        enc_norm_w=jnp.ones((1, D), jnp.float32),
        enc_norm_b=jnp.zeros((1, D), jnp.float32),
        dec_embed_w=_xavier(keys[4], D, D, (D, D)),
        dec_embed_b=jnp.zeros((1, D), jnp.float32),
        dec_norm_w=jnp.ones((1, D), jnp.float32),
        dec_norm_b=jnp.zeros((1, D), jnp.float32),
        pred_w=_xavier(keys[5], D, 1, (1, D)),               # Linear(D, 1) row-major
        pred_b=jnp.zeros((1, 1), jnp.float32),
        blk_stack=blk_stack,
    )


# ------------------------------ forward pass -----------------------------------

def remasker_forward(params, data, miss_idx, noise_key, *,
                     mask_ratio, num_heads, depth, decoder_depth):
    """data: (N, 1, L) float32; miss_idx: (N, L) float32 (1 observed, 0 missing)."""
    N, _, L = data.shape
    vals = data[:, 0, :]                                              # (N, L)

    # random_masking (training branch)
    # TODO(synk): rand/argsort/take_along_axis index routing stays in XLA (no
    # Pallas TPU sort primitive); the resulting index tables are consumed
    # in-kernel via SMEM.
    len_keep = int(L * (1 - mask_ratio))
    noise = jax.random.uniform(noise_key, (N, L), jnp.float32)
    noise = jnp.where(miss_idx < EPS, 1.0, noise)
    ids_shuffle = jnp.argsort(noise, axis=1).astype(jnp.int32)
    ids_restore = jnp.argsort(ids_shuffle, axis=1).astype(jnp.int32)
    ids_keep = ids_shuffle[:, :len_keep]
    mask = jnp.ones((N, L), jnp.float32).at[:, :len_keep].set(0.0)
    mask = jnp.take_along_axis(mask, ids_restore, axis=1)
    nask = 1.0 - mask
    mask = jnp.where(miss_idx < EPS, 0.0, mask)   # training: drop unobserved

    # Everything else (embed, encoder, decoder, pred head, loss): ONE fused call.
    pred, loss = remasker_call(params, vals, ids_keep, ids_restore, mask, nask,
                               num_heads=num_heads, keep=len_keep,
                               enc_depth=depth, dec_depth=decoder_depth)
    return loss, pred.reshape(N, L, 1), mask, nask


# ----------------------------------- main ---------------------------------------

if __name__ == "__main__":
    N, L = 2, 8                      # batch, rec_len (EncodedInfo.Encoded_dim)
    config = dict(embed_dim=64, depth=2, decoder_depth=2, num_heads=4,
                  mlp_ratio=4.0, mask_ratio=0.5)

    key = jax.random.PRNGKey(0)
    k_param, k_data, k_noise = jax.random.split(key, 3)

    params = init_params(k_param, L, config["embed_dim"], config["depth"],
                         config["decoder_depth"], config["num_heads"],
                         config["mlp_ratio"])

    data = jax.random.normal(k_data, (N, 1, L), jnp.float32)
    miss_idx = jnp.ones((N, L), jnp.float32).at[0, 3].set(0.0).at[1, 6].set(0.0)

    fwd = jax.jit(functools.partial(remasker_forward,
                                    mask_ratio=config["mask_ratio"],
                                    num_heads=config["num_heads"],
                                    depth=config["depth"],
                                    decoder_depth=config["decoder_depth"]))
    loss, pred, mask, nask = fwd(params, data, miss_idx, k_noise)
    jax.block_until_ready((loss, pred, mask, nask))

    assert pred.shape == (N, L, 1)
    assert mask.shape == (N, L) and nask.shape == (N, L)
    assert bool(jnp.isfinite(loss))
    print("KERNEL_OK")
</pallas_src>

<mosaic_0001>
module attributes {stable_mosaic.version = 11 : i64} {
  func.func @remasker_kernel(%arg0: memref<2x8xf32, #tpu.memory_space<smem>>, %arg1: memref<2x4xi32, #tpu.memory_space<smem>>, %arg2: memref<2x8xi32, #tpu.memory_space<smem>>, %arg3: memref<2x8xf32, #tpu.memory_space<vmem>>, %arg4: memref<2x8xf32, #tpu.memory_space<vmem>>, %arg5: memref<2x8xf32, #tpu.memory_space<vmem>>, %arg6: memref<1x64xf32, #tpu.memory_space<vmem>>, %arg7: memref<1x64xf32, #tpu.memory_space<vmem>>, %arg8: memref<1x64xf32, #tpu.memory_space<vmem>>, %arg9: memref<9x64xf32, #tpu.memory_space<vmem>>, %arg10: memref<1x64xf32, #tpu.memory_space<vmem>>, %arg11: memref<9x64xf32, #tpu.memory_space<vmem>>, %arg12: memref<10x10xf32, #tpu.memory_space<vmem>>, %arg13: memref<18x18xf32, #tpu.memory_space<vmem>>, %arg14: memref<4x1x64xf32, #tpu.memory_space<vmem>>, %arg15: memref<4x1x64xf32, #tpu.memory_space<vmem>>, %arg16: memref<4x64x192xf32, #tpu.memory_space<vmem>>, %arg17: memref<4x1x192xf32, #tpu.memory_space<vmem>>, %arg18: memref<4x4x16x64xf32, #tpu.memory_space<vmem>>, %arg19: memref<4x1x64xf32, #tpu.memory_space<vmem>>, %arg20: memref<4x1x64xf32, #tpu.memory_space<vmem>>, %arg21: memref<4x1x64xf32, #tpu.memory_space<vmem>>, %arg22: memref<4x64x256xf32, #tpu.memory_space<vmem>>, %arg23: memref<4x1x256xf32, #tpu.memory_space<vmem>>, %arg24: memref<4x256x64xf32, #tpu.memory_space<vmem>>, %arg25: memref<4x1x64xf32, #tpu.memory_space<vmem>>, %arg26: memref<1x64xf32, #tpu.memory_space<vmem>>, %arg27: memref<1x64xf32, #tpu.memory_space<vmem>>, %arg28: memref<64x64xf32, #tpu.memory_space<vmem>>, %arg29: memref<1x64xf32, #tpu.memory_space<vmem>>, %arg30: memref<1x64xf32, #tpu.memory_space<vmem>>, %arg31: memref<1x64xf32, #tpu.memory_space<vmem>>, %arg32: memref<1x64xf32, #tpu.memory_space<vmem>>, %arg33: memref<1x1xf32, #tpu.memory_space<vmem>>, %arg34: memref<2x8xf32, #tpu.memory_space<vmem>>, %arg35: memref<1x1xf32, #tpu.memory_space<smem>>, %arg36: memref<10x64xf32, #tpu.memory_space<vmem>>, %arg37: memref<18x64xf32, #tpu.memory_space<vmem>>) attributes {dimension_semantics = [], scalar_prefetch = 0 : i64, scratch_operands = 2 : i64, tpu.core_type = #tpu.core_type<tc>} {
    %c0 = arith.constant 0 : index
    %c0_0 = arith.constant 0 : index
    %0 = vector.load %arg6[%c0, %c0_0] : memref<1x64xf32, #tpu.memory_space<vmem>>, vector<1x64xf32>
    %c0_1 = arith.constant 0 : index
    %c0_2 = arith.constant 0 : index
    %1 = vector.load %arg7[%c0_1, %c0_2] : memref<1x64xf32, #tpu.memory_space<vmem>>, vector<1x64xf32>
    %c0_3 = arith.constant 0 : index
    %c0_4 = arith.constant 0 : index
    %2 = vector.load %arg8[%c0_3, %c0_4] : memref<1x64xf32, #tpu.memory_space<vmem>>, vector<1x64xf32>
    %c0_5 = arith.constant 0 : index
    %c0_6 = arith.constant 0 : index
    %3 = vector.load %arg9[%c0_5, %c0_6] : memref<9x64xf32, #tpu.memory_space<vmem>>, vector<1x64xf32>
    %4 = arith.addf %2, %3 : vector<1x64xf32>
    %c0_7 = arith.constant 0 : index
    %c0_8 = arith.constant 0 : index
    %5 = vector.load %arg36[%c0_7, %c0_8] : memref<10x64xf32, #tpu.memory_space<vmem>>, vector<1x64xf32>
    tpu.vector_store %arg36[%c0_7, %c0_8], %4 {strides = array<i32>} : memref<10x64xf32, #tpu.memory_space<vmem>>, vector<1x64xf32>,
    %c0_9 = arith.constant 0 : index
    %c0_10 = arith.constant 0 : index
    %6 = memref.load %arg1[%c0_9, %c0_10] : memref<2x4xi32, #tpu.memory_space<smem>>
    %c0_11 = arith.constant 0 : index
    %7 = arith.index_cast %6 : i32 to index
    %8 = memref.load %arg0[%c0_11, %7] : memref<2x8xf32, #tpu.memory_space<smem>>
    %9 = vector.broadcast %8 : f32 to vector<1x64xf32>
    %10 = arith.mulf %9, %0 : vector<1x64xf32>
    %11 = arith.addf %10, %1 : vector<1x64xf32>
    %c1_i32 = arith.constant 1 : i32
    %12 = arith.addi %6, %c1_i32 : i32
    %13 = arith.index_cast %12 : i32 to index
    %c0_12 = arith.constant 0 : index
    %14 = vector.load %arg9[%13, %c0_12] : memref<9x64xf32, #tpu.memory_space<vmem>>, vector<1x64xf32>
    %15 = arith.addf %11, %14 : vector<1x64xf32>
    %c1 = arith.constant 1 : index
    %c0_13 = arith.constant 0 : index
    %16 = vector.load %arg36[%c1, %c0_13] : memref<10x64xf32, #tpu.memory_space<vmem>>, vector<1x64xf32>
    tpu.vector_store %arg36[%c1, %c0_13], %15 {strides = array<i32>} : memref<10x64xf32, #tpu.memory_space<vmem>>, vector<1x64xf32>,
    %c0_14 = arith.constant 0 : index
    %c1_15 = arith.constant 1 : index
    %17 = memref.load %arg1[%c0_14, %c1_15] : memref<2x4xi32, #tpu.memory_space<smem>>
    %c0_16 = arith.constant 0 : index
    %18 = arith.index_cast %17 : i32 to index
    %19 = memref.load %arg0[%c0_16, %18] : memref<2x8xf32, #tpu.memory_space<smem>>
    %20 = vector.broadcast %19 : f32 to vector<1x64xf32>
    %21 = arith.mulf %20, %0 : vector<1x64xf32>
    %22 = arith.addf %21, %1 : vector<1x64xf32>
    %c1_i32_17 = arith.constant 1 : i32
    %23 = arith.addi %17, %c1_i32_17 : i32
    %24 = arith.index_cast %23 : i32 to index
    %c0_18 = arith.constant 0 : index
    %25 = vector.load %arg9[%24, %c0_18] : memref<9x64xf32, #tpu.memory_space<vmem>>, vector<1x64xf32>
    %26 = arith.addf %22, %25 : vector<1x64xf32>
    %c2 = arith.constant 2 : index
    %c0_19 = arith.constant 0 : index
    %27 = vector.load %arg36[%c2, %c0_19] : memref<10x64xf32, #tpu.memory_space<vmem>>, vector<1x64xf32>
    tpu.vector_store %arg36[%c2, %c0_19], %26 {strides = array<i32>} : memref<10x64xf32, #tpu.memory_space<vmem>>, vector<1x64xf32>,
    %c0_20 = arith.constant 0 : index
    %c2_21 = arith.constant 2 : index
    %28 = memref.load %arg1[%c0_20, %c2_21] : memref<2x4xi32, #tpu.memory_space<smem>>
    %c0_22 = arith.constant 0 : index
    %29 = arith.index_cast %28 : i32 to index
    %30 = memref.load %arg0[%c0_22, %29] : memref<2x8xf32, #tpu.memory_space<smem>>
    %31 = vector.broadcast %30 : f32 to vector<1x64xf32>
    %32 = arith.mulf %31, %0 : vector<1x64xf32>
    %33 = arith.addf %32, %1 : vector<1x64xf32>
    %c1_i32_23 = arith.constant 1 : i32
    %34 = arith.addi %28, %c1_i32_23 : i32
    %35 = arith.index_cast %34 : i32 to index
    %c0_24 = arith.constant 0 : index
    %36 = vector.load %arg9[%35, %c0_24] : memref<9x64xf32, #tpu.memory_space<vmem>>, vector<1x64xf32>
    %37 = arith.addf %33, %36 : vector<1x64xf32>
    %c3 = arith.constant 3 : index
    %c0_25 = arith.constant 0 : index
    %38 = vector.load %arg36[%c3, %c0_25] : memref<10x64xf32, #tpu.memory_space<vmem>>, vector<1x64xf32>
    tpu.vector_store %arg36[%c3, %c0_25], %37 {strides = array<i32>} : memref<10x64xf32, #tpu.memory_space<vmem>>, vector<1x64xf32>,
    %c0_26 = arith.constant 0 : index
    %c3_27 = arith.constant 3 : index
    %39 = memref.load %arg1[%c0_26, %c3_27] : memref<2x4xi32, #tpu.memory_space<smem>>
    %c0_28 = arith.constant 0 : index
    %40 = arith.index_cast %39 : i32 to index
    %41 = memref.load %arg0[%c0_28, %40] : memref<2x8xf32, #tpu.memory_space<smem>>
    %42 = vector.broadcast %41 : f32 to vector<1x64xf32>
    %43 = arith.mulf %42, %0 : vector<1x64xf32>
    %44 = arith.addf %43, %1 : vector<1x64xf32>
    %c1_i32_29 = arith.constant 1 : i32
    %45 = arith.addi %39, %c1_i32_29 : i32
    %46 = arith.index_cast %45 : i32 to index
    %c0_30 = arith.constant 0 : index
    %47 = vector.load %arg9[%46, %c0_30] : memref<9x64xf32, #tpu.memory_space<vmem>>, vector<1x64xf32>
    %48 = arith.addf %44, %47 : vector<1x64xf32>
    %c4 = arith.constant 4 : index
    %c0_31 = arith.constant 0 : index
    %49 = vector.load %arg36[%c4, %c0_31] : memref<10x64xf32, #tpu.memory_space<vmem>>, vector<1x64xf32>
    tpu.vector_store %arg36[%c4, %c0_31], %48 {strides = array<i32>} : memref<10x64xf32, #tpu.memory_space<vmem>>, vector<1x64xf32>,
    %c5 = arith.constant 5 : index
    %c0_32 = arith.constant 0 : index
    %50 = vector.load %arg36[%c5, %c0_32] : memref<10x64xf32, #tpu.memory_space<vmem>>, vector<1x64xf32>
    tpu.vector_store %arg36[%c5, %c0_32], %4 {strides = array<i32>} : memref<10x64xf32, #tpu.memory_space<vmem>>, vector<1x64xf32>,
    %c1_33 = arith.constant 1 : index
    %c0_34 = arith.constant 0 : index
    %51 = memref.load %arg1[%c1_33, %c0_34] : memref<2x4xi32, #tpu.memory_space<smem>>
    %c1_35 = arith.constant 1 : index
    %52 = arith.index_cast %51 : i32 to index
    %53 = memref.load %arg0[%c1_35, %52] : memref<2x8xf32, #tpu.memory_space<smem>>
    %54 = vector.broadcast %53 : f32 to vector<1x64xf32>
    %55 = arith.mulf %54, %0 : vector<1x64xf32>
    %56 = arith.addf %55, %1 : vector<1x64xf32>
    %c1_i32_36 = arith.constant 1 : i32
    %57 = arith.addi %51, %c1_i32_36 : i32
    %58 = arith.index_cast %57 : i32 to index
    %c0_37 = arith.constant 0 : index
    %59 = vector.load %arg9[%58, %c0_37] : memref<9x64xf32, #tpu.memory_space<vmem>>, vector<1x64xf32>
    %60 = arith.addf %56, %59 : vector<1x64xf32>
    %c6 = arith.constant 6 : index
    %c0_38 = arith.constant 0 : index
    %61 = vector.load %arg36[%c6, %c0_38] : memref<10x64xf32, #tpu.memory_space<vmem>>, vector<1x64xf32>
    tpu.vector_store %arg36[%c6, %c0_38], %60 {strides = array<i32>} : memref<10x64xf32, #tpu.memory_space<vmem>>, vector<1x64xf32>,
    %c1_39 = arith.constant 1 : index
    %c1_40 = arith.constant 1 : index
    %62 = memref.load %arg1[%c1_39, %c1_40] : memref<2x4xi32, #tpu.memory_space<smem>>
    %c1_41 = arith.constant 1 : index
    %63 = arith.index_cast %62 : i32 to index
    %64 = memref.load %arg0[%c1_41, %63] : memref<2x8xf32, #tpu.memory_space<smem>>
    %65 = vector.broadcast %64 : f32 to vector<1x64xf32>
    %66 = arith.mulf %65, %0 : vector<1x64xf32>
    %67 = arith.addf %66, %1 : vector<1x64xf32>
    %c1_i32_42 = arith.constant 1 : i32
    %68 = arith.addi %62, %c1_i32_42 : i32
    %69 = arith.index_cast %68 : i32 to index
    %c0_43 = arith.constant 0 : index
    %70 = vector.load %arg9[%69, %c0_43] : memref<9x64xf32, #tpu.memory_space<vmem>>, vector<1x64xf32>
    %71 = arith.addf %67, %70 : vector<1x64xf32>
    %c7 = arith.constant 7 : index
    %c0_44 = arith.constant 0 : index
    %72 = vector.load %arg36[%c7, %c0_44] : memref<10x64xf32, #tpu.memory_space<vmem>>, vector<1x64xf32>
    tpu.vector_store %arg36[%c7, %c0_44], %71 {strides = array<i32>} : memref<10x64xf32, #tpu.memory_space<vmem>>, vector<1x64xf32>,
    %c1_45 = arith.constant 1 : index
    %c2_46 = arith.constant 2 : index
    %73 = memref.load %arg1[%c1_45, %c2_46] : memref<2x4xi32, #tpu.memory_space<smem>>
    %c1_47 = arith.constant 1 : index
    %74 = arith.index_cast %73 : i32 to index
    %75 = memref.load %arg0[%c1_47, %74] : memref<2x8xf32, #tpu.memory_space<smem>>
    %76 = vector.broadcast %75 : f32 to vector<1x64xf32>
    %77 = arith.mulf %76, %0 : vector<1x64xf32>
    %78 = arith.addf %77, %1 : vector<1x64xf32>
    %c1_i32_48 = arith.constant 1 : i32
    %79 = arith.addi %73, %c1_i32_48 : i32
    %80 = arith.index_cast %79 : i32 to index
    %c0_49 = arith.constant 0 : index
    %81 = vector.load %arg9[%80, %c0_49] : memref<9x64xf32, #tpu.memory_space<vmem>>, vector<1x64xf32>
    %82 = arith.addf %78, %81 : vector<1x64xf32>
    %c8 = arith.constant 8 : index
    %c0_50 = arith.constant 0 : index
    %83 = vector.load %arg36[%c8, %c0_50] : memref<10x64xf32, #tpu.memory_space<vmem>>, vector<1x64xf32>
    tpu.vector_store %arg36[%c8, %c0_50], %82 {strides = array<i32>} : memref<10x64xf32, #tpu.memory_space<vmem>>, vector<1x64xf32>,
    %c1_51 = arith.constant 1 : index
    %c3_52 = arith.constant 3 : index
    %84 = memref.load %arg1[%c1_51, %c3_52] : memref<2x4xi32, #tpu.memory_space<smem>>
    %c1_53 = arith.constant 1 : index
    %85 = arith.index_cast %84 : i32 to index
    %86 = memref.load %arg0[%c1_53, %85] : memref<2x8xf32, #tpu.memory_space<smem>>
    %87 = vector.broadcast %86 : f32 to vector<1x64xf32>
    %88 = arith.mulf %87, %0 : vector<1x64xf32>
    %89 = arith.addf %88, %1 : vector<1x64xf32>
    %c1_i32_54 = arith.constant 1 : i32
    %90 = arith.addi %84, %c1_i32_54 : i32
    %91 = arith.index_cast %90 : i32 to index
    %c0_55 = arith.constant 0 : index
    %92 = vector.load %arg9[%91, %c0_55] : memref<9x64xf32, #tpu.memory_space<vmem>>, vector<1x64xf32>
    %93 = arith.addf %89, %92 : vector<1x64xf32>
    %c9 = arith.constant 9 : index
    %c0_56 = arith.constant 0 : index
    %94 = vector.load %arg36[%c9, %c0_56] : memref<10x64xf32, #tpu.memory_space<vmem>>, vector<1x64xf32>
    tpu.vector_store %arg36[%c9, %c0_56], %93 {strides = array<i32>} : memref<10x64xf32, #tpu.memory_space<vmem>>, vector<1x64xf32>,
    %c0_57 = arith.constant 0 : index
    %c0_58 = arith.constant 0 : index
    %95 = vector.load %arg36[%c0_57, %c0_58] : memref<10x64xf32, #tpu.memory_space<vmem>>, vector<10x64xf32>
    %c0_59 = arith.constant 0 : index
    %c0_60 = arith.constant 0 : index
    %96 = vector.load %arg12[%c0_59, %c0_60] : memref<10x10xf32, #tpu.memory_space<vmem>>, vector<10x10xf32>
    %c0_61 = arith.constant 0 : index
    %c0_62 = arith.constant 0 : index
    %c0_63 = arith.constant 0 : index
    %97 = vector.load %arg14[%c0_61, %c0_62, %c0_63] : memref<4x1x64xf32, #tpu.memory_space<vmem>>, vector<1x1x64xf32>
    %98 = vector.shape_cast %97 : vector<1x1x64xf32> to vector<1x64xf32>
    %c0_64 = arith.constant 0 : index
    %c0_65 = arith.constant 0 : index
    %c0_66 = arith.constant 0 : index
    %99 = vector.load %arg15[%c0_64, %c0_65, %c0_66] : memref<4x1x64xf32, #tpu.memory_space<vmem>>, vector<1x1x64xf32>
    %100 = vector.shape_cast %99 : vector<1x1x64xf32> to vector<1x64xf32>
    %c0_67 = arith.constant 0 : index
    %c0_68 = arith.constant 0 : index
    %c0_69 = arith.constant 0 : index
    %101 = vector.load %arg16[%c0_67, %c0_68, %c0_69] : memref<4x64x192xf32, #tpu.memory_space<vmem>>, vector<1x64x192xf32>
    %102 = vector.shape_cast %101 : vector<1x64x192xf32> to vector<64x192xf32>
    %c0_70 = arith.constant 0 : index
    %c0_71 = arith.constant 0 : index
    %c0_72 = arith.constant 0 : index
    %103 = vector.load %arg17[%c0_70, %c0_71, %c0_72] : memref<4x1x192xf32, #tpu.memory_space<vmem>>, vector<1x1x192xf32>
    %104 = vector.shape_cast %103 : vector<1x1x192xf32> to vector<1x192xf32>
    %c0_73 = arith.constant 0 : index
    %c0_74 = arith.constant 0 : index
    %c0_75 = arith.constant 0 : index
    %c0_76 = arith.constant 0 : index
    %105 = vector.load %arg18[%c0_73, %c0_74, %c0_75, %c0_76] : memref<4x4x16x64xf32, #tpu.memory_space<vmem>>, vector<1x4x16x64xf32>
    %106 = vector.shape_cast %105 : vector<1x4x16x64xf32> to vector<4x16x64xf32>
    %c0_77 = arith.constant 0 : index
    %c0_78 = arith.constant 0 : index
    %c0_79 = arith.constant 0 : index
    %107 = vector.load %arg19[%c0_77, %c0_78, %c0_79] : memref<4x1x64xf32, #tpu.memory_space<vmem>>, vector<1x1x64xf32>
    %108 = vector.shape_cast %107 : vector<1x1x64xf32> to vector<1x64xf32>
    %c0_80 = arith.constant 0 : index
    %c0_81 = arith.constant 0 : index
    %c0_82 = arith.constant 0 : index
    %109 = vector.load %arg20[%c0_80, %c0_81, %c0_82] : memref<4x1x64xf32, #tpu.memory_space<vmem>>, vector<1x1x64xf32>
    %110 = vector.shape_cast %109 : vector<1x1x64xf32> to vector<1x64xf32>
    %c0_83 = arith.constant 0 : index
    %c0_84 = arith.constant 0 : index
    %c0_85 = arith.constant 0 : index
    %111 = vector.load %arg21[%c0_83, %c0_84, %c0_85] : memref<4x1x64xf32, #tpu.memory_space<vmem>>, vector<1x1x64xf32>
    %112 = vector.shape_cast %111 : vector<1x1x64xf32> to vector<1x64xf32>
    %c0_86 = arith.constant 0 : index
    %c0_87 = arith.constant 0 : index
    %c0_88 = arith.constant 0 : index
    %113 = vector.load %arg22[%c0_86, %c0_87, %c0_88] : memref<4x64x256xf32, #tpu.memory_space<vmem>>, vector<1x64x256xf32>
    %114 = vector.shape_cast %113 : vector<1x64x256xf32> to vector<64x256xf32>
    %c0_89 = arith.constant 0 : index
    %c0_90 = arith.constant 0 : index
    %c0_91 = arith.constant 0 : index
    %115 = vector.load %arg23[%c0_89, %c0_90, %c0_91] : memref<4x1x256xf32, #tpu.memory_space<vmem>>, vector<1x1x256xf32>
    %116 = vector.shape_cast %115 : vector<1x1x256xf32> to vector<1x256xf32>
    %c0_92 = arith.constant 0 : index
    %c0_93 = arith.constant 0 : index
    %c0_94 = arith.constant 0 : index
    %117 = vector.load %arg24[%c0_92, %c0_93, %c0_94] : memref<4x256x64xf32, #tpu.memory_space<vmem>>, vector<1x256x64xf32>
    %118 = vector.shape_cast %117 : vector<1x256x64xf32> to vector<256x64xf32>
    %c0_95 = arith.constant 0 : index
    %c0_96 = arith.constant 0 : index
    %c0_97 = arith.constant 0 : index
    %119 = vector.load %arg25[%c0_95, %c0_96, %c0_97] : memref<4x1x64xf32, #tpu.memory_space<vmem>>, vector<1x1x64xf32>
    %120 = vector.shape_cast %119 : vector<1x1x64xf32> to vector<1x64xf32>
    %cst = arith.constant dense<0.000000e+00> : vector<10xf32>
    %121 = vector.multi_reduction <add>, %95, %cst [1] : vector<10x64xf32> to vector<10xf32>
    %122 = vector.shape_cast %121 : vector<10xf32> to vector<10x1xf32>
    %cst_98 = arith.constant 6.400000e+01 : f32
    %123 = vector.broadcast %cst_98 : f32 to vector<10x1xf32>
    %124 = arith.divf %122, %123 : vector<10x1xf32>
    %125 = vector.broadcast %124 : vector<10x1xf32> to vector<10x64xf32>
    %126 = arith.subf %95, %125 : vector<10x64xf32>
    %127 = arith.mulf %126, %126 : vector<10x64xf32>
    %cst_99 = arith.constant dense<0.000000e+00> : vector<10xf32>
    %128 = vector.multi_reduction <add>, %127, %cst_99 [1] : vector<10x64xf32> to vector<10xf32>
    %129 = vector.shape_cast %128 : vector<10xf32> to vector<10x1xf32>
    %cst_100 = arith.constant 6.400000e+01 : f32
    %130 = vector.broadcast %cst_100 : f32 to vector<10x1xf32>
    %131 = arith.divf %129, %130 : vector<10x1xf32>
    %cst_101 = arith.constant 9.99999997E-7 : f32
    %132 = vector.broadcast %cst_101 : f32 to vector<10x1xf32>
    %133 = arith.addf %131, %132 : vector<10x1xf32>
    %134 = math.rsqrt %133 : vector<10x1xf32>
    %135 = vector.broadcast %134 : vector<10x1xf32> to vector<10x64xf32>
    %136 = arith.mulf %126, %135 : vector<10x64xf32>
    %137 = vector.broadcast %98 : vector<1x64xf32> to vector<10x64xf32>
    %138 = arith.mulf %136, %137 : vector<10x64xf32>
    %139 = vector.broadcast %100 : vector<1x64xf32> to vector<10x64xf32>
    %140 = arith.addf %138, %139 : vector<10x64xf32>
    %cst_102 = arith.constant dense<0.000000e+00> : vector<10x192xf32>
    %141 = tpu.matmul %140, %102, %cst_102 {dimension_numbers = #tpu.dot_dimension_numbers<[1], [0], [0], [1], [0, 0, 1, 1], [], []>} : vector<10x64xf32>, vector<64x192xf32>, vector<10x192xf32> -> vector<10x192xf32>
    %142 = vector.broadcast %104 : vector<1x192xf32> to vector<10x192xf32>
    %143 = arith.addf %141, %142 : vector<10x192xf32>
    %144 = vector.extract_strided_slice %143 {offsets = [0, 0], sizes = [10, 48], strides = [1, 1]} : vector<10x192xf32> to vector<10x48xf32>
    %145 = vector.extract_strided_slice %144 {offsets = [0, 0], sizes = [10, 16], strides = [1, 1]} : vector<10x48xf32> to vector<10x16xf32>
    %146 = vector.extract_strided_slice %144 {offsets = [0, 16], sizes = [10, 16], strides = [1, 1]} : vector<10x48xf32> to vector<10x16xf32>
    %147 = vector.extract_strided_slice %144 {offsets = [0, 32], sizes = [10, 16], strides = [1, 1]} : vector<10x48xf32> to vector<10x16xf32>
    %cst_103 = arith.constant dense<0.000000e+00> : vector<10x10xf32>
    %148 = tpu.matmul %145, %146, %cst_103 {dimension_numbers = #tpu.dot_dimension_numbers<[1], [1], [0], [0], [0, 0, 1, 0], [], []>} : vector<10x16xf32>, vector<10x16xf32>, vector<10x10xf32> -> vector<10x10xf32>
    %cst_104 = arith.constant 2.500000e-01 : f32
    %149 = vector.broadcast %cst_104 : f32 to vector<10x10xf32>
    %150 = arith.mulf %148, %149 : vector<10x10xf32>
    %151 = arith.addf %150, %96 : vector<10x10xf32>
    %cst_105 = arith.constant dense<0xFF800000> : vector<10xf32>
    %152 = vector.multi_reduction <maximumf>, %151, %cst_105 [1] : vector<10x10xf32> to vector<10xf32>
    %153 = vector.shape_cast %152 : vector<10xf32> to vector<10x1xf32>
    %154 = vector.broadcast %153 : vector<10x1xf32> to vector<10x10xf32>
    %155 = arith.subf %151, %154 : vector<10x10xf32>
    %156 = math.exp %155 : vector<10x10xf32>
    %cst_106 = arith.constant dense<0.000000e+00> : vector<10xf32>
    %157 = vector.multi_reduction <add>, %156, %cst_106 [1] : vector<10x10xf32> to vector<10xf32>
    %158 = vector.shape_cast %157 : vector<10xf32> to vector<10x1xf32>
    %159 = vector.broadcast %158 : vector<10x1xf32> to vector<10x10xf32>
    %160 = arith.divf %156, %159 : vector<10x10xf32>
    %cst_107 = arith.constant dense<0.000000e+00> : vector<10x16xf32>
    %161 = tpu.matmul %160, %147, %cst_107 {dimension_numbers = #tpu.dot_dimension_numbers<[1], [0], [0], [1], [0, 0, 1, 1], [], []>} : vector<10x10xf32>, vector<10x16xf32>, vector<10x16xf32> -> vector<10x16xf32>
    %162 = vector.extract_strided_slice %106 {offsets = [0, 0, 0], sizes = [1, 16, 64], strides = [1, 1, 1]} : vector<4x16x64xf32> to vector<1x16x64xf32>
    %163 = vector.shape_cast %162 : vector<1x16x64xf32> to vector<16x64xf32>
    %cst_108 = arith.constant dense<0.000000e+00> : vector<10x64xf32>
    %164 = tpu.matmul %161, %163, %cst_108 {dimension_numbers = #tpu.dot_dimension_numbers<[1], [0], [0], [1], [0, 0, 1, 1], [], []>} : vector<10x16xf32>, vector<16x64xf32>, vector<10x64xf32> -> vector<10x64xf32>
    %165 = vector.extract_strided_slice %143 {offsets = [0, 48], sizes = [10, 48], strides = [1, 1]} : vector<10x192xf32> to vector<10x48xf32>
    %166 = vector.extract_strided_slice %165 {offsets = [0, 0], sizes = [10, 16], strides = [1, 1]} : vector<10x48xf32> to vector<10x16xf32>
    %167 = vector.extract_strided_slice %165 {offsets = [0, 16], sizes = [10, 16], strides = [1, 1]} : vector<10x48xf32> to vector<10x16xf32>
    %168 = vector.extract_strided_slice %165 {offsets = [0, 32], sizes = [10, 16], strides = [1, 1]} : vector<10x48xf32> to vector<10x16xf32>
    %cst_109 = arith.constant dense<0.000000e+00> : vector<10x10xf32>
    %169 = tpu.matmul %166, %167, %cst_109 {dimension_numbers = #tpu.dot_dimension_numbers<[1], [1], [0], [0], [0, 0, 1, 0], [], []>} : vector<10x16xf32>, vector<10x16xf32>, vector<10x10xf32> -> vector<10x10xf32>
    %cst_110 = arith.constant 2.500000e-01 : f32
    %170 = vector.broadcast %cst_110 : f32 to vector<10x10xf32>
    %171 = arith.mulf %169, %170 : vector<10x10xf32>
    %172 = arith.addf %171, %96 : vector<10x10xf32>
    %cst_111 = arith.constant dense<0xFF800000> : vector<10xf32>
    %173 = vector.multi_reduction <maximumf>, %172, %cst_111 [1] : vector<10x10xf32> to vector<10xf32>
    %174 = vector.shape_cast %173 : vector<10xf32> to vector<10x1xf32>
    %175 = vector.broadcast %174 : vector<10x1xf32> to vector<10x10xf32>
    %176 = arith.subf %172, %175 : vector<10x10xf32>
    %177 = math.exp %176 : vector<10x10xf32>
    %cst_112 = arith.constant dense<0.000000e+00> : vector<10xf32>
    %178 = vector.multi_reduction <add>, %177, %cst_112 [1] : vector<10x10xf32> to vector<10xf32>
    %179 = vector.shape_cast %178 : vector<10xf32> to vector<10x1xf32>
    %180 = vector.broadcast %179 : vector<10x1xf32> to vector<10x10xf32>
    %181 = arith.divf %177, %180 : vector<10x10xf32>
    %cst_113 = arith.constant dense<0.000000e+00> : vector<10x16xf32>
    %182 = tpu.matmul %181, %168, %cst_113 {dimension_numbers = #tpu.dot_dimension_numbers<[1], [0], [0], [1], [0, 0, 1, 1], [], []>} : vector<10x10xf32>, vector<10x16xf32>, vector<10x16xf32> -> vector<10x16xf32>
    %183 = vector.extract_strided_slice %106 {offsets = [1, 0, 0], sizes = [1, 16, 64], strides = [1, 1, 1]} : vector<4x16x64xf32> to vector<1x16x64xf32>
    %184 = vector.shape_cast %183 : vector<1x16x64xf32> to vector<16x64xf32>
    %cst_114 = arith.constant dense<0.000000e+00> : vector<10x64xf32>
    %185 = tpu.matmul %182, %184, %cst_114 {dimension_numbers = #tpu.dot_dimension_numbers<[1], [0], [0], [1], [0, 0, 1, 1], [], []>} : vector<10x16xf32>, vector<16x64xf32>, vector<10x64xf32> -> vector<10x64xf32>
    %186 = arith.addf %164, %185 : vector<10x64xf32>
    %187 = vector.extract_strided_slice %143 {offsets = [0, 96], sizes = [10, 48], strides = [1, 1]} : vector<10x192xf32> to vector<10x48xf32>
    %188 = vector.extract_strided_slice %187 {offsets = [0, 0], sizes = [10, 16], strides = [1, 1]} : vector<10x48xf32> to vector<10x16xf32>
    %189 = vector.extract_strided_slice %187 {offsets = [0, 16], sizes = [10, 16], strides = [1, 1]} : vector<10x48xf32> to vector<10x16xf32>
    %190 = vector.extract_strided_slice %187 {offsets = [0, 32], sizes = [10, 16], strides = [1, 1]} : vector<10x48xf32> to vector<10x16xf32>
    %cst_115 = arith.constant dense<0.000000e+00> : vector<10x10xf32>
    %191 = tpu.matmul %188, %189, %cst_115 {dimension_numbers = #tpu.dot_dimension_numbers<[1], [1], [0], [0], [0, 0, 1, 0], [], []>} : vector<10x16xf32>, vector<10x16xf32>, vector<10x10xf32> -> vector<10x10xf32>
    %cst_116 = arith.constant 2.500000e-01 : f32
    %192 = vector.broadcast %cst_116 : f32 to vector<10x10xf32>
    %193 = arith.mulf %191, %192 : vector<10x10xf32>
    %194 = arith.addf %193, %96 : vector<10x10xf32>
    %cst_117 = arith.constant dense<0xFF800000> : vector<10xf32>
    %195 = vector.multi_reduction <maximumf>, %194, %cst_117 [1] : vector<10x10xf32> to vector<10xf32>
    %196 = vector.shape_cast %195 : vector<10xf32> to vector<10x1xf32>
    %197 = vector.broadcast %196 : vector<10x1xf32> to vector<10x10xf32>
    %198 = arith.subf %194, %197 : vector<10x10xf32>
    %199 = math.exp %198 : vector<10x10xf32>
    %cst_118 = arith.constant dense<0.000000e+00> : vector<10xf32>
    %200 = vector.multi_reduction <add>, %199, %cst_118 [1] : vector<10x10xf32> to vector<10xf32>
    %201 = vector.shape_cast %200 : vector<10xf32> to vector<10x1xf32>
    %202 = vector.broadcast %201 : vector<10x1xf32> to vector<10x10xf32>
    %203 = arith.divf %199, %202 : vector<10x10xf32>
    %cst_119 = arith.constant dense<0.000000e+00> : vector<10x16xf32>
    %204 = tpu.matmul %203, %190, %cst_119 {dimension_numbers = #tpu.dot_dimension_numbers<[1], [0], [0], [1], [0, 0, 1, 1], [], []>} : vector<10x10xf32>, vector<10x16xf32>, vector<10x16xf32> -> vector<10x16xf32>
    %205 = vector.extract_strided_slice %106 {offsets = [2, 0, 0], sizes = [1, 16, 64], strides = [1, 1, 1]} : vector<4x16x64xf32> to vector<1x16x64xf32>
    %206 = vector.shape_cast %205 : vector<1x16x64xf32> to vector<16x64xf32>
    %cst_120 = arith.constant dense<0.000000e+00> : vector<10x64xf32>
    %207 = tpu.matmul %204, %206, %cst_120 {dimension_numbers = #tpu.dot_dimension_numbers<[1], [0], [0], [1], [0, 0, 1, 1], [], []>} : vector<10x16xf32>, vector<16x64xf32>, vector<10x64xf32> -> vector<10x64xf32>
    %208 = arith.addf %186, %207 : vector<10x64xf32>
    %209 = vector.extract_strided_slice %143 {offsets = [0, 144], sizes = [10, 48], strides = [1, 1]} : vector<10x192xf32> to vector<10x48xf32>
    %210 = vector.extract_strided_slice %209 {offsets = [0, 0], sizes = [10, 16], strides = [1, 1]} : vector<10x48xf32> to vector<10x16xf32>
    %211 = vector.extract_strided_slice %209 {offsets = [0, 16], sizes = [10, 16], strides = [1, 1]} : vector<10x48xf32> to vector<10x16xf32>
    %212 = vector.extract_strided_slice %209 {offsets = [0, 32], sizes = [10, 16], strides = [1, 1]} : vector<10x48xf32> to vector<10x16xf32>
    %cst_121 = arith.constant dense<0.000000e+00> : vector<10x10xf32>
    %213 = tpu.matmul %210, %211, %cst_121 {dimension_numbers = #tpu.dot_dimension_numbers<[1], [1], [0], [0], [0, 0, 1, 0], [], []>} : vector<10x16xf32>, vector<10x16xf32>, vector<10x10xf32> -> vector<10x10xf32>
    %cst_122 = arith.constant 2.500000e-01 : f32
    %214 = vector.broadcast %cst_122 : f32 to vector<10x10xf32>
    %215 = arith.mulf %213, %214 : vector<10x10xf32>
    %216 = arith.addf %215, %96 : vector<10x10xf32>
    %cst_123 = arith.constant dense<0xFF800000> : vector<10xf32>
    %217 = vector.multi_reduction <maximumf>, %216, %cst_123 [1] : vector<10x10xf32> to vector<10xf32>
    %218 = vector.shape_cast %217 : vector<10xf32> to vector<10x1xf32>
    %219 = vector.broadcast %218 : vector<10x1xf32> to vector<10x10xf32>
    %220 = arith.subf %216, %219 : vector<10x10xf32>
    %221 = math.exp %220 : vector<10x10xf32>
    %cst_124 = arith.constant dense<0.000000e+00> : vector<10xf32>
    %222 = vector.multi_reduction <add>, %221, %cst_124 [1] : vector<10x10xf32> to vector<10xf32>
    %223 = vector.shape_cast %222 : vector<10xf32> to vector<10x1xf32>
    %224 = vector.broadcast %223 : vector<10x1xf32> to vector<10x10xf32>
    %225 = arith.divf %221, %224 : vector<10x10xf32>
    %cst_125 = arith.constant dense<0.000000e+00> : vector<10x16xf32>
    %226 = tpu.matmul %225, %212, %cst_125 {dimension_numbers = #tpu.dot_dimension_numbers<[1], [0], [0], [1], [0, 0, 1, 1], [], []>} : vector<10x10xf32>, vector<10x16xf32>, vector<10x16xf32> -> vector<10x16xf32>
    %227 = vector.extract_strided_slice %106 {offsets = [3, 0, 0], sizes = [1, 16, 64], strides = [1, 1, 1]} : vector<4x16x64xf32> to vector<1x16x64xf32>
    %228 = vector.shape_cast %227 : vector<1x16x64xf32> to vector<16x64xf32>
    %cst_126 = arith.constant dense<0.000000e+00> : vector<10x64xf32>
    %229 = tpu.matmul %226, %228, %cst_126 {dimension_numbers = #tpu.dot_dimension_numbers<[1], [0], [0], [1], [0, 0, 1, 1], [], []>} : vector<10x16xf32>, vector<16x64xf32>, vector<10x64xf32> -> vector<10x64xf32>
    %230 = arith.addf %208, %229 : vector<10x64xf32>
    %231 = arith.addf %95, %230 : vector<10x64xf32>
    %232 = vector.broadcast %108 : vector<1x64xf32> to vector<10x64xf32>
    %233 = arith.addf %231, %232 : vector<10x64xf32>
    %cst_127 = arith.constant dense<0.000000e+00> : vector<10xf32>
    %234 = vector.multi_reduction <add>, %233, %cst_127 [1] : vector<10x64xf32> to vector<10xf32>
    %235 = vector.shape_cast %234 : vector<10xf32> to vector<10x1xf32>
    %cst_128 = arith.constant 6.400000e+01 : f32
    %236 = vector.broadcast %cst_128 : f32 to vector<10x1xf32>
    %237 = arith.divf %235, %236 : vector<10x1xf32>
    %238 = vector.broadcast %237 : vector<10x1xf32> to vector<10x64xf32>
    %239 = arith.subf %233, %238 : vector<10x64xf32>
    %240 = arith.mulf %239, %239 : vector<10x64xf32>
    %cst_129 = arith.constant dense<0.000000e+00> : vector<10xf32>
    %241 = vector.multi_reduction <add>, %240, %cst_129 [1] : vector<10x64xf32> to vector<10xf32>
    %242 = vector.shape_cast %241 : vector<10xf32> to vector<10x1xf32>
    %cst_130 = arith.constant 6.400000e+01 : f32
    %243 = vector.broadcast %cst_130 : f32 to vector<10x1xf32>
    %244 = arith.divf %242, %243 : vector<10x1xf32>
    %cst_131 = arith.constant 9.99999997E-7 : f32
    %245 = vector.broadcast %cst_131 : f32 to vector<10x1xf32>
    %246 = arith.addf %244, %245 : vector<10x1xf32>
    %247 = math.rsqrt %246 : vector<10x1xf32>
    %248 = vector.broadcast %247 : vector<10x1xf32> to vector<10x64xf32>
    %249 = arith.mulf %239, %248 : vector<10x64xf32>
    %250 = vector.broadcast %110 : vector<1x64xf32> to vector<10x64xf32>
    %251 = arith.mulf %249, %250 : vector<10x64xf32>
    %252 = vector.broadcast %112 : vector<1x64xf32> to vector<10x64xf32>
    %253 = arith.addf %251, %252 : vector<10x64xf32>
    %cst_132 = arith.constant dense<0.000000e+00> : vector<10x256xf32>
    %254 = tpu.matmul %253, %114, %cst_132 {dimension_numbers = #tpu.dot_dimension_numbers<[1], [0], [0], [1], [0, 0, 1, 1], [], []>} : vector<10x64xf32>, vector<64x256xf32>, vector<10x256xf32> -> vector<10x256xf32>
    %255 = vector.broadcast %116 : vector<1x256xf32> to vector<10x256xf32>
    %256 = arith.addf %254, %255 : vector<10x256xf32>
    %cst_133 = arith.constant 5.000000e-01 : f32
    %257 = vector.broadcast %cst_133 : f32 to vector<10x256xf32>
    %258 = arith.mulf %257, %256 : vector<10x256xf32>
    %cst_134 = arith.constant 0.707106769 : f32
    %259 = vector.broadcast %cst_134 : f32 to vector<10x256xf32>
    %260 = arith.mulf %256, %259 : vector<10x256xf32>
    %261 = math.erf %260 : vector<10x256xf32>
    %cst_135 = arith.constant 1.000000e+00 : f32
    %262 = vector.broadcast %cst_135 : f32 to vector<10x256xf32>
    %263 = arith.addf %262, %261 : vector<10x256xf32>
    %264 = arith.mulf %258, %263 : vector<10x256xf32>
    %cst_136 = arith.constant dense<0.000000e+00> : vector<10x64xf32>
    %265 = tpu.matmul %264, %118, %cst_136 {dimension_numbers = #tpu.dot_dimension_numbers<[1], [0], [0], [1], [0, 0, 1, 1], [], []>} : vector<10x256xf32>, vector<256x64xf32>, vector<10x64xf32> -> vector<10x64xf32>
    %266 = vector.broadcast %120 : vector<1x64xf32> to vector<10x64xf32>
    %267 = arith.addf %265, %266 : vector<10x64xf32>
    %268 = arith.addf %233, %267 : vector<10x64xf32>
    %c1_137 = arith.constant 1 : index
    %c0_138 = arith.constant 0 : index
    %c0_139 = arith.constant 0 : index
    %269 = vector.load %arg14[%c1_137, %c0_138, %c0_139] : memref<4x1x64xf32, #tpu.memory_space<vmem>>, vector<1x1x64xf32>
    %270 = vector.shape_cast %269 : vector<1x1x64xf32> to vector<1x64xf32>
    %c1_140 = arith.constant 1 : index
    %c0_141 = arith.constant 0 : index
    %c0_142 = arith.constant 0 : index
    %271 = vector.load %arg15[%c1_140, %c0_141, %c0_142] : memref<4x1x64xf32, #tpu.memory_space<vmem>>, vector<1x1x64xf32>
    %272 = vector.shape_cast %271 : vector<1x1x64xf32> to vector<1x64xf32>
    %c1_143 = arith.constant 1 : index
    %c0_144 = arith.constant 0 : index
    %c0_145 = arith.constant 0 : index
    %273 = vector.load %arg16[%c1_143, %c0_144, %c0_145] : memref<4x64x192xf32, #tpu.memory_space<vmem>>, vector<1x64x192xf32>
    %274 = vector.shape_cast %273 : vector<1x64x192xf32> to vector<64x192xf32>
    %c1_146 = arith.constant 1 : index
    %c0_147 = arith.constant 0 : index
    %c0_148 = arith.constant 0 : index
    %275 = vector.load %arg17[%c1_146, %c0_147, %c0_148] : memref<4x1x192xf32, #tpu.memory_space<vmem>>, vector<1x1x192xf32>
    %276 = vector.shape_cast %275 : vector<1x1x192xf32> to vector<1x192xf32>
    %c1_149 = arith.constant 1 : index
    %c0_150 = arith.constant 0 : index
    %c0_151 = arith.constant 0 : index
    %c0_152 = arith.constant 0 : index
    %277 = vector.load %arg18[%c1_149, %c0_150, %c0_151, %c0_152] : memref<4x4x16x64xf32, #tpu.memory_space<vmem>>, vector<1x4x16x64xf32>
    %278 = vector.shape_cast %277 : vector<1x4x16x64xf32> to vector<4x16x64xf32>
    %c1_153 = arith.constant 1 : index
    %c0_154 = arith.constant 0 : index
    %c0_155 = arith.constant 0 : index
    %279 = vector.load %arg19[%c1_153, %c0_154, %c0_155] : memref<4x1x64xf32, #tpu.memory_space<vmem>>, vector<1x1x64xf32>
    %280 = vector.shape_cast %279 : vector<1x1x64xf32> to vector<1x64xf32>
    %c1_156 = arith.constant 1 : index
    %c0_157 = arith.constant 0 : index
    %c0_158 = arith.constant 0 : index
    %281 = vector.load %arg20[%c1_156, %c0_157, %c0_158] : memref<4x1x64xf32, #tpu.memory_space<vmem>>, vector<1x1x64xf32>
    %282 = vector.shape_cast %281 : vector<1x1x64xf32> to vector<1x64xf32>
    %c1_159 = arith.constant 1 : index
    %c0_160 = arith.constant 0 : index
    %c0_161 = arith.constant 0 : index
    %283 = vector.load %arg21[%c1_159, %c0_160, %c0_161] : memref<4x1x64xf32, #tpu.memory_space<vmem>>, vector<1x1x64xf32>
    %284 = vector.shape_cast %283 : vector<1x1x64xf32> to vector<1x64xf32>
    %c1_162 = arith.constant 1 : index
    %c0_163 = arith.constant 0 : index
    %c0_164 = arith.constant 0 : index
    %285 = vector.load %arg22[%c1_162, %c0_163, %c0_164] : memref<4x64x256xf32, #tpu.memory_space<vmem>>, vector<1x64x256xf32>
    %286 = vector.shape_cast %285 : vector<1x64x256xf32> to vector<64x256xf32>
    %c1_165 = arith.constant 1 : index
    %c0_166 = arith.constant 0 : index
    %c0_167 = arith.constant 0 : index
    %287 = vector.load %arg23[%c1_165, %c0_166, %c0_167] : memref<4x1x256xf32, #tpu.memory_space<vmem>>, vector<1x1x256xf32>
    %288 = vector.shape_cast %287 : vector<1x1x256xf32> to vector<1x256xf32>
    %c1_168 = arith.constant 1 : index
    %c0_169 = arith.constant 0 : index
    %c0_170 = arith.constant 0 : index
    %289 = vector.load %arg24[%c1_168, %c0_169, %c0_170] : memref<4x256x64xf32, #tpu.memory_space<vmem>>, vector<1x256x64xf32>
    %290 = vector.shape_cast %289 : vector<1x256x64xf32> to vector<256x64xf32>
    %c1_171 = arith.constant 1 : index
    %c0_172 = arith.constant 0 : index
    %c0_173 = arith.constant 0 : index
    %291 = vector.load %arg25[%c1_171, %c0_172, %c0_173] : memref<4x1x64xf32, #tpu.memory_space<vmem>>, vector<1x1x64xf32>
    %292 = vector.shape_cast %291 : vector<1x1x64xf32> to vector<1x64xf32>
    %cst_174 = arith.constant dense<0.000000e+00> : vector<10xf32>
    %293 = vector.multi_reduction <add>, %268, %cst_174 [1] : vector<10x64xf32> to vector<10xf32>
    %294 = vector.shape_cast %293 : vector<10xf32> to vector<10x1xf32>
    %cst_175 = arith.constant 6.400000e+01 : f32
    %295 = vector.broadcast %cst_175 : f32 to vector<10x1xf32>
    %296 = arith.divf %294, %295 : vector<10x1xf32>
    %297 = vector.broadcast %296 : vector<10x1xf32> to vector<10x64xf32>
    %298 = arith.subf %268, %297 : vector<10x64xf32>
    %299 = arith.mulf %298, %298 : vector<10x64xf32>
    %cst_176 = arith.constant dense<0.000000e+00> : vector<10xf32>
    %300 = vector.multi_reduction <add>, %299, %cst_176 [1] : vector<10x64xf32> to vector<10xf32>
    %301 = vector.shape_cast %300 : vector<10xf32> to vector<10x1xf32>
    %cst_177 = arith.constant 6.400000e+01 : f32
    %302 = vector.broadcast %cst_177 : f32 to vector<10x1xf32>
    %303 = arith.divf %301, %302 : vector<10x1xf32>
    %cst_178 = arith.constant 9.99999997E-7 : f32
    %304 = vector.broadcast %cst_178 : f32 to vector<10x1xf32>
    %305 = arith.addf %303, %304 : vector<10x1xf32>
    %306 = math.rsqrt %305 : vector<10x1xf32>
    %307 = vector.broadcast %306 : vector<10x1xf32> to vector<10x64xf32>
    %308 = arith.mulf %298, %307 : vector<10x64xf32>
    %309 = vector.broadcast %270 : vector<1x64xf32> to vector<10x64xf32>
    %310 = arith.mulf %308, %309 : vector<10x64xf32>
    %311 = vector.broadcast %272 : vector<1x64xf32> to vector<10x64xf32>
    %312 = arith.addf %310, %311 : vector<10x64xf32>
    %cst_179 = arith.constant dense<0.000000e+00> : vector<10x192xf32>
    %313 = tpu.matmul %312, %274, %cst_179 {dimension_numbers = #tpu.dot_dimension_numbers<[1], [0], [0], [1], [0, 0, 1, 1], [], []>} : vector<10x64xf32>, vector<64x192xf32>, vector<10x192xf32> -> vector<10x192xf32>
    %314 = vector.broadcast %276 : vector<1x192xf32> to vector<10x192xf32>
    %315 = arith.addf %313, %314 : vector<10x192xf32>
    %316 = vector.extract_strided_slice %315 {offsets = [0, 0], sizes = [10, 48], strides = [1, 1]} : vector<10x192xf32> to vector<10x48xf32>
    %317 = vector.extract_strided_slice %316 {offsets = [0, 0], sizes = [10, 16], strides = [1, 1]} : vector<10x48xf32> to vector<10x16xf32>
    %318 = vector.extract_strided_slice %316 {offsets = [0, 16], sizes = [10, 16], strides = [1, 1]} : vector<10x48xf32> to vector<10x16xf32>
    %319 = vector.extract_strided_slice %316 {offsets = [0, 32], sizes = [10, 16], strides = [1, 1]} : vector<10x48xf32> to vector<10x16xf32>
    %cst_180 = arith.constant dense<0.000000e+00> : vector<10x10xf32>
    %320 = tpu.matmul %317, %318, %cst_180 {dimension_numbers = #tpu.dot_dimension_numbers<[1], [1], [0], [0], [0, 0, 1, 0], [], []>} : vector<10x16xf32>, vector<10x16xf32>, vector<10x10xf32> -> vector<10x10xf32>
    %cst_181 = arith.constant 2.500000e-01 : f32
    %321 = vector.broadcast %cst_181 : f32 to vector<10x10xf32>
    %322 = arith.mulf %320, %321 : vector<10x10xf32>
    %323 = arith.addf %322, %96 : vector<10x10xf32>
    %cst_182 = arith.constant dense<0xFF800000> : vector<10xf32>
    %324 = vector.multi_reduction <maximumf>, %323, %cst_182 [1] : vector<10x10xf32> to vector<10xf32>
    %325 = vector.shape_cast %324 : vector<10xf32> to vector<10x1xf32>
    %326 = vector.broadcast %325 : vector<10x1xf32> to vector<10x10xf32>
    %327 = arith.subf %323, %326 : vector<10x10xf32>
    %328 = math.exp %327 : vector<10x10xf32>
    %cst_183 = arith.constant dense<0.000000e+00> : vector<10xf32>
    %329 = vector.multi_reduction <add>, %328, %cst_183 [1] : vector<10x10xf32> to vector<10xf32>
    %330 = vector.shape_cast %329 : vector<10xf32> to vector<10x1xf32>
    %331 = vector.broadcast %330 : vector<10x1xf32> to vector<10x10xf32>
    %332 = arith.divf %328, %331 : vector<10x10xf32>
    %cst_184 = arith.constant dense<0.000000e+00> : vector<10x16xf32>
    %333 = tpu.matmul %332, %319, %cst_184 {dimension_numbers = #tpu.dot_dimension_numbers<[1], [0], [0], [1], [0, 0, 1, 1], [], []>} : vector<10x10xf32>, vector<10x16xf32>, vector<10x16xf32> -> vector<10x16xf32>
    %334 = vector.extract_strided_slice %278 {offsets = [0, 0, 0], sizes = [1, 16, 64], strides = [1, 1, 1]} : vector<4x16x64xf32> to vector<1x16x64xf32>
    %335 = vector.shape_cast %334 : vector<1x16x64xf32> to vector<16x64xf32>
    %cst_185 = arith.constant dense<0.000000e+00> : vector<10x64xf32>
    %336 = tpu.matmul %333, %335, %cst_185 {dimension_numbers = #tpu.dot_dimension_numbers<[1], [0], [0], [1], [0, 0, 1, 1], [], []>} : vector<10x16xf32>, vector<16x64xf32>, vector<10x64xf32> -> vector<10x64xf32>
    %337 = vector.extract_strided_slice %315 {offsets = [0, 48], sizes = [10, 48], strides = [1, 1]} : vector<10x192xf32> to vector<10x48xf32>
    %338 = vector.extract_strided_slice %337 {offsets = [0, 0], sizes = [10, 16], strides = [1, 1]} : vector<10x48xf32> to vector<10x16xf32>
    %339 = vector.extract_strided_slice %337 {offsets = [0, 16], sizes = [10, 16], strides = [1, 1]} : vector<10x48xf32> to vector<10x16xf32>
    %340 = vector.extract_strided_slice %337 {offsets = [0, 32], sizes = [10, 16], strides = [1, 1]} : vector<10x48xf32> to vector<10x16xf32>
    %cst_186 = arith.constant dense<0.000000e+00> : vector<10x10xf32>
    %341 = tpu.matmul %338, %339, %cst_186 {dimension_numbers = #tpu.dot_dimension_numbers<[1], [1], [0], [0], [0, 0, 1, 0], [], []>} : vector<10x16xf32>, vector<10x16xf32>, vector<10x10xf32> -> vector<10x10xf32>
    %cst_187 = arith.constant 2.500000e-01 : f32
    %342 = vector.broadcast %cst_187 : f32 to vector<10x10xf32>
    %343 = arith.mulf %341, %342 : vector<10x10xf32>
    %344 = arith.addf %343, %96 : vector<10x10xf32>
    %cst_188 = arith.constant dense<0xFF800000> : vector<10xf32>
    %345 = vector.multi_reduction <maximumf>, %344, %cst_188 [1] : vector<10x10xf32> to vector<10xf32>
    %346 = vector.shape_cast %345 : vector<10xf32> to vector<10x1xf32>
    %347 = vector.broadcast %346 : vector<10x1xf32> to vector<10x10xf32>
    %348 = arith.subf %344, %347 : vector<10x10xf32>
    %349 = math.exp %348 : vector<10x10xf32>
    %cst_189 = arith.constant dense<0.000000e+00> : vector<10xf32>
    %350 = vector.multi_reduction <add>, %349, %cst_189 [1] : vector<10x10xf32> to vector<10xf32>
    %351 = vector.shape_cast %350 : vector<10xf32> to vector<10x1xf32>
    %352 = vector.broadcast %351 : vector<10x1xf32> to vector<10x10xf32>
    %353 = arith.divf %349, %352 : vector<10x10xf32>
    %cst_190 = arith.constant dense<0.000000e+00> : vector<10x16xf32>
    %354 = tpu.matmul %353, %340, %cst_190 {dimension_numbers = #tpu.dot_dimension_numbers<[1], [0], [0], [1], [0, 0, 1, 1], [], []>} : vector<10x10xf32>, vector<10x16xf32>, vector<10x16xf32> -> vector<10x16xf32>
    %355 = vector.extract_strided_slice %278 {offsets = [1, 0, 0], sizes = [1, 16, 64], strides = [1, 1, 1]} : vector<4x16x64xf32> to vector<1x16x64xf32>
    %356 = vector.shape_cast %355 : vector<1x16x64xf32> to vector<16x64xf32>
    %cst_191 = arith.constant dense<0.000000e+00> : vector<10x64xf32>
    %357 = tpu.matmul %354, %356, %cst_191 {dimension_numbers = #tpu.dot_dimension_numbers<[1], [0], [0], [1], [0, 0, 1, 1], [], []>} : vector<10x16xf32>, vector<16x64xf32>, vector<10x64xf32> -> vector<10x64xf32>
    %358 = arith.addf %336, %357 : vector<10x64xf32>
    %359 = vector.extract_strided_slice %315 {offsets = [0, 96], sizes = [10, 48], strides = [1, 1]} : vector<10x192xf32> to vector<10x48xf32>
    %360 = vector.extract_strided_slice %359 {offsets = [0, 0], sizes = [10, 16], strides = [1, 1]} : vector<10x48xf32> to vector<10x16xf32>
    %361 = vector.extract_strided_slice %359 {offsets = [0, 16], sizes = [10, 16], strides = [1, 1]} : vector<10x48xf32> to vector<10x16xf32>
    %362 = vector.extract_strided_slice %359 {offsets = [0, 32], sizes = [10, 16], strides = [1, 1]} : vector<10x48xf32> to vector<10x16xf32>
    %cst_192 = arith.constant dense<0.000000e+00> : vector<10x10xf32>
    %363 = tpu.matmul %360, %361, %cst_192 {dimension_numbers = #tpu.dot_dimension_numbers<[1], [1], [0], [0], [0, 0, 1, 0], [], []>} : vector<10x16xf32>, vector<10x16xf32>, vector<10x10xf32> -> vector<10x10xf32>
    %cst_193 = arith.constant 2.500000e-01 : f32
    %364 = vector.broadcast %cst_193 : f32 to vector<10x10xf32>
    %365 = arith.mulf %363, %364 : vector<10x10xf32>
    %366 = arith.addf %365, %96 : vector<10x10xf32>
    %cst_194 = arith.constant dense<0xFF800000> : vector<10xf32>
    %367 = vector.multi_reduction <maximumf>, %366, %cst_194 [1] : vector<10x10xf32> to vector<10xf32>
    %368 = vector.shape_cast %367 : vector<10xf32> to vector<10x1xf32>
    %369 = vector.broadcast %368 : vector<10x1xf32> to vector<10x10xf32>
    %370 = arith.subf %366, %369 : vector<10x10xf32>
    %371 = math.exp %370 : vector<10x10xf32>
    %cst_195 = arith.constant dense<0.000000e+00> : vector<10xf32>
    %372 = vector.multi_reduction <add>, %371, %cst_195 [1] : vector<10x10xf32> to vector<10xf32>
    %373 = vector.shape_cast %372 : vector<10xf32> to vector<10x1xf32>
    %374 = vector.broadcast %373 : vector<10x1xf32> to vector<10x10xf32>
    %375 = arith.divf %371, %374 : vector<10x10xf32>
    %cst_196 = arith.constant dense<0.000000e+00> : vector<10x16xf32>
    %376 = tpu.matmul %375, %362, %cst_196 {dimension_numbers = #tpu.dot_dimension_numbers<[1], [0], [0], [1], [0, 0, 1, 1], [], []>} : vector<10x10xf32>, vector<10x16xf32>, vector<10x16xf32> -> vector<10x16xf32>
    %377 = vector.extract_strided_slice %278 {offsets = [2, 0, 0], sizes = [1, 16, 64], strides = [1, 1, 1]} : vector<4x16x64xf32> to vector<1x16x64xf32>
    %378 = vector.shape_cast %377 : vector<1x16x64xf32> to vector<16x64xf32>
    %cst_197 = arith.constant dense<0.000000e+00> : vector<10x64xf32>
    %379 = tpu.matmul %376, %378, %cst_197 {dimension_numbers = #tpu.dot_dimension_numbers<[1], [0], [0], [1], [0, 0, 1, 1], [], []>} : vector<10x16xf32>, vector<16x64xf32>, vector<10x64xf32> -> vector<10x64xf32>
    %380 = arith.addf %358, %379 : vector<10x64xf32>
    %381 = vector.extract_strided_slice %315 {offsets = [0, 144], sizes = [10, 48], strides = [1, 1]} : vector<10x192xf32> to vector<10x48xf32>
    %382 = vector.extract_strided_slice %381 {offsets = [0, 0], sizes = [10, 16], strides = [1, 1]} : vector<10x48xf32> to vector<10x16xf32>
    %383 = vector.extract_strided_slice %381 {offsets = [0, 16], sizes = [10, 16], strides = [1, 1]} : vector<10x48xf32> to vector<10x16xf32>
    %384 = vector.extract_strided_slice %381 {offsets = [0, 32], sizes = [10, 16], strides = [1, 1]} : vector<10x48xf32> to vector<10x16xf32>
    %cst_198 = arith.constant dense<0.000000e+00> : vector<10x10xf32>
    %385 = tpu.matmul %382, %383, %cst_198 {dimension_numbers = #tpu.dot_dimension_numbers<[1], [1], [0], [0], [0, 0, 1, 0], [], []>} : vector<10x16xf32>, vector<10x16xf32>, vector<10x10xf32> -> vector<10x10xf32>
    %cst_199 = arith.constant 2.500000e-01 : f32
    %386 = vector.broadcast %cst_199 : f32 to vector<10x10xf32>
    %387 = arith.mulf %385, %386 : vector<10x10xf32>
    %388 = arith.addf %387, %96 : vector<10x10xf32>
    %cst_200 = arith.constant dense<0xFF800000> : vector<10xf32>
    %389 = vector.multi_reduction <maximumf>, %388, %cst_200 [1] : vector<10x10xf32> to vector<10xf32>
    %390 = vector.shape_cast %389 : vector<10xf32> to vector<10x1xf32>
    %391 = vector.broadcast %390 : vector<10x1xf32> to vector<10x10xf32>
    %392 = arith.subf %388, %391 : vector<10x10xf32>
    %393 = math.exp %392 : vector<10x10xf32>
    %cst_201 = arith.constant dense<0.000000e+00> : vector<10xf32>
    %394 = vector.multi_reduction <add>, %393, %cst_201 [1] : vector<10x10xf32> to vector<10xf32>
    %395 = vector.shape_cast %394 : vector<10xf32> to vector<10x1xf32>
    %396 = vector.broadcast %395 : vector<10x1xf32> to vector<10x10xf32>
    %397 = arith.divf %393, %396 : vector<10x10xf32>
    %cst_202 = arith.constant dense<0.000000e+00> : vector<10x16xf32>
    %398 = tpu.matmul %397, %384, %cst_202 {dimension_numbers = #tpu.dot_dimension_numbers<[1], [0], [0], [1], [0, 0, 1, 1], [], []>} : vector<10x10xf32>, vector<10x16xf32>, vector<10x16xf32> -> vector<10x16xf32>
    %399 = vector.extract_strided_slice %278 {offsets = [3, 0, 0], sizes = [1, 16, 64], strides = [1, 1, 1]} : vector<4x16x64xf32> to vector<1x16x64xf32>
    %400 = vector.shape_cast %399 : vector<1x16x64xf32> to vector<16x64xf32>
    %cst_203 = arith.constant dense<0.000000e+00> : vector<10x64xf32>
    %401 = tpu.matmul %398, %400, %cst_203 {dimension_numbers = #tpu.dot_dimension_numbers<[1], [0], [0], [1], [0, 0, 1, 1], [], []>} : vector<10x16xf32>, vector<16x64xf32>, vector<10x64xf32> -> vector<10x64xf32>
    %402 = arith.addf %380, %401 : vector<10x64xf32>
    %403 = arith.addf %268, %402 : vector<10x64xf32>
    %404 = vector.broadcast %280 : vector<1x64xf32> to vector<10x64xf32>
    %405 = arith.addf %403, %404 : vector<10x64xf32>
    %cst_204 = arith.constant dense<0.000000e+00> : vector<10xf32>
    %406 = vector.multi_reduction <add>, %405, %cst_204 [1] : vector<10x64xf32> to vector<10xf32>
    %407 = vector.shape_cast %406 : vector<10xf32> to vector<10x1xf32>
    %cst_205 = arith.constant 6.400000e+01 : f32
    %408 = vector.broadcast %cst_205 : f32 to vector<10x1xf32>
    %409 = arith.divf %407, %408 : vector<10x1xf32>
    %410 = vector.broadcast %409 : vector<10x1xf32> to vector<10x64xf32>
    %411 = arith.subf %405, %410 : vector<10x64xf32>
    %412 = arith.mulf %411, %411 : vector<10x64xf32>
    %cst_206 = arith.constant dense<0.000000e+00> : vector<10xf32>
    %413 = vector.multi_reduction <add>, %412, %cst_206 [1] : vector<10x64xf32> to vector<10xf32>
    %414 = vector.shape_cast %413 : vector<10xf32> to vector<10x1xf32>
    %cst_207 = arith.constant 6.400000e+01 : f32
    %415 = vector.broadcast %cst_207 : f32 to vector<10x1xf32>
    %416 = arith.divf %414, %415 : vector<10x1xf32>
    %cst_208 = arith.constant 9.99999997E-7 : f32
    %417 = vector.broadcast %cst_208 : f32 to vector<10x1xf32>
    %418 = arith.addf %416, %417 : vector<10x1xf32>
    %419 = math.rsqrt %418 : vector<10x1xf32>
    %420 = vector.broadcast %419 : vector<10x1xf32> to vector<10x64xf32>
    %421 = arith.mulf %411, %420 : vector<10x64xf32>
    %422 = vector.broadcast %282 : vector<1x64xf32> to vector<10x64xf32>
    %423 = arith.mulf %421, %422 : vector<10x64xf32>
    %424 = vector.broadcast %284 : vector<1x64xf32> to vector<10x64xf32>
    %425 = arith.addf %423, %424 : vector<10x64xf32>
    %cst_209 = arith.constant dense<0.000000e+00> : vector<10x256xf32>
    %426 = tpu.matmul %425, %286, %cst_209 {dimension_numbers = #tpu.dot_dimension_numbers<[1], [0], [0], [1], [0, 0, 1, 1], [], []>} : vector<10x64xf32>, vector<64x256xf32>, vector<10x256xf32> -> vector<10x256xf32>
    %427 = vector.broadcast %288 : vector<1x256xf32> to vector<10x256xf32>
    %428 = arith.addf %426, %427 : vector<10x256xf32>
    %cst_210 = arith.constant 5.000000e-01 : f32
    %429 = vector.broadcast %cst_210 : f32 to vector<10x256xf32>
    %430 = arith.mulf %429, %428 : vector<10x256xf32>
    %cst_211 = arith.constant 0.707106769 : f32
    %431 = vector.broadcast %cst_211 : f32 to vector<10x256xf32>
    %432 = arith.mulf %428, %431 : vector<10x256xf32>
    %433 = math.erf %432 : vector<10x256xf32>
    %cst_212 = arith.constant 1.000000e+00 : f32
    %434 = vector.broadcast %cst_212 : f32 to vector<10x256xf32>
    %435 = arith.addf %434, %433 : vector<10x256xf32>
    %436 = arith.mulf %430, %435 : vector<10x256xf32>
    %cst_213 = arith.constant dense<0.000000e+00> : vector<10x64xf32>
    %437 = tpu.matmul %436, %290, %cst_213 {dimension_numbers = #tpu.dot_dimension_numbers<[1], [0], [0], [1], [0, 0, 1, 1], [], []>} : vector<10x256xf32>, vector<256x64xf32>, vector<10x64xf32> -> vector<10x64xf32>
    %438 = vector.broadcast %292 : vector<1x64xf32> to vector<10x64xf32>
    %439 = arith.addf %437, %438 : vector<10x64xf32>
    %440 = arith.addf %405, %439 : vector<10x64xf32>
    %c0_214 = arith.constant 0 : index
    %c0_215 = arith.constant 0 : index
    %441 = vector.load %arg26[%c0_214, %c0_215] : memref<1x64xf32, #tpu.memory_space<vmem>>, vector<1x64xf32>
    %c0_216 = arith.constant 0 : index
    %c0_217 = arith.constant 0 : index
    %442 = vector.load %arg27[%c0_216, %c0_217] : memref<1x64xf32, #tpu.memory_space<vmem>>, vector<1x64xf32>
    %cst_218 = arith.constant dense<0.000000e+00> : vector<10xf32>
    %443 = vector.multi_reduction <add>, %440, %cst_218 [1] : vector<10x64xf32> to vector<10xf32>
    %444 = vector.shape_cast %443 : vector<10xf32> to vector<10x1xf32>
    %cst_219 = arith.constant 6.400000e+01 : f32
    %445 = vector.broadcast %cst_219 : f32 to vector<10x1xf32>
    %446 = arith.divf %444, %445 : vector<10x1xf32>
    %447 = vector.broadcast %446 : vector<10x1xf32> to vector<10x64xf32>
    %448 = arith.subf %440, %447 : vector<10x64xf32>
    %449 = arith.mulf %448, %448 : vector<10x64xf32>
    %cst_220 = arith.constant dense<0.000000e+00> : vector<10xf32>
    %450 = vector.multi_reduction <add>, %449, %cst_220 [1] : vector<10x64xf32> to vector<10xf32>
    %451 = vector.shape_cast %450 : vector<10xf32> to vector<10x1xf32>
    %cst_221 = arith.constant 6.400000e+01 : f32
    %452 = vector.broadcast %cst_221 : f32 to vector<10x1xf32>
    %453 = arith.divf %451, %452 : vector<10x1xf32>
    %cst_222 = arith.constant 9.99999997E-7 : f32
    %454 = vector.broadcast %cst_222 : f32 to vector<10x1xf32>
    %455 = arith.addf %453, %454 : vector<10x1xf32>
    %456 = math.rsqrt %455 : vector<10x1xf32>
    %457 = vector.broadcast %456 : vector<10x1xf32> to vector<10x64xf32>
    %458 = arith.mulf %448, %457 : vector<10x64xf32>
    %459 = vector.broadcast %441 : vector<1x64xf32> to vector<10x64xf32>
    %460 = arith.mulf %458, %459 : vector<10x64xf32>
    %461 = vector.broadcast %442 : vector<1x64xf32> to vector<10x64xf32>
    %462 = arith.addf %460, %461 : vector<10x64xf32>
    %c0_223 = arith.constant 0 : index
    %c0_224 = arith.constant 0 : index
    %463 = vector.load %arg28[%c0_223, %c0_224] : memref<64x64xf32, #tpu.memory_space<vmem>>, vector<64x64xf32>
    %cst_225 = arith.constant dense<0.000000e+00> : vector<10x64xf32>
    %464 = tpu.matmul %462, %463, %cst_225 {dimension_numbers = #tpu.dot_dimension_numbers<[1], [0], [0], [1], [0, 0, 1, 1], [], []>} : vector<10x64xf32>, vector<64x64xf32>, vector<10x64xf32> -> vector<10x64xf32>
    %c0_226 = arith.constant 0 : index
    %c0_227 = arith.constant 0 : index
    %465 = vector.load %arg29[%c0_226, %c0_227] : memref<1x64xf32, #tpu.memory_space<vmem>>, vector<1x64xf32>
    %466 = vector.broadcast %465 : vector<1x64xf32> to vector<10x64xf32>
    %467 = arith.addf %464, %466 : vector<10x64xf32>
    %c0_228 = arith.constant 0 : index
    %c0_229 = arith.constant 0 : index
    %468 = vector.load %arg36[%c0_228, %c0_229] : memref<10x64xf32, #tpu.memory_space<vmem>>, vector<10x64xf32>
    tpu.vector_store %arg36[%c0_228, %c0_229], %467 {strides = array<i32>} : memref<10x64xf32, #tpu.memory_space<vmem>>, vector<10x64xf32>,
    %c0_230 = arith.constant 0 : index
    %c0_231 = arith.constant 0 : index
    %469 = vector.load %arg10[%c0_230, %c0_231] : memref<1x64xf32, #tpu.memory_space<vmem>>, vector<1x64xf32>
    %c0_232 = arith.constant 0 : index
    %c0_233 = arith.constant 0 : index
    %470 = vector.load %arg36[%c0_232, %c0_233] : memref<10x64xf32, #tpu.memory_space<vmem>>, vector<1x64xf32>
    %c0_234 = arith.constant 0 : index
    %c0_235 = arith.constant 0 : index
    %471 = vector.load %arg11[%c0_234, %c0_235] : memref<9x64xf32, #tpu.memory_space<vmem>>, vector<1x64xf32>
    %472 = arith.addf %470, %471 : vector<1x64xf32>
    %c0_236 = arith.constant 0 : index
    %c0_237 = arith.constant 0 : index
    %473 = vector.load %arg37[%c0_236, %c0_237] : memref<18x64xf32, #tpu.memory_space<vmem>>, vector<1x64xf32>
    tpu.vector_store %arg37[%c0_236, %c0_237], %472 {strides = array<i32>} : memref<18x64xf32, #tpu.memory_space<vmem>>, vector<1x64xf32>,
    %c0_238 = arith.constant 0 : index
    %c0_239 = arith.constant 0 : index
    %474 = memref.load %arg2[%c0_238, %c0_239] : memref<2x8xi32, #tpu.memory_space<smem>>
    %c3_i32 = arith.constant 3 : i32
    %475 = arith.minsi %474, %c3_i32 : i32
    %c1_i32_240 = arith.constant 1 : i32
    %476 = arith.addi %c1_i32_240, %475 : i32
    %477 = arith.index_cast %476 : i32 to index
    %c0_241 = arith.constant 0 : index
    %478 = vector.load %arg36[%477, %c0_241] : memref<10x64xf32, #tpu.memory_space<vmem>>, vector<1x64xf32>
    %c4_i32 = arith.constant 4 : i32
    %479 = arith.cmpi slt, %474, %c4_i32 : i32
    %480 = arith.extui %479 : i1 to i32
    %481 = arith.sitofp %480 : i32 to f32
    %482 = vector.broadcast %481 : f32 to vector<1x64xf32>
    %483 = arith.mulf %482, %478 : vector<1x64xf32>
    %cst_242 = arith.constant 1.000000e+00 : f32
    %484 = arith.subf %cst_242, %481 : f32
    %485 = vector.broadcast %484 : f32 to vector<1x64xf32>
    %486 = arith.mulf %485, %469 : vector<1x64xf32>
    %487 = arith.addf %483, %486 : vector<1x64xf32>
    %c1_243 = arith.constant 1 : index
    %c0_244 = arith.constant 0 : index
    %488 = vector.load %arg11[%c1_243, %c0_244] : memref<9x64xf32, #tpu.memory_space<vmem>>, vector<1x64xf32>
    %489 = arith.addf %487, %488 : vector<1x64xf32>
    %c1_245 = arith.constant 1 : index
    %c0_246 = arith.constant 0 : index
    %490 = vector.load %arg37[%c1_245, %c0_246] : memref<18x64xf32, #tpu.memory_space<vmem>>, vector<1x64xf32>
    tpu.vector_store %arg37[%c1_245, %c0_246], %489 {strides = array<i32>} : memref<18x64xf32, #tpu.memory_space<vmem>>, vector<1x64xf32>,
    %c0_247 = arith.constant 0 : index
    %c1_248 = arith.constant 1 : index
    %491 = memref.load %arg2[%c0_247, %c1_248] : memref<2x8xi32, #tpu.memory_space<smem>>
    %c3_i32_249 = arith.constant 3 : i32
    %492 = arith.minsi %491, %c3_i32_249 : i32
    %c1_i32_250 = arith.constant 1 : i32
    %493 = arith.addi %c1_i32_250, %492 : i32
    %494 = arith.index_cast %493 : i32 to index
    %c0_251 = arith.constant 0 : index
    %495 = vector.load %arg36[%494, %c0_251] : memref<10x64xf32, #tpu.memory_space<vmem>>, vector<1x64xf32>
    %c4_i32_252 = arith.constant 4 : i32
    %496 = arith.cmpi slt, %491, %c4_i32_252 : i32
    %497 = arith.extui %496 : i1 to i32
    %498 = arith.sitofp %497 : i32 to f32
    %499 = vector.broadcast %498 : f32 to vector<1x64xf32>
    %500 = arith.mulf %499, %495 : vector<1x64xf32>
    %cst_253 = arith.constant 1.000000e+00 : f32
    %501 = arith.subf %cst_253, %498 : f32
    %502 = vector.broadcast %501 : f32 to vector<1x64xf32>
    %503 = arith.mulf %502, %469 : vector<1x64xf32>
    %504 = arith.addf %500, %503 : vector<1x64xf32>
    %c2_254 = arith.constant 2 : index
    %c0_255 = arith.constant 0 : index
    %505 = vector.load %arg11[%c2_254, %c0_255] : memref<9x64xf32, #tpu.memory_space<vmem>>, vector<1x64xf32>
    %506 = arith.addf %504, %505 : vector<1x64xf32>
    %c2_256 = arith.constant 2 : index
    %c0_257 = arith.constant 0 : index
    %507 = vector.load %arg37[%c2_256, %c0_257] : memref<18x64xf32, #tpu.memory_space<vmem>>, vector<1x64xf32>
    tpu.vector_store %arg37[%c2_256, %c0_257], %506 {strides = array<i32>} : memref<18x64xf32, #tpu.memory_space<vmem>>, vector<1x64xf32>,
    %c0_258 = arith.constant 0 : index
    %c2_259 = arith.constant 2 : index
    %508 = memref.load %arg2[%c0_258, %c2_259] : memref<2x8xi32, #tpu.memory_space<smem>>
    %c3_i32_260 = arith.constant 3 : i32
    %509 = arith.minsi %508, %c3_i32_260 : i32
    %c1_i32_261 = arith.constant 1 : i32
    %510 = arith.addi %c1_i32_261, %509 : i32
    %511 = arith.index_cast %510 : i32 to index
    %c0_262 = arith.constant 0 : index
    %512 = vector.load %arg36[%511, %c0_262] : memref<10x64xf32, #tpu.memory_space<vmem>>, vector<1x64xf32>
    %c4_i32_263 = arith.constant 4 : i32
    %513 = arith.cmpi slt, %508, %c4_i32_263 : i32
    %514 = arith.extui %513 : i1 to i32
    %515 = arith.sitofp %514 : i32 to f32
    %516 = vector.broadcast %515 : f32 to vector<1x64xf32>
    %517 = arith.mulf %516, %512 : vector<1x64xf32>
    %cst_264 = arith.constant 1.000000e+00 : f32
    %518 = arith.subf %cst_264, %515 : f32
    %519 = vector.broadcast %518 : f32 to vector<1x64xf32>
    %520 = arith.mulf %519, %469 : vector<1x64xf32>
    %521 = arith.addf %517, %520 : vector<1x64xf32>
    %c3_265 = arith.constant 3 : index
    %c0_266 = arith.constant 0 : index
    %522 = vector.load %arg11[%c3_265, %c0_266] : memref<9x64xf32, #tpu.memory_space<vmem>>, vector<1x64xf32>
    %523 = arith.addf %521, %522 : vector<1x64xf32>
    %c3_267 = arith.constant 3 : index
    %c0_268 = arith.constant 0 : index
    %524 = vector.load %arg37[%c3_267, %c0_268] : memref<18x64xf32, #tpu.memory_space<vmem>>, vector<1x64xf32>
    tpu.vector_store %arg37[%c3_267, %c0_268], %523 {strides = array<i32>} : memref<18x64xf32, #tpu.memory_space<vmem>>, vector<1x64xf32>,
    %c0_269 = arith.constant 0 : index
    %c3_270 = arith.constant 3 : index
    %525 = memref.load %arg2[%c0_269, %c3_270] : memref<2x8xi32, #tpu.memory_space<smem>>
    %c3_i32_271 = arith.constant 3 : i32
    %526 = arith.minsi %525, %c3_i32_271 : i32
    %c1_i32_272 = arith.constant 1 : i32
    %527 = arith.addi %c1_i32_272, %526 : i32
    %528 = arith.index_cast %527 : i32 to index
    %c0_273 = arith.constant 0 : index
    %529 = vector.load %arg36[%528, %c0_273] : memref<10x64xf32, #tpu.memory_space<vmem>>, vector<1x64xf32>
    %c4_i32_274 = arith.constant 4 : i32
    %530 = arith.cmpi slt, %525, %c4_i32_274 : i32
    %531 = arith.extui %530 : i1 to i32
    %532 = arith.sitofp %531 : i32 to f32
    %533 = vector.broadcast %532 : f32 to vector<1x64xf32>
    %534 = arith.mulf %533, %529 : vector<1x64xf32>
    %cst_275 = arith.constant 1.000000e+00 : f32
    %535 = arith.subf %cst_275, %532 : f32
    %536 = vector.broadcast %535 : f32 to vector<1x64xf32>
    %537 = arith.mulf %536, %469 : vector<1x64xf32>
    %538 = arith.addf %534, %537 : vector<1x64xf32>
    %c4_276 = arith.constant 4 : index
    %c0_277 = arith.constant 0 : index
    %539 = vector.load %arg11[%c4_276, %c0_277] : memref<9x64xf32, #tpu.memory_space<vmem>>, vector<1x64xf32>
    %540 = arith.addf %538, %539 : vector<1x64xf32>
    %c4_278 = arith.constant 4 : index
    %c0_279 = arith.constant 0 : index
    %541 = vector.load %arg37[%c4_278, %c0_279] : memref<18x64xf32, #tpu.memory_space<vmem>>, vector<1x64xf32>
    tpu.vector_store %arg37[%c4_278, %c0_279], %540 {strides = array<i32>} : memref<18x64xf32, #tpu.memory_space<vmem>>, vector<1x64xf32>,
    %c0_280 = arith.constant 0 : index
    %c4_281 = arith.constant 4 : index
    %542 = memref.load %arg2[%c0_280, %c4_281] : memref<2x8xi32, #tpu.memory_space<smem>>
    %c3_i32_282 = arith.constant 3 : i32
    %543 = arith.minsi %542, %c3_i32_282 : i32
    %c1_i32_283 = arith.constant 1 : i32
    %544 = arith.addi %c1_i32_283, %543 : i32
    %545 = arith.index_cast %544 : i32 to index
    %c0_284 = arith.constant 0 : index
    %546 = vector.load %arg36[%545, %c0_284] : memref<10x64xf32, #tpu.memory_space<vmem>>, vector<1x64xf32>
    %c4_i32_285 = arith.constant 4 : i32
    %547 = arith.cmpi slt, %542, %c4_i32_285 : i32
    %548 = arith.extui %547 : i1 to i32
    %549 = arith.sitofp %548 : i32 to f32
    %550 = vector.broadcast %549 : f32 to vector<1x64xf32>
    %551 = arith.mulf %550, %546 : vector<1x64xf32>
    %cst_286 = arith.constant 1.000000e+00 : f32
    %552 = arith.subf %cst_286, %549 : f32
    %553 = vector.broadcast %552 : f32 to vector<1x64xf32>
    %554 = arith.mulf %553, %469 : vector<1x64xf32>
    %555 = arith.addf %551, %554 : vector<1x64xf32>
    %c5_287 = arith.constant 5 : index
    %c0_288 = arith.constant 0 : index
    %556 = vector.load %arg11[%c5_287, %c0_288] : memref<9x64xf32, #tpu.memory_space<vmem>>, vector<1x64xf32>
    %557 = arith.addf %555, %556 : vector<1x64xf32>
    %c5_289 = arith.constant 5 : index
    %c0_290 = arith.constant 0 : index
    %558 = vector.load %arg37[%c5_289, %c0_290] : memref<18x64xf32, #tpu.memory_space<vmem>>, vector<1x64xf32>
    tpu.vector_store %arg37[%c5_289, %c0_290], %557 {strides = array<i32>} : memref<18x64xf32, #tpu.memory_space<vmem>>, vector<1x64xf32>,
    %c0_291 = arith.constant 0 : index
    %c5_292 = arith.constant 5 : index
    %559 = memref.load %arg2[%c0_291, %c5_292] : memref<2x8xi32, #tpu.memory_space<smem>>
    %c3_i32_293 = arith.constant 3 : i32
    %560 = arith.minsi %559, %c3_i32_293 : i32
    %c1_i32_294 = arith.constant 1 : i32
    %561 = arith.addi %c1_i32_294, %560 : i32
    %562 = arith.index_cast %561 : i32 to index
    %c0_295 = arith.constant 0 : index
    %563 = vector.load %arg36[%562, %c0_295] : memref<10x64xf32, #tpu.memory_space<vmem>>, vector<1x64xf32>
    %c4_i32_296 = arith.constant 4 : i32
    %564 = arith.cmpi slt, %559, %c4_i32_296 : i32
    %565 = arith.extui %564 : i1 to i32
    %566 = arith.sitofp %565 : i32 to f32
    %567 = vector.broadcast %566 : f32 to vector<1x64xf32>
    %568 = arith.mulf %567, %563 : vector<1x64xf32>
    %cst_297 = arith.constant 1.000000e+00 : f32
    %569 = arith.subf %cst_297, %566 : f32
    %570 = vector.broadcast %569 : f32 to vector<1x64xf32>
    %571 = arith.mulf %570, %469 : vector<1x64xf32>
    %572 = arith.addf %568, %571 : vector<1x64xf32>
    %c6_298 = arith.constant 6 : index
    %c0_299 = arith.constant 0 : index
    %573 = vector.load %arg11[%c6_298, %c0_299] : memref<9x64xf32, #tpu.memory_space<vmem>>, vector<1x64xf32>
    %574 = arith.addf %572, %573 : vector<1x64xf32>
    %c6_300 = arith.constant 6 : index
    %c0_301 = arith.constant 0 : index
    %575 = vector.load %arg37[%c6_300, %c0_301] : memref<18x64xf32, #tpu.memory_space<vmem>>, vector<1x64xf32>
    tpu.vector_store %arg37[%c6_300, %c0_301], %574 {strides = array<i32>} : memref<18x64xf32, #tpu.memory_space<vmem>>, vector<1x64xf32>,
    %c0_302 = arith.constant 0 : index
    %c6_303 = arith.constant 6 : index
    %576 = memref.load %arg2[%c0_302, %c6_303] : memref<2x8xi32, #tpu.memory_space<smem>>
    %c3_i32_304 = arith.constant 3 : i32
    %577 = arith.minsi %576, %c3_i32_304 : i32
    %c1_i32_305 = arith.constant 1 : i32
    %578 = arith.addi %c1_i32_305, %577 : i32
    %579 = arith.index_cast %578 : i32 to index
    %c0_306 = arith.constant 0 : index
    %580 = vector.load %arg36[%579, %c0_306] : memref<10x64xf32, #tpu.memory_space<vmem>>, vector<1x64xf32>
    %c4_i32_307 = arith.constant 4 : i32
    %581 = arith.cmpi slt, %576, %c4_i32_307 : i32
    %582 = arith.extui %581 : i1 to i32
    %583 = arith.sitofp %582 : i32 to f32
    %584 = vector.broadcast %583 : f32 to vector<1x64xf32>
    %585 = arith.mulf %584, %580 : vector<1x64xf32>
    %cst_308 = arith.constant 1.000000e+00 : f32
    %586 = arith.subf %cst_308, %583 : f32
    %587 = vector.broadcast %586 : f32 to vector<1x64xf32>
    %588 = arith.mulf %587, %469 : vector<1x64xf32>
    %589 = arith.addf %585, %588 : vector<1x64xf32>
    %c7_309 = arith.constant 7 : index
    %c0_310 = arith.constant 0 : index
    %590 = vector.load %arg11[%c7_309, %c0_310] : memref<9x64xf32, #tpu.memory_space<vmem>>, vector<1x64xf32>
    %591 = arith.addf %589, %590 : vector<1x64xf32>
    %c7_311 = arith.constant 7 : index
    %c0_312 = arith.constant 0 : index
    %592 = vector.load %arg37[%c7_311, %c0_312] : memref<18x64xf32, #tpu.memory_space<vmem>>, vector<1x64xf32>
    tpu.vector_store %arg37[%c7_311, %c0_312], %591 {strides = array<i32>} : memref<18x64xf32, #tpu.memory_space<vmem>>, vector<1x64xf32>,
    %c0_313 = arith.constant 0 : index
    %c7_314 = arith.constant 7 : index
    %593 = memref.load %arg2[%c0_313, %c7_314] : memref<2x8xi32, #tpu.memory_space<smem>>
    %c3_i32_315 = arith.constant 3 : i32
    %594 = arith.minsi %593, %c3_i32_315 : i32
    %c1_i32_316 = arith.constant 1 : i32
    %595 = arith.addi %c1_i32_316, %594 : i32
    %596 = arith.index_cast %595 : i32 to index
    %c0_317 = arith.constant 0 : index
    %597 = vector.load %arg36[%596, %c0_317] : memref<10x64xf32, #tpu.memory_space<vmem>>, vector<1x64xf32>
    %c4_i32_318 = arith.constant 4 : i32
    %598 = arith.cmpi slt, %593, %c4_i32_318 : i32
    %599 = arith.extui %598 : i1 to i32
    %600 = arith.sitofp %599 : i32 to f32
    %601 = vector.broadcast %600 : f32 to vector<1x64xf32>
    %602 = arith.mulf %601, %597 : vector<1x64xf32>
    %cst_319 = arith.constant 1.000000e+00 : f32
    %603 = arith.subf %cst_319, %600 : f32
    %604 = vector.broadcast %603 : f32 to vector<1x64xf32>
    %605 = arith.mulf %604, %469 : vector<1x64xf32>
    %606 = arith.addf %602, %605 : vector<1x64xf32>
    %c8_320 = arith.constant 8 : index
    %c0_321 = arith.constant 0 : index
    %607 = vector.load %arg11[%c8_320, %c0_321] : memref<9x64xf32, #tpu.memory_space<vmem>>, vector<1x64xf32>
    %608 = arith.addf %606, %607 : vector<1x64xf32>
    %c8_322 = arith.constant 8 : index
    %c0_323 = arith.constant 0 : index
    %609 = vector.load %arg37[%c8_322, %c0_323] : memref<18x64xf32, #tpu.memory_space<vmem>>, vector<1x64xf32>
    tpu.vector_store %arg37[%c8_322, %c0_323], %608 {strides = array<i32>} : memref<18x64xf32, #tpu.memory_space<vmem>>, vector<1x64xf32>,
    %c5_324 = arith.constant 5 : index
    %c0_325 = arith.constant 0 : index
    %610 = vector.load %arg36[%c5_324, %c0_325] : memref<10x64xf32, #tpu.memory_space<vmem>>, vector<1x64xf32>
    %c0_326 = arith.constant 0 : index
    %c0_327 = arith.constant 0 : index
    %611 = vector.load %arg11[%c0_326, %c0_327] : memref<9x64xf32, #tpu.memory_space<vmem>>, vector<1x64xf32>
    %612 = arith.addf %610, %611 : vector<1x64xf32>
    %c9_328 = arith.constant 9 : index
    %c0_329 = arith.constant 0 : index
    %613 = vector.load %arg37[%c9_328, %c0_329] : memref<18x64xf32, #tpu.memory_space<vmem>>, vector<1x64xf32>
    tpu.vector_store %arg37[%c9_328, %c0_329], %612 {strides = array<i32>} : memref<18x64xf32, #tpu.memory_space<vmem>>, vector<1x64xf32>,
    %c1_330 = arith.constant 1 : index
    %c0_331 = arith.constant 0 : index
    %614 = memref.load %arg2[%c1_330, %c0_331] : memref<2x8xi32, #tpu.memory_space<smem>>
    %c3_i32_332 = arith.constant 3 : i32
    %615 = arith.minsi %614, %c3_i32_332 : i32
    %c6_i32 = arith.constant 6 : i32
    %616 = arith.addi %c6_i32, %615 : i32
    %617 = arith.index_cast %616 : i32 to index
    %c0_333 = arith.constant 0 : index
    %618 = vector.load %arg36[%617, %c0_333] : memref<10x64xf32, #tpu.memory_space<vmem>>, vector<1x64xf32>
    %c4_i32_334 = arith.constant 4 : i32
    %619 = arith.cmpi slt, %614, %c4_i32_334 : i32
    %620 = arith.extui %619 : i1 to i32
    %621 = arith.sitofp %620 : i32 to f32
    %622 = vector.broadcast %621 : f32 to vector<1x64xf32>
    %623 = arith.mulf %622, %618 : vector<1x64xf32>
    %cst_335 = arith.constant 1.000000e+00 : f32
    %624 = arith.subf %cst_335, %621 : f32
    %625 = vector.broadcast %624 : f32 to vector<1x64xf32>
    %626 = arith.mulf %625, %469 : vector<1x64xf32>
    %627 = arith.addf %623, %626 : vector<1x64xf32>
    %c1_336 = arith.constant 1 : index
    %c0_337 = arith.constant 0 : index
    %628 = vector.load %arg11[%c1_336, %c0_337] : memref<9x64xf32, #tpu.memory_space<vmem>>, vector<1x64xf32>
    %629 = arith.addf %627, %628 : vector<1x64xf32>
    %c10 = arith.constant 10 : index
    %c0_338 = arith.constant 0 : index
    %630 = vector.load %arg37[%c10, %c0_338] : memref<18x64xf32, #tpu.memory_space<vmem>>, vector<1x64xf32>
    tpu.vector_store %arg37[%c10, %c0_338], %629 {strides = array<i32>} : memref<18x64xf32, #tpu.memory_space<vmem>>, vector<1x64xf32>,
    %c1_339 = arith.constant 1 : index
    %c1_340 = arith.constant 1 : index
    %631 = memref.load %arg2[%c1_339, %c1_340] : memref<2x8xi32, #tpu.memory_space<smem>>
    %c3_i32_341 = arith.constant 3 : i32
    %632 = arith.minsi %631, %c3_i32_341 : i32
    %c6_i32_342 = arith.constant 6 : i32
    %633 = arith.addi %c6_i32_342, %632 : i32
    %634 = arith.index_cast %633 : i32 to index
    %c0_343 = arith.constant 0 : index
    %635 = vector.load %arg36[%634, %c0_343] : memref<10x64xf32, #tpu.memory_space<vmem>>, vector<1x64xf32>
    %c4_i32_344 = arith.constant 4 : i32
    %636 = arith.cmpi slt, %631, %c4_i32_344 : i32
    %637 = arith.extui %636 : i1 to i32
    %638 = arith.sitofp %637 : i32 to f32
    %639 = vector.broadcast %638 : f32 to vector<1x64xf32>
    %640 = arith.mulf %639, %635 : vector<1x64xf32>
    %cst_345 = arith.constant 1.000000e+00 : f32
    %641 = arith.subf %cst_345, %638 : f32
    %642 = vector.broadcast %641 : f32 to vector<1x64xf32>
    %643 = arith.mulf %642, %469 : vector<1x64xf32>
    %644 = arith.addf %640, %643 : vector<1x64xf32>
    %c2_346 = arith.constant 2 : index
    %c0_347 = arith.constant 0 : index
    %645 = vector.load %arg11[%c2_346, %c0_347] : memref<9x64xf32, #tpu.memory_space<vmem>>, vector<1x64xf32>
    %646 = arith.addf %644, %645 : vector<1x64xf32>
    %c11 = arith.constant 11 : index
    %c0_348 = arith.constant 0 : index
    %647 = vector.load %arg37[%c11, %c0_348] : memref<18x64xf32, #tpu.memory_space<vmem>>, vector<1x64xf32>
    tpu.vector_store %arg37[%c11, %c0_348], %646 {strides = array<i32>} : memref<18x64xf32, #tpu.memory_space<vmem>>, vector<1x64xf32>,
    %c1_349 = arith.constant 1 : index
    %c2_350 = arith.constant 2 : index
    %648 = memref.load %arg2[%c1_349, %c2_350] : memref<2x8xi32, #tpu.memory_space<smem>>
    %c3_i32_351 = arith.constant 3 : i32
    %649 = arith.minsi %648, %c3_i32_351 : i32
    %c6_i32_352 = arith.constant 6 : i32
    %650 = arith.addi %c6_i32_352, %649 : i32
    %651 = arith.index_cast %650 : i32 to index
    %c0_353 = arith.constant 0 : index
    %652 = vector.load %arg36[%651, %c0_353] : memref<10x64xf32, #tpu.memory_space<vmem>>, vector<1x64xf32>
    %c4_i32_354 = arith.constant 4 : i32
    %653 = arith.cmpi slt, %648, %c4_i32_354 : i32
    %654 = arith.extui %653 : i1 to i32
    %655 = arith.sitofp %654 : i32 to f32
    %656 = vector.broadcast %655 : f32 to vector<1x64xf32>
    %657 = arith.mulf %656, %652 : vector<1x64xf32>
    %cst_355 = arith.constant 1.000000e+00 : f32
    %658 = arith.subf %cst_355, %655 : f32
    %659 = vector.broadcast %658 : f32 to vector<1x64xf32>
    %660 = arith.mulf %659, %469 : vector<1x64xf32>
    %661 = arith.addf %657, %660 : vector<1x64xf32>
    %c3_356 = arith.constant 3 : index
    %c0_357 = arith.constant 0 : index
    %662 = vector.load %arg11[%c3_356, %c0_357] : memref<9x64xf32, #tpu.memory_space<vmem>>, vector<1x64xf32>
    %663 = arith.addf %661, %662 : vector<1x64xf32>
    %c12 = arith.constant 12 : index
    %c0_358 = arith.constant 0 : index
    %664 = vector.load %arg37[%c12, %c0_358] : memref<18x64xf32, #tpu.memory_space<vmem>>, vector<1x64xf32>
    tpu.vector_store %arg37[%c12, %c0_358], %663 {strides = array<i32>} : memref<18x64xf32, #tpu.memory_space<vmem>>, vector<1x64xf32>,
    %c1_359 = arith.constant 1 : index
    %c3_360 = arith.constant 3 : index
    %665 = memref.load %arg2[%c1_359, %c3_360] : memref<2x8xi32, #tpu.memory_space<smem>>
    %c3_i32_361 = arith.constant 3 : i32
    %666 = arith.minsi %665, %c3_i32_361 : i32
    %c6_i32_362 = arith.constant 6 : i32
    %667 = arith.addi %c6_i32_362, %666 : i32
    %668 = arith.index_cast %667 : i32 to index
    %c0_363 = arith.constant 0 : index
    %669 = vector.load %arg36[%668, %c0_363] : memref<10x64xf32, #tpu.memory_space<vmem>>, vector<1x64xf32>
    %c4_i32_364 = arith.constant 4 : i32
    %670 = arith.cmpi slt, %665, %c4_i32_364 : i32
    %671 = arith.extui %670 : i1 to i32
    %672 = arith.sitofp %671 : i32 to f32
    %673 = vector.broadcast %672 : f32 to vector<1x64xf32>
    %674 = arith.mulf %673, %669 : vector<1x64xf32>
    %cst_365 = arith.constant 1.000000e+00 : f32
    %675 = arith.subf %cst_365, %672 : f32
    %676 = vector.broadcast %675 : f32 to vector<1x64xf32>
    %677 = arith.mulf %676, %469 : vector<1x64xf32>
    %678 = arith.addf %674, %677 : vector<1x64xf32>
    %c4_366 = arith.constant 4 : index
    %c0_367 = arith.constant 0 : index
    %679 = vector.load %arg11[%c4_366, %c0_367] : memref<9x64xf32, #tpu.memory_space<vmem>>, vector<1x64xf32>
    %680 = arith.addf %678, %679 : vector<1x64xf32>
    %c13 = arith.constant 13 : index
    %c0_368 = arith.constant 0 : index
    %681 = vector.load %arg37[%c13, %c0_368] : memref<18x64xf32, #tpu.memory_space<vmem>>, vector<1x64xf32>
    tpu.vector_store %arg37[%c13, %c0_368], %680 {strides = array<i32>} : memref<18x64xf32, #tpu.memory_space<vmem>>, vector<1x64xf32>,
    %c1_369 = arith.constant 1 : index
    %c4_370 = arith.constant 4 : index
    %682 = memref.load %arg2[%c1_369, %c4_370] : memref<2x8xi32, #tpu.memory_space<smem>>
    %c3_i32_371 = arith.constant 3 : i32
    %683 = arith.minsi %682, %c3_i32_371 : i32
    %c6_i32_372 = arith.constant 6 : i32
    %684 = arith.addi %c6_i32_372, %683 : i32
    %685 = arith.index_cast %684 : i32 to index
    %c0_373 = arith.constant 0 : index
    %686 = vector.load %arg36[%685, %c0_373] : memref<10x64xf32, #tpu.memory_space<vmem>>, vector<1x64xf32>
    %c4_i32_374 = arith.constant 4 : i32
    %687 = arith.cmpi slt, %682, %c4_i32_374 : i32
    %688 = arith.extui %687 : i1 to i32
    %689 = arith.sitofp %688 : i32 to f32
    %690 = vector.broadcast %689 : f32 to vector<1x64xf32>
    %691 = arith.mulf %690, %686 : vector<1x64xf32>
    %cst_375 = arith.constant 1.000000e+00 : f32
    %692 = arith.subf %cst_375, %689 : f32
    %693 = vector.broadcast %692 : f32 to vector<1x64xf32>
    %694 = arith.mulf %693, %469 : vector<1x64xf32>
    %695 = arith.addf %691, %694 : vector<1x64xf32>
    %c5_376 = arith.constant 5 : index
    %c0_377 = arith.constant 0 : index
    %696 = vector.load %arg11[%c5_376, %c0_377] : memref<9x64xf32, #tpu.memory_space<vmem>>, vector<1x64xf32>
    %697 = arith.addf %695, %696 : vector<1x64xf32>
    %c14 = arith.constant 14 : index
    %c0_378 = arith.constant 0 : index
    %698 = vector.load %arg37[%c14, %c0_378] : memref<18x64xf32, #tpu.memory_space<vmem>>, vector<1x64xf32>
    tpu.vector_store %arg37[%c14, %c0_378], %697 {strides = array<i32>} : memref<18x64xf32, #tpu.memory_space<vmem>>, vector<1x64xf32>,
    %c1_379 = arith.constant 1 : index
    %c5_380 = arith.constant 5 : index
    %699 = memref.load %arg2[%c1_379, %c5_380] : memref<2x8xi32, #tpu.memory_space<smem>>
    %c3_i32_381 = arith.constant 3 : i32
    %700 = arith.minsi %699, %c3_i32_381 : i32
    %c6_i32_382 = arith.constant 6 : i32
    %701 = arith.addi %c6_i32_382, %700 : i32
    %702 = arith.index_cast %701 : i32 to index
    %c0_383 = arith.constant 0 : index
    %703 = vector.load %arg36[%702, %c0_383] : memref<10x64xf32, #tpu.memory_space<vmem>>, vector<1x64xf32>
    %c4_i32_384 = arith.constant 4 : i32
    %704 = arith.cmpi slt, %699, %c4_i32_384 : i32
    %705 = arith.extui %704 : i1 to i32
    %706 = arith.sitofp %705 : i32 to f32
    %707 = vector.broadcast %706 : f32 to vector<1x64xf32>
    %708 = arith.mulf %707, %703 : vector<1x64xf32>
    %cst_385 = arith.constant 1.000000e+00 : f32
    %709 = arith.subf %cst_385, %706 : f32
    %710 = vector.broadcast %709 : f32 to vector<1x64xf32>
    %711 = arith.mulf %710, %469 : vector<1x64xf32>
    %712 = arith.addf %708, %711 : vector<1x64xf32>
    %c6_386 = arith.constant 6 : index
    %c0_387 = arith.constant 0 : index
    %713 = vector.load %arg11[%c6_386, %c0_387] : memref<9x64xf32, #tpu.memory_space<vmem>>, vector<1x64xf32>
    %714 = arith.addf %712, %713 : vector<1x64xf32>
    %c15 = arith.constant 15 : index
    %c0_388 = arith.constant 0 : index
    %715 = vector.load %arg37[%c15, %c0_388] : memref<18x64xf32, #tpu.memory_space<vmem>>, vector<1x64xf32>
    tpu.vector_store %arg37[%c15, %c0_388], %714 {strides = array<i32>} : memref<18x64xf32, #tpu.memory_space<vmem>>, vector<1x64xf32>,
    %c1_389 = arith.constant 1 : index
    %c6_390 = arith.constant 6 : index
    %716 = memref.load %arg2[%c1_389, %c6_390] : memref<2x8xi32, #tpu.memory_space<smem>>
    %c3_i32_391 = arith.constant 3 : i32
    %717 = arith.minsi %716, %c3_i32_391 : i32
    %c6_i32_392 = arith.constant 6 : i32
    %718 = arith.addi %c6_i32_392, %717 : i32
    %719 = arith.index_cast %718 : i32 to index
    %c0_393 = arith.constant 0 : index
    %720 = vector.load %arg36[%719, %c0_393] : memref<10x64xf32, #tpu.memory_space<vmem>>, vector<1x64xf32>
    %c4_i32_394 = arith.constant 4 : i32
    %721 = arith.cmpi slt, %716, %c4_i32_394 : i32
    %722 = arith.extui %721 : i1 to i32
    %723 = arith.sitofp %722 : i32 to f32
    %724 = vector.broadcast %723 : f32 to vector<1x64xf32>
    %725 = arith.mulf %724, %720 : vector<1x64xf32>
    %cst_395 = arith.constant 1.000000e+00 : f32
    %726 = arith.subf %cst_395, %723 : f32
    %727 = vector.broadcast %726 : f32 to vector<1x64xf32>
    %728 = arith.mulf %727, %469 : vector<1x64xf32>
    %729 = arith.addf %725, %728 : vector<1x64xf32>
    %c7_396 = arith.constant 7 : index
    %c0_397 = arith.constant 0 : index
    %730 = vector.load %arg11[%c7_396, %c0_397] : memref<9x64xf32, #tpu.memory_space<vmem>>, vector<1x64xf32>
    %731 = arith.addf %729, %730 : vector<1x64xf32>
    %c16 = arith.constant 16 : index
    %c0_398 = arith.constant 0 : index
    %732 = vector.load %arg37[%c16, %c0_398] : memref<18x64xf32, #tpu.memory_space<vmem>>, vector<1x64xf32>
    tpu.vector_store %arg37[%c16, %c0_398], %731 {strides = array<i32>} : memref<18x64xf32, #tpu.memory_space<vmem>>, vector<1x64xf32>,
    %c1_399 = arith.constant 1 : index
    %c7_400 = arith.constant 7 : index
    %733 = memref.load %arg2[%c1_399, %c7_400] : memref<2x8xi32, #tpu.memory_space<smem>>
    %c3_i32_401 = arith.constant 3 : i32
    %734 = arith.minsi %733, %c3_i32_401 : i32
    %c6_i32_402 = arith.constant 6 : i32
    %735 = arith.addi %c6_i32_402, %734 : i32
    %736 = arith.index_cast %735 : i32 to index
    %c0_403 = arith.constant 0 : index
    %737 = vector.load %arg36[%736, %c0_403] : memref<10x64xf32, #tpu.memory_space<vmem>>, vector<1x64xf32>
    %c4_i32_404 = arith.constant 4 : i32
    %738 = arith.cmpi slt, %733, %c4_i32_404 : i32
    %739 = arith.extui %738 : i1 to i32
    %740 = arith.sitofp %739 : i32 to f32
    %741 = vector.broadcast %740 : f32 to vector<1x64xf32>
    %742 = arith.mulf %741, %737 : vector<1x64xf32>
    %cst_405 = arith.constant 1.000000e+00 : f32
    %743 = arith.subf %cst_405, %740 : f32
    %744 = vector.broadcast %743 : f32 to vector<1x64xf32>
    %745 = arith.mulf %744, %469 : vector<1x64xf32>
    %746 = arith.addf %742, %745 : vector<1x64xf32>
    %c8_406 = arith.constant 8 : index
    %c0_407 = arith.constant 0 : index
    %747 = vector.load %arg11[%c8_406, %c0_407] : memref<9x64xf32, #tpu.memory_space<vmem>>, vector<1x64xf32>
    %748 = arith.addf %746, %747 : vector<1x64xf32>
    %c17 = arith.constant 17 : index
    %c0_408 = arith.constant 0 : index
    %749 = vector.load %arg37[%c17, %c0_408] : memref<18x64xf32, #tpu.memory_space<vmem>>, vector<1x64xf32>
    tpu.vector_store %arg37[%c17, %c0_408], %748 {strides = array<i32>} : memref<18x64xf32, #tpu.memory_space<vmem>>, vector<1x64xf32>,
    %c0_409 = arith.constant 0 : index
    %c0_410 = arith.constant 0 : index
    %750 = vector.load %arg37[%c0_409, %c0_410] : memref<18x64xf32, #tpu.memory_space<vmem>>, vector<18x64xf32>
    %c0_411 = arith.constant 0 : index
    %c0_412 = arith.constant 0 : index
    %751 = vector.load %arg13[%c0_411, %c0_412] : memref<18x18xf32, #tpu.memory_space<vmem>>, vector<18x18xf32>
    %c2_413 = arith.constant 2 : index
    %c0_414 = arith.constant 0 : index
    %c0_415 = arith.constant 0 : index
    %752 = vector.load %arg14[%c2_413, %c0_414, %c0_415] : memref<4x1x64xf32, #tpu.memory_space<vmem>>, vector<1x1x64xf32>
    %753 = vector.shape_cast %752 : vector<1x1x64xf32> to vector<1x64xf32>
    %c2_416 = arith.constant 2 : index
    %c0_417 = arith.constant 0 : index
    %c0_418 = arith.constant 0 : index
    %754 = vector.load %arg15[%c2_416, %c0_417, %c0_418] : memref<4x1x64xf32, #tpu.memory_space<vmem>>, vector<1x1x64xf32>
    %755 = vector.shape_cast %754 : vector<1x1x64xf32> to vector<1x64xf32>
    %c2_419 = arith.constant 2 : index
    %c0_420 = arith.constant 0 : index
    %c0_421 = arith.constant 0 : index
    %756 = vector.load %arg16[%c2_419, %c0_420, %c0_421] : memref<4x64x192xf32, #tpu.memory_space<vmem>>, vector<1x64x192xf32>
    %757 = vector.shape_cast %756 : vector<1x64x192xf32> to vector<64x192xf32>
    %c2_422 = arith.constant 2 : index
    %c0_423 = arith.constant 0 : index
    %c0_424 = arith.constant 0 : index
    %758 = vector.load %arg17[%c2_422, %c0_423, %c0_424] : memref<4x1x192xf32, #tpu.memory_space<vmem>>, vector<1x1x192xf32>
    %759 = vector.shape_cast %758 : vector<1x1x192xf32> to vector<1x192xf32>
    %c2_425 = arith.constant 2 : index
    %c0_426 = arith.constant 0 : index
    %c0_427 = arith.constant 0 : index
    %c0_428 = arith.constant 0 : index
    %760 = vector.load %arg18[%c2_425, %c0_426, %c0_427, %c0_428] : memref<4x4x16x64xf32, #tpu.memory_space<vmem>>, vector<1x4x16x64xf32>
    %761 = vector.shape_cast %760 : vector<1x4x16x64xf32> to vector<4x16x64xf32>
    %c2_429 = arith.constant 2 : index
    %c0_430 = arith.constant 0 : index
    %c0_431 = arith.constant 0 : index
    %762 = vector.load %arg19[%c2_429, %c0_430, %c0_431] : memref<4x1x64xf32, #tpu.memory_space<vmem>>, vector<1x1x64xf32>
    %763 = vector.shape_cast %762 : vector<1x1x64xf32> to vector<1x64xf32>
    %c2_432 = arith.constant 2 : index
    %c0_433 = arith.constant 0 : index
    %c0_434 = arith.constant 0 : index
    %764 = vector.load %arg20[%c2_432, %c0_433, %c0_434] : memref<4x1x64xf32, #tpu.memory_space<vmem>>, vector<1x1x64xf32>
    %765 = vector.shape_cast %764 : vector<1x1x64xf32> to vector<1x64xf32>
    %c2_435 = arith.constant 2 : index
    %c0_436 = arith.constant 0 : index
    %c0_437 = arith.constant 0 : index
    %766 = vector.load %arg21[%c2_435, %c0_436, %c0_437] : memref<4x1x64xf32, #tpu.memory_space<vmem>>, vector<1x1x64xf32>
    %767 = vector.shape_cast %766 : vector<1x1x64xf32> to vector<1x64xf32>
    %c2_438 = arith.constant 2 : index
    %c0_439 = arith.constant 0 : index
    %c0_440 = arith.constant 0 : index
    %768 = vector.load %arg22[%c2_438, %c0_439, %c0_440] : memref<4x64x256xf32, #tpu.memory_space<vmem>>, vector<1x64x256xf32>
    %769 = vector.shape_cast %768 : vector<1x64x256xf32> to vector<64x256xf32>
    %c2_441 = arith.constant 2 : index
    %c0_442 = arith.constant 0 : index
    %c0_443 = arith.constant 0 : index
    %770 = vector.load %arg23[%c2_441, %c0_442, %c0_443] : memref<4x1x256xf32, #tpu.memory_space<vmem>>, vector<1x1x256xf32>
    %771 = vector.shape_cast %770 : vector<1x1x256xf32> to vector<1x256xf32>
    %c2_444 = arith.constant 2 : index
    %c0_445 = arith.constant 0 : index
    %c0_446 = arith.constant 0 : index
    %772 = vector.load %arg24[%c2_444, %c0_445, %c0_446] : memref<4x256x64xf32, #tpu.memory_space<vmem>>, vector<1x256x64xf32>
    %773 = vector.shape_cast %772 : vector<1x256x64xf32> to vector<256x64xf32>
    %c2_447 = arith.constant 2 : index
    %c0_448 = arith.constant 0 : index
    %c0_449 = arith.constant 0 : index
    %774 = vector.load %arg25[%c2_447, %c0_448, %c0_449] : memref<4x1x64xf32, #tpu.memory_space<vmem>>, vector<1x1x64xf32>
    %775 = vector.shape_cast %774 : vector<1x1x64xf32> to vector<1x64xf32>
    %cst_450 = arith.constant dense<0.000000e+00> : vector<18xf32>
    %776 = vector.multi_reduction <add>, %750, %cst_450 [1] : vector<18x64xf32> to vector<18xf32>
    %777 = vector.shape_cast %776 : vector<18xf32> to vector<18x1xf32>
    %cst_451 = arith.constant 6.400000e+01 : f32
    %778 = vector.broadcast %cst_451 : f32 to vector<18x1xf32>
    %779 = arith.divf %777, %778 : vector<18x1xf32>
    %780 = vector.broadcast %779 : vector<18x1xf32> to vector<18x64xf32>
    %781 = arith.subf %750, %780 : vector<18x64xf32>
    %782 = arith.mulf %781, %781 : vector<18x64xf32>
    %cst_452 = arith.constant dense<0.000000e+00> : vector<18xf32>
    %783 = vector.multi_reduction <add>, %782, %cst_452 [1] : vector<18x64xf32> to vector<18xf32>
    %784 = vector.shape_cast %783 : vector<18xf32> to vector<18x1xf32>
    %cst_453 = arith.constant 6.400000e+01 : f32
    %785 = vector.broadcast %cst_453 : f32 to vector<18x1xf32>
    %786 = arith.divf %784, %785 : vector<18x1xf32>
    %cst_454 = arith.constant 9.99999997E-7 : f32
    %787 = vector.broadcast %cst_454 : f32 to vector<18x1xf32>
    %788 = arith.addf %786, %787 : vector<18x1xf32>
    %789 = math.rsqrt %788 : vector<18x1xf32>
    %790 = vector.broadcast %789 : vector<18x1xf32> to vector<18x64xf32>
    %791 = arith.mulf %781, %790 : vector<18x64xf32>
    %792 = vector.broadcast %753 : vector<1x64xf32> to vector<18x64xf32>
    %793 = arith.mulf %791, %792 : vector<18x64xf32>
    %794 = vector.broadcast %755 : vector<1x64xf32> to vector<18x64xf32>
    %795 = arith.addf %793, %794 : vector<18x64xf32>
    %cst_455 = arith.constant dense<0.000000e+00> : vector<18x192xf32>
    %796 = tpu.matmul %795, %757, %cst_455 {dimension_numbers = #tpu.dot_dimension_numbers<[1], [0], [0], [1], [0, 0, 1, 1], [], []>} : vector<18x64xf32>, vector<64x192xf32>, vector<18x192xf32> -> vector<18x192xf32>
    %797 = vector.broadcast %759 : vector<1x192xf32> to vector<18x192xf32>
    %798 = arith.addf %796, %797 : vector<18x192xf32>
    %799 = vector.extract_strided_slice %798 {offsets = [0, 0], sizes = [18, 48], strides = [1, 1]} : vector<18x192xf32> to vector<18x48xf32>
    %800 = vector.extract_strided_slice %799 {offsets = [0, 0], sizes = [18, 16], strides = [1, 1]} : vector<18x48xf32> to vector<18x16xf32>
    %801 = vector.extract_strided_slice %799 {offsets = [0, 16], sizes = [18, 16], strides = [1, 1]} : vector<18x48xf32> to vector<18x16xf32>
    %802 = vector.extract_strided_slice %799 {offsets = [0, 32], sizes = [18, 16], strides = [1, 1]} : vector<18x48xf32> to vector<18x16xf32>
    %cst_456 = arith.constant dense<0.000000e+00> : vector<18x18xf32>
    %803 = tpu.matmul %800, %801, %cst_456 {dimension_numbers = #tpu.dot_dimension_numbers<[1], [1], [0], [0], [0, 0, 1, 0], [], []>} : vector<18x16xf32>, vector<18x16xf32>, vector<18x18xf32> -> vector<18x18xf32>
    %cst_457 = arith.constant 2.500000e-01 : f32
    %804 = vector.broadcast %cst_457 : f32 to vector<18x18xf32>
    %805 = arith.mulf %803, %804 : vector<18x18xf32>
    %806 = arith.addf %805, %751 : vector<18x18xf32>
    %cst_458 = arith.constant dense<0xFF800000> : vector<18xf32>
    %807 = vector.multi_reduction <maximumf>, %806, %cst_458 [1] : vector<18x18xf32> to vector<18xf32>
    %808 = vector.shape_cast %807 : vector<18xf32> to vector<18x1xf32>
    %809 = vector.broadcast %808 : vector<18x1xf32> to vector<18x18xf32>
    %810 = arith.subf %806, %809 : vector<18x18xf32>
    %811 = math.exp %810 : vector<18x18xf32>
    %cst_459 = arith.constant dense<0.000000e+00> : vector<18xf32>
    %812 = vector.multi_reduction <add>, %811, %cst_459 [1] : vector<18x18xf32> to vector<18xf32>
    %813 = vector.shape_cast %812 : vector<18xf32> to vector<18x1xf32>
    %814 = vector.broadcast %813 : vector<18x1xf32> to vector<18x18xf32>
    %815 = arith.divf %811, %814 : vector<18x18xf32>
    %cst_460 = arith.constant dense<0.000000e+00> : vector<18x16xf32>
    %816 = tpu.matmul %815, %802, %cst_460 {dimension_numbers = #tpu.dot_dimension_numbers<[1], [0], [0], [1], [0, 0, 1, 1], [], []>} : vector<18x18xf32>, vector<18x16xf32>, vector<18x16xf32> -> vector<18x16xf32>
    %817 = vector.extract_strided_slice %761 {offsets = [0, 0, 0], sizes = [1, 16, 64], strides = [1, 1, 1]} : vector<4x16x64xf32> to vector<1x16x64xf32>
    %818 = vector.shape_cast %817 : vector<1x16x64xf32> to vector<16x64xf32>
    %cst_461 = arith.constant dense<0.000000e+00> : vector<18x64xf32>
    %819 = tpu.matmul %816, %818, %cst_461 {dimension_numbers = #tpu.dot_dimension_numbers<[1], [0], [0], [1], [0, 0, 1, 1], [], []>} : vector<18x16xf32>, vector<16x64xf32>, vector<18x64xf32> -> vector<18x64xf32>
    %820 = vector.extract_strided_slice %798 {offsets = [0, 48], sizes = [18, 48], strides = [1, 1]} : vector<18x192xf32> to vector<18x48xf32>
    %821 = vector.extract_strided_slice %820 {offsets = [0, 0], sizes = [18, 16], strides = [1, 1]} : vector<18x48xf32> to vector<18x16xf32>
    %822 = vector.extract_strided_slice %820 {offsets = [0, 16], sizes = [18, 16], strides = [1, 1]} : vector<18x48xf32> to vector<18x16xf32>
    %823 = vector.extract_strided_slice %820 {offsets = [0, 32], sizes = [18, 16], strides = [1, 1]} : vector<18x48xf32> to vector<18x16xf32>
    %cst_462 = arith.constant dense<0.000000e+00> : vector<18x18xf32>
    %824 = tpu.matmul %821, %822, %cst_462 {dimension_numbers = #tpu.dot_dimension_numbers<[1], [1], [0], [0], [0, 0, 1, 0], [], []>} : vector<18x16xf32>, vector<18x16xf32>, vector<18x18xf32> -> vector<18x18xf32>
    %cst_463 = arith.constant 2.500000e-01 : f32
    %825 = vector.broadcast %cst_463 : f32 to vector<18x18xf32>
    %826 = arith.mulf %824, %825 : vector<18x18xf32>
    %827 = arith.addf %826, %751 : vector<18x18xf32>
    %cst_464 = arith.constant dense<0xFF800000> : vector<18xf32>
    %828 = vector.multi_reduction <maximumf>, %827, %cst_464 [1] : vector<18x18xf32> to vector<18xf32>
    %829 = vector.shape_cast %828 : vector<18xf32> to vector<18x1xf32>
    %830 = vector.broadcast %829 : vector<18x1xf32> to vector<18x18xf32>
    %831 = arith.subf %827, %830 : vector<18x18xf32>
    %832 = math.exp %831 : vector<18x18xf32>
    %cst_465 = arith.constant dense<0.000000e+00> : vector<18xf32>
    %833 = vector.multi_reduction <add>, %832, %cst_465 [1] : vector<18x18xf32> to vector<18xf32>
    %834 = vector.shape_cast %833 : vector<18xf32> to vector<18x1xf32>
    %835 = vector.broadcast %834 : vector<18x1xf32> to vector<18x18xf32>
    %836 = arith.divf %832, %835 : vector<18x18xf32>
    %cst_466 = arith.constant dense<0.000000e+00> : vector<18x16xf32>
    %837 = tpu.matmul %836, %823, %cst_466 {dimension_numbers = #tpu.dot_dimension_numbers<[1], [0], [0], [1], [0, 0, 1, 1], [], []>} : vector<18x18xf32>, vector<18x16xf32>, vector<18x16xf32> -> vector<18x16xf32>
    %838 = vector.extract_strided_slice %761 {offsets = [1, 0, 0], sizes = [1, 16, 64], strides = [1, 1, 1]} : vector<4x16x64xf32> to vector<1x16x64xf32>
    %839 = vector.shape_cast %838 : vector<1x16x64xf32> to vector<16x64xf32>
    %cst_467 = arith.constant dense<0.000000e+00> : vector<18x64xf32>
    %840 = tpu.matmul %837, %839, %cst_467 {dimension_numbers = #tpu.dot_dimension_numbers<[1], [0], [0], [1], [0, 0, 1, 1], [], []>} : vector<18x16xf32>, vector<16x64xf32>, vector<18x64xf32> -> vector<18x64xf32>
    %841 = arith.addf %819, %840 : vector<18x64xf32>
    %842 = vector.extract_strided_slice %798 {offsets = [0, 96], sizes = [18, 48], strides = [1, 1]} : vector<18x192xf32> to vector<18x48xf32>
    %843 = vector.extract_strided_slice %842 {offsets = [0, 0], sizes = [18, 16], strides = [1, 1]} : vector<18x48xf32> to vector<18x16xf32>
    %844 = vector.extract_strided_slice %842 {offsets = [0, 16], sizes = [18, 16], strides = [1, 1]} : vector<18x48xf32> to vector<18x16xf32>
    %845 = vector.extract_strided_slice %842 {offsets = [0, 32], sizes = [18, 16], strides = [1, 1]} : vector<18x48xf32> to vector<18x16xf32>
    %cst_468 = arith.constant dense<0.000000e+00> : vector<18x18xf32>
    %846 = tpu.matmul %843, %844, %cst_468 {dimension_numbers = #tpu.dot_dimension_numbers<[1], [1], [0], [0], [0, 0, 1, 0], [], []>} : vector<18x16xf32>, vector<18x16xf32>, vector<18x18xf32> -> vector<18x18xf32>
    %cst_469 = arith.constant 2.500000e-01 : f32
    %847 = vector.broadcast %cst_469 : f32 to vector<18x18xf32>
    %848 = arith.mulf %846, %847 : vector<18x18xf32>
    %849 = arith.addf %848, %751 : vector<18x18xf32>
    %cst_470 = arith.constant dense<0xFF800000> : vector<18xf32>
    %850 = vector.multi_reduction <maximumf>, %849, %cst_470 [1] : vector<18x18xf32> to vector<18xf32>
    %851 = vector.shape_cast %850 : vector<18xf32> to vector<18x1xf32>
    %852 = vector.broadcast %851 : vector<18x1xf32> to vector<18x18xf32>
    %853 = arith.subf %849, %852 : vector<18x18xf32>
    %854 = math.exp %853 : vector<18x18xf32>
    %cst_471 = arith.constant dense<0.000000e+00> : vector<18xf32>
    %855 = vector.multi_reduction <add>, %854, %cst_471 [1] : vector<18x18xf32> to vector<18xf32>
    %856 = vector.shape_cast %855 : vector<18xf32> to vector<18x1xf32>
    %857 = vector.broadcast %856 : vector<18x1xf32> to vector<18x18xf32>
    %858 = arith.divf %854, %857 : vector<18x18xf32>
    %cst_472 = arith.constant dense<0.000000e+00> : vector<18x16xf32>
    %859 = tpu.matmul %858, %845, %cst_472 {dimension_numbers = #tpu.dot_dimension_numbers<[1], [0], [0], [1], [0, 0, 1, 1], [], []>} : vector<18x18xf32>, vector<18x16xf32>, vector<18x16xf32> -> vector<18x16xf32>
    %860 = vector.extract_strided_slice %761 {offsets = [2, 0, 0], sizes = [1, 16, 64], strides = [1, 1, 1]} : vector<4x16x64xf32> to vector<1x16x64xf32>
    %861 = vector.shape_cast %860 : vector<1x16x64xf32> to vector<16x64xf32>
    %cst_473 = arith.constant dense<0.000000e+00> : vector<18x64xf32>
    %862 = tpu.matmul %859, %861, %cst_473 {dimension_numbers = #tpu.dot_dimension_numbers<[1], [0], [0], [1], [0, 0, 1, 1], [], []>} : vector<18x16xf32>, vector<16x64xf32>, vector<18x64xf32> -> vector<18x64xf32>
    %863 = arith.addf %841, %862 : vector<18x64xf32>
    %864 = vector.extract_strided_slice %798 {offsets = [0, 144], sizes = [18, 48], strides = [1, 1]} : vector<18x192xf32> to vector<18x48xf32>
    %865 = vector.extract_strided_slice %864 {offsets = [0, 0], sizes = [18, 16], strides = [1, 1]} : vector<18x48xf32> to vector<18x16xf32>
    %866 = vector.extract_strided_slice %864 {offsets = [0, 16], sizes = [18, 16], strides = [1, 1]} : vector<18x48xf32> to vector<18x16xf32>
    %867 = vector.extract_strided_slice %864 {offsets = [0, 32], sizes = [18, 16], strides = [1, 1]} : vector<18x48xf32> to vector<18x16xf32>
    %cst_474 = arith.constant dense<0.000000e+00> : vector<18x18xf32>
    %868 = tpu.matmul %865, %866, %cst_474 {dimension_numbers = #tpu.dot_dimension_numbers<[1], [1], [0], [0], [0, 0, 1, 0], [], []>} : vector<18x16xf32>, vector<18x16xf32>, vector<18x18xf32> -> vector<18x18xf32>
    %cst_475 = arith.constant 2.500000e-01 : f32
    %869 = vector.broadcast %cst_475 : f32 to vector<18x18xf32>
    %870 = arith.mulf %868, %869 : vector<18x18xf32>
    %871 = arith.addf %870, %751 : vector<18x18xf32>
    %cst_476 = arith.constant dense<0xFF800000> : vector<18xf32>
    %872 = vector.multi_reduction <maximumf>, %871, %cst_476 [1] : vector<18x18xf32> to vector<18xf32>
    %873 = vector.shape_cast %872 : vector<18xf32> to vector<18x1xf32>
    %874 = vector.broadcast %873 : vector<18x1xf32> to vector<18x18xf32>
    %875 = arith.subf %871, %874 : vector<18x18xf32>
    %876 = math.exp %875 : vector<18x18xf32>
    %cst_477 = arith.constant dense<0.000000e+00> : vector<18xf32>
    %877 = vector.multi_reduction <add>, %876, %cst_477 [1] : vector<18x18xf32> to vector<18xf32>
    %878 = vector.shape_cast %877 : vector<18xf32> to vector<18x1xf32>
    %879 = vector.broadcast %878 : vector<18x1xf32> to vector<18x18xf32>
    %880 = arith.divf %876, %879 : vector<18x18xf32>
    %cst_478 = arith.constant dense<0.000000e+00> : vector<18x16xf32>
    %881 = tpu.matmul %880, %867, %cst_478 {dimension_numbers = #tpu.dot_dimension_numbers<[1], [0], [0], [1], [0, 0, 1, 1], [], []>} : vector<18x18xf32>, vector<18x16xf32>, vector<18x16xf32> -> vector<18x16xf32>
    %882 = vector.extract_strided_slice %761 {offsets = [3, 0, 0], sizes = [1, 16, 64], strides = [1, 1, 1]} : vector<4x16x64xf32> to vector<1x16x64xf32>
    %883 = vector.shape_cast %882 : vector<1x16x64xf32> to vector<16x64xf32>
    %cst_479 = arith.constant dense<0.000000e+00> : vector<18x64xf32>
    %884 = tpu.matmul %881, %883, %cst_479 {dimension_numbers = #tpu.dot_dimension_numbers<[1], [0], [0], [1], [0, 0, 1, 1], [], []>} : vector<18x16xf32>, vector<16x64xf32>, vector<18x64xf32> -> vector<18x64xf32>
    %885 = arith.addf %863, %884 : vector<18x64xf32>
    %886 = arith.addf %750, %885 : vector<18x64xf32>
    %887 = vector.broadcast %763 : vector<1x64xf32> to vector<18x64xf32>
    %888 = arith.addf %886, %887 : vector<18x64xf32>
    %cst_480 = arith.constant dense<0.000000e+00> : vector<18xf32>
    %889 = vector.multi_reduction <add>, %888, %cst_480 [1] : vector<18x64xf32> to vector<18xf32>
    %890 = vector.shape_cast %889 : vector<18xf32> to vector<18x1xf32>
    %cst_481 = arith.constant 6.400000e+01 : f32
    %891 = vector.broadcast %cst_481 : f32 to vector<18x1xf32>
    %892 = arith.divf %890, %891 : vector<18x1xf32>
    %893 = vector.broadcast %892 : vector<18x1xf32> to vector<18x64xf32>
    %894 = arith.subf %888, %893 : vector<18x64xf32>
    %895 = arith.mulf %894, %894 : vector<18x64xf32>
    %cst_482 = arith.constant dense<0.000000e+00> : vector<18xf32>
    %896 = vector.multi_reduction <add>, %895, %cst_482 [1] : vector<18x64xf32> to vector<18xf32>
    %897 = vector.shape_cast %896 : vector<18xf32> to vector<18x1xf32>
    %cst_483 = arith.constant 6.400000e+01 : f32
    %898 = vector.broadcast %cst_483 : f32 to vector<18x1xf32>
    %899 = arith.divf %897, %898 : vector<18x1xf32>
    %cst_484 = arith.constant 9.99999997E-7 : f32
    %900 = vector.broadcast %cst_484 : f32 to vector<18x1xf32>
    %901 = arith.addf %899, %900 : vector<18x1xf32>
    %902 = math.rsqrt %901 : vector<18x1xf32>
    %903 = vector.broadcast %902 : vector<18x1xf32> to vector<18x64xf32>
    %904 = arith.mulf %894, %903 : vector<18x64xf32>
    %905 = vector.broadcast %765 : vector<1x64xf32> to vector<18x64xf32>
    %906 = arith.mulf %904, %905 : vector<18x64xf32>
    %907 = vector.broadcast %767 : vector<1x64xf32> to vector<18x64xf32>
    %908 = arith.addf %906, %907 : vector<18x64xf32>
    %cst_485 = arith.constant dense<0.000000e+00> : vector<18x256xf32>
    %909 = tpu.matmul %908, %769, %cst_485 {dimension_numbers = #tpu.dot_dimension_numbers<[1], [0], [0], [1], [0, 0, 1, 1], [], []>} : vector<18x64xf32>, vector<64x256xf32>, vector<18x256xf32> -> vector<18x256xf32>
    %910 = vector.broadcast %771 : vector<1x256xf32> to vector<18x256xf32>
    %911 = arith.addf %909, %910 : vector<18x256xf32>
    %cst_486 = arith.constant 5.000000e-01 : f32
    %912 = vector.broadcast %cst_486 : f32 to vector<18x256xf32>
    %913 = arith.mulf %912, %911 : vector<18x256xf32>
    %cst_487 = arith.constant 0.707106769 : f32
    %914 = vector.broadcast %cst_487 : f32 to vector<18x256xf32>
    %915 = arith.mulf %911, %914 : vector<18x256xf32>
    %916 = math.erf %915 : vector<18x256xf32>
    %cst_488 = arith.constant 1.000000e+00 : f32
    %917 = vector.broadcast %cst_488 : f32 to vector<18x256xf32>
    %918 = arith.addf %917, %916 : vector<18x256xf32>
    %919 = arith.mulf %913, %918 : vector<18x256xf32>
    %cst_489 = arith.constant dense<0.000000e+00> : vector<18x64xf32>
    %920 = tpu.matmul %919, %773, %cst_489 {dimension_numbers = #tpu.dot_dimension_numbers<[1], [0], [0], [1], [0, 0, 1, 1], [], []>} : vector<18x256xf32>, vector<256x64xf32>, vector<18x64xf32> -> vector<18x64xf32>
    %921 = vector.broadcast %775 : vector<1x64xf32> to vector<18x64xf32>
    %922 = arith.addf %920, %921 : vector<18x64xf32>
    %923 = arith.addf %888, %922 : vector<18x64xf32>
    %c3_490 = arith.constant 3 : index
    %c0_491 = arith.constant 0 : index
    %c0_492 = arith.constant 0 : index
    %924 = vector.load %arg14[%c3_490, %c0_491, %c0_492] : memref<4x1x64xf32, #tpu.memory_space<vmem>>, vector<1x1x64xf32>
    %925 = vector.shape_cast %924 : vector<1x1x64xf32> to vector<1x64xf32>
    %c3_493 = arith.constant 3 : index
    %c0_494 = arith.constant 0 : index
    %c0_495 = arith.constant 0 : index
    %926 = vector.load %arg15[%c3_493, %c0_494, %c0_495] : memref<4x1x64xf32, #tpu.memory_space<vmem>>, vector<1x1x64xf32>
    %927 = vector.shape_cast %926 : vector<1x1x64xf32> to vector<1x64xf32>
    %c3_496 = arith.constant 3 : index
    %c0_497 = arith.constant 0 : index
    %c0_498 = arith.constant 0 : index
    %928 = vector.load %arg16[%c3_496, %c0_497, %c0_498] : memref<4x64x192xf32, #tpu.memory_space<vmem>>, vector<1x64x192xf32>
    %929 = vector.shape_cast %928 : vector<1x64x192xf32> to vector<64x192xf32>
    %c3_499 = arith.constant 3 : index
    %c0_500 = arith.constant 0 : index
    %c0_501 = arith.constant 0 : index
    %930 = vector.load %arg17[%c3_499, %c0_500, %c0_501] : memref<4x1x192xf32, #tpu.memory_space<vmem>>, vector<1x1x192xf32>
    %931 = vector.shape_cast %930 : vector<1x1x192xf32> to vector<1x192xf32>
    %c3_502 = arith.constant 3 : index
    %c0_503 = arith.constant 0 : index
    %c0_504 = arith.constant 0 : index
    %c0_505 = arith.constant 0 : index
    %932 = vector.load %arg18[%c3_502, %c0_503, %c0_504, %c0_505] : memref<4x4x16x64xf32, #tpu.memory_space<vmem>>, vector<1x4x16x64xf32>
    %933 = vector.shape_cast %932 : vector<1x4x16x64xf32> to vector<4x16x64xf32>
    %c3_506 = arith.constant 3 : index
    %c0_507 = arith.constant 0 : index
    %c0_508 = arith.constant 0 : index
    %934 = vector.load %arg19[%c3_506, %c0_507, %c0_508] : memref<4x1x64xf32, #tpu.memory_space<vmem>>, vector<1x1x64xf32>
    %935 = vector.shape_cast %934 : vector<1x1x64xf32> to vector<1x64xf32>
    %c3_509 = arith.constant 3 : index
    %c0_510 = arith.constant 0 : index
    %c0_511 = arith.constant 0 : index
    %936 = vector.load %arg20[%c3_509, %c0_510, %c0_511] : memref<4x1x64xf32, #tpu.memory_space<vmem>>, vector<1x1x64xf32>
    %937 = vector.shape_cast %936 : vector<1x1x64xf32> to vector<1x64xf32>
    %c3_512 = arith.constant 3 : index
    %c0_513 = arith.constant 0 : index
    %c0_514 = arith.constant 0 : index
    %938 = vector.load %arg21[%c3_512, %c0_513, %c0_514] : memref<4x1x64xf32, #tpu.memory_space<vmem>>, vector<1x1x64xf32>
    %939 = vector.shape_cast %938 : vector<1x1x64xf32> to vector<1x64xf32>
    %c3_515 = arith.constant 3 : index
    %c0_516 = arith.constant 0 : index
    %c0_517 = arith.constant 0 : index
    %940 = vector.load %arg22[%c3_515, %c0_516, %c0_517] : memref<4x64x256xf32, #tpu.memory_space<vmem>>, vector<1x64x256xf32>
    %941 = vector.shape_cast %940 : vector<1x64x256xf32> to vector<64x256xf32>
    %c3_518 = arith.constant 3 : index
    %c0_519 = arith.constant 0 : index
    %c0_520 = arith.constant 0 : index
    %942 = vector.load %arg23[%c3_518, %c0_519, %c0_520] : memref<4x1x256xf32, #tpu.memory_space<vmem>>, vector<1x1x256xf32>
    %943 = vector.shape_cast %942 : vector<1x1x256xf32> to vector<1x256xf32>
    %c3_521 = arith.constant 3 : index
    %c0_522 = arith.constant 0 : index
    %c0_523 = arith.constant 0 : index
    %944 = vector.load %arg24[%c3_521, %c0_522, %c0_523] : memref<4x256x64xf32, #tpu.memory_space<vmem>>, vector<1x256x64xf32>
    %945 = vector.shape_cast %944 : vector<1x256x64xf32> to vector<256x64xf32>
    %c3_524 = arith.constant 3 : index
    %c0_525 = arith.constant 0 : index
    %c0_526 = arith.constant 0 : index
    %946 = vector.load %arg25[%c3_524, %c0_525, %c0_526] : memref<4x1x64xf32, #tpu.memory_space<vmem>>, vector<1x1x64xf32>
    %947 = vector.shape_cast %946 : vector<1x1x64xf32> to vector<1x64xf32>
    %cst_527 = arith.constant dense<0.000000e+00> : vector<18xf32>
    %948 = vector.multi_reduction <add>, %923, %cst_527 [1] : vector<18x64xf32> to vector<18xf32>
    %949 = vector.shape_cast %948 : vector<18xf32> to vector<18x1xf32>
    %cst_528 = arith.constant 6.400000e+01 : f32
    %950 = vector.broadcast %cst_528 : f32 to vector<18x1xf32>
    %951 = arith.divf %949, %950 : vector<18x1xf32>
    %952 = vector.broadcast %951 : vector<18x1xf32> to vector<18x64xf32>
    %953 = arith.subf %923, %952 : vector<18x64xf32>
    %954 = arith.mulf %953, %953 : vector<18x64xf32>
    %cst_529 = arith.constant dense<0.000000e+00> : vector<18xf32>
    %955 = vector.multi_reduction <add>, %954, %cst_529 [1] : vector<18x64xf32> to vector<18xf32>
    %956 = vector.shape_cast %955 : vector<18xf32> to vector<18x1xf32>
    %cst_530 = arith.constant 6.400000e+01 : f32
    %957 = vector.broadcast %cst_530 : f32 to vector<18x1xf32>
    %958 = arith.divf %956, %957 : vector<18x1xf32>
    %cst_531 = arith.constant 9.99999997E-7 : f32
    %959 = vector.broadcast %cst_531 : f32 to vector<18x1xf32>
    %960 = arith.addf %958, %959 : vector<18x1xf32>
    %961 = math.rsqrt %960 : vector<18x1xf32>
    %962 = vector.broadcast %961 : vector<18x1xf32> to vector<18x64xf32>
    %963 = arith.mulf %953, %962 : vector<18x64xf32>
    %964 = vector.broadcast %925 : vector<1x64xf32> to vector<18x64xf32>
    %965 = arith.mulf %963, %964 : vector<18x64xf32>
    %966 = vector.broadcast %927 : vector<1x64xf32> to vector<18x64xf32>
    %967 = arith.addf %965, %966 : vector<18x64xf32>
    %cst_532 = arith.constant dense<0.000000e+00> : vector<18x192xf32>
    %968 = tpu.matmul %967, %929, %cst_532 {dimension_numbers = #tpu.dot_dimension_numbers<[1], [0], [0], [1], [0, 0, 1, 1], [], []>} : vector<18x64xf32>, vector<64x192xf32>, vector<18x192xf32> -> vector<18x192xf32>
    %969 = vector.broadcast %931 : vector<1x192xf32> to vector<18x192xf32>
    %970 = arith.addf %968, %969 : vector<18x192xf32>
    %971 = vector.extract_strided_slice %970 {offsets = [0, 0], sizes = [18, 48], strides = [1, 1]} : vector<18x192xf32> to vector<18x48xf32>
    %972 = vector.extract_strided_slice %971 {offsets = [0, 0], sizes = [18, 16], strides = [1, 1]} : vector<18x48xf32> to vector<18x16xf32>
    %973 = vector.extract_strided_slice %971 {offsets = [0, 16], sizes = [18, 16], strides = [1, 1]} : vector<18x48xf32> to vector<18x16xf32>
    %974 = vector.extract_strided_slice %971 {offsets = [0, 32], sizes = [18, 16], strides = [1, 1]} : vector<18x48xf32> to vector<18x16xf32>
    %cst_533 = arith.constant dense<0.000000e+00> : vector<18x18xf32>
    %975 = tpu.matmul %972, %973, %cst_533 {dimension_numbers = #tpu.dot_dimension_numbers<[1], [1], [0], [0], [0, 0, 1, 0], [], []>} : vector<18x16xf32>, vector<18x16xf32>, vector<18x18xf32> -> vector<18x18xf32>
    %cst_534 = arith.constant 2.500000e-01 : f32
    %976 = vector.broadcast %cst_534 : f32 to vector<18x18xf32>
    %977 = arith.mulf %975, %976 : vector<18x18xf32>
    %978 = arith.addf %977, %751 : vector<18x18xf32>
    %cst_535 = arith.constant dense<0xFF800000> : vector<18xf32>
    %979 = vector.multi_reduction <maximumf>, %978, %cst_535 [1] : vector<18x18xf32> to vector<18xf32>
    %980 = vector.shape_cast %979 : vector<18xf32> to vector<18x1xf32>
    %981 = vector.broadcast %980 : vector<18x1xf32> to vector<18x18xf32>
    %982 = arith.subf %978, %981 : vector<18x18xf32>
    %983 = math.exp %982 : vector<18x18xf32>
    %cst_536 = arith.constant dense<0.000000e+00> : vector<18xf32>
    %984 = vector.multi_reduction <add>, %983, %cst_536 [1] : vector<18x18xf32> to vector<18xf32>
    %985 = vector.shape_cast %984 : vector<18xf32> to vector<18x1xf32>
    %986 = vector.broadcast %985 : vector<18x1xf32> to vector<18x18xf32>
    %987 = arith.divf %983, %986 : vector<18x18xf32>
    %cst_537 = arith.constant dense<0.000000e+00> : vector<18x16xf32>
    %988 = tpu.matmul %987, %974, %cst_537 {dimension_numbers = #tpu.dot_dimension_numbers<[1], [0], [0], [1], [0, 0, 1, 1], [], []>} : vector<18x18xf32>, vector<18x16xf32>, vector<18x16xf32> -> vector<18x16xf32>
    %989 = vector.extract_strided_slice %933 {offsets = [0, 0, 0], sizes = [1, 16, 64], strides = [1, 1, 1]} : vector<4x16x64xf32> to vector<1x16x64xf32>
    %990 = vector.shape_cast %989 : vector<1x16x64xf32> to vector<16x64xf32>
    %cst_538 = arith.constant dense<0.000000e+00> : vector<18x64xf32>
    %991 = tpu.matmul %988, %990, %cst_538 {dimension_numbers = #tpu.dot_dimension_numbers<[1], [0], [0], [1], [0, 0, 1, 1], [], []>} : vector<18x16xf32>, vector<16x64xf32>, vector<18x64xf32> -> vector<18x64xf32>
    %992 = vector.extract_strided_slice %970 {offsets = [0, 48], sizes = [18, 48], strides = [1, 1]} : vector<18x192xf32> to vector<18x48xf32>
    %993 = vector.extract_strided_slice %992 {offsets = [0, 0], sizes = [18, 16], strides = [1, 1]} : vector<18x48xf32> to vector<18x16xf32>
    %994 = vector.extract_strided_slice %992 {offsets = [0, 16], sizes = [18, 16], strides = [1, 1]} : vector<18x48xf32> to vector<18x16xf32>
    %995 = vector.extract_strided_slice %992 {offsets = [0, 32], sizes = [18, 16], strides = [1, 1]} : vector<18x48xf32> to vector<18x16xf32>
    %cst_539 = arith.constant dense<0.000000e+00> : vector<18x18xf32>
    %996 = tpu.matmul %993, %994, %cst_539 {dimension_numbers = #tpu.dot_dimension_numbers<[1], [1], [0], [0], [0, 0, 1, 0], [], []>} : vector<18x16xf32>, vector<18x16xf32>, vector<18x18xf32> -> vector<18x18xf32>
    %cst_540 = arith.constant 2.500000e-01 : f32
    %997 = vector.broadcast %cst_540 : f32 to vector<18x18xf32>
    %998 = arith.mulf %996, %997 : vector<18x18xf32>
    %999 = arith.addf %998, %751 : vector<18x18xf32>
    %cst_541 = arith.constant dense<0xFF800000> : vector<18xf32>
    %1000 = vector.multi_reduction <maximumf>, %999, %cst_541 [1] : vector<18x18xf32> to vector<18xf32>
    %1001 = vector.shape_cast %1000 : vector<18xf32> to vector<18x1xf32>
    %1002 = vector.broadcast %1001 : vector<18x1xf32> to vector<18x18xf32>
    %1003 = arith.subf %999, %1002 : vector<18x18xf32>
    %1004 = math.exp %1003 : vector<18x18xf32>
    %cst_542 = arith.constant dense<0.000000e+00> : vector<18xf32>
    %1005 = vector.multi_reduction <add>, %1004, %cst_542 [1] : vector<18x18xf32> to vector<18xf32>
    %1006 = vector.shape_cast %1005 : vector<18xf32> to vector<18x1xf32>
    %1007 = vector.broadcast %1006 : vector<18x1xf32> to vector<18x18xf32>
    %1008 = arith.divf %1004, %1007 : vector<18x18xf32>
    %cst_543 = arith.constant dense<0.000000e+00> : vector<18x16xf32>
    %1009 = tpu.matmul %1008, %995, %cst_543 {dimension_numbers = #tpu.dot_dimension_numbers<[1], [0], [0], [1], [0, 0, 1, 1], [], []>} : vector<18x18xf32>, vector<18x16xf32>, vector<18x16xf32> -> vector<18x16xf32>
    %1010 = vector.extract_strided_slice %933 {offsets = [1, 0, 0], sizes = [1, 16, 64], strides = [1, 1, 1]} : vector<4x16x64xf32> to vector<1x16x64xf32>
    %1011 = vector.shape_cast %1010 : vector<1x16x64xf32> to vector<16x64xf32>
    %cst_544 = arith.constant dense<0.000000e+00> : vector<18x64xf32>
    %1012 = tpu.matmul %1009, %1011, %cst_544 {dimension_numbers = #tpu.dot_dimension_numbers<[1], [0], [0], [1], [0, 0, 1, 1], [], []>} : vector<18x16xf32>, vector<16x64xf32>, vector<18x64xf32> -> vector<18x64xf32>
    %1013 = arith.addf %991, %1012 : vector<18x64xf32>
    %1014 = vector.extract_strided_slice %970 {offsets = [0, 96], sizes = [18, 48], strides = [1, 1]} : vector<18x192xf32> to vector<18x48xf32>
    %1015 = vector.extract_strided_slice %1014 {offsets = [0, 0], sizes = [18, 16], strides = [1, 1]} : vector<18x48xf32> to vector<18x16xf32>
    %1016 = vector.extract_strided_slice %1014 {offsets = [0, 16], sizes = [18, 16], strides = [1, 1]} : vector<18x48xf32> to vector<18x16xf32>
    %1017 = vector.extract_strided_slice %1014 {offsets = [0, 32], sizes = [18, 16], strides = [1, 1]} : vector<18x48xf32> to vector<18x16xf32>
    %cst_545 = arith.constant dense<0.000000e+00> : vector<18x18xf32>
    %1018 = tpu.matmul %1015, %1016, %cst_545 {dimension_numbers = #tpu.dot_dimension_numbers<[1], [1], [0], [0], [0, 0, 1, 0], [], []>} : vector<18x16xf32>, vector<18x16xf32>, vector<18x18xf32> -> vector<18x18xf32>
    %cst_546 = arith.constant 2.500000e-01 : f32
    %1019 = vector.broadcast %cst_546 : f32 to vector<18x18xf32>
    %1020 = arith.mulf %1018, %1019 : vector<18x18xf32>
    %1021 = arith.addf %1020, %751 : vector<18x18xf32>
    %cst_547 = arith.constant dense<0xFF800000> : vector<18xf32>
    %1022 = vector.multi_reduction <maximumf>, %1021, %cst_547 [1] : vector<18x18xf32> to vector<18xf32>
    %1023 = vector.shape_cast %1022 : vector<18xf32> to vector<18x1xf32>
    %1024 = vector.broadcast %1023 : vector<18x1xf32> to vector<18x18xf32>
    %1025 = arith.subf %1021, %1024 : vector<18x18xf32>
    %1026 = math.exp %1025 : vector<18x18xf32>
    %cst_548 = arith.constant dense<0.000000e+00> : vector<18xf32>
    %1027 = vector.multi_reduction <add>, %1026, %cst_548 [1] : vector<18x18xf32> to vector<18xf32>
    %1028 = vector.shape_cast %1027 : vector<18xf32> to vector<18x1xf32>
    %1029 = vector.broadcast %1028 : vector<18x1xf32> to vector<18x18xf32>
    %1030 = arith.divf %1026, %1029 : vector<18x18xf32>
    %cst_549 = arith.constant dense<0.000000e+00> : vector<18x16xf32>
    %1031 = tpu.matmul %1030, %1017, %cst_549 {dimension_numbers = #tpu.dot_dimension_numbers<[1], [0], [0], [1], [0, 0, 1, 1], [], []>} : vector<18x18xf32>, vector<18x16xf32>, vector<18x16xf32> -> vector<18x16xf32>
    %1032 = vector.extract_strided_slice %933 {offsets = [2, 0, 0], sizes = [1, 16, 64], strides = [1, 1, 1]} : vector<4x16x64xf32> to vector<1x16x64xf32>
    %1033 = vector.shape_cast %1032 : vector<1x16x64xf32> to vector<16x64xf32>
    %cst_550 = arith.constant dense<0.000000e+00> : vector<18x64xf32>
    %1034 = tpu.matmul %1031, %1033, %cst_550 {dimension_numbers = #tpu.dot_dimension_numbers<[1], [0], [0], [1], [0, 0, 1, 1], [], []>} : vector<18x16xf32>, vector<16x64xf32>, vector<18x64xf32> -> vector<18x64xf32>
    %1035 = arith.addf %1013, %1034 : vector<18x64xf32>
    %1036 = vector.extract_strided_slice %970 {offsets = [0, 144], sizes = [18, 48], strides = [1, 1]} : vector<18x192xf32> to vector<18x48xf32>
    %1037 = vector.extract_strided_slice %1036 {offsets = [0, 0], sizes = [18, 16], strides = [1, 1]} : vector<18x48xf32> to vector<18x16xf32>
    %1038 = vector.extract_strided_slice %1036 {offsets = [0, 16], sizes = [18, 16], strides = [1, 1]} : vector<18x48xf32> to vector<18x16xf32>
    %1039 = vector.extract_strided_slice %1036 {offsets = [0, 32], sizes = [18, 16], strides = [1, 1]} : vector<18x48xf32> to vector<18x16xf32>
    %cst_551 = arith.constant dense<0.000000e+00> : vector<18x18xf32>
    %1040 = tpu.matmul %1037, %1038, %cst_551 {dimension_numbers = #tpu.dot_dimension_numbers<[1], [1], [0], [0], [0, 0, 1, 0], [], []>} : vector<18x16xf32>, vector<18x16xf32>, vector<18x18xf32> -> vector<18x18xf32>
    %cst_552 = arith.constant 2.500000e-01 : f32
    %1041 = vector.broadcast %cst_552 : f32 to vector<18x18xf32>
    %1042 = arith.mulf %1040, %1041 : vector<18x18xf32>
    %1043 = arith.addf %1042, %751 : vector<18x18xf32>
    %cst_553 = arith.constant dense<0xFF800000> : vector<18xf32>
    %1044 = vector.multi_reduction <maximumf>, %1043, %cst_553 [1] : vector<18x18xf32> to vector<18xf32>
    %1045 = vector.shape_cast %1044 : vector<18xf32> to vector<18x1xf32>
    %1046 = vector.broadcast %1045 : vector<18x1xf32> to vector<18x18xf32>
    %1047 = arith.subf %1043, %1046 : vector<18x18xf32>
    %1048 = math.exp %1047 : vector<18x18xf32>
    %cst_554 = arith.constant dense<0.000000e+00> : vector<18xf32>
    %1049 = vector.multi_reduction <add>, %1048, %cst_554 [1] : vector<18x18xf32> to vector<18xf32>
    %1050 = vector.shape_cast %1049 : vector<18xf32> to vector<18x1xf32>
    %1051 = vector.broadcast %1050 : vector<18x1xf32> to vector<18x18xf32>
    %1052 = arith.divf %1048, %1051 : vector<18x18xf32>
    %cst_555 = arith.constant dense<0.000000e+00> : vector<18x16xf32>
    %1053 = tpu.matmul %1052, %1039, %cst_555 {dimension_numbers = #tpu.dot_dimension_numbers<[1], [0], [0], [1], [0, 0, 1, 1], [], []>} : vector<18x18xf32>, vector<18x16xf32>, vector<18x16xf32> -> vector<18x16xf32>
    %1054 = vector.extract_strided_slice %933 {offsets = [3, 0, 0], sizes = [1, 16, 64], strides = [1, 1, 1]} : vector<4x16x64xf32> to vector<1x16x64xf32>
    %1055 = vector.shape_cast %1054 : vector<1x16x64xf32> to vector<16x64xf32>
    %cst_556 = arith.constant dense<0.000000e+00> : vector<18x64xf32>
    %1056 = tpu.matmul %1053, %1055, %cst_556 {dimension_numbers = #tpu.dot_dimension_numbers<[1], [0], [0], [1], [0, 0, 1, 1], [], []>} : vector<18x16xf32>, vector<16x64xf32>, vector<18x64xf32> -> vector<18x64xf32>
    %1057 = arith.addf %1035, %1056 : vector<18x64xf32>
    %1058 = arith.addf %923, %1057 : vector<18x64xf32>
    %1059 = vector.broadcast %935 : vector<1x64xf32> to vector<18x64xf32>
    %1060 = arith.addf %1058, %1059 : vector<18x64xf32>
    %cst_557 = arith.constant dense<0.000000e+00> : vector<18xf32>
    %1061 = vector.multi_reduction <add>, %1060, %cst_557 [1] : vector<18x64xf32> to vector<18xf32>
    %1062 = vector.shape_cast %1061 : vector<18xf32> to vector<18x1xf32>
    %cst_558 = arith.constant 6.400000e+01 : f32
    %1063 = vector.broadcast %cst_558 : f32 to vector<18x1xf32>
    %1064 = arith.divf %1062, %1063 : vector<18x1xf32>
    %1065 = vector.broadcast %1064 : vector<18x1xf32> to vector<18x64xf32>
    %1066 = arith.subf %1060, %1065 : vector<18x64xf32>
    %1067 = arith.mulf %1066, %1066 : vector<18x64xf32>
    %cst_559 = arith.constant dense<0.000000e+00> : vector<18xf32>
    %1068 = vector.multi_reduction <add>, %1067, %cst_559 [1] : vector<18x64xf32> to vector<18xf32>
    %1069 = vector.shape_cast %1068 : vector<18xf32> to vector<18x1xf32>
    %cst_560 = arith.constant 6.400000e+01 : f32
    %1070 = vector.broadcast %cst_560 : f32 to vector<18x1xf32>
    %1071 = arith.divf %1069, %1070 : vector<18x1xf32>
    %cst_561 = arith.constant 9.99999997E-7 : f32
    %1072 = vector.broadcast %cst_561 : f32 to vector<18x1xf32>
    %1073 = arith.addf %1071, %1072 : vector<18x1xf32>
    %1074 = math.rsqrt %1073 : vector<18x1xf32>
    %1075 = vector.broadcast %1074 : vector<18x1xf32> to vector<18x64xf32>
    %1076 = arith.mulf %1066, %1075 : vector<18x64xf32>
    %1077 = vector.broadcast %937 : vector<1x64xf32> to vector<18x64xf32>
    %1078 = arith.mulf %1076, %1077 : vector<18x64xf32>
    %1079 = vector.broadcast %939 : vector<1x64xf32> to vector<18x64xf32>
    %1080 = arith.addf %1078, %1079 : vector<18x64xf32>
    %cst_562 = arith.constant dense<0.000000e+00> : vector<18x256xf32>
    %1081 = tpu.matmul %1080, %941, %cst_562 {dimension_numbers = #tpu.dot_dimension_numbers<[1], [0], [0], [1], [0, 0, 1, 1], [], []>} : vector<18x64xf32>, vector<64x256xf32>, vector<18x256xf32> -> vector<18x256xf32>
    %1082 = vector.broadcast %943 : vector<1x256xf32> to vector<18x256xf32>
    %1083 = arith.addf %1081, %1082 : vector<18x256xf32>
    %cst_563 = arith.constant 5.000000e-01 : f32
    %1084 = vector.broadcast %cst_563 : f32 to vector<18x256xf32>
    %1085 = arith.mulf %1084, %1083 : vector<18x256xf32>
    %cst_564 = arith.constant 0.707106769 : f32
    %1086 = vector.broadcast %cst_564 : f32 to vector<18x256xf32>
    %1087 = arith.mulf %1083, %1086 : vector<18x256xf32>
    %1088 = math.erf %1087 : vector<18x256xf32>
    %cst_565 = arith.constant 1.000000e+00 : f32
    %1089 = vector.broadcast %cst_565 : f32 to vector<18x256xf32>
    %1090 = arith.addf %1089, %1088 : vector<18x256xf32>
    %1091 = arith.mulf %1085, %1090 : vector<18x256xf32>
    %cst_566 = arith.constant dense<0.000000e+00> : vector<18x64xf32>
    %1092 = tpu.matmul %1091, %945, %cst_566 {dimension_numbers = #tpu.dot_dimension_numbers<[1], [0], [0], [1], [0, 0, 1, 1], [], []>} : vector<18x256xf32>, vector<256x64xf32>, vector<18x64xf32> -> vector<18x64xf32>
    %1093 = vector.broadcast %947 : vector<1x64xf32> to vector<18x64xf32>
    %1094 = arith.addf %1092, %1093 : vector<18x64xf32>
    %1095 = arith.addf %1060, %1094 : vector<18x64xf32>
    %c0_567 = arith.constant 0 : index
    %c0_568 = arith.constant 0 : index
    %1096 = vector.load %arg30[%c0_567, %c0_568] : memref<1x64xf32, #tpu.memory_space<vmem>>, vector<1x64xf32>
    %c0_569 = arith.constant 0 : index
    %c0_570 = arith.constant 0 : index
    %1097 = vector.load %arg31[%c0_569, %c0_570] : memref<1x64xf32, #tpu.memory_space<vmem>>, vector<1x64xf32>
    %cst_571 = arith.constant dense<0.000000e+00> : vector<18xf32>
    %1098 = vector.multi_reduction <add>, %1095, %cst_571 [1] : vector<18x64xf32> to vector<18xf32>
    %1099 = vector.shape_cast %1098 : vector<18xf32> to vector<18x1xf32>
    %cst_572 = arith.constant 6.400000e+01 : f32
    %1100 = vector.broadcast %cst_572 : f32 to vector<18x1xf32>
    %1101 = arith.divf %1099, %1100 : vector<18x1xf32>
    %1102 = vector.broadcast %1101 : vector<18x1xf32> to vector<18x64xf32>
    %1103 = arith.subf %1095, %1102 : vector<18x64xf32>
    %1104 = arith.mulf %1103, %1103 : vector<18x64xf32>
    %cst_573 = arith.constant dense<0.000000e+00> : vector<18xf32>
    %1105 = vector.multi_reduction <add>, %1104, %cst_573 [1] : vector<18x64xf32> to vector<18xf32>
    %1106 = vector.shape_cast %1105 : vector<18xf32> to vector<18x1xf32>
    %cst_574 = arith.constant 6.400000e+01 : f32
    %1107 = vector.broadcast %cst_574 : f32 to vector<18x1xf32>
    %1108 = arith.divf %1106, %1107 : vector<18x1xf32>
    %cst_575 = arith.constant 9.99999997E-7 : f32
    %1109 = vector.broadcast %cst_575 : f32 to vector<18x1xf32>
    %1110 = arith.addf %1108, %1109 : vector<18x1xf32>
    %1111 = math.rsqrt %1110 : vector<18x1xf32>
    %1112 = vector.broadcast %1111 : vector<18x1xf32> to vector<18x64xf32>
    %1113 = arith.mulf %1103, %1112 : vector<18x64xf32>
    %1114 = vector.broadcast %1096 : vector<1x64xf32> to vector<18x64xf32>
    %1115 = arith.mulf %1113, %1114 : vector<18x64xf32>
    %1116 = vector.broadcast %1097 : vector<1x64xf32> to vector<18x64xf32>
    %1117 = arith.addf %1115, %1116 : vector<18x64xf32>
    %c0_576 = arith.constant 0 : index
    %c0_577 = arith.constant 0 : index
    %1118 = vector.load %arg32[%c0_576, %c0_577] : memref<1x64xf32, #tpu.memory_space<vmem>>, vector<1x64xf32>
    %1119 = vector.extract_strided_slice %1117 {offsets = [1, 0], sizes = [8, 64], strides = [1, 1]} : vector<18x64xf32> to vector<8x64xf32>
    %cst_578 = arith.constant dense<0.000000e+00> : vector<1x8xf32>
    %1120 = tpu.matmul %1118, %1119, %cst_578 {dimension_numbers = #tpu.dot_dimension_numbers<[1], [1], [0], [0], [0, 0, 1, 0], [], []>} : vector<1x64xf32>, vector<8x64xf32>, vector<1x8xf32> -> vector<1x8xf32>
    %1121 = vector.extract_strided_slice %1117 {offsets = [10, 0], sizes = [8, 64], strides = [1, 1]} : vector<18x64xf32> to vector<8x64xf32>
    %cst_579 = arith.constant dense<0.000000e+00> : vector<1x8xf32>
    %1122 = tpu.matmul %1118, %1121, %cst_579 {dimension_numbers = #tpu.dot_dimension_numbers<[1], [1], [0], [0], [0, 0, 1, 0], [], []>} : vector<1x64xf32>, vector<8x64xf32>, vector<1x8xf32> -> vector<1x8xf32>
    %1123 = tpu.concatenate %1120, %1122 in 0 : vector<1x8xf32>, vector<1x8xf32> -> vector<2x8xf32>
    %c0_580 = arith.constant 0 : index
    %c0_581 = arith.constant 0 : index
    %1124 = vector.load %arg33[%c0_580, %c0_581] : memref<1x1xf32, #tpu.memory_space<vmem>>, vector<1x1xf32>
    %1125 = vector.broadcast %1124 : vector<1x1xf32> to vector<2x8xf32>
    %1126 = arith.addf %1123, %1125 : vector<2x8xf32>
    %1127 = math.tanh %1126 : vector<2x8xf32>
    %cst_582 = arith.constant 5.000000e-01 : f32
    %1128 = vector.broadcast %cst_582 : f32 to vector<2x8xf32>
    %1129 = arith.mulf %1127, %1128 : vector<2x8xf32>
    %cst_583 = arith.constant 5.000000e-01 : f32
    %1130 = vector.broadcast %cst_583 : f32 to vector<2x8xf32>
    %1131 = arith.addf %1129, %1130 : vector<2x8xf32>
    %c0_584 = arith.constant 0 : index
    %c0_585 = arith.constant 0 : index
    %1132 = vector.load %arg34[%c0_584, %c0_585] : memref<2x8xf32, #tpu.memory_space<vmem>>, vector<2x8xf32>
    tpu.vector_store %arg34[%c0_584, %c0_585], %1131 {strides = array<i32>} : memref<2x8xf32, #tpu.memory_space<vmem>>, vector<2x8xf32>,
    %c0_586 = arith.constant 0 : index
    %c0_587 = arith.constant 0 : index
    %1133 = vector.load %arg3[%c0_586, %c0_587] : memref<2x8xf32, #tpu.memory_space<vmem>>, vector<2x8xf32>
    %1134 = arith.subf %1131, %1133 : vector<2x8xf32>
    %1135 = arith.mulf %1134, %1134 : vector<2x8xf32>
    %c0_588 = arith.constant 0 : index
    %c0_589 = arith.constant 0 : index
    %1136 = vector.load %arg4[%c0_588, %c0_589] : memref<2x8xf32, #tpu.memory_space<vmem>>, vector<2x8xf32>
    %c0_590 = arith.constant 0 : index
    %c0_591 = arith.constant 0 : index
    %1137 = vector.load %arg5[%c0_590, %c0_591] : memref<2x8xf32, #tpu.memory_space<vmem>>, vector<2x8xf32>
    %1138 = arith.mulf %1135, %1136 : vector<2x8xf32>
    %1139 = vector.shape_cast %1138 : vector<2x8xf32> to vector<1x2x8xf32>
    %cst_592 = arith.constant dense<0.000000e+00> : vector<1xf32>
    %1140 = vector.multi_reduction <add>, %1139, %cst_592 [1, 2] : vector<1x2x8xf32> to vector<1xf32>
    %1141 = vector.shape_cast %1140 : vector<1xf32> to vector<1x1x1xf32>
    %1142 = vector.extract %1141[0, 0, 0] : f32 from vector<1x1x1xf32>
    %1143 = vector.shape_cast %1136 : vector<2x8xf32> to vector<1x2x8xf32>
    %cst_593 = arith.constant dense<0.000000e+00> : vector<1xf32>
    %1144 = vector.multi_reduction <add>, %1143, %cst_593 [1, 2] : vector<1x2x8xf32> to vector<1xf32>
    %1145 = vector.shape_cast %1144 : vector<1xf32> to vector<1x1x1xf32>
    %1146 = vector.extract %1145[0, 0, 0] : f32 from vector<1x1x1xf32>
    %1147 = arith.divf %1142, %1146 : f32
    %1148 = arith.mulf %1135, %1137 : vector<2x8xf32>
    %1149 = vector.shape_cast %1148 : vector<2x8xf32> to vector<1x2x8xf32>
    %cst_594 = arith.constant dense<0.000000e+00> : vector<1xf32>
    %1150 = vector.multi_reduction <add>, %1149, %cst_594 [1, 2] : vector<1x2x8xf32> to vector<1xf32>
    %1151 = vector.shape_cast %1150 : vector<1xf32> to vector<1x1x1xf32>
    %1152 = vector.extract %1151[0, 0, 0] : f32 from vector<1x1x1xf32>
    %1153 = vector.shape_cast %1137 : vector<2x8xf32> to vector<1x2x8xf32>
    %cst_595 = arith.constant dense<0.000000e+00> : vector<1xf32>
    %1154 = vector.multi_reduction <add>, %1153, %cst_595 [1, 2] : vector<1x2x8xf32> to vector<1xf32>
    %1155 = vector.shape_cast %1154 : vector<1xf32> to vector<1x1x1xf32>
    %1156 = vector.extract %1155[0, 0, 0] : f32 from vector<1x1x1xf32>
    %1157 = arith.divf %1152, %1156 : f32
    %1158 = arith.addf %1147, %1157 : f32
    %c0_596 = arith.constant 0 : index
    %c0_597 = arith.constant 0 : index
    %1159 = memref.load %arg35[%c0_596, %c0_597] : memref<1x1xf32, #tpu.memory_space<smem>>
    memref.store %1158, %arg35[%c0_596, %c0_597] : memref<1x1xf32, #tpu.memory_space<smem>>
    return
  }
}

</mosaic_0001>

<llo_original>
// kernel: remasker_forward.1
$region0: #{remasker_forward.1}
  #allocation0 [shape = 'u32[]', space=smem, size = 0x4, offset = 0x4, fixed_abs, tag = 'smem constant byte address 0x4 - core index']
  #allocation1 [shape = 'u32[72,128]{1,0:T(1,128)}', space=vmem, size = 0x9000, scoped, tag = 'internal scratch']
  #allocation2 [shape = 'f32[10,64]{1,0:T(8,128)}', space=vmem, size = 0x2000, scoped, tag = 'scratch operand']
  #allocation3 [shape = 'f32[18,64]{1,0:T(8,128)}', space=vmem, size = 0x3000, scoped, tag = 'scratch operand']
  #allocation4 [shape = 'f32[1,1]{1,0:T(1,128)S(1)}', space=vmem, size = 0x200, scoped, tag = 'scoped memory for remasker_forward.1']
  %s0 = inlined_call_operand.smem [shape: u32[36], index: -1, kind: input, shape index: {}]
  %s1 = sld [smem:[%s0]]
  %s2 = scalar_lea.smem %s0, 1
  %s3 = sld [smem:[%s2]]
  %s4 = scalar_lea.smem %s0, 2
  %s5 = sld [smem:[%s4]]
  %s6 = scalar_lea.smem %s0, 3
  %s7 = sld [smem:[%s6]]
  %s8 = scalar_lea.smem %s0, 4
  %s9 = sld [smem:[%s8]]
  %s10 = scalar_lea.smem %s0, 5
  %s11 = sld [smem:[%s10]]
  %s12 = scalar_lea.smem %s0, 6
  %s13 = sld [smem:[%s12]]
  %s14 = scalar_lea.smem %s0, 7
  %s15 = sld [smem:[%s14]]
  %s16 = scalar_lea.smem %s0, 8
  %s17 = sld [smem:[%s16]]
  %s18 = scalar_lea.smem %s0, 9
  %s19 = sld [smem:[%s18]]
  %s20 = scalar_lea.smem %s0, 10
  %s21 = sld [smem:[%s20]]
  %s22 = scalar_lea.smem %s0, 11
  %s23 = sld [smem:[%s22]]
  %s24 = scalar_lea.smem %s0, 12
  %s25 = sld [smem:[%s24]]
  %s26 = scalar_lea.smem %s0, 13
  %s27 = sld [smem:[%s26]]
  %s28 = scalar_lea.smem %s0, 14
  %s29 = sld [smem:[%s28]]
  %s30 = scalar_lea.smem %s0, 15
  %s31 = sld [smem:[%s30]]
  %s32 = scalar_lea.smem %s0, 16
  %s33 = sld [smem:[%s32]]
  %s34 = scalar_lea.smem %s0, 17
  %s35 = sld [smem:[%s34]]
  %s36 = scalar_lea.smem %s0, 18
  %s37 = sld [smem:[%s36]]
  %s38 = scalar_lea.smem %s0, 19
  %s39 = sld [smem:[%s38]]
  %s40 = scalar_lea.smem %s0, 20
  %s41 = sld [smem:[%s40]]
  %s42 = scalar_lea.smem %s0, 21
  %s43 = sld [smem:[%s42]]
  %s44 = scalar_lea.smem %s0, 22
  %s45 = sld [smem:[%s44]]
  %s46 = scalar_lea.smem %s0, 23
  %s47 = sld [smem:[%s46]]
  %s48 = scalar_lea.smem %s0, 24
  %s49 = sld [smem:[%s48]]
  %s50 = scalar_lea.smem %s0, 25
  %s51 = sld [smem:[%s50]]
  %s52 = scalar_lea.smem %s0, 26
  %s53 = sld [smem:[%s52]]
  %s54 = scalar_lea.smem %s0, 27
  %s55 = sld [smem:[%s54]]
  %s56 = scalar_lea.smem %s0, 28
  %s57 = sld [smem:[%s56]]
  %s58 = scalar_lea.smem %s0, 29
  %s59 = sld [smem:[%s58]]
  %s60 = scalar_lea.smem %s0, 30
  %s61 = sld [smem:[%s60]]
  %s62 = scalar_lea.smem %s0, 31
  %s63 = sld [smem:[%s62]]
  %s64 = scalar_lea.smem %s0, 32
  %s65 = sld [smem:[%s64]]
  %s66 = scalar_lea.smem %s0, 33
  %s67 = sld [smem:[%s66]]
  %s68 = scalar_lea.smem %s0, 34
  %s69 = sld [smem:[%s68]]
  %s70 = scalar_lea.smem %s0, 35
  %s71 = sld [smem:[%s70]]
  %72 = xla_tuple %s69, %s71
  %s73 = sld [smem:[#allocation0]]
  $region166: #{remasker_forward.1} parent=0
    _
  %s75 = ssub.s32 1, %s73
  %s76 = scalar_select 0, %s75, %s73
  %v77 = vstv %s67
  %78 = vst [vmem:[#allocation4] sm:$0x1] %v77
  $region1: #{remasker_forward.1} parent=0
    #allocation5 [shape = 'u8[1024]{0}', space=smem, size = 0x400, scoped, tag = 'input window, operand 0, single buffered']
    #allocation6 [shape = 's32[1]{0}', space=sflag, size = 0x4, scoped, tag = 'scoped memory for remasker_forward.1']
    #allocation7 [shape = 's32[1]{0}', space=sflag, size = 0x4, scoped, tag = 'scoped memory for remasker_forward.1']
    #allocation8 [shape = 's32[1]{0}', space=sflag, size = 0x4, scoped, tag = 'scoped memory for remasker_forward.1']
    #allocation9 [shape = 'u8[1024]{0}', space=smem, size = 0x400, scoped, tag = 'input window, operand 1, single buffered']
    #allocation10 [shape = 's32[1]{0}', space=sflag, size = 0x4, scoped, tag = 'scoped memory for remasker_forward.1']
    #allocation11 [shape = 'u8[1024]{0}', space=smem, size = 0x400, scoped, tag = 'input window, operand 2, single buffered']
    #allocation12 [shape = 'u8[1024]{0}', space=vmem, size = 0x400, scoped, tag = 'output window, operand 0, single buffered']
    #allocation13 [shape = 'u8[512]{0}', space=smem, size = 0x200, scoped, tag = 'output window, operand 1, single buffered']
    %79 = vsyncpa [#allocation8], 0
    %80 = vsyncpa [#allocation10], 0
    %81 = vsyncpa [#allocation6], 0
    %82 = vsyncpa [#allocation7], 0
    // Predicated region
    $region2: #{remasker_forward.1} parent=1 // pred_check
      _
    $region3: #{remasker_forward.1} parent=1 // pred_check_branch
      %84 = sbr.rel (0) target = $region5
    $region4: #{remasker_forward.1} parent=1 // pred_region
      %86 = vsyncadd [#allocation8], 0
      %s88 = sshll.u32 %s1, 4
      %s89 = int_to_ptr.vmem [resolvable:$true] %s88
      %91 = dma.vmem_to_smem %s89, 32, [#allocation5], [#allocation8]
    $region5: #{remasker_forward.1} parent=1 // pred_fallthru
      _
    // Predicated region
    $region6: #{remasker_forward.1} parent=1 // pred_check
      _
    $region7: #{remasker_forward.1} parent=1 // pred_check_branch
      %93 = sbr.rel (0) target = $region9
    $region8: #{remasker_forward.1} parent=1 // pred_region
      %95 = vsyncadd [#allocation10], 0
      %s97 = sshll.u32 %s3, 4
      %s98 = int_to_ptr.vmem [resolvable:$true] %s97
      %100 = dma.vmem_to_smem %s98, 32, [#allocation9], [#allocation10]
    $region9: #{remasker_forward.1} parent=1 // pred_fallthru
      _
    // Predicated region
    $region10: #{remasker_forward.1} parent=1 // pred_check
      _
    $region11: #{remasker_forward.1} parent=1 // pred_check_branch
      %102 = sbr.rel (0) target = $region13
    $region12: #{remasker_forward.1} parent=1 // pred_region
      %104 = vsyncadd [#allocation10], 0
      %s106 = sshll.u32 %s5, 4
      %s107 = int_to_ptr.vmem [resolvable:$true] %s106
      %109 = dma.vmem_to_smem %s107, 32, [#allocation11], [#allocation10]
    $region13: #{remasker_forward.1} parent=1 // pred_fallthru
      _
    // Predicated region
    $region14: #{remasker_forward.1} parent=1 // pred_check
      _
    $region15: #{remasker_forward.1} parent=1 // pred_check_branch
      %111 = sbr.rel (0) target = $region17
    $region16: #{remasker_forward.1} parent=1 // pred_region
      _
    $region17: #{remasker_forward.1} parent=1 // pred_fallthru
      _
    // Predicated region
    $region18: #{remasker_forward.1} parent=1 // pred_check
      _
    $region19: #{remasker_forward.1} parent=1 // pred_check_branch
      %113 = sbr.rel (0) target = $region21
    $region20: #{remasker_forward.1} parent=1 // pred_region
      _
    $region21: #{remasker_forward.1} parent=1 // pred_fallthru
      _
    // Predicated region
    $region22: #{remasker_forward.1} parent=1 // pred_check
      _
    $region23: #{remasker_forward.1} parent=1 // pred_check_branch
      %115 = sbr.rel (0) target = $region25
    $region24: #{remasker_forward.1} parent=1 // pred_region
      _
    $region25: #{remasker_forward.1} parent=1 // pred_fallthru
      _
    // Predicated region
    $region26: #{remasker_forward.1} parent=1 // pred_check
      _
    $region27: #{remasker_forward.1} parent=1 // pred_check_branch
      %117 = sbr.rel (0) target = $region29
    $region28: #{remasker_forward.1} parent=1 // pred_region
      _
    $region29: #{remasker_forward.1} parent=1 // pred_fallthru
      _
    // Predicated region
    $region30: #{remasker_forward.1} parent=1 // pred_check
      _
    $region31: #{remasker_forward.1} parent=1 // pred_check_branch
      %119 = sbr.rel (0) target = $region33
    $region32: #{remasker_forward.1} parent=1 // pred_region
      _
    $region33: #{remasker_forward.1} parent=1 // pred_fallthru
      _
    // Predicated region
    $region34: #{remasker_forward.1} parent=1 // pred_check
      _
    $region35: #{remasker_forward.1} parent=1 // pred_check_branch
      %121 = sbr.rel (0) target = $region37
    $region36: #{remasker_forward.1} parent=1 // pred_region
      _
    $region37: #{remasker_forward.1} parent=1 // pred_fallthru
      _
    // Predicated region
    $region38: #{remasker_forward.1} parent=1 // pred_check
      _
    $region39: #{remasker_forward.1} parent=1 // pred_check_branch
      %123 = sbr.rel (0) target = $region41
    $region40: #{remasker_forward.1} parent=1 // pred_region
      _
    $region41: #{remasker_forward.1} parent=1 // pred_fallthru
      _
    // Predicated region
    $region42: #{remasker_forward.1} parent=1 // pred_check
      _
    $region43: #{remasker_forward.1} parent=1 // pred_check_branch
      %125 = sbr.rel (0) target = $region45
    $region44: #{remasker_forward.1} parent=1 // pred_region
      _
    $region45: #{remasker_forward.1} parent=1 // pred_fallthru
      _
    // Predicated region
    $region46: #{remasker_forward.1} parent=1 // pred_check
      _
    $region47: #{remasker_forward.1} parent=1 // pred_check_branch
      %127 = sbr.rel (0) target = $region49
    $region48: #{remasker_forward.1} parent=1 // pred_region
      _
    $region49: #{remasker_forward.1} parent=1 // pred_fallthru
      _
    // Predicated region
    $region50: #{remasker_forward.1} parent=1 // pred_check
      _
    $region51: #{remasker_forward.1} parent=1 // pred_check_branch
      %129 = sbr.rel (0) target = $region53
    $region52: #{remasker_forward.1} parent=1 // pred_region
      _
    $region53: #{remasker_forward.1} parent=1 // pred_fallthru
      _
    // Predicated region
    $region54: #{remasker_forward.1} parent=1 // pred_check
      _
    $region55: #{remasker_forward.1} parent=1 // pred_check_branch
      %131 = sbr.rel (0) target = $region57
    $region56: #{remasker_forward.1} parent=1 // pred_region
      _
    $region57: #{remasker_forward.1} parent=1 // pred_fallthru
      _
    // Predicated region
    $region58: #{remasker_forward.1} parent=1 // pred_check
      _
    $region59: #{remasker_forward.1} parent=1 // pred_check_branch
      %133 = sbr.rel (0) target = $region61
    $region60: #{remasker_forward.1} parent=1 // pred_region
      _
    $region61: #{remasker_forward.1} parent=1 // pred_fallthru
      _
    // Predicated region
    $region62: #{remasker_forward.1} parent=1 // pred_check
      _
    $region63: #{remasker_forward.1} parent=1 // pred_check_branch
      %135 = sbr.rel (0) target = $region65
    $region64: #{remasker_forward.1} parent=1 // pred_region
      _
    $region65: #{remasker_forward.1} parent=1 // pred_fallthru
      _
    // Predicated region
    $region66: #{remasker_forward.1} parent=1 // pred_check
      _
    $region67: #{remasker_forward.1} parent=1 // pred_check_branch
      %137 = sbr.rel (0) target = $region69
    $region68: #{remasker_forward.1} parent=1 // pred_region
      _
    $region69: #{remasker_forward.1} parent=1 // pred_fallthru
      _
    // Predicated region
    $region70: #{remasker_forward.1} parent=1 // pred_check
      _
    $region71: #{remasker_forward.1} parent=1 // pred_check_branch
      %139 = sbr.rel (0) target = $region73
    $region72: #{remasker_forward.1} parent=1 // pred_region
      _
    $region73: #{remasker_forward.1} parent=1 // pred_fallthru
      _
    // Predicated region
    $region74: #{remasker_forward.1} parent=1 // pred_check
      _
    $region75: #{remasker_forward.1} parent=1 // pred_check_branch
      %141 = sbr.rel (0) target = $region77
    $region76: #{remasker_forward.1} parent=1 // pred_region
      _
    $region77: #{remasker_forward.1} parent=1 // pred_fallthru
      _
    // Predicated region
    $region78: #{remasker_forward.1} parent=1 // pred_check
      _
    $region79: #{remasker_forward.1} parent=1 // pred_check_branch
      %143 = sbr.rel (0) target = $region81
    $region80: #{remasker_forward.1} parent=1 // pred_region
      _
    $region81: #{remasker_forward.1} parent=1 // pred_fallthru
      _
    // Predicated region
    $region82: #{remasker_forward.1} parent=1 // pred_check
      _
    $region83: #{remasker_forward.1} parent=1 // pred_check_branch
      %145 = sbr.rel (0) target = $region85
    $region84: #{remasker_forward.1} parent=1 // pred_region
      _
    $region85: #{remasker_forward.1} parent=1 // pred_fallthru
      _
    // Predicated region
    $region86: #{remasker_forward.1} parent=1 // pred_check
      _
    $region87: #{remasker_forward.1} parent=1 // pred_check_branch
      %147 = sbr.rel (0) target = $region89
    $region88: #{remasker_forward.1} parent=1 // pred_region
      _
    $region89: #{remasker_forward.1} parent=1 // pred_fallthru
      _
    // Predicated region
    $region90: #{remasker_forward.1} parent=1 // pred_check
      _
    $region91: #{remasker_forward.1} parent=1 // pred_check_branch
      %149 = sbr.rel (0) target = $region93
    $region92: #{remasker_forward.1} parent=1 // pred_region
      _
    $region93: #{remasker_forward.1} parent=1 // pred_fallthru
      _
    // Predicated region
    $region94: #{remasker_forward.1} parent=1 // pred_check
      _
    $region95: #{remasker_forward.1} parent=1 // pred_check_branch
      %151 = sbr.rel (0) target = $region97
    $region96: #{remasker_forward.1} parent=1 // pred_region
      _
    $region97: #{remasker_forward.1} parent=1 // pred_fallthru
      _
    // Predicated region
    $region98: #{remasker_forward.1} parent=1 // pred_check
      _
    $region99: #{remasker_forward.1} parent=1 // pred_check_branch
      %153 = sbr.rel (0) target = $region101
    $region100: #{remasker_forward.1} parent=1 // pred_region
      _
    $region101: #{remasker_forward.1} parent=1 // pred_fallthru
      _
    // Predicated region
    $region102: #{remasker_forward.1} parent=1 // pred_check
      _
    $region103: #{remasker_forward.1} parent=1 // pred_check_branch
      %155 = sbr.rel (0) target = $region105
    $region104: #{remasker_forward.1} parent=1 // pred_region
      _
    $region105: #{remasker_forward.1} parent=1 // pred_fallthru
      _
    // Predicated region
    $region106: #{remasker_forward.1} parent=1 // pred_check
      _
    $region107: #{remasker_forward.1} parent=1 // pred_check_branch
      %157 = sbr.rel (0) target = $region109
    $region108: #{remasker_forward.1} parent=1 // pred_region
      _
    $region109: #{remasker_forward.1} parent=1 // pred_fallthru
      _
    // Predicated region
    $region110: #{remasker_forward.1} parent=1 // pred_check
      _
    $region111: #{remasker_forward.1} parent=1 // pred_check_branch
      %159 = sbr.rel (0) target = $region113
    $region112: #{remasker_forward.1} parent=1 // pred_region
      _
    $region113: #{remasker_forward.1} parent=1 // pred_fallthru
      _
    // Predicated region
    $region114: #{remasker_forward.1} parent=1 // pred_check
      _
    $region115: #{remasker_forward.1} parent=1 // pred_check_branch
      %161 = sbr.rel (0) target = $region117
    $region116: #{remasker_forward.1} parent=1 // pred_region
      _
    $region117: #{remasker_forward.1} parent=1 // pred_fallthru
      _
    // Predicated region
    $region118: #{remasker_forward.1} parent=1 // pred_check
      _
    $region119: #{remasker_forward.1} parent=1 // pred_check_branch
      %163 = sbr.rel (0) target = $region121
    $region120: #{remasker_forward.1} parent=1 // pred_region
      _
    $region121: #{remasker_forward.1} parent=1 // pred_fallthru
      _
    // Predicated region
    $region122: #{remasker_forward.1} parent=1 // pred_check
      _
    $region123: #{remasker_forward.1} parent=1 // pred_check_branch
      %165 = sbr.rel (0) target = $region125
    $region124: #{remasker_forward.1} parent=1 // pred_region
      _
    $region125: #{remasker_forward.1} parent=1 // pred_fallthru
      _
    // Predicated region
    $region126: #{remasker_forward.1} parent=1 // pred_check
      _
    $region127: #{remasker_forward.1} parent=1 // pred_check_branch
      %167 = sbr.rel (0) target = $region129
    $region128: #{remasker_forward.1} parent=1 // pred_region
      _
    $region129: #{remasker_forward.1} parent=1 // pred_fallthru
      _
    // Predicated region
    $region130: #{remasker_forward.1} parent=1 // pred_check
      _
    $region131: #{remasker_forward.1} parent=1 // pred_check_branch
      %169 = sbr.rel (0) target = $region133
    $region132: #{remasker_forward.1} parent=1 // pred_region
      _
    $region133: #{remasker_forward.1} parent=1 // pred_fallthru
      _
    // Predicated region
    $region134: #{remasker_forward.1} parent=1 // pred_check
      _
    $region135: #{remasker_forward.1} parent=1 // pred_check_branch
      %171 = sbr.rel (0) target = $region137
    $region136: #{remasker_forward.1} parent=1 // pred_region
      _
    $region137: #{remasker_forward.1} parent=1 // pred_fallthru
      _
    // Predicated region
    $region138: #{remasker_forward.1} parent=1 // pred_check
      _
    $region139: #{remasker_forward.1} parent=1 // pred_check_branch
      %173 = sbr.rel (0) target = $region141
    $region140: #{remasker_forward.1} parent=1 // pred_region
      %175 = dma.done [#allocation8], 32
    $region141: #{remasker_forward.1} parent=1 // pred_fallthru
      _
    // Predicated region
    $region142: #{remasker_forward.1} parent=1 // pred_check
      _
    $region143: #{remasker_forward.1} parent=1 // pred_check_branch
      %177 = sbr.rel (0) target = $region145
    $region144: #{remasker_forward.1} parent=1 // pred_region
      %179 = dma.done [#allocation10], 32
    $region145: #{remasker_forward.1} parent=1 // pred_fallthru
      _
    // Predicated region
    $region146: #{remasker_forward.1} parent=1 // pred_check
      _
    $region147: #{remasker_forward.1} parent=1 // pred_check_branch
      %181 = sbr.rel (0) target = $region149
    $region148: #{remasker_forward.1} parent=1 // pred_region
      %183 = dma.done [#allocation10], 32
    $region149: #{remasker_forward.1} parent=1 // pred_fallthru
      _
    %184 = sfence
    %v185 = vld [vmem:[%s13] sm:$0x1]
    %v186 = vld [vmem:[%s15] sm:$0x1]
    %v187 = vld [vmem:[%s17] sm:$0x1]
    %v188 = vld [vmem:[%s19] sm:$0x1]
    %v189 = vadd.f32 %v187, %v188
    %vm190 = vcmask 516096
    %191 = vst.msk [vmem:[#allocation2] sm:$0x1] %vm190, %v189
    %s192 = sld [smem:[#allocation9]]
    %s193 = sld [smem:[#allocation5 + %s192]]
    %v194 = vstv %s193
    %v195 = vmul.f32 %v194, %v185
    %v196 = vadd.f32 %v195, %v186
    %s197 = sadd.s32 %s192, 1
    %s198 = scalar_lea.vmem %s19, %s197
    %v199 = vld [vmem:[%s198] sm:$0x1]
    %v200 = vadd.f32 %v196, %v199
    %201 = vst.msk [vmem:[#allocation2 + $0x1] sm:$0x1] %vm190, %v200
    %s202 = sld [smem:[#allocation9 + $0x1]]
    %s203 = sld [smem:[#allocation5 + %s202]]
    %v204 = vstv %s203
    %v205 = vmul.f32 %v204, %v185
    %v206 = vadd.f32 %v205, %v186
    %s207 = sadd.s32 %s202, 1
    %s208 = scalar_lea.vmem %s19, %s207
    %v209 = vld [vmem:[%s208] sm:$0x1]
    %v210 = vadd.f32 %v206, %v209
    %211 = vst.msk [vmem:[#allocation2 + $0x2] sm:$0x1] %vm190, %v210
    %s212 = sld [smem:[#allocation9 + $0x2]]
    %s213 = sld [smem:[#allocation5 + %s212]]
    %v214 = vstv %s213
    %v215 = vmul.f32 %v214, %v185
    %v216 = vadd.f32 %v215, %v186
    %s217 = sadd.s32 %s212, 1
    %s218 = scalar_lea.vmem %s19, %s217
    %v219 = vld [vmem:[%s218] sm:$0x1]
    %v220 = vadd.f32 %v216, %v219
    %221 = vst.msk [vmem:[#allocation2 + $0x3] sm:$0x1] %vm190, %v220
    %s222 = sld [smem:[#allocation9 + $0x3]]
    %s223 = sld [smem:[#allocation5 + %s222]]
    %v224 = vstv %s223
    %v225 = vmul.f32 %v224, %v185
    %v226 = vadd.f32 %v225, %v186
    %s227 = sadd.s32 %s222, 1
    %s228 = scalar_lea.vmem %s19, %s227
    %v229 = vld [vmem:[%s228] sm:$0x1]
    %v230 = vadd.f32 %v226, %v229
    %231 = vst.msk [vmem:[#allocation2 + $0x4] sm:$0x1] %vm190, %v230
    %232 = vst.msk [vmem:[#allocation2 + $0x5] sm:$0x1] %vm190, %v189
    %s233 = sld [smem:[#allocation9 + $0x80]]
    %s234 = sshra.s32 %s233, 7
    %s235 = sand.u32 %s233, 127
    %s236 = sadd.s32 %s234, 1
    %s237 = smul.u32 %s236, 128
    %s238 = sshra.s32 %s233, 7
    %s239 = sand.u32 %s233, 127
    %s240 = sadd.s32 %s237, %s239
    %s241 = sld [smem:[#allocation5 + %s240]]
    %v242 = vstv %s241
    %v243 = vmul.f32 %v242, %v185
    %v244 = vadd.f32 %v243, %v186
    %s245 = sadd.s32 %s233, 1
    %s246 = scalar_lea.vmem %s19, %s245
    %v247 = vld [vmem:[%s246] sm:$0x1]
    %v248 = vadd.f32 %v244, %v247
    %249 = vst.msk [vmem:[#allocation2 + $0x6] sm:$0x1] %vm190, %v248
    %s250 = sld [smem:[#allocation9 + $0x81]]
    %s251 = sshra.s32 %s250, 7
    %s252 = sand.u32 %s250, 127
    %s253 = sadd.s32 %s251, 1
    %s254 = smul.u32 %s253, 128
    %s255 = sshra.s32 %s250, 7
    %s256 = sand.u32 %s250, 127
    %s257 = sadd.s32 %s254, %s256
    %s258 = sld [smem:[#allocation5 + %s257]]
    %v259 = vstv %s258
    %v260 = vmul.f32 %v259, %v185
    %v261 = vadd.f32 %v260, %v186
    %s262 = sadd.s32 %s250, 1
    %s263 = scalar_lea.vmem %s19, %s262
    %v264 = vld [vmem:[%s263] sm:$0x1]
    %v265 = vadd.f32 %v261, %v264
    %266 = vst.msk [vmem:[#allocation2 + $0x7] sm:$0x1] %vm190, %v265
    %s267 = sld [smem:[#allocation9 + $0x82]]
    %s268 = sshra.s32 %s267, 7
    %s269 = sand.u32 %s267, 127
    %s270 = sadd.s32 %s268, 1
    %s271 = smul.u32 %s270, 128
    %s272 = sshra.s32 %s267, 7
    %s273 = sand.u32 %s267, 127
    %s274 = sadd.s32 %s271, %s273
    %s275 = sld [smem:[#allocation5 + %s274]]
    %v276 = vstv %s275
    %v277 = vmul.f32 %v276, %v185
    %v278 = vadd.f32 %v277, %v186
    %s279 = sadd.s32 %s267, 1
    %s280 = scalar_lea.vmem %s19, %s279
    %v281 = vld [vmem:[%s280] sm:$0x1]
    %v282 = vadd.f32 %v278, %v281
    %283 = vst.msk [vmem:[#allocation2 + $0x8] sm:$0x1] %vm190, %v282
    %s284 = sld [smem:[#allocation9 + $0x83]]
    %s285 = sshra.s32 %s284, 7
    %s286 = sand.u32 %s284, 127
    %s287 = sadd.s32 %s285, 1
    %s288 = smul.u32 %s287, 128
    %s289 = sshra.s32 %s284, 7
    %s290 = sand.u32 %s284, 127
    %s291 = sadd.s32 %s288, %s290
    %s292 = sld [smem:[#allocation5 + %s291]]
    %v293 = vstv %s292
    %v294 = vmul.f32 %v293, %v185
    %v295 = vadd.f32 %v294, %v186
    %s296 = sadd.s32 %s284, 1
    %s297 = scalar_lea.vmem %s19, %s296
    %v298 = vld [vmem:[%s297] sm:$0x1]
    %v299 = vadd.f32 %v295, %v298
    %300 = vst.msk [vmem:[#allocation2 + $0x9] sm:$0x1] %vm190, %v299
    %v301 = vld [vmem:[#allocation2] sm:$0xff]
    %v302 = vld [vmem:[#allocation2 + $0x8] sm:$0x3]
    %v303 = vld [vmem:[%s25] sm:$0xff]
    %v304 = vld [vmem:[%s25 + $0x8] sm:$0x3]
    %v305 = vld [vmem:[%s29] sm:$0x1]
    %v306 = vld [vmem:[%s31] sm:$0x1]
    %v307 = vld [vmem:[%s33] sm:$0xff]
    %v308 = vld [vmem:[%s33 + $0x8] sm:$0xff]
    %v309 = vld [vmem:[%s33 + $0x10] sm:$0xff]
    %v310 = vld [vmem:[%s33 + $0x18] sm:$0xff]
    %v311 = vld [vmem:[%s33 + $0x20] sm:$0xff]
    %v312 = vld [vmem:[%s33 + $0x28] sm:$0xff]
    %v313 = vld [vmem:[%s33 + $0x30] sm:$0xff]
    %v314 = vld [vmem:[%s33 + $0x38] sm:$0xff]
    %v315 = vld [vmem:[%s33 + $0x40] sm:$0xff]
    %v316 = vld [vmem:[%s33 + $0x48] sm:$0xff]
    %v317 = vld [vmem:[%s33 + $0x50] sm:$0xff]
    %v318 = vld [vmem:[%s33 + $0x58] sm:$0xff]
    %v319 = vld [vmem:[%s33 + $0x60] sm:$0xff]
    %v320 = vld [vmem:[%s33 + $0x68] sm:$0xff]
    %v321 = vld [vmem:[%s33 + $0x70] sm:$0xff]
    %v322 = vld [vmem:[%s33 + $0x78] sm:$0xff]
    %v323 = vld [vmem:[%s35] sm:$0x3]
    %v324 = vld [vmem:[%s37] sm:$0xff]
    %v325 = vld [vmem:[%s37 + $0x8] sm:$0xff]
    %v326 = vld [vmem:[%s37 + $0x10] sm:$0xff]
    %v327 = vld [vmem:[%s37 + $0x18] sm:$0xff]
    %v328 = vld [vmem:[%s37 + $0x20] sm:$0xff]
    %v329 = vld [vmem:[%s37 + $0x28] sm:$0xff]
    %v330 = vld [vmem:[%s37 + $0x30] sm:$0xff]
    %v331 = vld [vmem:[%s37 + $0x38] sm:$0xff]
    %v332 = vld [vmem:[%s39] sm:$0x1]
    %v333 = vld [vmem:[%s41] sm:$0x1]
    %v334 = vld [vmem:[%s43] sm:$0x1]
    %v335 = vld [vmem:[%s45] sm:$0xff]
    %v336 = vld [vmem:[%s45 + $0x8] sm:$0xff]
    %v337 = vld [vmem:[%s45 + $0x10] sm:$0xff]
    %v338 = vld [vmem:[%s45 + $0x18] sm:$0xff]
    %v339 = vld [vmem:[%s45 + $0x20] sm:$0xff]
    %v340 = vld [vmem:[%s45 + $0x28] sm:$0xff]
    %v341 = vld [vmem:[%s45 + $0x30] sm:$0xff]
    %v342 = vld [vmem:[%s45 + $0x38] sm:$0xff]
    %v343 = vld [vmem:[%s45 + $0x40] sm:$0xff]
    %v344 = vld [vmem:[%s45 + $0x48] sm:$0xff]
    %v345 = vld [vmem:[%s45 + $0x50] sm:$0xff]
    %v346 = vld [vmem:[%s45 + $0x58] sm:$0xff]
    %v347 = vld [vmem:[%s45 + $0x60] sm:$0xff]
    %v348 = vld [vmem:[%s45 + $0x68] sm:$0xff]
    %v349 = vld [vmem:[%s45 + $0x70] sm:$0xff]
    %v350 = vld [vmem:[%s45 + $0x78] sm:$0xff]
    %v351 = vld [vmem:[%s47] sm:$0x3]
    %v352 = vld [vmem:[%s49] sm:$0xff]
    %v353 = vld [vmem:[%s49 + $0x8] sm:$0xff]
    %v354 = vld [vmem:[%s49 + $0x10] sm:$0xff]
    %v355 = vld [vmem:[%s49 + $0x18] sm:$0xff]
    %v356 = vld [vmem:[%s49 + $0x20] sm:$0xff]
    %v357 = vld [vmem:[%s49 + $0x28] sm:$0xff]
    %v358 = vld [vmem:[%s49 + $0x30] sm:$0xff]
    %v359 = vld [vmem:[%s49 + $0x38] sm:$0xff]
    %v360 = vld [vmem:[%s49 + $0x40] sm:$0xff]
    %v361 = vld [vmem:[%s49 + $0x48] sm:$0xff]
    %v362 = vld [vmem:[%s49 + $0x50] sm:$0xff]
    %v363 = vld [vmem:[%s49 + $0x58] sm:$0xff]
    %v364 = vld [vmem:[%s49 + $0x60] sm:$0xff]
    %v365 = vld [vmem:[%s49 + $0x68] sm:$0xff]
    %v366 = vld [vmem:[%s49 + $0x70] sm:$0xff]
    %v367 = vld [vmem:[%s49 + $0x78] sm:$0xff]
    %v368 = vld [vmem:[%s49 + $0x80] sm:$0xff]
    %v369 = vld [vmem:[%s49 + $0x88] sm:$0xff]
    %v370 = vld [vmem:[%s49 + $0x90] sm:$0xff]
    %v371 = vld [vmem:[%s49 + $0x98] sm:$0xff]
    %v372 = vld [vmem:[%s49 + $0xa0] sm:$0xff]
    %v373 = vld [vmem:[%s49 + $0xa8] sm:$0xff]
    %v374 = vld [vmem:[%s49 + $0xb0] sm:$0xff]
    %v375 = vld [vmem:[%s49 + $0xb8] sm:$0xff]
    %v376 = vld [vmem:[%s49 + $0xc0] sm:$0xff]
    %v377 = vld [vmem:[%s49 + $0xc8] sm:$0xff]
    %v378 = vld [vmem:[%s49 + $0xd0] sm:$0xff]
    %v379 = vld [vmem:[%s49 + $0xd8] sm:$0xff]
    %v380 = vld [vmem:[%s49 + $0xe0] sm:$0xff]
    %v381 = vld [vmem:[%s49 + $0xe8] sm:$0xff]
    %v382 = vld [vmem:[%s49 + $0xf0] sm:$0xff]
    %v383 = vld [vmem:[%s49 + $0xf8] sm:$0xff]
    %v384 = vld [vmem:[%s51] sm:$0x1]
    %vm385 = vcmask 523264
    %v386 = vsel %vm385, %v301, 0.0
    %387 = vadd.xlane.f32.xlu0 %v386
    %v388 = vpop.xlane.xlu0 %387
    %vm389 = vcmask 517120
    %v390 = vsel %vm389, %v302, 0.0
    %391 = vadd.xlane.f32.xlu0 %v390
    %v392 = vpop.xlane.xlu0 %391
    %v393 = vrcp.pop 64.0
    %v394 = vmul.f32 64.0, %v393
    %v395 = vsub.f32 1.0, %v394
    %v396 = vmul.f32 %v393, %v395
    %v397 = vadd.f32 %v393, %v396
    %vm398 = vweird.f32 %v393
    %v399 = vsel %vm398, %v393, %v397
    %v400 = vmul.f32 %v388, %v399
    %v401 = vmul.f32 %v392, %v399
    %v402 = vsub.f32 %v301, %v400
    %v403 = vsub.f32 %v302, %v401
    %v404 = vmul.f32 %v402, %v402
    %v405 = vmul.f32 %v403, %v403
    %v406 = vsel %vm385, %v404, 0.0
    %407 = vadd.xlane.f32.xlu0 %v406
    %v408 = vpop.xlane.xlu0 %407
    %v409 = vsel %vm389, %v405, 0.0
    %410 = vadd.xlane.f32.xlu0 %v409
    %v411 = vpop.xlane.xlu0 %410
    %v412 = vmul.f32 %v408, %v399
    %v413 = vmul.f32 %v411, %v399
    %v414 = vadd.f32 %v412, 1e-06
    %v415 = vadd.f32 %v413, 1e-06
    %v416 = vrsqrt.pop %v414
    %v417 = vmul.f32 %v416, %v414
    %v418 = vmul.f32 %v417, %v416
    %v419 = vmul.f32 0.5, %v418
    %v420 = vsub.f32 1.5, %v419
    %v421 = vmul.f32 %v416, %v420
    %vm422 = vweird.f32 %v414
    %vm423 = vweird.f32 %v416
    %vm424 = vmor %vm422, %vm423
    %v425 = vsel %vm424, %v416, %v421
    %v426 = vrsqrt.pop %v415
    %v427 = vmul.f32 %v426, %v415
    %v428 = vmul.f32 %v427, %v426
    %v429 = vmul.f32 0.5, %v428
    %v430 = vsub.f32 1.5, %v429
    %v431 = vmul.f32 %v426, %v430
    %vm432 = vweird.f32 %v415
    %vm433 = vweird.f32 %v426
    %vm434 = vmor %vm432, %vm433
    %v435 = vsel %vm434, %v426, %v431
    %v436 = vmul.f32 %v402, %v425
    %v437 = vmul.f32 %v403, %v435
    %v439 = vperm.slane %v305, 0
    %v441 = vmul.f32 %v436, %v439
    %v442 = vmul.f32 %v437, %v439
    %v444 = vperm.slane %v306, 0
    %v446 = vadd.f32 %v441, %v444
    %v447 = vadd.f32 %v442, %v444
    %v449 = vperm.slane %v323, 0
    %v450 = vperm.slane %v323, 1
    %v454 = vsel %vm385, %v446, 0
    %v457 = vsel %vm385, %v447, 0
    %459 = vmatpush.msra.mxu0 0.0
    %460 = vmatpush.msra.mxu0 0.0
    %461 = vmatpush.msra.mxu0 0.0
    %462 = vmatpush.msra.mxu0 0.0
    %463 = vmatpush.msra.mxu0 0.0
    %464 = vmatpush.msra.mxu0 0.0
    %465 = vmatpush.msra.mxu0 0.0
    %466 = vmatpush.msra.mxu0 0.0
    %467 = vmatpush.msra.mxu0 %v321
    %468 = vmatpush.msra.mxu0 %v319
    %469 = vmatpush.msra.mxu0 %v317
    %470 = vmatpush.msra.mxu0 %v315
    %471 = vmatpush.msra.mxu0 %v313
    %472 = vmatpush.msra.mxu0 %v311
    %473 = vmatpush.msra.mxu0 %v309
    %474 = vmatpush.msra.mxu0 %v307
    %475 = vmatmul.f32.gmra.mxu0 %v454
    %v476 = vpop.f32.mrf.mxu0
    %v477 = vadd.f32 %v449, %v476
    %478 = vmatmul.f32.gmra.mxu0 %v457
    %v479 = vpop.f32.mrf.mxu0
    %v480 = vadd.f32 %v449, %v479
    %481 = vdwg.mxu0
    %482 = vmatpush.msra.mxu0 0.0
    %483 = vmatpush.msra.mxu0 0.0
    %484 = vmatpush.msra.mxu0 0.0
    %485 = vmatpush.msra.mxu0 0.0
    %486 = vmatpush.msra.mxu0 0.0
    %487 = vmatpush.msra.mxu0 0.0
    %488 = vmatpush.msra.mxu0 0.0
    %489 = vmatpush.msra.mxu0 0.0
    %490 = vmatpush.msra.mxu0 %v322
    %491 = vmatpush.msra.mxu0 %v320
    %492 = vmatpush.msra.mxu0 %v318
    %493 = vmatpush.msra.mxu0 %v316
    %494 = vmatpush.msra.mxu0 %v314
    %495 = vmatpush.msra.mxu0 %v312
    %496 = vmatpush.msra.mxu0 %v310
    %497 = vmatpush.msra.mxu0 %v308
    %498 = vmatmul.f32.gmra.mxu0 %v454
    %v499 = vpop.f32.mrf.mxu0
    %v500 = vadd.f32 %v450, %v499
    %501 = vmatmul.f32.gmra.mxu0 %v457
    %v502 = vpop.f32.mrf.mxu0
    %v503 = vadd.f32 %v450, %v502
    %504 = vdwg.mxu0
    %507 = vrot.lane.b32.xlu0 %v477, 112
    %v508 = vpop.permute.xlu0 %507
    %509 = vrot.lane.b32.xlu0 %v480, 112
    %v510 = vpop.permute.xlu0 %509
    %vm511 = vcmask 130048
    %v512 = vsel %vm511, %v477, 0
    %v514 = vsel %vm511, %v480, 0
    %v516 = vsel %vm511, %v508, 0
    %v518 = vsel %vm511, %v510, 0
    %520 = vmatpush.xpose.msra.mxu0 0.0
    %521 = vmatpush.xpose.msra.mxu0 0.0
    %522 = vmatpush.xpose.msra.mxu0 0.0
    %523 = vmatpush.xpose.msra.mxu0 0.0
    %524 = vmatpush.xpose.msra.mxu0 0.0
    %525 = vmatpush.xpose.msra.mxu0 0.0
    %526 = vmatpush.xpose.msra.mxu0 0.0
    %527 = vmatpush.xpose.msra.mxu0 0.0
    %528 = vmatpush.xpose.msra.mxu0 0.0
    %529 = vmatpush.xpose.msra.mxu0 0.0
    %530 = vmatpush.xpose.msra.mxu0 0.0
    %531 = vmatpush.xpose.msra.mxu0 0.0
    %532 = vmatpush.xpose.msra.mxu0 0.0
    %533 = vmatpush.xpose.msra.mxu0 0.0
    %534 = vmatpush.xpose.msra.mxu0 %v518
    %535 = vmatpush.xpose.msra.mxu0 %v516
    %536 = vmatmul.f32.gmra.mxu0 %v512
    %v537 = vpop.f32.mrf.mxu0
    %v538 = vadd.f32 0.0, %v537
    %539 = vmatmul.f32.gmra.mxu0 %v514
    %v540 = vpop.f32.mrf.mxu0
    %v541 = vadd.f32 0.0, %v540
    %542 = vdwg.mxu0
    %v543 = vmul.f32 %v538, 0.25
    %v544 = vmul.f32 %v541, 0.25
    %v545 = vadd.f32 %v543, %v303
    %v546 = vadd.f32 %v544, %v304
    %vm547 = vcmask 80896
    %v548 = vsel %vm547, %v545, -inf
    %549 = vmax.xlane.f32.xlu0 %v548
    %v550 = vpop.xlane.xlu0 %549
    %vm551 = vcmask 74752
    %v552 = vsel %vm551, %v546, -inf
    %553 = vmax.xlane.f32.xlu0 %v552
    %v554 = vpop.xlane.xlu0 %553
    %v555 = vsub.f32 %v545, %v550
    %v556 = vsub.f32 %v546, %v554
    %v557 = vmul.f32 %v555, 1.442695
    %v558 = vpow.pop %v557
    %v559 = vmul.f32 %v556, 1.442695
    %v560 = vpow.pop %v559
    %v561 = vsel %vm547, %v558, 0.0
    %562 = vadd.xlane.f32.xlu0 %v561
    %v563 = vpop.xlane.xlu0 %562
    %v564 = vsel %vm551, %v560, 0.0
    %565 = vadd.xlane.f32.xlu0 %v564
    %v566 = vpop.xlane.xlu0 %565
    %v567 = vrcp.pop %v563
    %v568 = vmul.f32 %v563, %v567
    %v569 = vsub.f32 1.0, %v568
    %v570 = vmul.f32 %v567, %v569
    %v571 = vadd.f32 %v567, %v570
    %vm572 = vweird.f32 %v563
    %vm573 = vweird.f32 %v567
    %vm574 = vmor %vm572, %vm573
    %v575 = vsel %vm574, %v567, %v571
    %v576 = vand.u32 2147483647, %v563
    %vm577 = vcmp.eq.f32.partialorder %v576, 8.507059e+37
    %v578 = vand.u32 %v563, 2147483648
    %v579 = vor.u32 1.1754944e-38, %v578
    %v580 = vsel %vm577, %v579, %v575
    %v581 = vmul.f32 %v558, %v580
    %v582 = vrcp.pop %v566
    %v583 = vmul.f32 %v566, %v582
    %v584 = vsub.f32 1.0, %v583
    %v585 = vmul.f32 %v582, %v584
    %v586 = vadd.f32 %v582, %v585
    %vm587 = vweird.f32 %v566
    %vm588 = vweird.f32 %v582
    %vm589 = vmor %vm587, %vm588
    %v590 = vsel %vm589, %v582, %v586
    %v591 = vand.u32 2147483647, %v566
    %vm592 = vcmp.eq.f32.partialorder %v591, 8.507059e+37
    %v593 = vand.u32 %v566, 2147483648
    %v594 = vor.u32 1.1754944e-38, %v593
    %v595 = vsel %vm592, %v594, %v590
    %v596 = vmul.f32 %v560, %v595
    %597 = vrot.lane.b32.xlu0 %v477, 96
    %v598 = vpop.permute.xlu0 %597
    %599 = vrot.lane.b32.xlu0 %v480, 96
    %v600 = vpop.permute.xlu0 %599
    %v603 = vsel %vm547, %v581, 0
    %v606 = vsel %vm547, %v596, 0
    %vm608 = vcmask 1041408
    %v609 = vsel %vm608, %v600, 0
    %611 = vmatpush.msra.mxu0 0.0
    %612 = vmatpush.msra.mxu0 0.0
    %613 = vmatpush.msra.mxu0 0.0
    %614 = vmatpush.msra.mxu0 0.0
    %615 = vmatpush.msra.mxu0 0.0
    %616 = vmatpush.msra.mxu0 0.0
    %617 = vmatpush.msra.mxu0 0.0
    %618 = vmatpush.msra.mxu0 0.0
    %619 = vmatpush.msra.mxu0 0.0
    %620 = vmatpush.msra.mxu0 0.0
    %621 = vmatpush.msra.mxu0 0.0
    %622 = vmatpush.msra.mxu0 0.0
    %623 = vmatpush.msra.mxu0 0.0
    %624 = vmatpush.msra.mxu0 0.0
    %625 = vmatpush.msra.mxu0 %v609
    %626 = vmatpush.msra.mxu0 %v598
    %627 = vmatmul.f32.gmra.mxu0 %v603
    %v628 = vpop.f32.mrf.mxu0
    %v629 = vadd.f32 0.0, %v628
    %630 = vmatmul.f32.gmra.mxu0 %v606
    %v631 = vpop.f32.mrf.mxu0
    %v632 = vadd.f32 0.0, %v631
    %633 = vdwg.mxu0
    %634 = vrot.lane.b32.xlu0 %v477, 80
    %v635 = vpop.permute.xlu0 %634
    %636 = vrot.lane.b32.xlu0 %v480, 80
    %v637 = vpop.permute.xlu0 %636
    %638 = vrot.lane.b32.xlu0 %v477, 64
    %v639 = vpop.permute.xlu0 %638
    %640 = vrot.lane.b32.xlu0 %v480, 64
    %v641 = vpop.permute.xlu0 %640
    %v642 = vsel %vm511, %v635, 0
    %v644 = vsel %vm511, %v637, 0
    %v646 = vsel %vm511, %v639, 0
    %v648 = vsel %vm511, %v641, 0
    %650 = vmatpush.xpose.msra.mxu0 0.0
    %651 = vmatpush.xpose.msra.mxu0 0.0
    %652 = vmatpush.xpose.msra.mxu0 0.0
    %653 = vmatpush.xpose.msra.mxu0 0.0
    %654 = vmatpush.xpose.msra.mxu0 0.0
    %655 = vmatpush.xpose.msra.mxu0 0.0
    %656 = vmatpush.xpose.msra.mxu0 0.0
    %657 = vmatpush.xpose.msra.mxu0 0.0
    %658 = vmatpush.xpose.msra.mxu0 0.0
    %659 = vmatpush.xpose.msra.mxu0 0.0
    %660 = vmatpush.xpose.msra.mxu0 0.0
    %661 = vmatpush.xpose.msra.mxu0 0.0
    %662 = vmatpush.xpose.msra.mxu0 0.0
    %663 = vmatpush.xpose.msra.mxu0 0.0
    %664 = vmatpush.xpose.msra.mxu0 %v648
    %665 = vmatpush.xpose.msra.mxu0 %v646
    %666 = vmatmul.f32.gmra.mxu0 %v642
    %v667 = vpop.f32.mrf.mxu0
    %v668 = vadd.f32 0.0, %v667
    %669 = vmatmul.f32.gmra.mxu0 %v644
    %v670 = vpop.f32.mrf.mxu0
    %v671 = vadd.f32 0.0, %v670
    %672 = vdwg.mxu0
    %v673 = vmul.f32 %v668, 0.25
    %v674 = vmul.f32 %v671, 0.25
    %v675 = vadd.f32 %v673, %v303
    %v676 = vadd.f32 %v674, %v304
    %v677 = vsel %vm547, %v675, -inf
    %678 = vmax.xlane.f32.xlu0 %v677
    %v679 = vpop.xlane.xlu0 %678
    %v680 = vsel %vm551, %v676, -inf
    %681 = vmax.xlane.f32.xlu0 %v680
    %v682 = vpop.xlane.xlu0 %681
    %v683 = vsub.f32 %v675, %v679
    %v684 = vsub.f32 %v676, %v682
    %v685 = vmul.f32 %v683, 1.442695
    %v686 = vpow.pop %v685
    %v687 = vmul.f32 %v684, 1.442695
    %v688 = vpow.pop %v687
    %v689 = vsel %vm547, %v686, 0.0
    %690 = vadd.xlane.f32.xlu0 %v689
    %v691 = vpop.xlane.xlu0 %690
    %v692 = vsel %vm551, %v688, 0.0
    %693 = vadd.xlane.f32.xlu0 %v692
    %v694 = vpop.xlane.xlu0 %693
    %v695 = vrcp.pop %v691
    %v696 = vmul.f32 %v691, %v695
    %v697 = vsub.f32 1.0, %v696
    %v698 = vmul.f32 %v695, %v697
    %v699 = vadd.f32 %v695, %v698
    %vm700 = vweird.f32 %v691
    %vm701 = vweird.f32 %v695
    %vm702 = vmor %vm700, %vm701
    %v703 = vsel %vm702, %v695, %v699
    %v704 = vand.u32 2147483647, %v691
    %vm705 = vcmp.eq.f32.partialorder %v704, 8.507059e+37
    %v706 = vand.u32 %v691, 2147483648
    %v707 = vor.u32 1.1754944e-38, %v706
    %v708 = vsel %vm705, %v707, %v703
    %v709 = vmul.f32 %v686, %v708
    %v710 = vrcp.pop %v694
    %v711 = vmul.f32 %v694, %v710
    %v712 = vsub.f32 1.0, %v711
    %v713 = vmul.f32 %v710, %v712
    %v714 = vadd.f32 %v710, %v713
    %vm715 = vweird.f32 %v694
    %vm716 = vweird.f32 %v710
    %vm717 = vmor %vm715, %vm716
    %v718 = vsel %vm717, %v710, %v714
    %v719 = vand.u32 2147483647, %v694
    %vm720 = vcmp.eq.f32.partialorder %v719, 8.507059e+37
    %v721 = vand.u32 %v694, 2147483648
    %v722 = vor.u32 1.1754944e-38, %v721
    %v723 = vsel %vm720, %v722, %v718
    %v724 = vmul.f32 %v688, %v723
    %725 = vrot.lane.b32.xlu0 %v477, 48
    %v726 = vpop.permute.xlu0 %725
    %727 = vrot.lane.b32.xlu0 %v480, 48
    %v728 = vpop.permute.xlu0 %727
    %v731 = vsel %vm547, %v709, 0
    %v734 = vsel %vm547, %v724, 0
    %v736 = vsel %vm608, %v728, 0
    %738 = vmatpush.msra.mxu0 0.0
    %739 = vmatpush.msra.mxu0 0.0
    %740 = vmatpush.msra.mxu0 0.0
    %741 = vmatpush.msra.mxu0 0.0
    %742 = vmatpush.msra.mxu0 0.0
    %743 = vmatpush.msra.mxu0 0.0
    %744 = vmatpush.msra.mxu0 0.0
    %745 = vmatpush.msra.mxu0 0.0
    %746 = vmatpush.msra.mxu0 0.0
    %747 = vmatpush.msra.mxu0 0.0
    %748 = vmatpush.msra.mxu0 0.0
    %749 = vmatpush.msra.mxu0 0.0
    %750 = vmatpush.msra.mxu0 0.0
    %751 = vmatpush.msra.mxu0 0.0
    %752 = vmatpush.msra.mxu0 %v736
    %753 = vmatpush.msra.mxu0 %v726
    %754 = vmatmul.f32.gmra.mxu0 %v731
    %v755 = vpop.f32.mrf.mxu0
    %v756 = vadd.f32 0.0, %v755
    %757 = vmatmul.f32.gmra.mxu0 %v734
    %v758 = vpop.f32.mrf.mxu0
    %v759 = vadd.f32 0.0, %v758
    %760 = vdwg.mxu0
    %v762 = vsel %vm511, %v756, 0
    %v765 = vsel %vm511, %v759, 0
    %767 = vmatpush.msra.mxu0 0.0
    %768 = vmatpush.msra.mxu0 0.0
    %769 = vmatpush.msra.mxu0 0.0
    %770 = vmatpush.msra.mxu0 0.0
    %771 = vmatpush.msra.mxu0 0.0
    %772 = vmatpush.msra.mxu0 0.0
    %773 = vmatpush.msra.mxu0 0.0
    %774 = vmatpush.msra.mxu0 0.0
    %775 = vmatpush.msra.mxu0 0.0
    %776 = vmatpush.msra.mxu0 0.0
    %777 = vmatpush.msra.mxu0 0.0
    %778 = vmatpush.msra.mxu0 0.0
    %779 = vmatpush.msra.mxu0 0.0
    %780 = vmatpush.msra.mxu0 0.0
    %781 = vmatpush.msra.mxu0 %v327
    %782 = vmatpush.msra.mxu0 %v326
    %783 = vmatmul.f32.gmra.mxu0 %v762
    %v784 = vpop.f32.mrf.mxu0
    %v785 = vadd.f32 0.0, %v784
    %786 = vmatmul.f32.gmra.mxu0 %v765
    %v787 = vpop.f32.mrf.mxu0
    %v788 = vadd.f32 0.0, %v787
    %789 = vdwg.mxu0
    %v791 = vsel %vm511, %v629, 0
    %v794 = vsel %vm511, %v632, 0
    %796 = vmatpush.msra.mxu0 0.0
    %797 = vmatpush.msra.mxu0 0.0
    %798 = vmatpush.msra.mxu0 0.0
    %799 = vmatpush.msra.mxu0 0.0
    %800 = vmatpush.msra.mxu0 0.0
    %801 = vmatpush.msra.mxu0 0.0
    %802 = vmatpush.msra.mxu0 0.0
    %803 = vmatpush.msra.mxu0 0.0
    %804 = vmatpush.msra.mxu0 0.0
    %805 = vmatpush.msra.mxu0 0.0
    %806 = vmatpush.msra.mxu0 0.0
    %807 = vmatpush.msra.mxu0 0.0
    %808 = vmatpush.msra.mxu0 0.0
    %809 = vmatpush.msra.mxu0 0.0
    %810 = vmatpush.msra.mxu0 %v325
    %811 = vmatpush.msra.mxu0 %v324
    %812 = vmatmul.f32.gmra.mxu0 %v791
    %v813 = vpop.f32.mrf.mxu0
    %v814 = vadd.f32 %v785, %v813
    %815 = vmatmul.f32.gmra.mxu0 %v794
    %v816 = vpop.f32.mrf.mxu0
    %v817 = vadd.f32 %v788, %v816
    %818 = vdwg.mxu0
    %819 = vrot.lane.b32.xlu0 %v477, 32
    %v820 = vpop.permute.xlu0 %819
    %821 = vrot.lane.b32.xlu0 %v480, 32
    %v822 = vpop.permute.xlu0 %821
    %823 = vrot.lane.b32.xlu0 %v477, 16
    %v824 = vpop.permute.xlu0 %823
    %825 = vrot.lane.b32.xlu0 %v480, 16
    %v826 = vpop.permute.xlu0 %825
    %v827 = vsel %vm511, %v820, 0
    %v829 = vsel %vm511, %v822, 0
    %v831 = vsel %vm511, %v824, 0
    %v833 = vsel %vm511, %v826, 0
    %835 = vmatpush.xpose.msra.mxu0 0.0
    %836 = vmatpush.xpose.msra.mxu0 0.0
    %837 = vmatpush.xpose.msra.mxu0 0.0
    %838 = vmatpush.xpose.msra.mxu0 0.0
    %839 = vmatpush.xpose.msra.mxu0 0.0
    %840 = vmatpush.xpose.msra.mxu0 0.0
    %841 = vmatpush.xpose.msra.mxu0 0.0
    %842 = vmatpush.xpose.msra.mxu0 0.0
    %843 = vmatpush.xpose.msra.mxu0 0.0
    %844 = vmatpush.xpose.msra.mxu0 0.0
    %845 = vmatpush.xpose.msra.mxu0 0.0
    %846 = vmatpush.xpose.msra.mxu0 0.0
    %847 = vmatpush.xpose.msra.mxu0 0.0
    %848 = vmatpush.xpose.msra.mxu0 0.0
    %849 = vmatpush.xpose.msra.mxu0 %v833
    %850 = vmatpush.xpose.msra.mxu0 %v831
    %851 = vmatmul.f32.gmra.mxu0 %v827
    %v852 = vpop.f32.mrf.mxu0
    %v853 = vadd.f32 0.0, %v852
    %854 = vmatmul.f32.gmra.mxu0 %v829
    %v855 = vpop.f32.mrf.mxu0
    %v856 = vadd.f32 0.0, %v855
    %857 = vdwg.mxu0
    %v858 = vmul.f32 %v853, 0.25
    %v859 = vmul.f32 %v856, 0.25
    %v860 = vadd.f32 %v858, %v303
    %v861 = vadd.f32 %v859, %v304
    %v862 = vsel %vm547, %v860, -inf
    %863 = vmax.xlane.f32.xlu0 %v862
    %v864 = vpop.xlane.xlu0 %863
    %v865 = vsel %vm551, %v861, -inf
    %866 = vmax.xlane.f32.xlu0 %v865
    %v867 = vpop.xlane.xlu0 %866
    %v868 = vsub.f32 %v860, %v864
    %v869 = vsub.f32 %v861, %v867
    %v870 = vmul.f32 %v868, 1.442695
    %v871 = vpow.pop %v870
    %v872 = vmul.f32 %v869, 1.442695
    %v873 = vpow.pop %v872
    %v874 = vsel %vm547, %v871, 0.0
    %875 = vadd.xlane.f32.xlu0 %v874
    %v876 = vpop.xlane.xlu0 %875
    %v877 = vsel %vm551, %v873, 0.0
    %878 = vadd.xlane.f32.xlu0 %v877
    %v879 = vpop.xlane.xlu0 %878
    %v880 = vrcp.pop %v876
    %v881 = vmul.f32 %v876, %v880
    %v882 = vsub.f32 1.0, %v881
    %v883 = vmul.f32 %v880, %v882
    %v884 = vadd.f32 %v880, %v883
    %vm885 = vweird.f32 %v876
    %vm886 = vweird.f32 %v880
    %vm887 = vmor %vm885, %vm886
    %v888 = vsel %vm887, %v880, %v884
    %v889 = vand.u32 2147483647, %v876
    %vm890 = vcmp.eq.f32.partialorder %v889, 8.507059e+37
    %v891 = vand.u32 %v876, 2147483648
    %v892 = vor.u32 1.1754944e-38, %v891
    %v893 = vsel %vm890, %v892, %v888
    %v894 = vmul.f32 %v871, %v893
    %v895 = vrcp.pop %v879
    %v896 = vmul.f32 %v879, %v895
    %v897 = vsub.f32 1.0, %v896
    %v898 = vmul.f32 %v895, %v897
    %v899 = vadd.f32 %v895, %v898
    %vm900 = vweird.f32 %v879
    %vm901 = vweird.f32 %v895
    %vm902 = vmor %vm900, %vm901
    %v903 = vsel %vm902, %v895, %v899
    %v904 = vand.u32 2147483647, %v879
    %vm905 = vcmp.eq.f32.partialorder %v904, 8.507059e+37
    %v906 = vand.u32 %v879, 2147483648
    %v907 = vor.u32 1.1754944e-38, %v906
    %v908 = vsel %vm905, %v907, %v903
    %v909 = vmul.f32 %v873, %v908
    %v911 = vsel %vm547, %v894, 0
    %v914 = vsel %vm547, %v909, 0
    %v917 = vsel %vm608, %v503, 0
    %919 = vmatpush.msra.mxu0 0.0
    %920 = vmatpush.msra.mxu0 0.0
    %921 = vmatpush.msra.mxu0 0.0
    %922 = vmatpush.msra.mxu0 0.0
    %923 = vmatpush.msra.mxu0 0.0
    %924 = vmatpush.msra.mxu0 0.0
    %925 = vmatpush.msra.mxu0 0.0
    %926 = vmatpush.msra.mxu0 0.0
    %927 = vmatpush.msra.mxu0 0.0
    %928 = vmatpush.msra.mxu0 0.0
    %929 = vmatpush.msra.mxu0 0.0
    %930 = vmatpush.msra.mxu0 0.0
    %931 = vmatpush.msra.mxu0 0.0
    %932 = vmatpush.msra.mxu0 0.0
    %933 = vmatpush.msra.mxu0 %v917
    %934 = vmatpush.msra.mxu0 %v500
    %935 = vmatmul.f32.gmra.mxu0 %v911
    %v936 = vpop.f32.mrf.mxu0
    %v937 = vadd.f32 0.0, %v936
    %938 = vmatmul.f32.gmra.mxu0 %v914
    %v939 = vpop.f32.mrf.mxu0
    %v940 = vadd.f32 0.0, %v939
    %941 = vdwg.mxu0
    %v943 = vsel %vm511, %v937, 0
    %v946 = vsel %vm511, %v940, 0
    %948 = vmatpush.msra.mxu0 0.0
    %949 = vmatpush.msra.mxu0 0.0
    %950 = vmatpush.msra.mxu0 0.0
    %951 = vmatpush.msra.mxu0 0.0
    %952 = vmatpush.msra.mxu0 0.0
    %953 = vmatpush.msra.mxu0 0.0
    %954 = vmatpush.msra.mxu0 0.0
    %955 = vmatpush.msra.mxu0 0.0
    %956 = vmatpush.msra.mxu0 0.0
    %957 = vmatpush.msra.mxu0 0.0
    %958 = vmatpush.msra.mxu0 0.0
    %959 = vmatpush.msra.mxu0 0.0
    %960 = vmatpush.msra.mxu0 0.0
    %961 = vmatpush.msra.mxu0 0.0
    %962 = vmatpush.msra.mxu0 %v329
    %963 = vmatpush.msra.mxu0 %v328
    %964 = vmatmul.f32.gmra.mxu0 %v943
    %v965 = vpop.f32.mrf.mxu0
    %v966 = vadd.f32 0.0, %v965
    %967 = vmatmul.f32.gmra.mxu0 %v946
    %v968 = vpop.f32.mrf.mxu0
    %v969 = vadd.f32 0.0, %v968
    %970 = vdwg.mxu0
    %v971 = vadd.f32 %v814, %v966
    %v972 = vadd.f32 %v817, %v969
    %974 = vrot.lane.b32.xlu0 %v500, 112
    %v975 = vpop.permute.xlu0 %974
    %976 = vrot.lane.b32.xlu0 %v503, 112
    %v977 = vpop.permute.xlu0 %976
    %978 = vrot.lane.b32.xlu0 %v500, 96
    %v979 = vpop.permute.xlu0 %978
    %980 = vrot.lane.b32.xlu0 %v503, 96
    %v981 = vpop.permute.xlu0 %980
    %v982 = vsel %vm511, %v975, 0
    %v984 = vsel %vm511, %v977, 0
    %v986 = vsel %vm511, %v979, 0
    %v988 = vsel %vm511, %v981, 0
    %990 = vmatpush.xpose.msra.mxu0 0.0
    %991 = vmatpush.xpose.msra.mxu0 0.0
    %992 = vmatpush.xpose.msra.mxu0 0.0
    %993 = vmatpush.xpose.msra.mxu0 0.0
    %994 = vmatpush.xpose.msra.mxu0 0.0
    %995 = vmatpush.xpose.msra.mxu0 0.0
    %996 = vmatpush.xpose.msra.mxu0 0.0
    %997 = vmatpush.xpose.msra.mxu0 0.0
    %998 = vmatpush.xpose.msra.mxu0 0.0
    %999 = vmatpush.xpose.msra.mxu0 0.0
    %1000 = vmatpush.xpose.msra.mxu0 0.0
    %1001 = vmatpush.xpose.msra.mxu0 0.0
    %1002 = vmatpush.xpose.msra.mxu0 0.0
    %1003 = vmatpush.xpose.msra.mxu0 0.0
    %1004 = vmatpush.xpose.msra.mxu0 %v988
    %1005 = vmatpush.xpose.msra.mxu0 %v986
    %1006 = vmatmul.f32.gmra.mxu0 %v982
    %v1007 = vpop.f32.mrf.mxu0
    %v1008 = vadd.f32 0.0, %v1007
    %1009 = vmatmul.f32.gmra.mxu0 %v984
    %v1010 = vpop.f32.mrf.mxu0
    %v1011 = vadd.f32 0.0, %v1010
    %1012 = vdwg.mxu0
    %v1013 = vmul.f32 %v1008, 0.25
    %v1014 = vmul.f32 %v1011, 0.25
    %v1015 = vadd.f32 %v1013, %v303
    %v1016 = vadd.f32 %v1014, %v304
    %v1017 = vsel %vm547, %v1015, -inf
    %1018 = vmax.xlane.f32.xlu0 %v1017
    %v1019 = vpop.xlane.xlu0 %1018
    %v1020 = vsel %vm551, %v1016, -inf
    %1021 = vmax.xlane.f32.xlu0 %v1020
    %v1022 = vpop.xlane.xlu0 %1021
    %v1023 = vsub.f32 %v1015, %v1019
    %v1024 = vsub.f32 %v1016, %v1022
    %v1025 = vmul.f32 %v1023, 1.442695
    %v1026 = vpow.pop %v1025
    %v1027 = vmul.f32 %v1024, 1.442695
    %v1028 = vpow.pop %v1027
    %v1029 = vsel %vm547, %v1026, 0.0
    %1030 = vadd.xlane.f32.xlu0 %v1029
    %v1031 = vpop.xlane.xlu0 %1030
    %v1032 = vsel %vm551, %v1028, 0.0
    %1033 = vadd.xlane.f32.xlu0 %v1032
    %v1034 = vpop.xlane.xlu0 %1033
    %v1035 = vrcp.pop %v1031
    %v1036 = vmul.f32 %v1031, %v1035
    %v1037 = vsub.f32 1.0, %v1036
    %v1038 = vmul.f32 %v1035, %v1037
    %v1039 = vadd.f32 %v1035, %v1038
    %vm1040 = vweird.f32 %v1031
    %vm1041 = vweird.f32 %v1035
    %vm1042 = vmor %vm1040, %vm1041
    %v1043 = vsel %vm1042, %v1035, %v1039
    %v1044 = vand.u32 2147483647, %v1031
    %vm1045 = vcmp.eq.f32.partialorder %v1044, 8.507059e+37
    %v1046 = vand.u32 %v1031, 2147483648
    %v1047 = vor.u32 1.1754944e-38, %v1046
    %v1048 = vsel %vm1045, %v1047, %v1043
    %v1049 = vmul.f32 %v1026, %v1048
    %v1050 = vrcp.pop %v1034
    %v1051 = vmul.f32 %v1034, %v1050
    %v1052 = vsub.f32 1.0, %v1051
    %v1053 = vmul.f32 %v1050, %v1052
    %v1054 = vadd.f32 %v1050, %v1053
    %vm1055 = vweird.f32 %v1034
    %vm1056 = vweird.f32 %v1050
    %vm1057 = vmor %vm1055, %vm1056
    %v1058 = vsel %vm1057, %v1050, %v1054
    %v1059 = vand.u32 2147483647, %v1034
    %vm1060 = vcmp.eq.f32.partialorder %v1059, 8.507059e+37
    %v1061 = vand.u32 %v1034, 2147483648
    %v1062 = vor.u32 1.1754944e-38, %v1061
    %v1063 = vsel %vm1060, %v1062, %v1058
    %v1064 = vmul.f32 %v1028, %v1063
    %1065 = vrot.lane.b32.xlu0 %v500, 80
    %v1066 = vpop.permute.xlu0 %1065
    %1067 = vrot.lane.b32.xlu0 %v503, 80
    %v1068 = vpop.permute.xlu0 %1067
    %v1071 = vsel %vm547, %v1049, 0
    %v1074 = vsel %vm547, %v1064, 0
    %v1076 = vsel %vm608, %v1068, 0
    %1078 = vmatpush.msra.mxu0 0.0
    %1079 = vmatpush.msra.mxu0 0.0
    %1080 = vmatpush.msra.mxu0 0.0
    %1081 = vmatpush.msra.mxu0 0.0
    %1082 = vmatpush.msra.mxu0 0.0
    %1083 = vmatpush.msra.mxu0 0.0
    %1084 = vmatpush.msra.mxu0 0.0
    %1085 = vmatpush.msra.mxu0 0.0
    %1086 = vmatpush.msra.mxu0 0.0
    %1087 = vmatpush.msra.mxu0 0.0
    %1088 = vmatpush.msra.mxu0 0.0
    %1089 = vmatpush.msra.mxu0 0.0
    %1090 = vmatpush.msra.mxu0 0.0
    %1091 = vmatpush.msra.mxu0 0.0
    %1092 = vmatpush.msra.mxu0 %v1076
    %1093 = vmatpush.msra.mxu0 %v1066
    %1094 = vmatmul.f32.gmra.mxu0 %v1071
    %v1095 = vpop.f32.mrf.mxu0
    %v1096 = vadd.f32 0.0, %v1095
    %1097 = vmatmul.f32.gmra.mxu0 %v1074
    %v1098 = vpop.f32.mrf.mxu0
    %v1099 = vadd.f32 0.0, %v1098
    %1100 = vdwg.mxu0
    %v1102 = vsel %vm511, %v1096, 0
    %v1105 = vsel %vm511, %v1099, 0
    %1107 = vmatpush.msra.mxu0 0.0
    %1108 = vmatpush.msra.mxu0 0.0
    %1109 = vmatpush.msra.mxu0 0.0
    %1110 = vmatpush.msra.mxu0 0.0
    %1111 = vmatpush.msra.mxu0 0.0
    %1112 = vmatpush.msra.mxu0 0.0
    %1113 = vmatpush.msra.mxu0 0.0
    %1114 = vmatpush.msra.mxu0 0.0
    %1115 = vmatpush.msra.mxu0 0.0
    %1116 = vmatpush.msra.mxu0 0.0
    %1117 = vmatpush.msra.mxu0 0.0
    %1118 = vmatpush.msra.mxu0 0.0
    %1119 = vmatpush.msra.mxu0 0.0
    %1120 = vmatpush.msra.mxu0 0.0
    %1121 = vmatpush.msra.mxu0 %v331
    %1122 = vmatpush.msra.mxu0 %v330
    %1123 = vmatmul.f32.gmra.mxu0 %v1102
    %v1124 = vpop.f32.mrf.mxu0
    %v1125 = vadd.f32 0.0, %v1124
    %1126 = vmatmul.f32.gmra.mxu0 %v1105
    %v1127 = vpop.f32.mrf.mxu0
    %v1128 = vadd.f32 0.0, %v1127
    %1129 = vdwg.mxu0
    %v1130 = vadd.f32 %v971, %v1125
    %v1131 = vadd.f32 %v972, %v1128
    %v1132 = vadd.f32 %v301, %v1130
    %v1133 = vadd.f32 %v302, %v1131
    %v1135 = vperm.slane %v332, 0
    %v1137 = vadd.f32 %v1132, %v1135
    %v1138 = vadd.f32 %v1133, %v1135
    %v1139 = vsel %vm385, %v1137, 0.0
    %1140 = vadd.xlane.f32.xlu0 %v1139
    %v1141 = vpop.xlane.xlu0 %1140
    %v1142 = vsel %vm389, %v1138, 0.0
    %1143 = vadd.xlane.f32.xlu0 %v1142
    %v1144 = vpop.xlane.xlu0 %1143
    %v1145 = vmul.f32 %v1141, %v399
    %v1146 = vmul.f32 %v1144, %v399
    %v1147 = vsub.f32 %v1137, %v1145
    %v1148 = vsub.f32 %v1138, %v1146
    %v1149 = vmul.f32 %v1147, %v1147
    %v1150 = vmul.f32 %v1148, %v1148
    %v1151 = vsel %vm385, %v1149, 0.0
    %1152 = vadd.xlane.f32.xlu0 %v1151
    %v1153 = vpop.xlane.xlu0 %1152
    %v1154 = vsel %vm389, %v1150, 0.0
    %1155 = vadd.xlane.f32.xlu0 %v1154
    %v1156 = vpop.xlane.xlu0 %1155
    %v1157 = vmul.f32 %v1153, %v399
    %v1158 = vmul.f32 %v1156, %v399
    %v1159 = vadd.f32 %v1157, 1e-06
    %v1160 = vadd.f32 %v1158, 1e-06
    %v1161 = vrsqrt.pop %v1159
    %v1162 = vmul.f32 %v1161, %v1159
    %v1163 = vmul.f32 %v1162, %v1161
    %v1164 = vmul.f32 0.5, %v1163
    %v1165 = vsub.f32 1.5, %v1164
    %v1166 = vmul.f32 %v1161, %v1165
    %vm1167 = vweird.f32 %v1159
    %vm1168 = vweird.f32 %v1161
    %vm1169 = vmor %vm1167, %vm1168
    %v1170 = vsel %vm1169, %v1161, %v1166
    %v1171 = vrsqrt.pop %v1160
    %v1172 = vmul.f32 %v1171, %v1160
    %v1173 = vmul.f32 %v1172, %v1171
    %v1174 = vmul.f32 0.5, %v1173
    %v1175 = vsub.f32 1.5, %v1174
    %v1176 = vmul.f32 %v1171, %v1175
    %vm1177 = vweird.f32 %v1160
    %vm1178 = vweird.f32 %v1171
    %vm1179 = vmor %vm1177, %vm1178
    %v1180 = vsel %vm1179, %v1171, %v1176
    %v1181 = vmul.f32 %v1147, %v1170
    %v1182 = vmul.f32 %v1148, %v1180
    %v1184 = vperm.slane %v333, 0
    %v1186 = vmul.f32 %v1181, %v1184
    %v1187 = vmul.f32 %v1182, %v1184
    %v1189 = vperm.slane %v334, 0
    %v1191 = vadd.f32 %v1186, %v1189
    %v1192 = vadd.f32 %v1187, %v1189
    %v1194 = vperm.slane %v351, 0
    %v1195 = vperm.slane %v351, 1
    %v1199 = vsel %vm385, %v1191, 0
    %v1202 = vsel %vm385, %v1192, 0
    %1204 = vmatpush.msra.mxu0 0.0
    %1205 = vmatpush.msra.mxu0 0.0
    %1206 = vmatpush.msra.mxu0 0.0
    %1207 = vmatpush.msra.mxu0 0.0
    %1208 = vmatpush.msra.mxu0 0.0
    %1209 = vmatpush.msra.mxu0 0.0
    %1210 = vmatpush.msra.mxu0 0.0
    %1211 = vmatpush.msra.mxu0 0.0
    %1212 = vmatpush.msra.mxu0 %v349
    %1213 = vmatpush.msra.mxu0 %v347
    %1214 = vmatpush.msra.mxu0 %v345
    %1215 = vmatpush.msra.mxu0 %v343
    %1216 = vmatpush.msra.mxu0 %v341
    %1217 = vmatpush.msra.mxu0 %v339
    %1218 = vmatpush.msra.mxu0 %v337
    %1219 = vmatpush.msra.mxu0 %v335
    %1220 = vmatmul.f32.gmra.mxu0 %v1199
    %v1221 = vpop.f32.mrf.mxu0
    %v1222 = vadd.f32 %v1194, %v1221
    %1223 = vmatmul.f32.gmra.mxu0 %v1202
    %v1224 = vpop.f32.mrf.mxu0
    %v1225 = vadd.f32 %v1194, %v1224
    %1226 = vdwg.mxu0
    %1227 = vmatpush.msra.mxu0 0.0
    %1228 = vmatpush.msra.mxu0 0.0
    %1229 = vmatpush.msra.mxu0 0.0
    %1230 = vmatpush.msra.mxu0 0.0
    %1231 = vmatpush.msra.mxu0 0.0
    %1232 = vmatpush.msra.mxu0 0.0
    %1233 = vmatpush.msra.mxu0 0.0
    %1234 = vmatpush.msra.mxu0 0.0
    %1235 = vmatpush.msra.mxu0 %v350
    %1236 = vmatpush.msra.mxu0 %v348
    %1237 = vmatpush.msra.mxu0 %v346
    %1238 = vmatpush.msra.mxu0 %v344
    %1239 = vmatpush.msra.mxu0 %v342
    %1240 = vmatpush.msra.mxu0 %v340
    %1241 = vmatpush.msra.mxu0 %v338
    %1242 = vmatpush.msra.mxu0 %v336
    %1243 = vmatmul.f32.gmra.mxu0 %v1199
    %v1244 = vpop.f32.mrf.mxu0
    %v1245 = vadd.f32 %v1195, %v1244
    %1246 = vmatmul.f32.gmra.mxu0 %v1202
    %v1247 = vpop.f32.mrf.mxu0
    %v1248 = vadd.f32 %v1195, %v1247
    %1249 = vdwg.mxu0
    %v1250 = vmul.f32 %v1222, 0.5
    %v1251 = vmul.f32 %v1245, 0.5
    %v1252 = vmul.f32 %v1225, 0.5
    %v1253 = vmul.f32 %v1248, 0.5
    %v1254 = vmul.f32 %v1222, 0.70710677
    %v1255 = vmul.f32 %v1245, 0.70710677
    %v1256 = vmul.f32 %v1225, 0.70710677
    %v1257 = vmul.f32 %v1248, 0.70710677
    %v1258 = vmul.f32 %v1254, %v1254
    %v1259 = vmin.f32 16.0, %v1258
    %v1260 = vmul.f32 %v1259, 2.1237322e-06
    %v1261 = vadd.f32 %v1260, 0.00028619796
    %v1262 = vmul.f32 %v1259, %v1261
    %v1263 = vadd.f32 %v1262, 0.0036580483
    %v1264 = vmul.f32 %v1259, %v1263
    %v1265 = vadd.f32 %v1264, 0.05243302
    %v1266 = vmul.f32 %v1259, %v1265
    %v1267 = vadd.f32 %v1266, 0.18741608
    %v1268 = vmul.f32 %v1259, %v1267
    %v1269 = vadd.f32 %v1268, 1.1283791
    %v1270 = vmul.f32 %v1254, %v1269
    %v1271 = vmul.f32 %v1259, 3.8918573e-05
    %v1272 = vadd.f32 %v1271, 0.001143296
    %v1273 = vmul.f32 %v1259, %v1272
    %v1274 = vadd.f32 %v1273, 0.014752088
    %v1275 = vmul.f32 %v1259, %v1274
    %v1276 = vadd.f32 %v1275, 0.112945676
    %v1277 = vmul.f32 %v1259, %v1276
    %v1278 = vadd.f32 %v1277, 0.4994258
    %v1279 = vmul.f32 %v1259, %v1278
    %v1280 = vadd.f32 %v1279, 1.0
    %v1281 = vrcp.pop %v1280
    %v1282 = vmul.f32 %v1280, %v1281
    %v1283 = vsub.f32 1.0, %v1282
    %v1284 = vmul.f32 %v1281, %v1283
    %v1285 = vadd.f32 %v1281, %v1284
    %vm1286 = vweird.f32 %v1280
    %vm1287 = vweird.f32 %v1281
    %vm1288 = vmor %vm1286, %vm1287
    %v1289 = vsel %vm1288, %v1281, %v1285
    %v1290 = vand.u32 2147483647, %v1280
    %vm1291 = vcmp.eq.f32.partialorder %v1290, 8.507059e+37
    %v1292 = vand.u32 %v1280, 2147483648
    %v1293 = vor.u32 1.1754944e-38, %v1292
    %v1294 = vsel %vm1291, %v1293, %v1289
    %v1295 = vmul.f32 %v1270, %v1294
    %v1296 = vmin.f32 %v1295, 1.0
    %v1297 = vmax.f32 %v1296, -1.0
    %v1298 = vmul.f32 %v1255, %v1255
    %v1299 = vmin.f32 16.0, %v1298
    %v1300 = vmul.f32 %v1299, 2.1237322e-06
    %v1301 = vadd.f32 %v1300, 0.00028619796
    %v1302 = vmul.f32 %v1299, %v1301
    %v1303 = vadd.f32 %v1302, 0.0036580483
    %v1304 = vmul.f32 %v1299, %v1303
    %v1305 = vadd.f32 %v1304, 0.05243302
    %v1306 = vmul.f32 %v1299, %v1305
    %v1307 = vadd.f32 %v1306, 0.18741608
    %v1308 = vmul.f32 %v1299, %v1307
    %v1309 = vadd.f32 %v1308, 1.1283791
    %v1310 = vmul.f32 %v1255, %v1309
    %v1311 = vmul.f32 %v1299, 3.8918573e-05
    %v1312 = vadd.f32 %v1311, 0.001143296
    %v1313 = vmul.f32 %v1299, %v1312
    %v1314 = vadd.f32 %v1313, 0.014752088
    %v1315 = vmul.f32 %v1299, %v1314
    %v1316 = vadd.f32 %v1315, 0.112945676
    %v1317 = vmul.f32 %v1299, %v1316
    %v1318 = vadd.f32 %v1317, 0.4994258
    %v1319 = vmul.f32 %v1299, %v1318
    %v1320 = vadd.f32 %v1319, 1.0
    %v1321 = vrcp.pop %v1320
    %v1322 = vmul.f32 %v1320, %v1321
    %v1323 = vsub.f32 1.0, %v1322
    %v1324 = vmul.f32 %v1321, %v1323
    %v1325 = vadd.f32 %v1321, %v1324
    %vm1326 = vweird.f32 %v1320
    %vm1327 = vweird.f32 %v1321
    %vm1328 = vmor %vm1326, %vm1327
    %v1329 = vsel %vm1328, %v1321, %v1325
    %v1330 = vand.u32 2147483647, %v1320
    %vm1331 = vcmp.eq.f32.partialorder %v1330, 8.507059e+37
    %v1332 = vand.u32 %v1320, 2147483648
    %v1333 = vor.u32 1.1754944e-38, %v1332
    %v1334 = vsel %vm1331, %v1333, %v1329
    %v1335 = vmul.f32 %v1310, %v1334
    %v1336 = vmin.f32 %v1335, 1.0
    %v1337 = vmax.f32 %v1336, -1.0
    %v1338 = vmul.f32 %v1256, %v1256
    %v1339 = vmin.f32 16.0, %v1338
    %v1340 = vmul.f32 %v1339, 2.1237322e-06
    %v1341 = vadd.f32 %v1340, 0.00028619796
    %v1342 = vmul.f32 %v1339, %v1341
    %v1343 = vadd.f32 %v1342, 0.0036580483
    %v1344 = vmul.f32 %v1339, %v1343
    %v1345 = vadd.f32 %v1344, 0.05243302
    %v1346 = vmul.f32 %v1339, %v1345
    %v1347 = vadd.f32 %v1346, 0.18741608
    %v1348 = vmul.f32 %v1339, %v1347
    %v1349 = vadd.f32 %v1348, 1.1283791
    %v1350 = vmul.f32 %v1256, %v1349
    %v1351 = vmul.f32 %v1339, 3.8918573e-05
    %v1352 = vadd.f32 %v1351, 0.001143296
    %v1353 = vmul.f32 %v1339, %v1352
    %v1354 = vadd.f32 %v1353, 0.014752088
    %v1355 = vmul.f32 %v1339, %v1354
    %v1356 = vadd.f32 %v1355, 0.112945676
    %v1357 = vmul.f32 %v1339, %v1356
    %v1358 = vadd.f32 %v1357, 0.4994258
    %v1359 = vmul.f32 %v1339, %v1358
    %v1360 = vadd.f32 %v1359, 1.0
    %v1361 = vrcp.pop %v1360
    %v1362 = vmul.f32 %v1360, %v1361
    %v1363 = vsub.f32 1.0, %v1362
    %v1364 = vmul.f32 %v1361, %v1363
    %v1365 = vadd.f32 %v1361, %v1364
    %vm1366 = vweird.f32 %v1360
    %vm1367 = vweird.f32 %v1361
    %vm1368 = vmor %vm1366, %vm1367
    %v1369 = vsel %vm1368, %v1361, %v1365
    %v1370 = vand.u32 2147483647, %v1360
    %vm1371 = vcmp.eq.f32.partialorder %v1370, 8.507059e+37
    %v1372 = vand.u32 %v1360, 2147483648
    %v1373 = vor.u32 1.1754944e-38, %v1372
    %v1374 = vsel %vm1371, %v1373, %v1369
    %v1375 = vmul.f32 %v1350, %v1374
    %v1376 = vmin.f32 %v1375, 1.0
    %v1377 = vmax.f32 %v1376, -1.0
    %v1378 = vmul.f32 %v1257, %v1257
    %v1379 = vmin.f32 16.0, %v1378
    %v1380 = vmul.f32 %v1379, 2.1237322e-06
    %v1381 = vadd.f32 %v1380, 0.00028619796
    %v1382 = vmul.f32 %v1379, %v1381
    %v1383 = vadd.f32 %v1382, 0.0036580483
    %v1384 = vmul.f32 %v1379, %v1383
    %v1385 = vadd.f32 %v1384, 0.05243302
    %v1386 = vmul.f32 %v1379, %v1385
    %v1387 = vadd.f32 %v1386, 0.18741608
    %v1388 = vmul.f32 %v1379, %v1387
    %v1389 = vadd.f32 %v1388, 1.1283791
    %v1390 = vmul.f32 %v1257, %v1389
    %v1391 = vmul.f32 %v1379, 3.8918573e-05
    %v1392 = vadd.f32 %v1391, 0.001143296
    %v1393 = vmul.f32 %v1379, %v1392
    %v1394 = vadd.f32 %v1393, 0.014752088
    %v1395 = vmul.f32 %v1379, %v1394
    %v1396 = vadd.f32 %v1395, 0.112945676
    %v1397 = vmul.f32 %v1379, %v1396
    %v1398 = vadd.f32 %v1397, 0.4994258
    %v1399 = vmul.f32 %v1379, %v1398
    %v1400 = vadd.f32 %v1399, 1.0
    %v1401 = vrcp.pop %v1400
    %v1402 = vmul.f32 %v1400, %v1401
    %v1403 = vsub.f32 1.0, %v1402
    %v1404 = vmul.f32 %v1401, %v1403
    %v1405 = vadd.f32 %v1401, %v1404
    %vm1406 = vweird.f32 %v1400
    %vm1407 = vweird.f32 %v1401
    %vm1408 = vmor %vm1406, %vm1407
    %v1409 = vsel %vm1408, %v1401, %v1405
    %v1410 = vand.u32 2147483647, %v1400
    %vm1411 = vcmp.eq.f32.partialorder %v1410, 8.507059e+37
    %v1412 = vand.u32 %v1400, 2147483648
    %v1413 = vor.u32 1.1754944e-38, %v1412
    %v1414 = vsel %vm1411, %v1413, %v1409
    %v1415 = vmul.f32 %v1390, %v1414
    %v1416 = vmin.f32 %v1415, 1.0
    %v1417 = vmax.f32 %v1416, -1.0
    %v1418 = vadd.f32 %v1297, 1.0
    %v1419 = vadd.f32 %v1337, 1.0
    %v1420 = vadd.f32 %v1377, 1.0
    %v1421 = vadd.f32 %v1417, 1.0
    %v1422 = vmul.f32 %v1250, %v1418
    %v1423 = vmul.f32 %v1251, %v1419
    %v1424 = vmul.f32 %v1252, %v1420
    %v1425 = vmul.f32 %v1253, %v1421
    %v1427 = vperm.slane %v384, 0
    %1429 = vmatpush.msra.mxu0 %v367
    %1430 = vmatpush.msra.mxu0 %v366
    %1431 = vmatpush.msra.mxu0 %v365
    %1432 = vmatpush.msra.mxu0 %v364
    %1433 = vmatpush.msra.mxu0 %v363
    %1434 = vmatpush.msra.mxu0 %v362
    %1435 = vmatpush.msra.mxu0 %v361
    %1436 = vmatpush.msra.mxu0 %v360
    %1437 = vmatpush.msra.mxu0 %v359
    %1438 = vmatpush.msra.mxu0 %v358
    %1439 = vmatpush.msra.mxu0 %v357
    %1440 = vmatpush.msra.mxu0 %v356
    %1441 = vmatpush.msra.mxu0 %v355
    %1442 = vmatpush.msra.mxu0 %v354
    %1443 = vmatpush.msra.mxu0 %v353
    %1444 = vmatpush.msra.mxu0 %v352
    %1445 = vmatmul.f32.gmra.mxu0 %v1422
    %v1446 = vpop.f32.mrf.mxu0
    %v1447 = vadd.f32 %v1427, %v1446
    %1448 = vmatmul.f32.gmra.mxu0 %v1424
    %v1449 = vpop.f32.mrf.mxu0
    %v1450 = vadd.f32 %v1427, %v1449
    %1451 = vdwg.mxu0
    %1452 = vmatpush.msra.mxu0 %v383
    %1453 = vmatpush.msra.mxu0 %v382
    %1454 = vmatpush.msra.mxu0 %v381
    %1455 = vmatpush.msra.mxu0 %v380
    %1456 = vmatpush.msra.mxu0 %v379
    %1457 = vmatpush.msra.mxu0 %v378
    %1458 = vmatpush.msra.mxu0 %v377
    %1459 = vmatpush.msra.mxu0 %v376
    %1460 = vmatpush.msra.mxu0 %v375
    %1461 = vmatpush.msra.mxu0 %v374
    %1462 = vmatpush.msra.mxu0 %v373
    %1463 = vmatpush.msra.mxu0 %v372
    %1464 = vmatpush.msra.mxu0 %v371
    %1465 = vmatpush.msra.mxu0 %v370
    %1466 = vmatpush.msra.mxu0 %v369
    %1467 = vmatpush.msra.mxu0 %v368
    %1468 = vmatmul.f32.gmra.mxu0 %v1423
    %v1469 = vpop.f32.mrf.mxu0
    %v1470 = vadd.f32 %v1447, %v1469
    %1471 = vmatmul.f32.gmra.mxu0 %v1425
    %v1472 = vpop.f32.mrf.mxu0
    %v1473 = vadd.f32 %v1450, %v1472
    %1474 = vdwg.mxu0
    %v1475 = vadd.f32 %v1137, %v1470
    %v1476 = vadd.f32 %v1138, %v1473
    %s1477 = scalar_lea.vmem %s29, 1
    %v1478 = vld [vmem:[%s1477] sm:$0x1]
    %s1479 = scalar_lea.vmem %s31, 1
    %v1480 = vld [vmem:[%s1479] sm:$0x1]
    %s1481 = scalar_lea.vmem %s33, 128
    %v1482 = vld [vmem:[%s1481] sm:$0xff]
    %v1483 = vld [vmem:[%s1481 + $0x8] sm:$0xff]
    %v1484 = vld [vmem:[%s1481 + $0x10] sm:$0xff]
    %v1485 = vld [vmem:[%s1481 + $0x18] sm:$0xff]
    %v1486 = vld [vmem:[%s1481 + $0x20] sm:$0xff]
    %v1487 = vld [vmem:[%s1481 + $0x28] sm:$0xff]
    %v1488 = vld [vmem:[%s1481 + $0x30] sm:$0xff]
    %v1489 = vld [vmem:[%s1481 + $0x38] sm:$0xff]
    %v1490 = vld [vmem:[%s1481 + $0x40] sm:$0xff]
    %v1491 = vld [vmem:[%s1481 + $0x48] sm:$0xff]
    %v1492 = vld [vmem:[%s1481 + $0x50] sm:$0xff]
    %v1493 = vld [vmem:[%s1481 + $0x58] sm:$0xff]
    %v1494 = vld [vmem:[%s1481 + $0x60] sm:$0xff]
    %v1495 = vld [vmem:[%s1481 + $0x68] sm:$0xff]
    %v1496 = vld [vmem:[%s1481 + $0x70] sm:$0xff]
    %v1497 = vld [vmem:[%s1481 + $0x78] sm:$0xff]
    %s1498 = scalar_lea.vmem %s35, 2
    %v1499 = vld [vmem:[%s1498] sm:$0x3]
    %s1500 = scalar_lea.vmem %s37, 64
    %v1501 = vld [vmem:[%s1500] sm:$0xff]
    %v1502 = vld [vmem:[%s1500 + $0x8] sm:$0xff]
    %v1503 = vld [vmem:[%s1500 + $0x10] sm:$0xff]
    %v1504 = vld [vmem:[%s1500 + $0x18] sm:$0xff]
    %v1505 = vld [vmem:[%s1500 + $0x20] sm:$0xff]
    %v1506 = vld [vmem:[%s1500 + $0x28] sm:$0xff]
    %v1507 = vld [vmem:[%s1500 + $0x30] sm:$0xff]
    %v1508 = vld [vmem:[%s1500 + $0x38] sm:$0xff]
    %s1509 = scalar_lea.vmem %s39, 1
    %v1510 = vld [vmem:[%s1509] sm:$0x1]
    %s1511 = scalar_lea.vmem %s41, 1
    %v1512 = vld [vmem:[%s1511] sm:$0x1]
    %s1513 = scalar_lea.vmem %s43, 1
    %v1514 = vld [vmem:[%s1513] sm:$0x1]
    %s1515 = scalar_lea.vmem %s45, 128
    %v1516 = vld [vmem:[%s1515] sm:$0xff]
    %v1517 = vld [vmem:[%s1515 + $0x8] sm:$0xff]
    %v1518 = vld [vmem:[%s1515 + $0x10] sm:$0xff]
    %v1519 = vld [vmem:[%s1515 + $0x18] sm:$0xff]
    %v1520 = vld [vmem:[%s1515 + $0x20] sm:$0xff]
    %v1521 = vld [vmem:[%s1515 + $0x28] sm:$0xff]
    %v1522 = vld [vmem:[%s1515 + $0x30] sm:$0xff]
    %v1523 = vld [vmem:[%s1515 + $0x38] sm:$0xff]
    %v1524 = vld [vmem:[%s1515 + $0x40] sm:$0xff]
    %v1525 = vld [vmem:[%s1515 + $0x48] sm:$0xff]
    %v1526 = vld [vmem:[%s1515 + $0x50] sm:$0xff]
    %v1527 = vld [vmem:[%s1515 + $0x58] sm:$0xff]
    %v1528 = vld [vmem:[%s1515 + $0x60] sm:$0xff]
    %v1529 = vld [vmem:[%s1515 + $0x68] sm:$0xff]
    %v1530 = vld [vmem:[%s1515 + $0x70] sm:$0xff]
    %v1531 = vld [vmem:[%s1515 + $0x78] sm:$0xff]
    %s1532 = scalar_lea.vmem %s47, 2
    %v1533 = vld [vmem:[%s1532] sm:$0x3]
    %s1534 = scalar_lea.vmem %s49, 256
    %v1535 = vld [vmem:[%s1534] sm:$0xff]
    %v1536 = vld [vmem:[%s1534 + $0x8] sm:$0xff]
    %v1537 = vld [vmem:[%s1534 + $0x10] sm:$0xff]
    %v1538 = vld [vmem:[%s1534 + $0x18] sm:$0xff]
    %v1539 = vld [vmem:[%s1534 + $0x20] sm:$0xff]
    %v1540 = vld [vmem:[%s1534 + $0x28] sm:$0xff]
    %v1541 = vld [vmem:[%s1534 + $0x30] sm:$0xff]
    %v1542 = vld [vmem:[%s1534 + $0x38] sm:$0xff]
    %v1543 = vld [vmem:[%s1534 + $0x40] sm:$0xff]
    %v1544 = vld [vmem:[%s1534 + $0x48] sm:$0xff]
    %v1545 = vld [vmem:[%s1534 + $0x50] sm:$0xff]
    %v1546 = vld [vmem:[%s1534 + $0x58] sm:$0xff]
    %v1547 = vld [vmem:[%s1534 + $0x60] sm:$0xff]
    %v1548 = vld [vmem:[%s1534 + $0x68] sm:$0xff]
    %v1549 = vld [vmem:[%s1534 + $0x70] sm:$0xff]
    %v1550 = vld [vmem:[%s1534 + $0x78] sm:$0xff]
    %v1551 = vld [vmem:[%s1534 + $0x80] sm:$0xff]
    %v1552 = vld [vmem:[%s1534 + $0x88] sm:$0xff]
    %v1553 = vld [vmem:[%s1534 + $0x90] sm:$0xff]
    %v1554 = vld [vmem:[%s1534 + $0x98] sm:$0xff]
    %v1555 = vld [vmem:[%s1534 + $0xa0] sm:$0xff]
    %v1556 = vld [vmem:[%s1534 + $0xa8] sm:$0xff]
    %v1557 = vld [vmem:[%s1534 + $0xb0] sm:$0xff]
    %v1558 = vld [vmem:[%s1534 + $0xb8] sm:$0xff]
    %v1559 = vld [vmem:[%s1534 + $0xc0] sm:$0xff]
    %v1560 = vld [vmem:[%s1534 + $0xc8] sm:$0xff]
    %v1561 = vld [vmem:[%s1534 + $0xd0] sm:$0xff]
    %v1562 = vld [vmem:[%s1534 + $0xd8] sm:$0xff]
    %v1563 = vld [vmem:[%s1534 + $0xe0] sm:$0xff]
    %v1564 = vld [vmem:[%s1534 + $0xe8] sm:$0xff]
    %v1565 = vld [vmem:[%s1534 + $0xf0] sm:$0xff]
    %v1566 = vld [vmem:[%s1534 + $0xf8] sm:$0xff]
    %s1567 = scalar_lea.vmem %s51, 1
    %v1568 = vld [vmem:[%s1567] sm:$0x1]
    %v1569 = vsel %vm385, %v1475, 0.0
    %1570 = vadd.xlane.f32.xlu0 %v1569
    %v1571 = vpop.xlane.xlu0 %1570
    %v1572 = vsel %vm389, %v1476, 0.0
    %1573 = vadd.xlane.f32.xlu0 %v1572
    %v1574 = vpop.xlane.xlu0 %1573
    %v1575 = vmul.f32 %v1571, %v399
    %v1576 = vmul.f32 %v1574, %v399
    %v1577 = vsub.f32 %v1475, %v1575
    %v1578 = vsub.f32 %v1476, %v1576
    %v1579 = vmul.f32 %v1577, %v1577
    %v1580 = vmul.f32 %v1578, %v1578
    %v1581 = vsel %vm385, %v1579, 0.0
    %1582 = vadd.xlane.f32.xlu0 %v1581
    %v1583 = vpop.xlane.xlu0 %1582
    %v1584 = vsel %vm389, %v1580, 0.0
    %1585 = vadd.xlane.f32.xlu0 %v1584
    %v1586 = vpop.xlane.xlu0 %1585
    %v1587 = vmul.f32 %v1583, %v399
    %v1588 = vmul.f32 %v1586, %v399
    %v1589 = vadd.f32 %v1587, 1e-06
    %v1590 = vadd.f32 %v1588, 1e-06
    %v1591 = vrsqrt.pop %v1589
    %v1592 = vmul.f32 %v1591, %v1589
    %v1593 = vmul.f32 %v1592, %v1591
    %v1594 = vmul.f32 0.5, %v1593
    %v1595 = vsub.f32 1.5, %v1594
    %v1596 = vmul.f32 %v1591, %v1595
    %vm1597 = vweird.f32 %v1589
    %vm1598 = vweird.f32 %v1591
    %vm1599 = vmor %vm1597, %vm1598
    %v1600 = vsel %vm1599, %v1591, %v1596
    %v1601 = vrsqrt.pop %v1590
    %v1602 = vmul.f32 %v1601, %v1590
    %v1603 = vmul.f32 %v1602, %v1601
    %v1604 = vmul.f32 0.5, %v1603
    %v1605 = vsub.f32 1.5, %v1604
    %v1606 = vmul.f32 %v1601, %v1605
    %vm1607 = vweird.f32 %v1590
    %vm1608 = vweird.f32 %v1601
    %vm1609 = vmor %vm1607, %vm1608
    %v1610 = vsel %vm1609, %v1601, %v1606
    %v1611 = vmul.f32 %v1577, %v1600
    %v1612 = vmul.f32 %v1578, %v1610
    %v1614 = vperm.slane %v1478, 0
    %v1616 = vmul.f32 %v1611, %v1614
    %v1617 = vmul.f32 %v1612, %v1614
    %v1619 = vperm.slane %v1480, 0
    %v1621 = vadd.f32 %v1616, %v1619
    %v1622 = vadd.f32 %v1617, %v1619
    %v1624 = vperm.slane %v1499, 0
    %v1625 = vperm.slane %v1499, 1
    %v1629 = vsel %vm385, %v1621, 0
    %v1632 = vsel %vm385, %v1622, 0
    %1634 = vmatpush.msra.mxu0 0.0
    %1635 = vmatpush.msra.mxu0 0.0
    %1636 = vmatpush.msra.mxu0 0.0
    %1637 = vmatpush.msra.mxu0 0.0
    %1638 = vmatpush.msra.mxu0 0.0
    %1639 = vmatpush.msra.mxu0 0.0
    %1640 = vmatpush.msra.mxu0 0.0
    %1641 = vmatpush.msra.mxu0 0.0
    %1642 = vmatpush.msra.mxu0 %v1496
    %1643 = vmatpush.msra.mxu0 %v1494
    %1644 = vmatpush.msra.mxu0 %v1492
    %1645 = vmatpush.msra.mxu0 %v1490
    %1646 = vmatpush.msra.mxu0 %v1488
    %1647 = vmatpush.msra.mxu0 %v1486
    %1648 = vmatpush.msra.mxu0 %v1484
    %1649 = vmatpush.msra.mxu0 %v1482
    %1650 = vmatmul.f32.gmra.mxu0 %v1629
    %v1651 = vpop.f32.mrf.mxu0
    %v1652 = vadd.f32 %v1624, %v1651
    %1653 = vmatmul.f32.gmra.mxu0 %v1632
    %v1654 = vpop.f32.mrf.mxu0
    %v1655 = vadd.f32 %v1624, %v1654
    %1656 = vdwg.mxu0
    %1657 = vmatpush.msra.mxu0 0.0
    %1658 = vmatpush.msra.mxu0 0.0
    %1659 = vmatpush.msra.mxu0 0.0
    %1660 = vmatpush.msra.mxu0 0.0
    %1661 = vmatpush.msra.mxu0 0.0
    %1662 = vmatpush.msra.mxu0 0.0
    %1663 = vmatpush.msra.mxu0 0.0
    %1664 = vmatpush.msra.mxu0 0.0
    %1665 = vmatpush.msra.mxu0 %v1497
    %1666 = vmatpush.msra.mxu0 %v1495
    %1667 = vmatpush.msra.mxu0 %v1493
    %1668 = vmatpush.msra.mxu0 %v1491
    %1669 = vmatpush.msra.mxu0 %v1489
    %1670 = vmatpush.msra.mxu0 %v1487
    %1671 = vmatpush.msra.mxu0 %v1485
    %1672 = vmatpush.msra.mxu0 %v1483
    %1673 = vmatmul.f32.gmra.mxu0 %v1629
    %v1674 = vpop.f32.mrf.mxu0
    %v1675 = vadd.f32 %v1625, %v1674
    %1676 = vmatmul.f32.gmra.mxu0 %v1632
    %v1677 = vpop.f32.mrf.mxu0
    %v1678 = vadd.f32 %v1625, %v1677
    %1679 = vdwg.mxu0
    %1682 = vrot.lane.b32.xlu0 %v1652, 112
    %v1683 = vpop.permute.xlu0 %1682
    %1684 = vrot.lane.b32.xlu0 %v1655, 112
    %v1685 = vpop.permute.xlu0 %1684
    %v1686 = vsel %vm511, %v1652, 0
    %v1688 = vsel %vm511, %v1655, 0
    %v1690 = vsel %vm511, %v1683, 0
    %v1692 = vsel %vm511, %v1685, 0
    %1694 = vmatpush.xpose.msra.mxu0 0.0
    %1695 = vmatpush.xpose.msra.mxu0 0.0
    %1696 = vmatpush.xpose.msra.mxu0 0.0
    %1697 = vmatpush.xpose.msra.mxu0 0.0
    %1698 = vmatpush.xpose.msra.mxu0 0.0
    %1699 = vmatpush.xpose.msra.mxu0 0.0
    %1700 = vmatpush.xpose.msra.mxu0 0.0
    %1701 = vmatpush.xpose.msra.mxu0 0.0
    %1702 = vmatpush.xpose.msra.mxu0 0.0
    %1703 = vmatpush.xpose.msra.mxu0 0.0
    %1704 = vmatpush.xpose.msra.mxu0 0.0
    %1705 = vmatpush.xpose.msra.mxu0 0.0
    %1706 = vmatpush.xpose.msra.mxu0 0.0
    %1707 = vmatpush.xpose.msra.mxu0 0.0
    %1708 = vmatpush.xpose.msra.mxu0 %v1692
    %1709 = vmatpush.xpose.msra.mxu0 %v1690
    %1710 = vmatmul.f32.gmra.mxu0 %v1686
    %v1711 = vpop.f32.mrf.mxu0
    %v1712 = vadd.f32 0.0, %v1711
    %1713 = vmatmul.f32.gmra.mxu0 %v1688
    %v1714 = vpop.f32.mrf.mxu0
    %v1715 = vadd.f32 0.0, %v1714
    %1716 = vdwg.mxu0
    %v1717 = vmul.f32 %v1712, 0.25
    %v1718 = vmul.f32 %v1715, 0.25
    %v1719 = vadd.f32 %v1717, %v303
    %v1720 = vadd.f32 %v1718, %v304
    %v1721 = vsel %vm547, %v1719, -inf
    %1722 = vmax.xlane.f32.xlu0 %v1721
    %v1723 = vpop.xlane.xlu0 %1722
    %v1724 = vsel %vm551, %v1720, -inf
    %1725 = vmax.xlane.f32.xlu0 %v1724
    %v1726 = vpop.xlane.xlu0 %1725
    %v1727 = vsub.f32 %v1719, %v1723
    %v1728 = vsub.f32 %v1720, %v1726
    %v1729 = vmul.f32 %v1727, 1.442695
    %v1730 = vpow.pop %v1729
    %v1731 = vmul.f32 %v1728, 1.442695
    %v1732 = vpow.pop %v1731
    %v1733 = vsel %vm547, %v1730, 0.0
    %1734 = vadd.xlane.f32.xlu0 %v1733
    %v1735 = vpop.xlane.xlu0 %1734
    %v1736 = vsel %vm551, %v1732, 0.0
    %1737 = vadd.xlane.f32.xlu0 %v1736
    %v1738 = vpop.xlane.xlu0 %1737
    %v1739 = vrcp.pop %v1735
    %v1740 = vmul.f32 %v1735, %v1739
    %v1741 = vsub.f32 1.0, %v1740
    %v1742 = vmul.f32 %v1739, %v1741
    %v1743 = vadd.f32 %v1739, %v1742
    %vm1744 = vweird.f32 %v1735
    %vm1745 = vweird.f32 %v1739
    %vm1746 = vmor %vm1744, %vm1745
    %v1747 = vsel %vm1746, %v1739, %v1743
    %v1748 = vand.u32 2147483647, %v1735
    %vm1749 = vcmp.eq.f32.partialorder %v1748, 8.507059e+37
    %v1750 = vand.u32 %v1735, 2147483648
    %v1751 = vor.u32 1.1754944e-38, %v1750
    %v1752 = vsel %vm1749, %v1751, %v1747
    %v1753 = vmul.f32 %v1730, %v1752
    %v1754 = vrcp.pop %v1738
    %v1755 = vmul.f32 %v1738, %v1754
    %v1756 = vsub.f32 1.0, %v1755
    %v1757 = vmul.f32 %v1754, %v1756
    %v1758 = vadd.f32 %v1754, %v1757
    %vm1759 = vweird.f32 %v1738
    %vm1760 = vweird.f32 %v1754
    %vm1761 = vmor %vm1759, %vm1760
    %v1762 = vsel %vm1761, %v1754, %v1758
    %v1763 = vand.u32 2147483647, %v1738
    %vm1764 = vcmp.eq.f32.partialorder %v1763, 8.507059e+37
    %v1765 = vand.u32 %v1738, 2147483648
    %v1766 = vor.u32 1.1754944e-38, %v1765
    %v1767 = vsel %vm1764, %v1766, %v1762
    %v1768 = vmul.f32 %v1732, %v1767
    %1769 = vrot.lane.b32.xlu0 %v1652, 96
    %v1770 = vpop.permute.xlu0 %1769
    %1771 = vrot.lane.b32.xlu0 %v1655, 96
    %v1772 = vpop.permute.xlu0 %1771
    %v1775 = vsel %vm547, %v1753, 0
    %v1778 = vsel %vm547, %v1768, 0
    %v1780 = vsel %vm608, %v1772, 0
    %1782 = vmatpush.msra.mxu0 0.0
    %1783 = vmatpush.msra.mxu0 0.0
    %1784 = vmatpush.msra.mxu0 0.0
    %1785 = vmatpush.msra.mxu0 0.0
    %1786 = vmatpush.msra.mxu0 0.0
    %1787 = vmatpush.msra.mxu0 0.0
    %1788 = vmatpush.msra.mxu0 0.0
    %1789 = vmatpush.msra.mxu0 0.0
    %1790 = vmatpush.msra.mxu0 0.0
    %1791 = vmatpush.msra.mxu0 0.0
    %1792 = vmatpush.msra.mxu0 0.0
    %1793 = vmatpush.msra.mxu0 0.0
    %1794 = vmatpush.msra.mxu0 0.0
    %1795 = vmatpush.msra.mxu0 0.0
    %1796 = vmatpush.msra.mxu0 %v1780
    %1797 = vmatpush.msra.mxu0 %v1770
    %1798 = vmatmul.f32.gmra.mxu0 %v1775
    %v1799 = vpop.f32.mrf.mxu0
    %v1800 = vadd.f32 0.0, %v1799
    %1801 = vmatmul.f32.gmra.mxu0 %v1778
    %v1802 = vpop.f32.mrf.mxu0
    %v1803 = vadd.f32 0.0, %v1802
    %1804 = vdwg.mxu0
    %1805 = vrot.lane.b32.xlu0 %v1652, 80
    %v1806 = vpop.permute.xlu0 %1805
    %1807 = vrot.lane.b32.xlu0 %v1655, 80
    %v1808 = vpop.permute.xlu0 %1807
    %1809 = vrot.lane.b32.xlu0 %v1652, 64
    %v1810 = vpop.permute.xlu0 %1809
    %1811 = vrot.lane.b32.xlu0 %v1655, 64
    %v1812 = vpop.permute.xlu0 %1811
    %v1813 = vsel %vm511, %v1806, 0
    %v1815 = vsel %vm511, %v1808, 0
    %v1817 = vsel %vm511, %v1810, 0
    %v1819 = vsel %vm511, %v1812, 0
    %1821 = vmatpush.xpose.msra.mxu0 0.0
    %1822 = vmatpush.xpose.msra.mxu0 0.0
    %1823 = vmatpush.xpose.msra.mxu0 0.0
    %1824 = vmatpush.xpose.msra.mxu0 0.0
    %1825 = vmatpush.xpose.msra.mxu0 0.0
    %1826 = vmatpush.xpose.msra.mxu0 0.0
    %1827 = vmatpush.xpose.msra.mxu0 0.0
    %1828 = vmatpush.xpose.msra.mxu0 0.0
    %1829 = vmatpush.xpose.msra.mxu0 0.0
    %1830 = vmatpush.xpose.msra.mxu0 0.0
    %1831 = vmatpush.xpose.msra.mxu0 0.0
    %1832 = vmatpush.xpose.msra.mxu0 0.0
    %1833 = vmatpush.xpose.msra.mxu0 0.0
    %1834 = vmatpush.xpose.msra.mxu0 0.0
    %1835 = vmatpush.xpose.msra.mxu0 %v1819
    %1836 = vmatpush.xpose.msra.mxu0 %v1817
    %1837 = vmatmul.f32.gmra.mxu0 %v1813
    %v1838 = vpop.f32.mrf.mxu0
    %v1839 = vadd.f32 0.0, %v1838
    %1840 = vmatmul.f32.gmra.mxu0 %v1815
    %v1841 = vpop.f32.mrf.mxu0
    %v1842 = vadd.f32 0.0, %v1841
    %1843 = vdwg.mxu0
    %v1844 = vmul.f32 %v1839, 0.25
    %v1845 = vmul.f32 %v1842, 0.25
    %v1846 = vadd.f32 %v1844, %v303
    %v1847 = vadd.f32 %v1845, %v304
    %v1848 = vsel %vm547, %v1846, -inf
    %1849 = vmax.xlane.f32.xlu0 %v1848
    %v1850 = vpop.xlane.xlu0 %1849
    %v1851 = vsel %vm551, %v1847, -inf
    %1852 = vmax.xlane.f32.xlu0 %v1851
    %v1853 = vpop.xlane.xlu0 %1852
    %v1854 = vsub.f32 %v1846, %v1850
    %v1855 = vsub.f32 %v1847, %v1853
    %v1856 = vmul.f32 %v1854, 1.442695
    %v1857 = vpow.pop %v1856
    %v1858 = vmul.f32 %v1855, 1.442695
    %v1859 = vpow.pop %v1858
    %v1860 = vsel %vm547, %v1857, 0.0
    %1861 = vadd.xlane.f32.xlu0 %v1860
    %v1862 = vpop.xlane.xlu0 %1861
    %v1863 = vsel %vm551, %v1859, 0.0
    %1864 = vadd.xlane.f32.xlu0 %v1863
    %v1865 = vpop.xlane.xlu0 %1864
    %v1866 = vrcp.pop %v1862
    %v1867 = vmul.f32 %v1862, %v1866
    %v1868 = vsub.f32 1.0, %v1867
    %v1869 = vmul.f32 %v1866, %v1868
    %v1870 = vadd.f32 %v1866, %v1869
    %vm1871 = vweird.f32 %v1862
    %vm1872 = vweird.f32 %v1866
    %vm1873 = vmor %vm1871, %vm1872
    %v1874 = vsel %vm1873, %v1866, %v1870
    %v1875 = vand.u32 2147483647, %v1862
    %vm1876 = vcmp.eq.f32.partialorder %v1875, 8.507059e+37
    %v1877 = vand.u32 %v1862, 2147483648
    %v1878 = vor.u32 1.1754944e-38, %v1877
    %v1879 = vsel %vm1876, %v1878, %v1874
    %v1880 = vmul.f32 %v1857, %v1879
    %v1881 = vrcp.pop %v1865
    %v1882 = vmul.f32 %v1865, %v1881
    %v1883 = vsub.f32 1.0, %v1882
    %v1884 = vmul.f32 %v1881, %v1883
    %v1885 = vadd.f32 %v1881, %v1884
    %vm1886 = vweird.f32 %v1865
    %vm1887 = vweird.f32 %v1881
    %vm1888 = vmor %vm1886, %vm1887
    %v1889 = vsel %vm1888, %v1881, %v1885
    %v1890 = vand.u32 2147483647, %v1865
    %vm1891 = vcmp.eq.f32.partialorder %v1890, 8.507059e+37
    %v1892 = vand.u32 %v1865, 2147483648
    %v1893 = vor.u32 1.1754944e-38, %v1892
    %v1894 = vsel %vm1891, %v1893, %v1889
    %v1895 = vmul.f32 %v1859, %v1894
    %1896 = vrot.lane.b32.xlu0 %v1652, 48
    %v1897 = vpop.permute.xlu0 %1896
    %1898 = vrot.lane.b32.xlu0 %v1655, 48
    %v1899 = vpop.permute.xlu0 %1898
    %v1902 = vsel %vm547, %v1880, 0
    %v1905 = vsel %vm547, %v1895, 0
    %v1907 = vsel %vm608, %v1899, 0
    %1909 = vmatpush.msra.mxu0 0.0
    %1910 = vmatpush.msra.mxu0 0.0
    %1911 = vmatpush.msra.mxu0 0.0
    %1912 = vmatpush.msra.mxu0 0.0
    %1913 = vmatpush.msra.mxu0 0.0
    %1914 = vmatpush.msra.mxu0 0.0
    %1915 = vmatpush.msra.mxu0 0.0
    %1916 = vmatpush.msra.mxu0 0.0
    %1917 = vmatpush.msra.mxu0 0.0
    %1918 = vmatpush.msra.mxu0 0.0
    %1919 = vmatpush.msra.mxu0 0.0
    %1920 = vmatpush.msra.mxu0 0.0
    %1921 = vmatpush.msra.mxu0 0.0
    %1922 = vmatpush.msra.mxu0 0.0
    %1923 = vmatpush.msra.mxu0 %v1907
    %1924 = vmatpush.msra.mxu0 %v1897
    %1925 = vmatmul.f32.gmra.mxu0 %v1902
    %v1926 = vpop.f32.mrf.mxu0
    %v1927 = vadd.f32 0.0, %v1926
    %1928 = vmatmul.f32.gmra.mxu0 %v1905
    %v1929 = vpop.f32.mrf.mxu0
    %v1930 = vadd.f32 0.0, %v1929
    %1931 = vdwg.mxu0
    %v1933 = vsel %vm511, %v1927, 0
    %v1936 = vsel %vm511, %v1930, 0
    %1938 = vmatpush.msra.mxu0 0.0
    %1939 = vmatpush.msra.mxu0 0.0
    %1940 = vmatpush.msra.mxu0 0.0
    %1941 = vmatpush.msra.mxu0 0.0
    %1942 = vmatpush.msra.mxu0 0.0
    %1943 = vmatpush.msra.mxu0 0.0
    %1944 = vmatpush.msra.mxu0 0.0
    %1945 = vmatpush.msra.mxu0 0.0
    %1946 = vmatpush.msra.mxu0 0.0
    %1947 = vmatpush.msra.mxu0 0.0
    %1948 = vmatpush.msra.mxu0 0.0
    %1949 = vmatpush.msra.mxu0 0.0
    %1950 = vmatpush.msra.mxu0 0.0
    %1951 = vmatpush.msra.mxu0 0.0
    %1952 = vmatpush.msra.mxu0 %v1504
    %1953 = vmatpush.msra.mxu0 %v1503
    %1954 = vmatmul.f32.gmra.mxu0 %v1933
    %v1955 = vpop.f32.mrf.mxu0
    %v1956 = vadd.f32 0.0, %v1955
    %1957 = vmatmul.f32.gmra.mxu0 %v1936
    %v1958 = vpop.f32.mrf.mxu0
    %v1959 = vadd.f32 0.0, %v1958
    %1960 = vdwg.mxu0
    %v1962 = vsel %vm511, %v1800, 0
    %v1965 = vsel %vm511, %v1803, 0
    %1967 = vmatpush.msra.mxu0 0.0
    %1968 = vmatpush.msra.mxu0 0.0
    %1969 = vmatpush.msra.mxu0 0.0
    %1970 = vmatpush.msra.mxu0 0.0
    %1971 = vmatpush.msra.mxu0 0.0
    %1972 = vmatpush.msra.mxu0 0.0
    %1973 = vmatpush.msra.mxu0 0.0
    %1974 = vmatpush.msra.mxu0 0.0
    %1975 = vmatpush.msra.mxu0 0.0
    %1976 = vmatpush.msra.mxu0 0.0
    %1977 = vmatpush.msra.mxu0 0.0
    %1978 = vmatpush.msra.mxu0 0.0
    %1979 = vmatpush.msra.mxu0 0.0
    %1980 = vmatpush.msra.mxu0 0.0
    %1981 = vmatpush.msra.mxu0 %v1502
    %1982 = vmatpush.msra.mxu0 %v1501
    %1983 = vmatmul.f32.gmra.mxu0 %v1962
    %v1984 = vpop.f32.mrf.mxu0
    %v1985 = vadd.f32 %v1956, %v1984
    %1986 = vmatmul.f32.gmra.mxu0 %v1965
    %v1987 = vpop.f32.mrf.mxu0
    %v1988 = vadd.f32 %v1959, %v1987
    %1989 = vdwg.mxu0
    %1990 = vrot.lane.b32.xlu0 %v1652, 32
    %v1991 = vpop.permute.xlu0 %1990
    %1992 = vrot.lane.b32.xlu0 %v1655, 32
    %v1993 = vpop.permute.xlu0 %1992
    %1994 = vrot.lane.b32.xlu0 %v1652, 16
    %v1995 = vpop.permute.xlu0 %1994
    %1996 = vrot.lane.b32.xlu0 %v1655, 16
    %v1997 = vpop.permute.xlu0 %1996
    %v1998 = vsel %vm511, %v1991, 0
    %v2000 = vsel %vm511, %v1993, 0
    %v2002 = vsel %vm511, %v1995, 0
    %v2004 = vsel %vm511, %v1997, 0
    %2006 = vmatpush.xpose.msra.mxu0 0.0
    %2007 = vmatpush.xpose.msra.mxu0 0.0
    %2008 = vmatpush.xpose.msra.mxu0 0.0
    %2009 = vmatpush.xpose.msra.mxu0 0.0
    %2010 = vmatpush.xpose.msra.mxu0 0.0
    %2011 = vmatpush.xpose.msra.mxu0 0.0
    %2012 = vmatpush.xpose.msra.mxu0 0.0
    %2013 = vmatpush.xpose.msra.mxu0 0.0
    %2014 = vmatpush.xpose.msra.mxu0 0.0
    %2015 = vmatpush.xpose.msra.mxu0 0.0
    %2016 = vmatpush.xpose.msra.mxu0 0.0
    %2017 = vmatpush.xpose.msra.mxu0 0.0
    %2018 = vmatpush.xpose.msra.mxu0 0.0
    %2019 = vmatpush.xpose.msra.mxu0 0.0
    %2020 = vmatpush.xpose.msra.mxu0 %v2004
    %2021 = vmatpush.xpose.msra.mxu0 %v2002
    %2022 = vmatmul.f32.gmra.mxu0 %v1998
    %v2023 = vpop.f32.mrf.mxu0
    %v2024 = vadd.f32 0.0, %v2023
    %2025 = vmatmul.f32.gmra.mxu0 %v2000
    %v2026 = vpop.f32.mrf.mxu0
    %v2027 = vadd.f32 0.0, %v2026
    %2028 = vdwg.mxu0
    %v2029 = vmul.f32 %v2024, 0.25
    %v2030 = vmul.f32 %v2027, 0.25
    %v2031 = vadd.f32 %v2029, %v303
    %v2032 = vadd.f32 %v2030, %v304
    %v2033 = vsel %vm547, %v2031, -inf
    %2034 = vmax.xlane.f32.xlu0 %v2033
    %v2035 = vpop.xlane.xlu0 %2034
    %v2036 = vsel %vm551, %v2032, -inf
    %2037 = vmax.xlane.f32.xlu0 %v2036
    %v2038 = vpop.xlane.xlu0 %2037
    %v2039 = vsub.f32 %v2031, %v2035
    %v2040 = vsub.f32 %v2032, %v2038
    %v2041 = vmul.f32 %v2039, 1.442695
    %v2042 = vpow.pop %v2041
    %v2043 = vmul.f32 %v2040, 1.442695
    %v2044 = vpow.pop %v2043
    %v2045 = vsel %vm547, %v2042, 0.0
    %2046 = vadd.xlane.f32.xlu0 %v2045
    %v2047 = vpop.xlane.xlu0 %2046
    %v2048 = vsel %vm551, %v2044, 0.0
    %2049 = vadd.xlane.f32.xlu0 %v2048
    %v2050 = vpop.xlane.xlu0 %2049
    %v2051 = vrcp.pop %v2047
    %v2052 = vmul.f32 %v2047, %v2051
    %v2053 = vsub.f32 1.0, %v2052
    %v2054 = vmul.f32 %v2051, %v2053
    %v2055 = vadd.f32 %v2051, %v2054
    %vm2056 = vweird.f32 %v2047
    %vm2057 = vweird.f32 %v2051
    %vm2058 = vmor %vm2056, %vm2057
    %v2059 = vsel %vm2058, %v2051, %v2055
    %v2060 = vand.u32 2147483647, %v2047
    %vm2061 = vcmp.eq.f32.partialorder %v2060, 8.507059e+37
    %v2062 = vand.u32 %v2047, 2147483648
    %v2063 = vor.u32 1.1754944e-38, %v2062
    %v2064 = vsel %vm2061, %v2063, %v2059
    %v2065 = vmul.f32 %v2042, %v2064
    %v2066 = vrcp.pop %v2050
    %v2067 = vmul.f32 %v2050, %v2066
    %v2068 = vsub.f32 1.0, %v2067
    %v2069 = vmul.f32 %v2066, %v2068
    %v2070 = vadd.f32 %v2066, %v2069
    %vm2071 = vweird.f32 %v2050
    %vm2072 = vweird.f32 %v2066
    %vm2073 = vmor %vm2071, %vm2072
    %v2074 = vsel %vm2073, %v2066, %v2070
    %v2075 = vand.u32 2147483647, %v2050
    %vm2076 = vcmp.eq.f32.partialorder %v2075, 8.507059e+37
    %v2077 = vand.u32 %v2050, 2147483648
    %v2078 = vor.u32 1.1754944e-38, %v2077
    %v2079 = vsel %vm2076, %v2078, %v2074
    %v2080 = vmul.f32 %v2044, %v2079
    %v2082 = vsel %vm547, %v2065, 0
    %v2085 = vsel %vm547, %v2080, 0
    %v2088 = vsel %vm608, %v1678, 0
    %2090 = vmatpush.msra.mxu0 0.0
    %2091 = vmatpush.msra.mxu0 0.0
    %2092 = vmatpush.msra.mxu0 0.0
    %2093 = vmatpush.msra.mxu0 0.0
    %2094 = vmatpush.msra.mxu0 0.0
    %2095 = vmatpush.msra.mxu0 0.0
    %2096 = vmatpush.msra.mxu0 0.0
    %2097 = vmatpush.msra.mxu0 0.0
    %2098 = vmatpush.msra.mxu0 0.0
    %2099 = vmatpush.msra.mxu0 0.0
    %2100 = vmatpush.msra.mxu0 0.0
    %2101 = vmatpush.msra.mxu0 0.0
    %2102 = vmatpush.msra.mxu0 0.0
    %2103 = vmatpush.msra.mxu0 0.0
    %2104 = vmatpush.msra.mxu0 %v2088
    %2105 = vmatpush.msra.mxu0 %v1675
    %2106 = vmatmul.f32.gmra.mxu0 %v2082
    %v2107 = vpop.f32.mrf.mxu0
    %v2108 = vadd.f32 0.0, %v2107
    %2109 = vmatmul.f32.gmra.mxu0 %v2085
    %v2110 = vpop.f32.mrf.mxu0
    %v2111 = vadd.f32 0.0, %v2110
    %2112 = vdwg.mxu0
    %v2114 = vsel %vm511, %v2108, 0
    %v2117 = vsel %vm511, %v2111, 0
    %2119 = vmatpush.msra.mxu0 0.0
    %2120 = vmatpush.msra.mxu0 0.0
    %2121 = vmatpush.msra.mxu0 0.0
    %2122 = vmatpush.msra.mxu0 0.0
    %2123 = vmatpush.msra.mxu0 0.0
    %2124 = vmatpush.msra.mxu0 0.0
    %2125 = vmatpush.msra.mxu0 0.0
    %2126 = vmatpush.msra.mxu0 0.0
    %2127 = vmatpush.msra.mxu0 0.0
    %2128 = vmatpush.msra.mxu0 0.0
    %2129 = vmatpush.msra.mxu0 0.0
    %2130 = vmatpush.msra.mxu0 0.0
    %2131 = vmatpush.msra.mxu0 0.0
    %2132 = vmatpush.msra.mxu0 0.0
    %2133 = vmatpush.msra.mxu0 %v1506
    %2134 = vmatpush.msra.mxu0 %v1505
    %2135 = vmatmul.f32.gmra.mxu0 %v2114
    %v2136 = vpop.f32.mrf.mxu0
    %v2137 = vadd.f32 0.0, %v2136
    %2138 = vmatmul.f32.gmra.mxu0 %v2117
    %v2139 = vpop.f32.mrf.mxu0
    %v2140 = vadd.f32 0.0, %v2139
    %2141 = vdwg.mxu0
    %v2142 = vadd.f32 %v1985, %v2137
    %v2143 = vadd.f32 %v1988, %v2140
    %2145 = vrot.lane.b32.xlu0 %v1675, 112
    %v2146 = vpop.permute.xlu0 %2145
    %2147 = vrot.lane.b32.xlu0 %v1678, 112
    %v2148 = vpop.permute.xlu0 %2147
    %2149 = vrot.lane.b32.xlu0 %v1675, 96
    %v2150 = vpop.permute.xlu0 %2149
    %2151 = vrot.lane.b32.xlu0 %v1678, 96
    %v2152 = vpop.permute.xlu0 %2151
    %v2153 = vsel %vm511, %v2146, 0
    %v2155 = vsel %vm511, %v2148, 0
    %v2157 = vsel %vm511, %v2150, 0
    %v2159 = vsel %vm511, %v2152, 0
    %2161 = vmatpush.xpose.msra.mxu0 0.0
    %2162 = vmatpush.xpose.msra.mxu0 0.0
    %2163 = vmatpush.xpose.msra.mxu0 0.0
    %2164 = vmatpush.xpose.msra.mxu0 0.0
    %2165 = vmatpush.xpose.msra.mxu0 0.0
    %2166 = vmatpush.xpose.msra.mxu0 0.0
    %2167 = vmatpush.xpose.msra.mxu0 0.0
    %2168 = vmatpush.xpose.msra.mxu0 0.0
    %2169 = vmatpush.xpose.msra.mxu0 0.0
    %2170 = vmatpush.xpose.msra.mxu0 0.0
    %2171 = vmatpush.xpose.msra.mxu0 0.0
    %2172 = vmatpush.xpose.msra.mxu0 0.0
    %2173 = vmatpush.xpose.msra.mxu0 0.0
    %2174 = vmatpush.xpose.msra.mxu0 0.0
    %2175 = vmatpush.xpose.msra.mxu0 %v2159
    %2176 = vmatpush.xpose.msra.mxu0 %v2157
    %2177 = vmatmul.f32.gmra.mxu0 %v2153
    %v2178 = vpop.f32.mrf.mxu0
    %v2179 = vadd.f32 0.0, %v2178
    %2180 = vmatmul.f32.gmra.mxu0 %v2155
    %v2181 = vpop.f32.mrf.mxu0
    %v2182 = vadd.f32 0.0, %v2181
    %2183 = vdwg.mxu0
    %v2184 = vmul.f32 %v2179, 0.25
    %v2185 = vmul.f32 %v2182, 0.25
    %v2186 = vadd.f32 %v2184, %v303
    %v2187 = vadd.f32 %v2185, %v304
    %v2188 = vsel %vm547, %v2186, -inf
    %2189 = vmax.xlane.f32.xlu0 %v2188
    %v2190 = vpop.xlane.xlu0 %2189
    %v2191 = vsel %vm551, %v2187, -inf
    %2192 = vmax.xlane.f32.xlu0 %v2191
    %v2193 = vpop.xlane.xlu0 %2192
    %v2194 = vsub.f32 %v2186, %v2190
    %v2195 = vsub.f32 %v2187, %v2193
    %v2196 = vmul.f32 %v2194, 1.442695
    %v2197 = vpow.pop %v2196
    %v2198 = vmul.f32 %v2195, 1.442695
    %v2199 = vpow.pop %v2198
    %v2200 = vsel %vm547, %v2197, 0.0
    %2201 = vadd.xlane.f32.xlu0 %v2200
    %v2202 = vpop.xlane.xlu0 %2201
    %v2203 = vsel %vm551, %v2199, 0.0
    %2204 = vadd.xlane.f32.xlu0 %v2203
    %v2205 = vpop.xlane.xlu0 %2204
    %v2206 = vrcp.pop %v2202
    %v2207 = vmul.f32 %v2202, %v2206
    %v2208 = vsub.f32 1.0, %v2207
    %v2209 = vmul.f32 %v2206, %v2208
    %v2210 = vadd.f32 %v2206, %v2209
    %vm2211 = vweird.f32 %v2202
    %vm2212 = vweird.f32 %v2206
    %vm2213 = vmor %vm2211, %vm2212
    %v2214 = vsel %vm2213, %v2206, %v2210
    %v2215 = vand.u32 2147483647, %v2202
    %vm2216 = vcmp.eq.f32.partialorder %v2215, 8.507059e+37
    %v2217 = vand.u32 %v2202, 2147483648
    %v2218 = vor.u32 1.1754944e-38, %v2217
    %v2219 = vsel %vm2216, %v2218, %v2214
    %v2220 = vmul.f32 %v2197, %v2219
    %v2221 = vrcp.pop %v2205
    %v2222 = vmul.f32 %v2205, %v2221
    %v2223 = vsub.f32 1.0, %v2222
    %v2224 = vmul.f32 %v2221, %v2223
    %v2225 = vadd.f32 %v2221, %v2224
    %vm2226 = vweird.f32 %v2205
    %vm2227 = vweird.f32 %v2221
    %vm2228 = vmor %vm2226, %vm2227
    %v2229 = vsel %vm2228, %v2221, %v2225
    %v2230 = vand.u32 2147483647, %v2205
    %vm2231 = vcmp.eq.f32.partialorder %v2230, 8.507059e+37
    %v2232 = vand.u32 %v2205, 2147483648
    %v2233 = vor.u32 1.1754944e-38, %v2232
    %v2234 = vsel %vm2231, %v2233, %v2229
    %v2235 = vmul.f32 %v2199, %v2234
    %2236 = vrot.lane.b32.xlu0 %v1675, 80
    %v2237 = vpop.permute.xlu0 %2236
    %2238 = vrot.lane.b32.xlu0 %v1678, 80
    %v2239 = vpop.permute.xlu0 %2238
    %v2242 = vsel %vm547, %v2220, 0
    %v2245 = vsel %vm547, %v2235, 0
    %v2247 = vsel %vm608, %v2239, 0
    %2249 = vmatpush.msra.mxu0 0.0
    %2250 = vmatpush.msra.mxu0 0.0
    %2251 = vmatpush.msra.mxu0 0.0
    %2252 = vmatpush.msra.mxu0 0.0
    %2253 = vmatpush.msra.mxu0 0.0
    %2254 = vmatpush.msra.mxu0 0.0
    %2255 = vmatpush.msra.mxu0 0.0
    %2256 = vmatpush.msra.mxu0 0.0
    %2257 = vmatpush.msra.mxu0 0.0
    %2258 = vmatpush.msra.mxu0 0.0
    %2259 = vmatpush.msra.mxu0 0.0
    %2260 = vmatpush.msra.mxu0 0.0
    %2261 = vmatpush.msra.mxu0 0.0
    %2262 = vmatpush.msra.mxu0 0.0
    %2263 = vmatpush.msra.mxu0 %v2247
    %2264 = vmatpush.msra.mxu0 %v2237
    %2265 = vmatmul.f32.gmra.mxu0 %v2242
    %v2266 = vpop.f32.mrf.mxu0
    %v2267 = vadd.f32 0.0, %v2266
    %2268 = vmatmul.f32.gmra.mxu0 %v2245
    %v2269 = vpop.f32.mrf.mxu0
    %v2270 = vadd.f32 0.0, %v2269
    %2271 = vdwg.mxu0
    %v2273 = vsel %vm511, %v2267, 0
    %v2276 = vsel %vm511, %v2270, 0
    %2278 = vmatpush.msra.mxu0 0.0
    %2279 = vmatpush.msra.mxu0 0.0
    %2280 = vmatpush.msra.mxu0 0.0
    %2281 = vmatpush.msra.mxu0 0.0
    %2282 = vmatpush.msra.mxu0 0.0
    %2283 = vmatpush.msra.mxu0 0.0
    %2284 = vmatpush.msra.mxu0 0.0
    %2285 = vmatpush.msra.mxu0 0.0
    %2286 = vmatpush.msra.mxu0 0.0
    %2287 = vmatpush.msra.mxu0 0.0
    %2288 = vmatpush.msra.mxu0 0.0
    %2289 = vmatpush.msra.mxu0 0.0
    %2290 = vmatpush.msra.mxu0 0.0
    %2291 = vmatpush.msra.mxu0 0.0
    %2292 = vmatpush.msra.mxu0 %v1508
    %2293 = vmatpush.msra.mxu0 %v1507
    %2294 = vmatmul.f32.gmra.mxu0 %v2273
    %v2295 = vpop.f32.mrf.mxu0
    %v2296 = vadd.f32 0.0, %v2295
    %2297 = vmatmul.f32.gmra.mxu0 %v2276
    %v2298 = vpop.f32.mrf.mxu0
    %v2299 = vadd.f32 0.0, %v2298
    %2300 = vdwg.mxu0
    %v2301 = vadd.f32 %v2142, %v2296
    %v2302 = vadd.f32 %v2143, %v2299
    %v2303 = vadd.f32 %v1475, %v2301
    %v2304 = vadd.f32 %v1476, %v2302
    %v2306 = vperm.slane %v1510, 0
    %v2308 = vadd.f32 %v2303, %v2306
    %v2309 = vadd.f32 %v2304, %v2306
    %v2310 = vsel %vm385, %v2308, 0.0
    %2311 = vadd.xlane.f32.xlu0 %v2310
    %v2312 = vpop.xlane.xlu0 %2311
    %v2313 = vsel %vm389, %v2309, 0.0
    %2314 = vadd.xlane.f32.xlu0 %v2313
    %v2315 = vpop.xlane.xlu0 %2314
    %v2316 = vmul.f32 %v2312, %v399
    %v2317 = vmul.f32 %v2315, %v399
    %v2318 = vsub.f32 %v2308, %v2316
    %v2319 = vsub.f32 %v2309, %v2317
    %v2320 = vmul.f32 %v2318, %v2318
    %v2321 = vmul.f32 %v2319, %v2319
    %v2322 = vsel %vm385, %v2320, 0.0
    %2323 = vadd.xlane.f32.xlu0 %v2322
    %v2324 = vpop.xlane.xlu0 %2323
    %v2325 = vsel %vm389, %v2321, 0.0
    %2326 = vadd.xlane.f32.xlu0 %v2325
    %v2327 = vpop.xlane.xlu0 %2326
    %v2328 = vmul.f32 %v2324, %v399
    %v2329 = vmul.f32 %v2327, %v399
    %v2330 = vadd.f32 %v2328, 1e-06
    %v2331 = vadd.f32 %v2329, 1e-06
    %v2332 = vrsqrt.pop %v2330
    %v2333 = vmul.f32 %v2332, %v2330
    %v2334 = vmul.f32 %v2333, %v2332
    %v2335 = vmul.f32 0.5, %v2334
    %v2336 = vsub.f32 1.5, %v2335
    %v2337 = vmul.f32 %v2332, %v2336
    %vm2338 = vweird.f32 %v2330
    %vm2339 = vweird.f32 %v2332
    %vm2340 = vmor %vm2338, %vm2339
    %v2341 = vsel %vm2340, %v2332, %v2337
    %v2342 = vrsqrt.pop %v2331
    %v2343 = vmul.f32 %v2342, %v2331
    %v2344 = vmul.f32 %v2343, %v2342
    %v2345 = vmul.f32 0.5, %v2344
    %v2346 = vsub.f32 1.5, %v2345
    %v2347 = vmul.f32 %v2342, %v2346
    %vm2348 = vweird.f32 %v2331
    %vm2349 = vweird.f32 %v2342
    %vm2350 = vmor %vm2348, %vm2349
    %v2351 = vsel %vm2350, %v2342, %v2347
    %v2352 = vmul.f32 %v2318, %v2341
    %v2353 = vmul.f32 %v2319, %v2351
    %v2355 = vperm.slane %v1512, 0
    %v2357 = vmul.f32 %v2352, %v2355
    %v2358 = vmul.f32 %v2353, %v2355
    %v2360 = vperm.slane %v1514, 0
    %v2362 = vadd.f32 %v2357, %v2360
    %v2363 = vadd.f32 %v2358, %v2360
    %v2365 = vperm.slane %v1533, 0
    %v2366 = vperm.slane %v1533, 1
    %v2370 = vsel %vm385, %v2362, 0
    %v2373 = vsel %vm385, %v2363, 0
    %2375 = vmatpush.msra.mxu0 0.0
    %2376 = vmatpush.msra.mxu0 0.0
    %2377 = vmatpush.msra.mxu0 0.0
    %2378 = vmatpush.msra.mxu0 0.0
    %2379 = vmatpush.msra.mxu0 0.0
    %2380 = vmatpush.msra.mxu0 0.0
    %2381 = vmatpush.msra.mxu0 0.0
    %2382 = vmatpush.msra.mxu0 0.0
    %2383 = vmatpush.msra.mxu0 %v1530
    %2384 = vmatpush.msra.mxu0 %v1528
    %2385 = vmatpush.msra.mxu0 %v1526
    %2386 = vmatpush.msra.mxu0 %v1524
    %2387 = vmatpush.msra.mxu0 %v1522
    %2388 = vmatpush.msra.mxu0 %v1520
    %2389 = vmatpush.msra.mxu0 %v1518
    %2390 = vmatpush.msra.mxu0 %v1516
    %2391 = vmatmul.f32.gmra.mxu0 %v2370
    %v2392 = vpop.f32.mrf.mxu0
    %v2393 = vadd.f32 %v2365, %v2392
    %2394 = vmatmul.f32.gmra.mxu0 %v2373
    %v2395 = vpop.f32.mrf.mxu0
    %v2396 = vadd.f32 %v2365, %v2395
    %2397 = vdwg.mxu0
    %2398 = vmatpush.msra.mxu0 0.0
    %2399 = vmatpush.msra.mxu0 0.0
    %2400 = vmatpush.msra.mxu0 0.0
    %2401 = vmatpush.msra.mxu0 0.0
    %2402 = vmatpush.msra.mxu0 0.0
    %2403 = vmatpush.msra.mxu0 0.0
    %2404 = vmatpush.msra.mxu0 0.0
    %2405 = vmatpush.msra.mxu0 0.0
    %2406 = vmatpush.msra.mxu0 %v1531
    %2407 = vmatpush.msra.mxu0 %v1529
    %2408 = vmatpush.msra.mxu0 %v1527
    %2409 = vmatpush.msra.mxu0 %v1525
    %2410 = vmatpush.msra.mxu0 %v1523
    %2411 = vmatpush.msra.mxu0 %v1521
    %2412 = vmatpush.msra.mxu0 %v1519
    %2413 = vmatpush.msra.mxu0 %v1517
    %2414 = vmatmul.f32.gmra.mxu0 %v2370
    %v2415 = vpop.f32.mrf.mxu0
    %v2416 = vadd.f32 %v2366, %v2415
    %2417 = vmatmul.f32.gmra.mxu0 %v2373
    %v2418 = vpop.f32.mrf.mxu0
    %v2419 = vadd.f32 %v2366, %v2418
    %2420 = vdwg.mxu0
    %v2421 = vmul.f32 %v2393, 0.5
    %v2422 = vmul.f32 %v2416, 0.5
    %v2423 = vmul.f32 %v2396, 0.5
    %v2424 = vmul.f32 %v2419, 0.5
    %v2425 = vmul.f32 %v2393, 0.70710677
    %v2426 = vmul.f32 %v2416, 0.70710677
    %v2427 = vmul.f32 %v2396, 0.70710677
    %v2428 = vmul.f32 %v2419, 0.70710677
    %v2429 = vmul.f32 %v2425, %v2425
    %v2430 = vmin.f32 16.0, %v2429
    %v2431 = vmul.f32 %v2430, 2.1237322e-06
    %v2432 = vadd.f32 %v2431, 0.00028619796
    %v2433 = vmul.f32 %v2430, %v2432
    %v2434 = vadd.f32 %v2433, 0.0036580483
    %v2435 = vmul.f32 %v2430, %v2434
    %v2436 = vadd.f32 %v2435, 0.05243302
    %v2437 = vmul.f32 %v2430, %v2436
    %v2438 = vadd.f32 %v2437, 0.18741608
    %v2439 = vmul.f32 %v2430, %v2438
    %v2440 = vadd.f32 %v2439, 1.1283791
    %v2441 = vmul.f32 %v2425, %v2440
    %v2442 = vmul.f32 %v2430, 3.8918573e-05
    %v2443 = vadd.f32 %v2442, 0.001143296
    %v2444 = vmul.f32 %v2430, %v2443
    %v2445 = vadd.f32 %v2444, 0.014752088
    %v2446 = vmul.f32 %v2430, %v2445
    %v2447 = vadd.f32 %v2446, 0.112945676
    %v2448 = vmul.f32 %v2430, %v2447
    %v2449 = vadd.f32 %v2448, 0.4994258
    %v2450 = vmul.f32 %v2430, %v2449
    %v2451 = vadd.f32 %v2450, 1.0
    %v2452 = vrcp.pop %v2451
    %v2453 = vmul.f32 %v2451, %v2452
    %v2454 = vsub.f32 1.0, %v2453
    %v2455 = vmul.f32 %v2452, %v2454
    %v2456 = vadd.f32 %v2452, %v2455
    %vm2457 = vweird.f32 %v2451
    %vm2458 = vweird.f32 %v2452
    %vm2459 = vmor %vm2457, %vm2458
    %v2460 = vsel %vm2459, %v2452, %v2456
    %v2461 = vand.u32 2147483647, %v2451
    %vm2462 = vcmp.eq.f32.partialorder %v2461, 8.507059e+37
    %v2463 = vand.u32 %v2451, 2147483648
    %v2464 = vor.u32 1.1754944e-38, %v2463
    %v2465 = vsel %vm2462, %v2464, %v2460
    %v2466 = vmul.f32 %v2441, %v2465
    %v2467 = vmin.f32 %v2466, 1.0
    %v2468 = vmax.f32 %v2467, -1.0
    %v2469 = vmul.f32 %v2426, %v2426
    %v2470 = vmin.f32 16.0, %v2469
    %v2471 = vmul.f32 %v2470, 2.1237322e-06
    %v2472 = vadd.f32 %v2471, 0.00028619796
    %v2473 = vmul.f32 %v2470, %v2472
    %v2474 = vadd.f32 %v2473, 0.0036580483
    %v2475 = vmul.f32 %v2470, %v2474
    %v2476 = vadd.f32 %v2475, 0.05243302
    %v2477 = vmul.f32 %v2470, %v2476
    %v2478 = vadd.f32 %v2477, 0.18741608
    %v2479 = vmul.f32 %v2470, %v2478
    %v2480 = vadd.f32 %v2479, 1.1283791
    %v2481 = vmul.f32 %v2426, %v2480
    %v2482 = vmul.f32 %v2470, 3.8918573e-05
    %v2483 = vadd.f32 %v2482, 0.001143296
    %v2484 = vmul.f32 %v2470, %v2483
    %v2485 = vadd.f32 %v2484, 0.014752088
    %v2486 = vmul.f32 %v2470, %v2485
    %v2487 = vadd.f32 %v2486, 0.112945676
    %v2488 = vmul.f32 %v2470, %v2487
    %v2489 = vadd.f32 %v2488, 0.4994258
    %v2490 = vmul.f32 %v2470, %v2489
    %v2491 = vadd.f32 %v2490, 1.0
    %v2492 = vrcp.pop %v2491
    %v2493 = vmul.f32 %v2491, %v2492
    %v2494 = vsub.f32 1.0, %v2493
    %v2495 = vmul.f32 %v2492, %v2494
    %v2496 = vadd.f32 %v2492, %v2495
    %vm2497 = vweird.f32 %v2491
    %vm2498 = vweird.f32 %v2492
    %vm2499 = vmor %vm2497, %vm2498
    %v2500 = vsel %vm2499, %v2492, %v2496
    %v2501 = vand.u32 2147483647, %v2491
    %vm2502 = vcmp.eq.f32.partialorder %v2501, 8.507059e+37
    %v2503 = vand.u32 %v2491, 2147483648
    %v2504 = vor.u32 1.1754944e-38, %v2503
    %v2505 = vsel %vm2502, %v2504, %v2500
    %v2506 = vmul.f32 %v2481, %v2505
    %v2507 = vmin.f32 %v2506, 1.0
    %v2508 = vmax.f32 %v2507, -1.0
    %v2509 = vmul.f32 %v2427, %v2427
    %v2510 = vmin.f32 16.0, %v2509
    %v2511 = vmul.f32 %v2510, 2.1237322e-06
    %v2512 = vadd.f32 %v2511, 0.00028619796
    %v2513 = vmul.f32 %v2510, %v2512
    %v2514 = vadd.f32 %v2513, 0.0036580483
    %v2515 = vmul.f32 %v2510, %v2514
    %v2516 = vadd.f32 %v2515, 0.05243302
    %v2517 = vmul.f32 %v2510, %v2516
    %v2518 = vadd.f32 %v2517, 0.18741608
    %v2519 = vmul.f32 %v2510, %v2518
    %v2520 = vadd.f32 %v2519, 1.1283791
    %v2521 = vmul.f32 %v2427, %v2520
    %v2522 = vmul.f32 %v2510, 3.8918573e-05
    %v2523 = vadd.f32 %v2522, 0.001143296
    %v2524 = vmul.f32 %v2510, %v2523
    %v2525 = vadd.f32 %v2524, 0.014752088
    %v2526 = vmul.f32 %v2510, %v2525
    %v2527 = vadd.f32 %v2526, 0.112945676
    %v2528 = vmul.f32 %v2510, %v2527
    %v2529 = vadd.f32 %v2528, 0.4994258
    %v2530 = vmul.f32 %v2510, %v2529
    %v2531 = vadd.f32 %v2530, 1.0
    %v2532 = vrcp.pop %v2531
    %v2533 = vmul.f32 %v2531, %v2532
    %v2534 = vsub.f32 1.0, %v2533
    %v2535 = vmul.f32 %v2532, %v2534
    %v2536 = vadd.f32 %v2532, %v2535
    %vm2537 = vweird.f32 %v2531
    %vm2538 = vweird.f32 %v2532
    %vm2539 = vmor %vm2537, %vm2538
    %v2540 = vsel %vm2539, %v2532, %v2536
    %v2541 = vand.u32 2147483647, %v2531
    %vm2542 = vcmp.eq.f32.partialorder %v2541, 8.507059e+37
    %v2543 = vand.u32 %v2531, 2147483648
    %v2544 = vor.u32 1.1754944e-38, %v2543
    %v2545 = vsel %vm2542, %v2544, %v2540
    %v2546 = vmul.f32 %v2521, %v2545
    %v2547 = vmin.f32 %v2546, 1.0
    %v2548 = vmax.f32 %v2547, -1.0
    %v2549 = vmul.f32 %v2428, %v2428
    %v2550 = vmin.f32 16.0, %v2549
    %v2551 = vmul.f32 %v2550, 2.1237322e-06
    %v2552 = vadd.f32 %v2551, 0.00028619796
    %v2553 = vmul.f32 %v2550, %v2552
    %v2554 = vadd.f32 %v2553, 0.0036580483
    %v2555 = vmul.f32 %v2550, %v2554
    %v2556 = vadd.f32 %v2555, 0.05243302
    %v2557 = vmul.f32 %v2550, %v2556
    %v2558 = vadd.f32 %v2557, 0.18741608
    %v2559 = vmul.f32 %v2550, %v2558
    %v2560 = vadd.f32 %v2559, 1.1283791
    %v2561 = vmul.f32 %v2428, %v2560
    %v2562 = vmul.f32 %v2550, 3.8918573e-05
    %v2563 = vadd.f32 %v2562, 0.001143296
    %v2564 = vmul.f32 %v2550, %v2563
    %v2565 = vadd.f32 %v2564, 0.014752088
    %v2566 = vmul.f32 %v2550, %v2565
    %v2567 = vadd.f32 %v2566, 0.112945676
    %v2568 = vmul.f32 %v2550, %v2567
    %v2569 = vadd.f32 %v2568, 0.4994258
    %v2570 = vmul.f32 %v2550, %v2569
    %v2571 = vadd.f32 %v2570, 1.0
    %v2572 = vrcp.pop %v2571
    %v2573 = vmul.f32 %v2571, %v2572
    %v2574 = vsub.f32 1.0, %v2573
    %v2575 = vmul.f32 %v2572, %v2574
    %v2576 = vadd.f32 %v2572, %v2575
    %vm2577 = vweird.f32 %v2571
    %vm2578 = vweird.f32 %v2572
    %vm2579 = vmor %vm2577, %vm2578
    %v2580 = vsel %vm2579, %v2572, %v2576
    %v2581 = vand.u32 2147483647, %v2571
    %vm2582 = vcmp.eq.f32.partialorder %v2581, 8.507059e+37
    %v2583 = vand.u32 %v2571, 2147483648
    %v2584 = vor.u32 1.1754944e-38, %v2583
    %v2585 = vsel %vm2582, %v2584, %v2580
    %v2586 = vmul.f32 %v2561, %v2585
    %v2587 = vmin.f32 %v2586, 1.0
    %v2588 = vmax.f32 %v2587, -1.0
    %v2589 = vadd.f32 %v2468, 1.0
    %v2590 = vadd.f32 %v2508, 1.0
    %v2591 = vadd.f32 %v2548, 1.0
    %v2592 = vadd.f32 %v2588, 1.0
    %v2593 = vmul.f32 %v2421, %v2589
    %v2594 = vmul.f32 %v2422, %v2590
    %v2595 = vmul.f32 %v2423, %v2591
    %v2596 = vmul.f32 %v2424, %v2592
    %v2598 = vperm.slane %v1568, 0
    %2600 = vmatpush.msra.mxu0 %v1550
    %2601 = vmatpush.msra.mxu0 %v1549
    %2602 = vmatpush.msra.mxu0 %v1548
    %2603 = vmatpush.msra.mxu0 %v1547
    %2604 = vmatpush.msra.mxu0 %v1546
    %2605 = vmatpush.msra.mxu0 %v1545
    %2606 = vmatpush.msra.mxu0 %v1544
    %2607 = vmatpush.msra.mxu0 %v1543
    %2608 = vmatpush.msra.mxu0 %v1542
    %2609 = vmatpush.msra.mxu0 %v1541
    %2610 = vmatpush.msra.mxu0 %v1540
    %2611 = vmatpush.msra.mxu0 %v1539
    %2612 = vmatpush.msra.mxu0 %v1538
    %2613 = vmatpush.msra.mxu0 %v1537
    %2614 = vmatpush.msra.mxu0 %v1536
    %2615 = vmatpush.msra.mxu0 %v1535
    %2616 = vmatmul.f32.gmra.mxu0 %v2593
    %v2617 = vpop.f32.mrf.mxu0
    %v2618 = vadd.f32 %v2598, %v2617
    %2619 = vmatmul.f32.gmra.mxu0 %v2595
    %v2620 = vpop.f32.mrf.mxu0
    %v2621 = vadd.f32 %v2598, %v2620
    %2622 = vdwg.mxu0
    %2623 = vmatpush.msra.mxu0 %v1566
    %2624 = vmatpush.msra.mxu0 %v1565
    %2625 = vmatpush.msra.mxu0 %v1564
    %2626 = vmatpush.msra.mxu0 %v1563
    %2627 = vmatpush.msra.mxu0 %v1562
    %2628 = vmatpush.msra.mxu0 %v1561
    %2629 = vmatpush.msra.mxu0 %v1560
    %2630 = vmatpush.msra.mxu0 %v1559
    %2631 = vmatpush.msra.mxu0 %v1558
    %2632 = vmatpush.msra.mxu0 %v1557
    %2633 = vmatpush.msra.mxu0 %v1556
    %2634 = vmatpush.msra.mxu0 %v1555
    %2635 = vmatpush.msra.mxu0 %v1554
    %2636 = vmatpush.msra.mxu0 %v1553
    %2637 = vmatpush.msra.mxu0 %v1552
    %2638 = vmatpush.msra.mxu0 %v1551
    %2639 = vmatmul.f32.gmra.mxu0 %v2594
    %v2640 = vpop.f32.mrf.mxu0
    %v2641 = vadd.f32 %v2618, %v2640
    %2642 = vmatmul.f32.gmra.mxu0 %v2596
    %v2643 = vpop.f32.mrf.mxu0
    %v2644 = vadd.f32 %v2621, %v2643
    %2645 = vdwg.mxu0
    %v2646 = vadd.f32 %v2308, %v2641
    %v2647 = vadd.f32 %v2309, %v2644
    %v2648 = vld [vmem:[%s53] sm:$0x1]
    %v2649 = vld [vmem:[%s55] sm:$0x1]
    %v2650 = vsel %vm385, %v2646, 0.0
    %2651 = vadd.xlane.f32.xlu0 %v2650
    %v2652 = vpop.xlane.xlu0 %2651
    %v2653 = vsel %vm389, %v2647, 0.0
    %2654 = vadd.xlane.f32.xlu0 %v2653
    %v2655 = vpop.xlane.xlu0 %2654
    %v2656 = vmul.f32 %v2652, %v399
    %v2657 = vmul.f32 %v2655, %v399
    %v2658 = vsub.f32 %v2646, %v2656
    %v2659 = vsub.f32 %v2647, %v2657
    %v2660 = vmul.f32 %v2658, %v2658
    %v2661 = vmul.f32 %v2659, %v2659
    %v2662 = vsel %vm385, %v2660, 0.0
    %2663 = vadd.xlane.f32.xlu0 %v2662
    %v2664 = vpop.xlane.xlu0 %2663
    %v2665 = vsel %vm389, %v2661, 0.0
    %2666 = vadd.xlane.f32.xlu0 %v2665
    %v2667 = vpop.xlane.xlu0 %2666
    %v2668 = vmul.f32 %v2664, %v399
    %v2669 = vmul.f32 %v2667, %v399
    %v2670 = vadd.f32 %v2668, 1e-06
    %v2671 = vadd.f32 %v2669, 1e-06
    %v2672 = vrsqrt.pop %v2670
    %v2673 = vmul.f32 %v2672, %v2670
    %v2674 = vmul.f32 %v2673, %v2672
    %v2675 = vmul.f32 0.5, %v2674
    %v2676 = vsub.f32 1.5, %v2675
    %v2677 = vmul.f32 %v2672, %v2676
    %vm2678 = vweird.f32 %v2670
    %vm2679 = vweird.f32 %v2672
    %vm2680 = vmor %vm2678, %vm2679
    %v2681 = vsel %vm2680, %v2672, %v2677
    %v2682 = vrsqrt.pop %v2671
    %v2683 = vmul.f32 %v2682, %v2671
    %v2684 = vmul.f32 %v2683, %v2682
    %v2685 = vmul.f32 0.5, %v2684
    %v2686 = vsub.f32 1.5, %v2685
    %v2687 = vmul.f32 %v2682, %v2686
    %vm2688 = vweird.f32 %v2671
    %vm2689 = vweird.f32 %v2682
    %vm2690 = vmor %vm2688, %vm2689
    %v2691 = vsel %vm2690, %v2682, %v2687
    %v2692 = vmul.f32 %v2658, %v2681
    %v2693 = vmul.f32 %v2659, %v2691
    %v2695 = vperm.slane %v2648, 0
    %v2697 = vmul.f32 %v2692, %v2695
    %v2698 = vmul.f32 %v2693, %v2695
    %v2700 = vperm.slane %v2649, 0
    %v2702 = vadd.f32 %v2697, %v2700
    %v2703 = vadd.f32 %v2698, %v2700
    %v2704 = vld [vmem:[%s57] sm:$0xff]
    %v2705 = vld [vmem:[%s57 + $0x8] sm:$0xff]
    %v2706 = vld [vmem:[%s57 + $0x10] sm:$0xff]
    %v2707 = vld [vmem:[%s57 + $0x18] sm:$0xff]
    %v2708 = vld [vmem:[%s57 + $0x20] sm:$0xff]
    %v2709 = vld [vmem:[%s57 + $0x28] sm:$0xff]
    %v2710 = vld [vmem:[%s57 + $0x30] sm:$0xff]
    %v2711 = vld [vmem:[%s57 + $0x38] sm:$0xff]
    %v2712 = vld [vmem:[%s59] sm:$0x1]
    %v2714 = vperm.slane %v2712, 0
    %v2717 = vsel %vm385, %v2702, 0
    %v2720 = vsel %vm385, %v2703, 0
    %2722 = vmatpush.msra.mxu0 0.0
    %2723 = vmatpush.msra.mxu0 0.0
    %2724 = vmatpush.msra.mxu0 0.0
    %2725 = vmatpush.msra.mxu0 0.0
    %2726 = vmatpush.msra.mxu0 0.0
    %2727 = vmatpush.msra.mxu0 0.0
    %2728 = vmatpush.msra.mxu0 0.0
    %2729 = vmatpush.msra.mxu0 0.0
    %2730 = vmatpush.msra.mxu0 %v2711
    %2731 = vmatpush.msra.mxu0 %v2710
    %2732 = vmatpush.msra.mxu0 %v2709
    %2733 = vmatpush.msra.mxu0 %v2708
    %2734 = vmatpush.msra.mxu0 %v2707
    %2735 = vmatpush.msra.mxu0 %v2706
    %2736 = vmatpush.msra.mxu0 %v2705
    %2737 = vmatpush.msra.mxu0 %v2704
    %2738 = vmatmul.f32.gmra.mxu0 %v2717
    %v2739 = vpop.f32.mrf.mxu0
    %v2740 = vadd.f32 %v2714, %v2739
    %2741 = vmatmul.f32.gmra.mxu0 %v2720
    %v2742 = vpop.f32.mrf.mxu0
    %v2743 = vadd.f32 %v2714, %v2742
    %2744 = vdwg.mxu0
    %2745 = vst.msk [vmem:[#allocation2] sm:$0xff] %vm385, %v2740
    %2746 = vst.msk [vmem:[#allocation2 + $0x8] sm:$0x3] %vm389, %v2743
    %v2747 = vld [vmem:[%s21] sm:$0x1]
    %v2748 = vld [vmem:[#allocation2] sm:$0x1]
    %v2749 = vld [vmem:[%s23] sm:$0x1]
    %v2750 = vadd.f32 %v2748, %v2749
    %2751 = vst.msk [vmem:[#allocation3] sm:$0x1] %vm190, %v2750
    %s2752 = sld [smem:[#allocation11]]
    %p2753 = scmp.lt.s32.totalorder %s2752, 3
    %s2754 = scalar_select %p2753, %s2752, 3
    %s2755 = sadd.s32 %s2754, 1
    %s2756 = scalar_lea.vmem [#allocation2], %s2755
    %v2757 = vld [vmem:[%s2756] sm:$0x1]
    %p2758 = scmp.lt.s32.totalorder %s2752, 4
    %s2759 = scalar_select %p2758, 1, 0
    %s2760 = scvt.s32.f32 %s2759
    %v2761 = vstv %s2760
    %v2762 = vmul.f32 %v2761, %v2757
    %s2763 = ssub.f32 1.0, %s2760
    %v2764 = vstv %s2763
    %v2765 = vmul.f32 %v2764, %v2747
    %v2766 = vadd.f32 %v2762, %v2765
    %v2767 = vld [vmem:[%s23 + $0x1] sm:$0x1]
    %v2768 = vadd.f32 %v2766, %v2767
    %2769 = vst.msk [vmem:[#allocation3 + $0x1] sm:$0x1] %vm190, %v2768
    %s2770 = sld [smem:[#allocation11 + $0x1]]
    %p2771 = scmp.lt.s32.totalorder %s2770, 3
    %s2772 = scalar_select %p2771, %s2770, 3
    %s2773 = sadd.s32 %s2772, 1
    %s2774 = scalar_lea.vmem [#allocation2], %s2773
    %v2775 = vld [vmem:[%s2774] sm:$0x1]
    %p2776 = scmp.lt.s32.totalorder %s2770, 4
    %s2777 = scalar_select %p2776, 1, 0
    %s2778 = scvt.s32.f32 %s2777
    %v2779 = vstv %s2778
    %v2780 = vmul.f32 %v2779, %v2775
    %s2781 = ssub.f32 1.0, %s2778
    %v2782 = vstv %s2781
    %v2783 = vmul.f32 %v2782, %v2747
    %v2784 = vadd.f32 %v2780, %v2783
    %v2785 = vld [vmem:[%s23 + $0x2] sm:$0x1]
    %v2786 = vadd.f32 %v2784, %v2785
    %2787 = vst.msk [vmem:[#allocation3 + $0x2] sm:$0x1] %vm190, %v2786
    %s2788 = sld [smem:[#allocation11 + $0x2]]
    %p2789 = scmp.lt.s32.totalorder %s2788, 3
    %s2790 = scalar_select %p2789, %s2788, 3
    %s2791 = sadd.s32 %s2790, 1
    %s2792 = scalar_lea.vmem [#allocation2], %s2791
    %v2793 = vld [vmem:[%s2792] sm:$0x1]
    %p2794 = scmp.lt.s32.totalorder %s2788, 4
    %s2795 = scalar_select %p2794, 1, 0
    %s2796 = scvt.s32.f32 %s2795
    %v2797 = vstv %s2796
    %v2798 = vmul.f32 %v2797, %v2793
    %s2799 = ssub.f32 1.0, %s2796
    %v2800 = vstv %s2799
    %v2801 = vmul.f32 %v2800, %v2747
    %v2802 = vadd.f32 %v2798, %v2801
    %v2803 = vld [vmem:[%s23 + $0x3] sm:$0x1]
    %v2804 = vadd.f32 %v2802, %v2803
    %2805 = vst.msk [vmem:[#allocation3 + $0x3] sm:$0x1] %vm190, %v2804
    %s2806 = sld [smem:[#allocation11 + $0x3]]
    %p2807 = scmp.lt.s32.totalorder %s2806, 3
    %s2808 = scalar_select %p2807, %s2806, 3
    %s2809 = sadd.s32 %s2808, 1
    %s2810 = scalar_lea.vmem [#allocation2], %s2809
    %v2811 = vld [vmem:[%s2810] sm:$0x1]
    %p2812 = scmp.lt.s32.totalorder %s2806, 4
    %s2813 = scalar_select %p2812, 1, 0
    %s2814 = scvt.s32.f32 %s2813
    %v2815 = vstv %s2814
    %v2816 = vmul.f32 %v2815, %v2811
    %s2817 = ssub.f32 1.0, %s2814
    %v2818 = vstv %s2817
    %v2819 = vmul.f32 %v2818, %v2747
    %v2820 = vadd.f32 %v2816, %v2819
    %v2821 = vld [vmem:[%s23 + $0x4] sm:$0x1]
    %v2822 = vadd.f32 %v2820, %v2821
    %2823 = vst.msk [vmem:[#allocation3 + $0x4] sm:$0x1] %vm190, %v2822
    %s2824 = sld [smem:[#allocation11 + $0x4]]
    %p2825 = scmp.lt.s32.totalorder %s2824, 3
    %s2826 = scalar_select %p2825, %s2824, 3
    %s2827 = sadd.s32 %s2826, 1
    %s2828 = scalar_lea.vmem [#allocation2], %s2827
    %v2829 = vld [vmem:[%s2828] sm:$0x1]
    %p2830 = scmp.lt.s32.totalorder %s2824, 4
    %s2831 = scalar_select %p2830, 1, 0
    %s2832 = scvt.s32.f32 %s2831
    %v2833 = vstv %s2832
    %v2834 = vmul.f32 %v2833, %v2829
    %s2835 = ssub.f32 1.0, %s2832
    %v2836 = vstv %s2835
    %v2837 = vmul.f32 %v2836, %v2747
    %v2838 = vadd.f32 %v2834, %v2837
    %v2839 = vld [vmem:[%s23 + $0x5] sm:$0x1]
    %v2840 = vadd.f32 %v2838, %v2839
    %2841 = vst.msk [vmem:[#allocation3 + $0x5] sm:$0x1] %vm190, %v2840
    %s2842 = sld [smem:[#allocation11 + $0x5]]
    %p2843 = scmp.lt.s32.totalorder %s2842, 3
    %s2844 = scalar_select %p2843, %s2842, 3
    %s2845 = sadd.s32 %s2844, 1
    %s2846 = scalar_lea.vmem [#allocation2], %s2845
    %v2847 = vld [vmem:[%s2846] sm:$0x1]
    %p2848 = scmp.lt.s32.totalorder %s2842, 4
    %s2849 = scalar_select %p2848, 1, 0
    %s2850 = scvt.s32.f32 %s2849
    %v2851 = vstv %s2850
    %v2852 = vmul.f32 %v2851, %v2847
    %s2853 = ssub.f32 1.0, %s2850
    %v2854 = vstv %s2853
    %v2855 = vmul.f32 %v2854, %v2747
    %v2856 = vadd.f32 %v2852, %v2855
    %v2857 = vld [vmem:[%s23 + $0x6] sm:$0x1]
    %v2858 = vadd.f32 %v2856, %v2857
    %2859 = vst.msk [vmem:[#allocation3 + $0x6] sm:$0x1] %vm190, %v2858
    %s2860 = sld [smem:[#allocation11 + $0x6]]
    %p2861 = scmp.lt.s32.totalorder %s2860, 3
    %s2862 = scalar_select %p2861, %s2860, 3
    %s2863 = sadd.s32 %s2862, 1
    %s2864 = scalar_lea.vmem [#allocation2], %s2863
    %v2865 = vld [vmem:[%s2864] sm:$0x1]
    %p2866 = scmp.lt.s32.totalorder %s2860, 4
    %s2867 = scalar_select %p2866, 1, 0
    %s2868 = scvt.s32.f32 %s2867
    %v2869 = vstv %s2868
    %v2870 = vmul.f32 %v2869, %v2865
    %s2871 = ssub.f32 1.0, %s2868
    %v2872 = vstv %s2871
    %v2873 = vmul.f32 %v2872, %v2747
    %v2874 = vadd.f32 %v2870, %v2873
    %v2875 = vld [vmem:[%s23 + $0x7] sm:$0x1]
    %v2876 = vadd.f32 %v2874, %v2875
    %2877 = vst.msk [vmem:[#allocation3 + $0x7] sm:$0x1] %vm190, %v2876
    %s2878 = sld [smem:[#allocation11 + $0x7]]
    %p2879 = scmp.lt.s32.totalorder %s2878, 3
    %s2880 = scalar_select %p2879, %s2878, 3
    %s2881 = sadd.s32 %s2880, 1
    %s2882 = scalar_lea.vmem [#allocation2], %s2881
    %v2883 = vld [vmem:[%s2882] sm:$0x1]
    %p2884 = scmp.lt.s32.totalorder %s2878, 4
    %s2885 = scalar_select %p2884, 1, 0
    %s2886 = scvt.s32.f32 %s2885
    %v2887 = vstv %s2886
    %v2888 = vmul.f32 %v2887, %v2883
    %s2889 = ssub.f32 1.0, %s2886
    %v2890 = vstv %s2889
    %v2891 = vmul.f32 %v2890, %v2747
    %v2892 = vadd.f32 %v2888, %v2891
    %v2893 = vld [vmem:[%s23 + $0x8] sm:$0x1]
    %v2894 = vadd.f32 %v2892, %v2893
    %2895 = vst.msk [vmem:[#allocation3 + $0x8] sm:$0x1] %vm190, %v2894
    %v2896 = vld [vmem:[#allocation2 + $0x5] sm:$0x1]
    %v2897 = vld [vmem:[%s23] sm:$0x1]
    %v2898 = vadd.f32 %v2896, %v2897
    %2899 = vst.msk [vmem:[#allocation3 + $0x9] sm:$0x1] %vm190, %v2898
    %s2900 = sld [smem:[#allocation11 + $0x80]]
    %p2901 = scmp.lt.s32.totalorder %s2900, 3
    %s2902 = scalar_select %p2901, %s2900, 3
    %s2903 = sadd.s32 %s2902, 6
    %s2904 = scalar_lea.vmem [#allocation2], %s2903
    %v2905 = vld [vmem:[%s2904] sm:$0x1]
    %p2906 = scmp.lt.s32.totalorder %s2900, 4
    %s2907 = scalar_select %p2906, 1, 0
    %s2908 = scvt.s32.f32 %s2907
    %v2909 = vstv %s2908
    %v2910 = vmul.f32 %v2909, %v2905
    %s2911 = ssub.f32 1.0, %s2908
    %v2912 = vstv %s2911
    %v2913 = vmul.f32 %v2912, %v2747
    %v2914 = vadd.f32 %v2910, %v2913
    %v2915 = vld [vmem:[%s23 + $0x1] sm:$0x1]
    %v2916 = vadd.f32 %v2914, %v2915
    %2917 = vst.msk [vmem:[#allocation3 + $0xa] sm:$0x1] %vm190, %v2916
    %s2918 = sld [smem:[#allocation11 + $0x81]]
    %p2919 = scmp.lt.s32.totalorder %s2918, 3
    %s2920 = scalar_select %p2919, %s2918, 3
    %s2921 = sadd.s32 %s2920, 6
    %s2922 = scalar_lea.vmem [#allocation2], %s2921
    %v2923 = vld [vmem:[%s2922] sm:$0x1]
    %p2924 = scmp.lt.s32.totalorder %s2918, 4
    %s2925 = scalar_select %p2924, 1, 0
    %s2926 = scvt.s32.f32 %s2925
    %v2927 = vstv %s2926
    %v2928 = vmul.f32 %v2927, %v2923
    %s2929 = ssub.f32 1.0, %s2926
    %v2930 = vstv %s2929
    %v2931 = vmul.f32 %v2930, %v2747
    %v2932 = vadd.f32 %v2928, %v2931
    %v2933 = vld [vmem:[%s23 + $0x2] sm:$0x1]
    %v2934 = vadd.f32 %v2932, %v2933
    %2935 = vst.msk [vmem:[#allocation3 + $0xb] sm:$0x1] %vm190, %v2934
    %s2936 = sld [smem:[#allocation11 + $0x82]]
    %p2937 = scmp.lt.s32.totalorder %s2936, 3
    %s2938 = scalar_select %p2937, %s2936, 3
    %s2939 = sadd.s32 %s2938, 6
    %s2940 = scalar_lea.vmem [#allocation2], %s2939
    %v2941 = vld [vmem:[%s2940] sm:$0x1]
    %p2942 = scmp.lt.s32.totalorder %s2936, 4
    %s2943 = scalar_select %p2942, 1, 0
    %s2944 = scvt.s32.f32 %s2943
    %v2945 = vstv %s2944
    %v2946 = vmul.f32 %v2945, %v2941
    %s2947 = ssub.f32 1.0, %s2944
    %v2948 = vstv %s2947
    %v2949 = vmul.f32 %v2948, %v2747
    %v2950 = vadd.f32 %v2946, %v2949
    %v2951 = vld [vmem:[%s23 + $0x3] sm:$0x1]
    %v2952 = vadd.f32 %v2950, %v2951
    %2953 = vst.msk [vmem:[#allocation3 + $0xc] sm:$0x1] %vm190, %v2952
    %s2954 = sld [smem:[#allocation11 + $0x83]]
    %p2955 = scmp.lt.s32.totalorder %s2954, 3
    %s2956 = scalar_select %p2955, %s2954, 3
    %s2957 = sadd.s32 %s2956, 6
    %s2958 = scalar_lea.vmem [#allocation2], %s2957
    %v2959 = vld [vmem:[%s2958] sm:$0x1]
    %p2960 = scmp.lt.s32.totalorder %s2954, 4
    %s2961 = scalar_select %p2960, 1, 0
    %s2962 = scvt.s32.f32 %s2961
    %v2963 = vstv %s2962
    %v2964 = vmul.f32 %v2963, %v2959
    %s2965 = ssub.f32 1.0, %s2962
    %v2966 = vstv %s2965
    %v2967 = vmul.f32 %v2966, %v2747
    %v2968 = vadd.f32 %v2964, %v2967
    %v2969 = vld [vmem:[%s23 + $0x4] sm:$0x1]
    %v2970 = vadd.f32 %v2968, %v2969
    %2971 = vst.msk [vmem:[#allocation3 + $0xd] sm:$0x1] %vm190, %v2970
    %s2972 = sld [smem:[#allocation11 + $0x84]]
    %p2973 = scmp.lt.s32.totalorder %s2972, 3
    %s2974 = scalar_select %p2973, %s2972, 3
    %s2975 = sadd.s32 %s2974, 6
    %s2976 = scalar_lea.vmem [#allocation2], %s2975
    %v2977 = vld [vmem:[%s2976] sm:$0x1]
    %p2978 = scmp.lt.s32.totalorder %s2972, 4
    %s2979 = scalar_select %p2978, 1, 0
    %s2980 = scvt.s32.f32 %s2979
    %v2981 = vstv %s2980
    %v2982 = vmul.f32 %v2981, %v2977
    %s2983 = ssub.f32 1.0, %s2980
    %v2984 = vstv %s2983
    %v2985 = vmul.f32 %v2984, %v2747
    %v2986 = vadd.f32 %v2982, %v2985
    %v2987 = vld [vmem:[%s23 + $0x5] sm:$0x1]
    %v2988 = vadd.f32 %v2986, %v2987
    %2989 = vst.msk [vmem:[#allocation3 + $0xe] sm:$0x1] %vm190, %v2988
    %s2990 = sld [smem:[#allocation11 + $0x85]]
    %p2991 = scmp.lt.s32.totalorder %s2990, 3
    %s2992 = scalar_select %p2991, %s2990, 3
    %s2993 = sadd.s32 %s2992, 6
    %s2994 = scalar_lea.vmem [#allocation2], %s2993
    %v2995 = vld [vmem:[%s2994] sm:$0x1]
    %p2996 = scmp.lt.s32.totalorder %s2990, 4
    %s2997 = scalar_select %p2996, 1, 0
    %s2998 = scvt.s32.f32 %s2997
    %v2999 = vstv %s2998
    %v3000 = vmul.f32 %v2999, %v2995
    %s3001 = ssub.f32 1.0, %s2998
    %v3002 = vstv %s3001
    %v3003 = vmul.f32 %v3002, %v2747
    %v3004 = vadd.f32 %v3000, %v3003
    %v3005 = vld [vmem:[%s23 + $0x6] sm:$0x1]
    %v3006 = vadd.f32 %v3004, %v3005
    %3007 = vst.msk [vmem:[#allocation3 + $0xf] sm:$0x1] %vm190, %v3006
    %s3008 = sld [smem:[#allocation11 + $0x86]]
    %p3009 = scmp.lt.s32.totalorder %s3008, 3
    %s3010 = scalar_select %p3009, %s3008, 3
    %s3011 = sadd.s32 %s3010, 6
    %s3012 = scalar_lea.vmem [#allocation2], %s3011
    %v3013 = vld [vmem:[%s3012] sm:$0x1]
    %p3014 = scmp.lt.s32.totalorder %s3008, 4
    %s3015 = scalar_select %p3014, 1, 0
    %s3016 = scvt.s32.f32 %s3015
    %v3017 = vstv %s3016
    %v3018 = vmul.f32 %v3017, %v3013
    %s3019 = ssub.f32 1.0, %s3016
    %v3020 = vstv %s3019
    %v3021 = vmul.f32 %v3020, %v2747
    %v3022 = vadd.f32 %v3018, %v3021
    %v3023 = vld [vmem:[%s23 + $0x7] sm:$0x1]
    %v3024 = vadd.f32 %v3022, %v3023
    %3025 = vst.msk [vmem:[#allocation3 + $0x10] sm:$0x1] %vm190, %v3024
    %s3026 = sld [smem:[#allocation11 + $0x87]]
    %p3027 = scmp.lt.s32.totalorder %s3026, 3
    %s3028 = scalar_select %p3027, %s3026, 3
    %s3029 = sadd.s32 %s3028, 6
    %s3030 = scalar_lea.vmem [#allocation2], %s3029
    %v3031 = vld [vmem:[%s3030] sm:$0x1]
    %p3032 = scmp.lt.s32.totalorder %s3026, 4
    %s3033 = scalar_select %p3032, 1, 0
    %s3034 = scvt.s32.f32 %s3033
    %v3035 = vstv %s3034
    %v3036 = vmul.f32 %v3035, %v3031
    %s3037 = ssub.f32 1.0, %s3034
    %v3038 = vstv %s3037
    %v3039 = vmul.f32 %v3038, %v2747
    %v3040 = vadd.f32 %v3036, %v3039
    %v3041 = vld [vmem:[%s23 + $0x8] sm:$0x1]
    %v3042 = vadd.f32 %v3040, %v3041
    %3043 = vst.msk [vmem:[#allocation3 + $0x11] sm:$0x1] %vm190, %v3042
    %v3044 = vld [vmem:[#allocation3] sm:$0xff]
    %v3045 = vld [vmem:[#allocation3 + $0x8] sm:$0xff]
    %v3046 = vld [vmem:[#allocation3 + $0x10] sm:$0x3]
    %v3047 = vld [vmem:[%s27] sm:$0xff]
    %v3048 = vld [vmem:[%s27 + $0x8] sm:$0xff]
    %v3049 = vld [vmem:[%s27 + $0x10] sm:$0x3]
    %s3050 = scalar_lea.vmem %s29, 2
    %v3051 = vld [vmem:[%s3050] sm:$0x1]
    %s3052 = scalar_lea.vmem %s31, 2
    %v3053 = vld [vmem:[%s3052] sm:$0x1]
    %s3054 = scalar_lea.vmem %s33, 256
    %v3055 = vld [vmem:[%s3054] sm:$0xff]
    %v3056 = vld [vmem:[%s3054 + $0x8] sm:$0xff]
    %v3057 = vld [vmem:[%s3054 + $0x10] sm:$0xff]
    %v3058 = vld [vmem:[%s3054 + $0x18] sm:$0xff]
    %v3059 = vld [vmem:[%s3054 + $0x20] sm:$0xff]
    %v3060 = vld [vmem:[%s3054 + $0x28] sm:$0xff]
    %v3061 = vld [vmem:[%s3054 + $0x30] sm:$0xff]
    %v3062 = vld [vmem:[%s3054 + $0x38] sm:$0xff]
    %v3063 = vld [vmem:[%s3054 + $0x40] sm:$0xff]
    %v3064 = vld [vmem:[%s3054 + $0x48] sm:$0xff]
    %v3065 = vld [vmem:[%s3054 + $0x50] sm:$0xff]
    %v3066 = vld [vmem:[%s3054 + $0x58] sm:$0xff]
    %v3067 = vld [vmem:[%s3054 + $0x60] sm:$0xff]
    %v3068 = vld [vmem:[%s3054 + $0x68] sm:$0xff]
    %v3069 = vld [vmem:[%s3054 + $0x70] sm:$0xff]
    %v3070 = vld [vmem:[%s3054 + $0x78] sm:$0xff]
    %s3071 = scalar_lea.vmem %s35, 4
    %v3072 = vld [vmem:[%s3071] sm:$0x3]
    %s3073 = scalar_lea.vmem %s37, 128
    %v3074 = vld [vmem:[%s3073] sm:$0xff]
    %v3075 = vld [vmem:[%s3073 + $0x8] sm:$0xff]
    %v3076 = vld [vmem:[%s3073 + $0x10] sm:$0xff]
    %v3077 = vld [vmem:[%s3073 + $0x18] sm:$0xff]
    %v3078 = vld [vmem:[%s3073 + $0x20] sm:$0xff]
    %v3079 = vld [vmem:[%s3073 + $0x28] sm:$0xff]
    %v3080 = vld [vmem:[%s3073 + $0x30] sm:$0xff]
    %v3081 = vld [vmem:[%s3073 + $0x38] sm:$0xff]
    %s3082 = scalar_lea.vmem %s39, 2
    %v3083 = vld [vmem:[%s3082] sm:$0x1]
    %s3084 = scalar_lea.vmem %s41, 2
    %v3085 = vld [vmem:[%s3084] sm:$0x1]
    %s3086 = scalar_lea.vmem %s43, 2
    %v3087 = vld [vmem:[%s3086] sm:$0x1]
    %s3088 = scalar_lea.vmem %s45, 256
    %v3089 = vld [vmem:[%s3088] sm:$0xff]
    %v3090 = vld [vmem:[%s3088 + $0x8] sm:$0xff]
    %v3091 = vld [vmem:[%s3088 + $0x10] sm:$0xff]
    %v3092 = vld [vmem:[%s3088 + $0x18] sm:$0xff]
    %v3093 = vld [vmem:[%s3088 + $0x20] sm:$0xff]
    %v3094 = vld [vmem:[%s3088 + $0x28] sm:$0xff]
    %v3095 = vld [vmem:[%s3088 + $0x30] sm:$0xff]
    %v3096 = vld [vmem:[%s3088 + $0x38] sm:$0xff]
    %v3097 = vld [vmem:[%s3088 + $0x40] sm:$0xff]
    %v3098 = vld [vmem:[%s3088 + $0x48] sm:$0xff]
    %v3099 = vld [vmem:[%s3088 + $0x50] sm:$0xff]
    %v3100 = vld [vmem:[%s3088 + $0x58] sm:$0xff]
    %v3101 = vld [vmem:[%s3088 + $0x60] sm:$0xff]
    %v3102 = vld [vmem:[%s3088 + $0x68] sm:$0xff]
    %v3103 = vld [vmem:[%s3088 + $0x70] sm:$0xff]
    %v3104 = vld [vmem:[%s3088 + $0x78] sm:$0xff]
    %s3105 = scalar_lea.vmem %s47, 4
    %v3106 = vld [vmem:[%s3105] sm:$0x3]
    %s3107 = scalar_lea.vmem %s49, 512
    %v3108 = vld [vmem:[%s3107] sm:$0xff]
    %v3109 = vld [vmem:[%s3107 + $0x8] sm:$0xff]
    %v3110 = vld [vmem:[%s3107 + $0x10] sm:$0xff]
    %v3111 = vld [vmem:[%s3107 + $0x18] sm:$0xff]
    %v3112 = vld [vmem:[%s3107 + $0x20] sm:$0xff]
    %v3113 = vld [vmem:[%s3107 + $0x28] sm:$0xff]
    %v3114 = vld [vmem:[%s3107 + $0x30] sm:$0xff]
    %v3115 = vld [vmem:[%s3107 + $0x38] sm:$0xff]
    %v3116 = vld [vmem:[%s3107 + $0x40] sm:$0xff]
    %v3117 = vld [vmem:[%s3107 + $0x48] sm:$0xff]
    %v3118 = vld [vmem:[%s3107 + $0x50] sm:$0xff]
    %v3119 = vld [vmem:[%s3107 + $0x58] sm:$0xff]
    %v3120 = vld [vmem:[%s3107 + $0x60] sm:$0xff]
    %v3121 = vld [vmem:[%s3107 + $0x68] sm:$0xff]
    %v3122 = vld [vmem:[%s3107 + $0x70] sm:$0xff]
    %v3123 = vld [vmem:[%s3107 + $0x78] sm:$0xff]
    %v3124 = vld [vmem:[%s3107 + $0x80] sm:$0xff]
    %v3125 = vld [vmem:[%s3107 + $0x88] sm:$0xff]
    %v3126 = vld [vmem:[%s3107 + $0x90] sm:$0xff]
    %v3127 = vld [vmem:[%s3107 + $0x98] sm:$0xff]
    %v3128 = vld [vmem:[%s3107 + $0xa0] sm:$0xff]
    %v3129 = vld [vmem:[%s3107 + $0xa8] sm:$0xff]
    %v3130 = vld [vmem:[%s3107 + $0xb0] sm:$0xff]
    %v3131 = vld [vmem:[%s3107 + $0xb8] sm:$0xff]
    %v3132 = vld [vmem:[%s3107 + $0xc0] sm:$0xff]
    %v3133 = vld [vmem:[%s3107 + $0xc8] sm:$0xff]
    %v3134 = vld [vmem:[%s3107 + $0xd0] sm:$0xff]
    %v3135 = vld [vmem:[%s3107 + $0xd8] sm:$0xff]
    %v3136 = vld [vmem:[%s3107 + $0xe0] sm:$0xff]
    %v3137 = vld [vmem:[%s3107 + $0xe8] sm:$0xff]
    %v3138 = vld [vmem:[%s3107 + $0xf0] sm:$0xff]
    %v3139 = vld [vmem:[%s3107 + $0xf8] sm:$0xff]
    %s3140 = scalar_lea.vmem %s51, 2
    %v3141 = vld [vmem:[%s3140] sm:$0x1]
    %v3142 = vsel %vm385, %v3044, 0.0
    %3143 = vadd.xlane.f32.xlu0 %v3142
    %v3144 = vpop.xlane.xlu0 %3143
    %v3145 = vsel %vm385, %v3045, 0.0
    %3146 = vadd.xlane.f32.xlu0 %v3145
    %v3147 = vpop.xlane.xlu0 %3146
    %v3148 = vsel %vm389, %v3046, 0.0
    %3149 = vadd.xlane.f32.xlu0 %v3148
    %v3150 = vpop.xlane.xlu0 %3149
    %v3151 = vmul.f32 %v3144, %v399
    %v3152 = vmul.f32 %v3147, %v399
    %v3153 = vmul.f32 %v3150, %v399
    %v3154 = vsub.f32 %v3044, %v3151
    %v3155 = vsub.f32 %v3045, %v3152
    %v3156 = vsub.f32 %v3046, %v3153
    %v3157 = vmul.f32 %v3154, %v3154
    %v3158 = vmul.f32 %v3155, %v3155
    %v3159 = vmul.f32 %v3156, %v3156
    %v3160 = vsel %vm385, %v3157, 0.0
    %3161 = vadd.xlane.f32.xlu0 %v3160
    %v3162 = vpop.xlane.xlu0 %3161
    %v3163 = vsel %vm385, %v3158, 0.0
    %3164 = vadd.xlane.f32.xlu0 %v3163
    %v3165 = vpop.xlane.xlu0 %3164
    %v3166 = vsel %vm389, %v3159, 0.0
    %3167 = vadd.xlane.f32.xlu0 %v3166
    %v3168 = vpop.xlane.xlu0 %3167
    %v3169 = vmul.f32 %v3162, %v399
    %v3170 = vmul.f32 %v3165, %v399
    %v3171 = vmul.f32 %v3168, %v399
    %v3172 = vadd.f32 %v3169, 1e-06
    %v3173 = vadd.f32 %v3170, 1e-06
    %v3174 = vadd.f32 %v3171, 1e-06
    %v3175 = vrsqrt.pop %v3172
    %v3176 = vmul.f32 %v3175, %v3172
    %v3177 = vmul.f32 %v3176, %v3175
    %v3178 = vmul.f32 0.5, %v3177
    %v3179 = vsub.f32 1.5, %v3178
    %v3180 = vmul.f32 %v3175, %v3179
    %vm3181 = vweird.f32 %v3172
    %vm3182 = vweird.f32 %v3175
    %vm3183 = vmor %vm3181, %vm3182
    %v3184 = vsel %vm3183, %v3175, %v3180
    %v3185 = vrsqrt.pop %v3173
    %v3186 = vmul.f32 %v3185, %v3173
    %v3187 = vmul.f32 %v3186, %v3185
    %v3188 = vmul.f32 0.5, %v3187
    %v3189 = vsub.f32 1.5, %v3188
    %v3190 = vmul.f32 %v3185, %v3189
    %vm3191 = vweird.f32 %v3173
    %vm3192 = vweird.f32 %v3185
    %vm3193 = vmor %vm3191, %vm3192
    %v3194 = vsel %vm3193, %v3185, %v3190
    %v3195 = vrsqrt.pop %v3174
    %v3196 = vmul.f32 %v3195, %v3174
    %v3197 = vmul.f32 %v3196, %v3195
    %v3198 = vmul.f32 0.5, %v3197
    %v3199 = vsub.f32 1.5, %v3198
    %v3200 = vmul.f32 %v3195, %v3199
    %vm3201 = vweird.f32 %v3174
    %vm3202 = vweird.f32 %v3195
    %vm3203 = vmor %vm3201, %vm3202
    %v3204 = vsel %vm3203, %v3195, %v3200
    %v3205 = vmul.f32 %v3154, %v3184
    %v3206 = vmul.f32 %v3155, %v3194
    %v3207 = vmul.f32 %v3156, %v3204
    %v3209 = vperm.slane %v3051, 0
    %v3211 = vmul.f32 %v3205, %v3209
    %v3212 = vmul.f32 %v3206, %v3209
    %v3213 = vmul.f32 %v3207, %v3209
    %v3215 = vperm.slane %v3053, 0
    %v3217 = vadd.f32 %v3211, %v3215
    %v3218 = vadd.f32 %v3212, %v3215
    %v3219 = vadd.f32 %v3213, %v3215
    %v3221 = vperm.slane %v3072, 0
    %v3222 = vperm.slane %v3072, 1
    %v3226 = vsel %vm385, %v3217, 0
    %v3229 = vsel %vm385, %v3218, 0
    %v3232 = vsel %vm385, %v3219, 0
    %3234 = vmatpush.msra.mxu0 0.0
    %3235 = vmatpush.msra.mxu0 0.0
    %3236 = vmatpush.msra.mxu0 0.0
    %3237 = vmatpush.msra.mxu0 0.0
    %3238 = vmatpush.msra.mxu0 0.0
    %3239 = vmatpush.msra.mxu0 0.0
    %3240 = vmatpush.msra.mxu0 0.0
    %3241 = vmatpush.msra.mxu0 0.0
    %3242 = vmatpush.msra.mxu0 %v3069
    %3243 = vmatpush.msra.mxu0 %v3067
    %3244 = vmatpush.msra.mxu0 %v3065
    %3245 = vmatpush.msra.mxu0 %v3063
    %3246 = vmatpush.msra.mxu0 %v3061
    %3247 = vmatpush.msra.mxu0 %v3059
    %3248 = vmatpush.msra.mxu0 %v3057
    %3249 = vmatpush.msra.mxu0 %v3055
    %3250 = vmatmul.f32.gmra.mxu0 %v3226
    %v3251 = vpop.f32.mrf.mxu0
    %v3252 = vadd.f32 %v3221, %v3251
    %3253 = vmatmul.f32.gmra.mxu0 %v3229
    %v3254 = vpop.f32.mrf.mxu0
    %v3255 = vadd.f32 %v3221, %v3254
    %3256 = vmatmul.f32.gmra.mxu0 %v3232
    %v3257 = vpop.f32.mrf.mxu0
    %v3258 = vadd.f32 %v3221, %v3257
    %3259 = vdwg.mxu0
    %3260 = vmatpush.msra.mxu0 0.0
    %3261 = vmatpush.msra.mxu0 0.0
    %3262 = vmatpush.msra.mxu0 0.0
    %3263 = vmatpush.msra.mxu0 0.0
    %3264 = vmatpush.msra.mxu0 0.0
    %3265 = vmatpush.msra.mxu0 0.0
    %3266 = vmatpush.msra.mxu0 0.0
    %3267 = vmatpush.msra.mxu0 0.0
    %3268 = vmatpush.msra.mxu0 %v3070
    %3269 = vmatpush.msra.mxu0 %v3068
    %3270 = vmatpush.msra.mxu0 %v3066
    %3271 = vmatpush.msra.mxu0 %v3064
    %3272 = vmatpush.msra.mxu0 %v3062
    %3273 = vmatpush.msra.mxu0 %v3060
    %3274 = vmatpush.msra.mxu0 %v3058
    %3275 = vmatpush.msra.mxu0 %v3056
    %3276 = vmatmul.f32.gmra.mxu0 %v3226
    %v3277 = vpop.f32.mrf.mxu0
    %v3278 = vadd.f32 %v3222, %v3277
    %3279 = vmatmul.f32.gmra.mxu0 %v3229
    %v3280 = vpop.f32.mrf.mxu0
    %v3281 = vadd.f32 %v3222, %v3280
    %3282 = vmatmul.f32.gmra.mxu0 %v3232
    %v3283 = vpop.f32.mrf.mxu0
    %v3284 = vadd.f32 %v3222, %v3283
    %3285 = vdwg.mxu0
    %3289 = vrot.lane.b32.xlu0 %v3252, 112
    %v3290 = vpop.permute.xlu0 %3289
    %3291 = vrot.lane.b32.xlu0 %v3255, 112
    %v3292 = vpop.permute.xlu0 %3291
    %3293 = vrot.lane.b32.xlu0 %v3258, 112
    %v3294 = vpop.permute.xlu0 %3293
    %v3295 = vsel %vm511, %v3252, 0
    %v3297 = vsel %vm511, %v3255, 0
    %v3299 = vsel %vm511, %v3258, 0
    %v3301 = vsel %vm511, %v3290, 0
    %v3303 = vsel %vm511, %v3292, 0
    %v3305 = vsel %vm511, %v3294, 0
    %3307 = vmatpush.xpose.msra.mxu0 0.0
    %3308 = vmatpush.xpose.msra.mxu0 0.0
    %3309 = vmatpush.xpose.msra.mxu0 0.0
    %3310 = vmatpush.xpose.msra.mxu0 0.0
    %3311 = vmatpush.xpose.msra.mxu0 0.0
    %3312 = vmatpush.xpose.msra.mxu0 0.0
    %3313 = vmatpush.xpose.msra.mxu0 0.0
    %3314 = vmatpush.xpose.msra.mxu0 0.0
    %3315 = vmatpush.xpose.msra.mxu0 0.0
    %3316 = vmatpush.xpose.msra.mxu0 0.0
    %3317 = vmatpush.xpose.msra.mxu0 0.0
    %3318 = vmatpush.xpose.msra.mxu0 0.0
    %3319 = vmatpush.xpose.msra.mxu0 0.0
    %3320 = vmatpush.xpose.msra.mxu0 %v3305
    %3321 = vmatpush.xpose.msra.mxu0 %v3303
    %3322 = vmatpush.xpose.msra.mxu0 %v3301
    %3323 = vmatmul.f32.gmra.mxu0 %v3295
    %v3324 = vpop.f32.mrf.mxu0
    %v3325 = vadd.f32 0.0, %v3324
    %3326 = vmatmul.f32.gmra.mxu0 %v3297
    %v3327 = vpop.f32.mrf.mxu0
    %v3328 = vadd.f32 0.0, %v3327
    %3329 = vmatmul.f32.gmra.mxu0 %v3299
    %v3330 = vpop.f32.mrf.mxu0
    %v3331 = vadd.f32 0.0, %v3330
    %3332 = vdwg.mxu0
    %v3333 = vmul.f32 %v3325, 0.25
    %v3334 = vmul.f32 %v3328, 0.25
    %v3335 = vmul.f32 %v3331, 0.25
    %v3336 = vadd.f32 %v3333, %v3047
    %v3337 = vadd.f32 %v3334, %v3048
    %v3338 = vadd.f32 %v3335, %v3049
    %vm3339 = vcmask 146432
    %v3340 = vsel %vm3339, %v3336, -inf
    %3341 = vmax.xlane.f32.xlu0 %v3340
    %v3342 = vpop.xlane.xlu0 %3341
    %v3343 = vsel %vm3339, %v3337, -inf
    %3344 = vmax.xlane.f32.xlu0 %v3343
    %v3345 = vpop.xlane.xlu0 %3344
    %vm3346 = vcmask 140288
    %v3347 = vsel %vm3346, %v3338, -inf
    %3348 = vmax.xlane.f32.xlu0 %v3347
    %v3349 = vpop.xlane.xlu0 %3348
    %v3350 = vsub.f32 %v3336, %v3342
    %v3351 = vsub.f32 %v3337, %v3345
    %v3352 = vsub.f32 %v3338, %v3349
    %v3353 = vmul.f32 %v3350, 1.442695
    %v3354 = vpow.pop %v3353
    %v3355 = vmul.f32 %v3351, 1.442695
    %v3356 = vpow.pop %v3355
    %v3357 = vmul.f32 %v3352, 1.442695
    %v3358 = vpow.pop %v3357
    %v3359 = vsel %vm3339, %v3354, 0.0
    %3360 = vadd.xlane.f32.xlu0 %v3359
    %v3361 = vpop.xlane.xlu0 %3360
    %v3362 = vsel %vm3339, %v3356, 0.0
    %3363 = vadd.xlane.f32.xlu0 %v3362
    %v3364 = vpop.xlane.xlu0 %3363
    %v3365 = vsel %vm3346, %v3358, 0.0
    %3366 = vadd.xlane.f32.xlu0 %v3365
    %v3367 = vpop.xlane.xlu0 %3366
    %v3368 = vrcp.pop %v3361
    %v3369 = vmul.f32 %v3361, %v3368
    %v3370 = vsub.f32 1.0, %v3369
    %v3371 = vmul.f32 %v3368, %v3370
    %v3372 = vadd.f32 %v3368, %v3371
    %vm3373 = vweird.f32 %v3361
    %vm3374 = vweird.f32 %v3368
    %vm3375 = vmor %vm3373, %vm3374
    %v3376 = vsel %vm3375, %v3368, %v3372
    %v3377 = vand.u32 2147483647, %v3361
    %vm3378 = vcmp.eq.f32.partialorder %v3377, 8.507059e+37
    %v3379 = vand.u32 %v3361, 2147483648
    %v3380 = vor.u32 1.1754944e-38, %v3379
    %v3381 = vsel %vm3378, %v3380, %v3376
    %v3382 = vmul.f32 %v3354, %v3381
    %v3383 = vrcp.pop %v3364
    %v3384 = vmul.f32 %v3364, %v3383
    %v3385 = vsub.f32 1.0, %v3384
    %v3386 = vmul.f32 %v3383, %v3385
    %v3387 = vadd.f32 %v3383, %v3386
    %vm3388 = vweird.f32 %v3364
    %vm3389 = vweird.f32 %v3383
    %vm3390 = vmor %vm3388, %vm3389
    %v3391 = vsel %vm3390, %v3383, %v3387
    %v3392 = vand.u32 2147483647, %v3364
    %vm3393 = vcmp.eq.f32.partialorder %v3392, 8.507059e+37
    %v3394 = vand.u32 %v3364, 2147483648
    %v3395 = vor.u32 1.1754944e-38, %v3394
    %v3396 = vsel %vm3393, %v3395, %v3391
    %v3397 = vmul.f32 %v3356, %v3396
    %v3398 = vrcp.pop %v3367
    %v3399 = vmul.f32 %v3367, %v3398
    %v3400 = vsub.f32 1.0, %v3399
    %v3401 = vmul.f32 %v3398, %v3400
    %v3402 = vadd.f32 %v3398, %v3401
    %vm3403 = vweird.f32 %v3367
    %vm3404 = vweird.f32 %v3398
    %vm3405 = vmor %vm3403, %vm3404
    %v3406 = vsel %vm3405, %v3398, %v3402
    %v3407 = vand.u32 2147483647, %v3367
    %vm3408 = vcmp.eq.f32.partialorder %v3407, 8.507059e+37
    %v3409 = vand.u32 %v3367, 2147483648
    %v3410 = vor.u32 1.1754944e-38, %v3409
    %v3411 = vsel %vm3408, %v3410, %v3406
    %v3412 = vmul.f32 %v3358, %v3411
    %3413 = vrot.lane.b32.xlu0 %v3252, 96
    %v3414 = vpop.permute.xlu0 %3413
    %3415 = vrot.lane.b32.xlu0 %v3255, 96
    %v3416 = vpop.permute.xlu0 %3415
    %3417 = vrot.lane.b32.xlu0 %v3258, 96
    %v3418 = vpop.permute.xlu0 %3417
    %v3422 = vsel %vm3339, %v3382, 0
    %v3425 = vsel %vm3339, %v3397, 0
    %v3428 = vsel %vm3339, %v3412, 0
    %v3430 = vsel %vm608, %v3418, 0
    %3432 = vmatpush.msra.mxu0 0.0
    %3433 = vmatpush.msra.mxu0 0.0
    %3434 = vmatpush.msra.mxu0 0.0
    %3435 = vmatpush.msra.mxu0 0.0
    %3436 = vmatpush.msra.mxu0 0.0
    %3437 = vmatpush.msra.mxu0 0.0
    %3438 = vmatpush.msra.mxu0 0.0
    %3439 = vmatpush.msra.mxu0 0.0
    %3440 = vmatpush.msra.mxu0 0.0
    %3441 = vmatpush.msra.mxu0 0.0
    %3442 = vmatpush.msra.mxu0 0.0
    %3443 = vmatpush.msra.mxu0 0.0
    %3444 = vmatpush.msra.mxu0 0.0
    %3445 = vmatpush.msra.mxu0 %v3430
    %3446 = vmatpush.msra.mxu0 %v3416
    %3447 = vmatpush.msra.mxu0 %v3414
    %3448 = vmatmul.f32.gmra.mxu0 %v3422
    %v3449 = vpop.f32.mrf.mxu0
    %v3450 = vadd.f32 0.0, %v3449
    %3451 = vmatmul.f32.gmra.mxu0 %v3425
    %v3452 = vpop.f32.mrf.mxu0
    %v3453 = vadd.f32 0.0, %v3452
    %3454 = vmatmul.f32.gmra.mxu0 %v3428
    %v3455 = vpop.f32.mrf.mxu0
    %v3456 = vadd.f32 0.0, %v3455
    %3457 = vdwg.mxu0
    %3458 = vrot.lane.b32.xlu0 %v3252, 80
    %v3459 = vpop.permute.xlu0 %3458
    %3460 = vrot.lane.b32.xlu0 %v3255, 80
    %v3461 = vpop.permute.xlu0 %3460
    %3462 = vrot.lane.b32.xlu0 %v3258, 80
    %v3463 = vpop.permute.xlu0 %3462
    %3464 = vrot.lane.b32.xlu0 %v3252, 64
    %v3465 = vpop.permute.xlu0 %3464
    %3466 = vrot.lane.b32.xlu0 %v3255, 64
    %v3467 = vpop.permute.xlu0 %3466
    %3468 = vrot.lane.b32.xlu0 %v3258, 64
    %v3469 = vpop.permute.xlu0 %3468
    %v3470 = vsel %vm511, %v3459, 0
    %v3472 = vsel %vm511, %v3461, 0
    %v3474 = vsel %vm511, %v3463, 0
    %v3476 = vsel %vm511, %v3465, 0
    %v3478 = vsel %vm511, %v3467, 0
    %v3480 = vsel %vm511, %v3469, 0
    %3482 = vmatpush.xpose.msra.mxu0 0.0
    %3483 = vmatpush.xpose.msra.mxu0 0.0
    %3484 = vmatpush.xpose.msra.mxu0 0.0
    %3485 = vmatpush.xpose.msra.mxu0 0.0
    %3486 = vmatpush.xpose.msra.mxu0 0.0
    %3487 = vmatpush.xpose.msra.mxu0 0.0
    %3488 = vmatpush.xpose.msra.mxu0 0.0
    %3489 = vmatpush.xpose.msra.mxu0 0.0
    %3490 = vmatpush.xpose.msra.mxu0 0.0
    %3491 = vmatpush.xpose.msra.mxu0 0.0
    %3492 = vmatpush.xpose.msra.mxu0 0.0
    %3493 = vmatpush.xpose.msra.mxu0 0.0
    %3494 = vmatpush.xpose.msra.mxu0 0.0
    %3495 = vmatpush.xpose.msra.mxu0 %v3480
    %3496 = vmatpush.xpose.msra.mxu0 %v3478
    %3497 = vmatpush.xpose.msra.mxu0 %v3476
    %3498 = vmatmul.f32.gmra.mxu0 %v3470
    %v3499 = vpop.f32.mrf.mxu0
    %v3500 = vadd.f32 0.0, %v3499
    %3501 = vmatmul.f32.gmra.mxu0 %v3472
    %v3502 = vpop.f32.mrf.mxu0
    %v3503 = vadd.f32 0.0, %v3502
    %3504 = vmatmul.f32.gmra.mxu0 %v3474
    %v3505 = vpop.f32.mrf.mxu0
    %v3506 = vadd.f32 0.0, %v3505
    %3507 = vdwg.mxu0
    %v3508 = vmul.f32 %v3500, 0.25
    %v3509 = vmul.f32 %v3503, 0.25
    %v3510 = vmul.f32 %v3506, 0.25
    %v3511 = vadd.f32 %v3508, %v3047
    %v3512 = vadd.f32 %v3509, %v3048
    %v3513 = vadd.f32 %v3510, %v3049
    %v3514 = vsel %vm3339, %v3511, -inf
    %3515 = vmax.xlane.f32.xlu0 %v3514
    %v3516 = vpop.xlane.xlu0 %3515
    %v3517 = vsel %vm3339, %v3512, -inf
    %3518 = vmax.xlane.f32.xlu0 %v3517
    %v3519 = vpop.xlane.xlu0 %3518
    %v3520 = vsel %vm3346, %v3513, -inf
    %3521 = vmax.xlane.f32.xlu0 %v3520
    %v3522 = vpop.xlane.xlu0 %3521
    %v3523 = vsub.f32 %v3511, %v3516
    %v3524 = vsub.f32 %v3512, %v3519
    %v3525 = vsub.f32 %v3513, %v3522
    %v3526 = vmul.f32 %v3523, 1.442695
    %v3527 = vpow.pop %v3526
    %v3528 = vmul.f32 %v3524, 1.442695
    %v3529 = vpow.pop %v3528
    %v3530 = vmul.f32 %v3525, 1.442695
    %v3531 = vpow.pop %v3530
    %v3532 = vsel %vm3339, %v3527, 0.0
    %3533 = vadd.xlane.f32.xlu0 %v3532
    %v3534 = vpop.xlane.xlu0 %3533
    %v3535 = vsel %vm3339, %v3529, 0.0
    %3536 = vadd.xlane.f32.xlu0 %v3535
    %v3537 = vpop.xlane.xlu0 %3536
    %v3538 = vsel %vm3346, %v3531, 0.0
    %3539 = vadd.xlane.f32.xlu0 %v3538
    %v3540 = vpop.xlane.xlu0 %3539
    %v3541 = vrcp.pop %v3534
    %v3542 = vmul.f32 %v3534, %v3541
    %v3543 = vsub.f32 1.0, %v3542
    %v3544 = vmul.f32 %v3541, %v3543
    %v3545 = vadd.f32 %v3541, %v3544
    %vm3546 = vweird.f32 %v3534
    %vm3547 = vweird.f32 %v3541
    %vm3548 = vmor %vm3546, %vm3547
    %v3549 = vsel %vm3548, %v3541, %v3545
    %v3550 = vand.u32 2147483647, %v3534
    %vm3551 = vcmp.eq.f32.partialorder %v3550, 8.507059e+37
    %v3552 = vand.u32 %v3534, 2147483648
    %v3553 = vor.u32 1.1754944e-38, %v3552
    %v3554 = vsel %vm3551, %v3553, %v3549
    %v3555 = vmul.f32 %v3527, %v3554
    %v3556 = vrcp.pop %v3537
    %v3557 = vmul.f32 %v3537, %v3556
    %v3558 = vsub.f32 1.0, %v3557
    %v3559 = vmul.f32 %v3556, %v3558
    %v3560 = vadd.f32 %v3556, %v3559
    %vm3561 = vweird.f32 %v3537
    %vm3562 = vweird.f32 %v3556
    %vm3563 = vmor %vm3561, %vm3562
    %v3564 = vsel %vm3563, %v3556, %v3560
    %v3565 = vand.u32 2147483647, %v3537
    %vm3566 = vcmp.eq.f32.partialorder %v3565, 8.507059e+37
    %v3567 = vand.u32 %v3537, 2147483648
    %v3568 = vor.u32 1.1754944e-38, %v3567
    %v3569 = vsel %vm3566, %v3568, %v3564
    %v3570 = vmul.f32 %v3529, %v3569
    %v3571 = vrcp.pop %v3540
    %v3572 = vmul.f32 %v3540, %v3571
    %v3573 = vsub.f32 1.0, %v3572
    %v3574 = vmul.f32 %v3571, %v3573
    %v3575 = vadd.f32 %v3571, %v3574
    %vm3576 = vweird.f32 %v3540
    %vm3577 = vweird.f32 %v3571
    %vm3578 = vmor %vm3576, %vm3577
    %v3579 = vsel %vm3578, %v3571, %v3575
    %v3580 = vand.u32 2147483647, %v3540
    %vm3581 = vcmp.eq.f32.partialorder %v3580, 8.507059e+37
    %v3582 = vand.u32 %v3540, 2147483648
    %v3583 = vor.u32 1.1754944e-38, %v3582
    %v3584 = vsel %vm3581, %v3583, %v3579
    %v3585 = vmul.f32 %v3531, %v3584
    %3586 = vrot.lane.b32.xlu0 %v3252, 48
    %v3587 = vpop.permute.xlu0 %3586
    %3588 = vrot.lane.b32.xlu0 %v3255, 48
    %v3589 = vpop.permute.xlu0 %3588
    %3590 = vrot.lane.b32.xlu0 %v3258, 48
    %v3591 = vpop.permute.xlu0 %3590
    %v3595 = vsel %vm3339, %v3555, 0
    %v3598 = vsel %vm3339, %v3570, 0
    %v3601 = vsel %vm3339, %v3585, 0
    %v3603 = vsel %vm608, %v3591, 0
    %3605 = vmatpush.msra.mxu0 0.0
    %3606 = vmatpush.msra.mxu0 0.0
    %3607 = vmatpush.msra.mxu0 0.0
    %3608 = vmatpush.msra.mxu0 0.0
    %3609 = vmatpush.msra.mxu0 0.0
    %3610 = vmatpush.msra.mxu0 0.0
    %3611 = vmatpush.msra.mxu0 0.0
    %3612 = vmatpush.msra.mxu0 0.0
    %3613 = vmatpush.msra.mxu0 0.0
    %3614 = vmatpush.msra.mxu0 0.0
    %3615 = vmatpush.msra.mxu0 0.0
    %3616 = vmatpush.msra.mxu0 0.0
    %3617 = vmatpush.msra.mxu0 0.0
    %3618 = vmatpush.msra.mxu0 %v3603
    %3619 = vmatpush.msra.mxu0 %v3589
    %3620 = vmatpush.msra.mxu0 %v3587
    %3621 = vmatmul.f32.gmra.mxu0 %v3595
    %v3622 = vpop.f32.mrf.mxu0
    %v3623 = vadd.f32 0.0, %v3622
    %3624 = vmatmul.f32.gmra.mxu0 %v3598
    %v3625 = vpop.f32.mrf.mxu0
    %v3626 = vadd.f32 0.0, %v3625
    %3627 = vmatmul.f32.gmra.mxu0 %v3601
    %v3628 = vpop.f32.mrf.mxu0
    %v3629 = vadd.f32 0.0, %v3628
    %3630 = vdwg.mxu0
    %v3632 = vsel %vm511, %v3623, 0
    %v3635 = vsel %vm511, %v3626, 0
    %v3638 = vsel %vm511, %v3629, 0
    %3640 = vmatpush.msra.mxu0 0.0
    %3641 = vmatpush.msra.mxu0 0.0
    %3642 = vmatpush.msra.mxu0 0.0
    %3643 = vmatpush.msra.mxu0 0.0
    %3644 = vmatpush.msra.mxu0 0.0
    %3645 = vmatpush.msra.mxu0 0.0
    %3646 = vmatpush.msra.mxu0 0.0
    %3647 = vmatpush.msra.mxu0 0.0
    %3648 = vmatpush.msra.mxu0 0.0
    %3649 = vmatpush.msra.mxu0 0.0
    %3650 = vmatpush.msra.mxu0 0.0
    %3651 = vmatpush.msra.mxu0 0.0
    %3652 = vmatpush.msra.mxu0 0.0
    %3653 = vmatpush.msra.mxu0 0.0
    %3654 = vmatpush.msra.mxu0 %v3077
    %3655 = vmatpush.msra.mxu0 %v3076
    %3656 = vmatmul.f32.gmra.mxu0 %v3632
    %v3657 = vpop.f32.mrf.mxu0
    %v3658 = vadd.f32 0.0, %v3657
    %3659 = vmatmul.f32.gmra.mxu0 %v3635
    %v3660 = vpop.f32.mrf.mxu0
    %v3661 = vadd.f32 0.0, %v3660
    %3662 = vmatmul.f32.gmra.mxu0 %v3638
    %v3663 = vpop.f32.mrf.mxu0
    %v3664 = vadd.f32 0.0, %v3663
    %3665 = vdwg.mxu0
    %v3667 = vsel %vm511, %v3450, 0
    %v3670 = vsel %vm511, %v3453, 0
    %v3673 = vsel %vm511, %v3456, 0
    %3675 = vmatpush.msra.mxu0 0.0
    %3676 = vmatpush.msra.mxu0 0.0
    %3677 = vmatpush.msra.mxu0 0.0
    %3678 = vmatpush.msra.mxu0 0.0
    %3679 = vmatpush.msra.mxu0 0.0
    %3680 = vmatpush.msra.mxu0 0.0
    %3681 = vmatpush.msra.mxu0 0.0
    %3682 = vmatpush.msra.mxu0 0.0
    %3683 = vmatpush.msra.mxu0 0.0
    %3684 = vmatpush.msra.mxu0 0.0
    %3685 = vmatpush.msra.mxu0 0.0
    %3686 = vmatpush.msra.mxu0 0.0
    %3687 = vmatpush.msra.mxu0 0.0
    %3688 = vmatpush.msra.mxu0 0.0
    %3689 = vmatpush.msra.mxu0 %v3075
    %3690 = vmatpush.msra.mxu0 %v3074
    %3691 = vmatmul.f32.gmra.mxu0 %v3667
    %v3692 = vpop.f32.mrf.mxu0
    %v3693 = vadd.f32 %v3658, %v3692
    %3694 = vmatmul.f32.gmra.mxu0 %v3670
    %v3695 = vpop.f32.mrf.mxu0
    %v3696 = vadd.f32 %v3661, %v3695
    %3697 = vmatmul.f32.gmra.mxu0 %v3673
    %v3698 = vpop.f32.mrf.mxu0
    %v3699 = vadd.f32 %v3664, %v3698
    %3700 = vdwg.mxu0
    %3701 = vrot.lane.b32.xlu0 %v3252, 32
    %v3702 = vpop.permute.xlu0 %3701
    %3703 = vrot.lane.b32.xlu0 %v3255, 32
    %v3704 = vpop.permute.xlu0 %3703
    %3705 = vrot.lane.b32.xlu0 %v3258, 32
    %v3706 = vpop.permute.xlu0 %3705
    %3707 = vrot.lane.b32.xlu0 %v3252, 16
    %v3708 = vpop.permute.xlu0 %3707
    %3709 = vrot.lane.b32.xlu0 %v3255, 16
    %v3710 = vpop.permute.xlu0 %3709
    %3711 = vrot.lane.b32.xlu0 %v3258, 16
    %v3712 = vpop.permute.xlu0 %3711
    %v3713 = vsel %vm511, %v3702, 0
    %v3715 = vsel %vm511, %v3704, 0
    %v3717 = vsel %vm511, %v3706, 0
    %v3719 = vsel %vm511, %v3708, 0
    %v3721 = vsel %vm511, %v3710, 0
    %v3723 = vsel %vm511, %v3712, 0
    %3725 = vmatpush.xpose.msra.mxu0 0.0
    %3726 = vmatpush.xpose.msra.mxu0 0.0
    %3727 = vmatpush.xpose.msra.mxu0 0.0
    %3728 = vmatpush.xpose.msra.mxu0 0.0
    %3729 = vmatpush.xpose.msra.mxu0 0.0
    %3730 = vmatpush.xpose.msra.mxu0 0.0
    %3731 = vmatpush.xpose.msra.mxu0 0.0
    %3732 = vmatpush.xpose.msra.mxu0 0.0
    %3733 = vmatpush.xpose.msra.mxu0 0.0
    %3734 = vmatpush.xpose.msra.mxu0 0.0
    %3735 = vmatpush.xpose.msra.mxu0 0.0
    %3736 = vmatpush.xpose.msra.mxu0 0.0
    %3737 = vmatpush.xpose.msra.mxu0 0.0
    %3738 = vmatpush.xpose.msra.mxu0 %v3723
    %3739 = vmatpush.xpose.msra.mxu0 %v3721
    %3740 = vmatpush.xpose.msra.mxu0 %v3719
    %3741 = vmatmul.f32.gmra.mxu0 %v3713
    %v3742 = vpop.f32.mrf.mxu0
    %v3743 = vadd.f32 0.0, %v3742
    %3744 = vmatmul.f32.gmra.mxu0 %v3715
    %v3745 = vpop.f32.mrf.mxu0
    %v3746 = vadd.f32 0.0, %v3745
    %3747 = vmatmul.f32.gmra.mxu0 %v3717
    %v3748 = vpop.f32.mrf.mxu0
    %v3749 = vadd.f32 0.0, %v3748
    %3750 = vdwg.mxu0
    %v3751 = vmul.f32 %v3743, 0.25
    %v3752 = vmul.f32 %v3746, 0.25
    %v3753 = vmul.f32 %v3749, 0.25
    %v3754 = vadd.f32 %v3751, %v3047
    %v3755 = vadd.f32 %v3752, %v3048
    %v3756 = vadd.f32 %v3753, %v3049
    %v3757 = vsel %vm3339, %v3754, -inf
    %3758 = vmax.xlane.f32.xlu0 %v3757
    %v3759 = vpop.xlane.xlu0 %3758
    %v3760 = vsel %vm3339, %v3755, -inf
    %3761 = vmax.xlane.f32.xlu0 %v3760
    %v3762 = vpop.xlane.xlu0 %3761
    %v3763 = vsel %vm3346, %v3756, -inf
    %3764 = vmax.xlane.f32.xlu0 %v3763
    %v3765 = vpop.xlane.xlu0 %3764
    %v3766 = vsub.f32 %v3754, %v3759
    %v3767 = vsub.f32 %v3755, %v3762
    %v3768 = vsub.f32 %v3756, %v3765
    %v3769 = vmul.f32 %v3766, 1.442695
    %v3770 = vpow.pop %v3769
    %v3771 = vmul.f32 %v3767, 1.442695
    %v3772 = vpow.pop %v3771
    %v3773 = vmul.f32 %v3768, 1.442695
    %v3774 = vpow.pop %v3773
    %v3775 = vsel %vm3339, %v3770, 0.0
    %3776 = vadd.xlane.f32.xlu0 %v3775
    %v3777 = vpop.xlane.xlu0 %3776
    %v3778 = vsel %vm3339, %v3772, 0.0
    %3779 = vadd.xlane.f32.xlu0 %v3778
    %v3780 = vpop.xlane.xlu0 %3779
    %v3781 = vsel %vm3346, %v3774, 0.0
    %3782 = vadd.xlane.f32.xlu0 %v3781
    %v3783 = vpop.xlane.xlu0 %3782
    %v3784 = vrcp.pop %v3777
    %v3785 = vmul.f32 %v3777, %v3784
    %v3786 = vsub.f32 1.0, %v3785
    %v3787 = vmul.f32 %v3784, %v3786
    %v3788 = vadd.f32 %v3784, %v3787
    %vm3789 = vweird.f32 %v3777
    %vm3790 = vweird.f32 %v3784
    %vm3791 = vmor %vm3789, %vm3790
    %v3792 = vsel %vm3791, %v3784, %v3788
    %v3793 = vand.u32 2147483647, %v3777
    %vm3794 = vcmp.eq.f32.partialorder %v3793, 8.507059e+37
    %v3795 = vand.u32 %v3777, 2147483648
    %v3796 = vor.u32 1.1754944e-38, %v3795
    %v3797 = vsel %vm3794, %v3796, %v3792
    %v3798 = vmul.f32 %v3770, %v3797
    %v3799 = vrcp.pop %v3780
    %v3800 = vmul.f32 %v3780, %v3799
    %v3801 = vsub.f32 1.0, %v3800
    %v3802 = vmul.f32 %v3799, %v3801
    %v3803 = vadd.f32 %v3799, %v3802
    %vm3804 = vweird.f32 %v3780
    %vm3805 = vweird.f32 %v3799
    %vm3806 = vmor %vm3804, %vm3805
    %v3807 = vsel %vm3806, %v3799, %v3803
    %v3808 = vand.u32 2147483647, %v3780
    %vm3809 = vcmp.eq.f32.partialorder %v3808, 8.507059e+37
    %v3810 = vand.u32 %v3780, 2147483648
    %v3811 = vor.u32 1.1754944e-38, %v3810
    %v3812 = vsel %vm3809, %v3811, %v3807
    %v3813 = vmul.f32 %v3772, %v3812
    %v3814 = vrcp.pop %v3783
    %v3815 = vmul.f32 %v3783, %v3814
    %v3816 = vsub.f32 1.0, %v3815
    %v3817 = vmul.f32 %v3814, %v3816
    %v3818 = vadd.f32 %v3814, %v3817
    %vm3819 = vweird.f32 %v3783
    %vm3820 = vweird.f32 %v3814
    %vm3821 = vmor %vm3819, %vm3820
    %v3822 = vsel %vm3821, %v3814, %v3818
    %v3823 = vand.u32 2147483647, %v3783
    %vm3824 = vcmp.eq.f32.partialorder %v3823, 8.507059e+37
    %v3825 = vand.u32 %v3783, 2147483648
    %v3826 = vor.u32 1.1754944e-38, %v3825
    %v3827 = vsel %vm3824, %v3826, %v3822
    %v3828 = vmul.f32 %v3774, %v3827
    %v3830 = vsel %vm3339, %v3798, 0
    %v3833 = vsel %vm3339, %v3813, 0
    %v3836 = vsel %vm3339, %v3828, 0
    %v3839 = vsel %vm608, %v3284, 0
    %3841 = vmatpush.msra.mxu0 0.0
    %3842 = vmatpush.msra.mxu0 0.0
    %3843 = vmatpush.msra.mxu0 0.0
    %3844 = vmatpush.msra.mxu0 0.0
    %3845 = vmatpush.msra.mxu0 0.0
    %3846 = vmatpush.msra.mxu0 0.0
    %3847 = vmatpush.msra.mxu0 0.0
    %3848 = vmatpush.msra.mxu0 0.0
    %3849 = vmatpush.msra.mxu0 0.0
    %3850 = vmatpush.msra.mxu0 0.0
    %3851 = vmatpush.msra.mxu0 0.0
    %3852 = vmatpush.msra.mxu0 0.0
    %3853 = vmatpush.msra.mxu0 0.0
    %3854 = vmatpush.msra.mxu0 %v3839
    %3855 = vmatpush.msra.mxu0 %v3281
    %3856 = vmatpush.msra.mxu0 %v3278
    %3857 = vmatmul.f32.gmra.mxu0 %v3830
    %v3858 = vpop.f32.mrf.mxu0
    %v3859 = vadd.f32 0.0, %v3858
    %3860 = vmatmul.f32.gmra.mxu0 %v3833
    %v3861 = vpop.f32.mrf.mxu0
    %v3862 = vadd.f32 0.0, %v3861
    %3863 = vmatmul.f32.gmra.mxu0 %v3836
    %v3864 = vpop.f32.mrf.mxu0
    %v3865 = vadd.f32 0.0, %v3864
    %3866 = vdwg.mxu0
    %v3868 = vsel %vm511, %v3859, 0
    %v3871 = vsel %vm511, %v3862, 0
    %v3874 = vsel %vm511, %v3865, 0
    %3876 = vmatpush.msra.mxu0 0.0
    %3877 = vmatpush.msra.mxu0 0.0
    %3878 = vmatpush.msra.mxu0 0.0
    %3879 = vmatpush.msra.mxu0 0.0
    %3880 = vmatpush.msra.mxu0 0.0
    %3881 = vmatpush.msra.mxu0 0.0
    %3882 = vmatpush.msra.mxu0 0.0
    %3883 = vmatpush.msra.mxu0 0.0
    %3884 = vmatpush.msra.mxu0 0.0
    %3885 = vmatpush.msra.mxu0 0.0
    %3886 = vmatpush.msra.mxu0 0.0
    %3887 = vmatpush.msra.mxu0 0.0
    %3888 = vmatpush.msra.mxu0 0.0
    %3889 = vmatpush.msra.mxu0 0.0
    %3890 = vmatpush.msra.mxu0 %v3079
    %3891 = vmatpush.msra.mxu0 %v3078
    %3892 = vmatmul.f32.gmra.mxu0 %v3868
    %v3893 = vpop.f32.mrf.mxu0
    %v3894 = vadd.f32 0.0, %v3893
    %3895 = vmatmul.f32.gmra.mxu0 %v3871
    %v3896 = vpop.f32.mrf.mxu0
    %v3897 = vadd.f32 0.0, %v3896
    %3898 = vmatmul.f32.gmra.mxu0 %v3874
    %v3899 = vpop.f32.mrf.mxu0
    %v3900 = vadd.f32 0.0, %v3899
    %3901 = vdwg.mxu0
    %v3902 = vadd.f32 %v3693, %v3894
    %v3903 = vadd.f32 %v3696, %v3897
    %v3904 = vadd.f32 %v3699, %v3900
    %3907 = vrot.lane.b32.xlu0 %v3278, 112
    %v3908 = vpop.permute.xlu0 %3907
    %3909 = vrot.lane.b32.xlu0 %v3281, 112
    %v3910 = vpop.permute.xlu0 %3909
    %3911 = vrot.lane.b32.xlu0 %v3284, 112
    %v3912 = vpop.permute.xlu0 %3911
    %3913 = vrot.lane.b32.xlu0 %v3278, 96
    %v3914 = vpop.permute.xlu0 %3913
    %3915 = vrot.lane.b32.xlu0 %v3281, 96
    %v3916 = vpop.permute.xlu0 %3915
    %3917 = vrot.lane.b32.xlu0 %v3284, 96
    %v3918 = vpop.permute.xlu0 %3917
    %v3919 = vsel %vm511, %v3908, 0
    %v3921 = vsel %vm511, %v3910, 0
    %v3923 = vsel %vm511, %v3912, 0
    %v3925 = vsel %vm511, %v3914, 0
    %v3927 = vsel %vm511, %v3916, 0
    %v3929 = vsel %vm511, %v3918, 0
    %3931 = vmatpush.xpose.msra.mxu0 0.0
    %3932 = vmatpush.xpose.msra.mxu0 0.0
    %3933 = vmatpush.xpose.msra.mxu0 0.0
    %3934 = vmatpush.xpose.msra.mxu0 0.0
    %3935 = vmatpush.xpose.msra.mxu0 0.0
    %3936 = vmatpush.xpose.msra.mxu0 0.0
    %3937 = vmatpush.xpose.msra.mxu0 0.0
    %3938 = vmatpush.xpose.msra.mxu0 0.0
    %3939 = vmatpush.xpose.msra.mxu0 0.0
    %3940 = vmatpush.xpose.msra.mxu0 0.0
    %3941 = vmatpush.xpose.msra.mxu0 0.0
    %3942 = vmatpush.xpose.msra.mxu0 0.0
    %3943 = vmatpush.xpose.msra.mxu0 0.0
    %3944 = vmatpush.xpose.msra.mxu0 %v3929
    %3945 = vmatpush.xpose.msra.mxu0 %v3927
    %3946 = vmatpush.xpose.msra.mxu0 %v3925
    %3947 = vmatmul.f32.gmra.mxu0 %v3919
    %v3948 = vpop.f32.mrf.mxu0
    %v3949 = vadd.f32 0.0, %v3948
    %3950 = vmatmul.f32.gmra.mxu0 %v3921
    %v3951 = vpop.f32.mrf.mxu0
    %v3952 = vadd.f32 0.0, %v3951
    %3953 = vmatmul.f32.gmra.mxu0 %v3923
    %v3954 = vpop.f32.mrf.mxu0
    %v3955 = vadd.f32 0.0, %v3954
    %3956 = vdwg.mxu0
    %v3957 = vmul.f32 %v3949, 0.25
    %v3958 = vmul.f32 %v3952, 0.25
    %v3959 = vmul.f32 %v3955, 0.25
    %v3960 = vadd.f32 %v3957, %v3047
    %v3961 = vadd.f32 %v3958, %v3048
    %v3962 = vadd.f32 %v3959, %v3049
    %v3963 = vsel %vm3339, %v3960, -inf
    %3964 = vmax.xlane.f32.xlu0 %v3963
    %v3965 = vpop.xlane.xlu0 %3964
    %v3966 = vsel %vm3339, %v3961, -inf
    %3967 = vmax.xlane.f32.xlu0 %v3966
    %v3968 = vpop.xlane.xlu0 %3967
    %v3969 = vsel %vm3346, %v3962, -inf
    %3970 = vmax.xlane.f32.xlu0 %v3969
    %v3971 = vpop.xlane.xlu0 %3970
    %v3972 = vsub.f32 %v3960, %v3965
    %v3973 = vsub.f32 %v3961, %v3968
    %v3974 = vsub.f32 %v3962, %v3971
    %v3975 = vmul.f32 %v3972, 1.442695
    %v3976 = vpow.pop %v3975
    %v3977 = vmul.f32 %v3973, 1.442695
    %v3978 = vpow.pop %v3977
    %v3979 = vmul.f32 %v3974, 1.442695
    %v3980 = vpow.pop %v3979
    %v3981 = vsel %vm3339, %v3976, 0.0
    %3982 = vadd.xlane.f32.xlu0 %v3981
    %v3983 = vpop.xlane.xlu0 %3982
    %v3984 = vsel %vm3339, %v3978, 0.0
    %3985 = vadd.xlane.f32.xlu0 %v3984
    %v3986 = vpop.xlane.xlu0 %3985
    %v3987 = vsel %vm3346, %v3980, 0.0
    %3988 = vadd.xlane.f32.xlu0 %v3987
    %v3989 = vpop.xlane.xlu0 %3988
    %v3990 = vrcp.pop %v3983
    %v3991 = vmul.f32 %v3983, %v3990
    %v3992 = vsub.f32 1.0, %v3991
    %v3993 = vmul.f32 %v3990, %v3992
    %v3994 = vadd.f32 %v3990, %v3993
    %vm3995 = vweird.f32 %v3983
    %vm3996 = vweird.f32 %v3990
    %vm3997 = vmor %vm3995, %vm3996
    %v3998 = vsel %vm3997, %v3990, %v3994
    %v3999 = vand.u32 2147483647, %v3983
    %vm4000 = vcmp.eq.f32.partialorder %v3999, 8.507059e+37
    %v4001 = vand.u32 %v3983, 2147483648
    %v4002 = vor.u32 1.1754944e-38, %v4001
    %v4003 = vsel %vm4000, %v4002, %v3998
    %v4004 = vmul.f32 %v3976, %v4003
    %v4005 = vrcp.pop %v3986
    %v4006 = vmul.f32 %v3986, %v4005
    %v4007 = vsub.f32 1.0, %v4006
    %v4008 = vmul.f32 %v4005, %v4007
    %v4009 = vadd.f32 %v4005, %v4008
    %vm4010 = vweird.f32 %v3986
    %vm4011 = vweird.f32 %v4005
    %vm4012 = vmor %vm4010, %vm4011
    %v4013 = vsel %vm4012, %v4005, %v4009
    %v4014 = vand.u32 2147483647, %v3986
    %vm4015 = vcmp.eq.f32.partialorder %v4014, 8.507059e+37
    %v4016 = vand.u32 %v3986, 2147483648
    %v4017 = vor.u32 1.1754944e-38, %v4016
    %v4018 = vsel %vm4015, %v4017, %v4013
    %v4019 = vmul.f32 %v3978, %v4018
    %v4020 = vrcp.pop %v3989
    %v4021 = vmul.f32 %v3989, %v4020
    %v4022 = vsub.f32 1.0, %v4021
    %v4023 = vmul.f32 %v4020, %v4022
    %v4024 = vadd.f32 %v4020, %v4023
    %vm4025 = vweird.f32 %v3989
    %vm4026 = vweird.f32 %v4020
    %vm4027 = vmor %vm4025, %vm4026
    %v4028 = vsel %vm4027, %v4020, %v4024
    %v4029 = vand.u32 2147483647, %v3989
    %vm4030 = vcmp.eq.f32.partialorder %v4029, 8.507059e+37
    %v4031 = vand.u32 %v3989, 2147483648
    %v4032 = vor.u32 1.1754944e-38, %v4031
    %v4033 = vsel %vm4030, %v4032, %v4028
    %v4034 = vmul.f32 %v3980, %v4033
    %4035 = vrot.lane.b32.xlu0 %v3278, 80
    %v4036 = vpop.permute.xlu0 %4035
    %4037 = vrot.lane.b32.xlu0 %v3281, 80
    %v4038 = vpop.permute.xlu0 %4037
    %4039 = vrot.lane.b32.xlu0 %v3284, 80
    %v4040 = vpop.permute.xlu0 %4039
    %v4044 = vsel %vm3339, %v4004, 0
    %v4047 = vsel %vm3339, %v4019, 0
    %v4050 = vsel %vm3339, %v4034, 0
    %v4052 = vsel %vm608, %v4040, 0
    %4054 = vmatpush.msra.mxu0 0.0
    %4055 = vmatpush.msra.mxu0 0.0
    %4056 = vmatpush.msra.mxu0 0.0
    %4057 = vmatpush.msra.mxu0 0.0
    %4058 = vmatpush.msra.mxu0 0.0
    %4059 = vmatpush.msra.mxu0 0.0
    %4060 = vmatpush.msra.mxu0 0.0
    %4061 = vmatpush.msra.mxu0 0.0
    %4062 = vmatpush.msra.mxu0 0.0
    %4063 = vmatpush.msra.mxu0 0.0
    %4064 = vmatpush.msra.mxu0 0.0
    %4065 = vmatpush.msra.mxu0 0.0
    %4066 = vmatpush.msra.mxu0 0.0
    %4067 = vmatpush.msra.mxu0 %v4052
    %4068 = vmatpush.msra.mxu0 %v4038
    %4069 = vmatpush.msra.mxu0 %v4036
    %4070 = vmatmul.f32.gmra.mxu0 %v4044
    %v4071 = vpop.f32.mrf.mxu0
    %v4072 = vadd.f32 0.0, %v4071
    %4073 = vmatmul.f32.gmra.mxu0 %v4047
    %v4074 = vpop.f32.mrf.mxu0
    %v4075 = vadd.f32 0.0, %v4074
    %4076 = vmatmul.f32.gmra.mxu0 %v4050
    %v4077 = vpop.f32.mrf.mxu0
    %v4078 = vadd.f32 0.0, %v4077
    %4079 = vdwg.mxu0
    %v4081 = vsel %vm511, %v4072, 0
    %v4084 = vsel %vm511, %v4075, 0
    %v4087 = vsel %vm511, %v4078, 0
    %4089 = vmatpush.msra.mxu0 0.0
    %4090 = vmatpush.msra.mxu0 0.0
    %4091 = vmatpush.msra.mxu0 0.0
    %4092 = vmatpush.msra.mxu0 0.0
    %4093 = vmatpush.msra.mxu0 0.0
    %4094 = vmatpush.msra.mxu0 0.0
    %4095 = vmatpush.msra.mxu0 0.0
    %4096 = vmatpush.msra.mxu0 0.0
    %4097 = vmatpush.msra.mxu0 0.0
    %4098 = vmatpush.msra.mxu0 0.0
    %4099 = vmatpush.msra.mxu0 0.0
    %4100 = vmatpush.msra.mxu0 0.0
    %4101 = vmatpush.msra.mxu0 0.0
    %4102 = vmatpush.msra.mxu0 0.0
    %4103 = vmatpush.msra.mxu0 %v3081
    %4104 = vmatpush.msra.mxu0 %v3080
    %4105 = vmatmul.f32.gmra.mxu0 %v4081
    %v4106 = vpop.f32.mrf.mxu0
    %v4107 = vadd.f32 0.0, %v4106
    %4108 = vmatmul.f32.gmra.mxu0 %v4084
    %v4109 = vpop.f32.mrf.mxu0
    %v4110 = vadd.f32 0.0, %v4109
    %4111 = vmatmul.f32.gmra.mxu0 %v4087
    %v4112 = vpop.f32.mrf.mxu0
    %v4113 = vadd.f32 0.0, %v4112
    %4114 = vdwg.mxu0
    %v4115 = vadd.f32 %v3902, %v4107
    %v4116 = vadd.f32 %v3903, %v4110
    %v4117 = vadd.f32 %v3904, %v4113
    %v4118 = vadd.f32 %v3044, %v4115
    %v4119 = vadd.f32 %v3045, %v4116
    %v4120 = vadd.f32 %v3046, %v4117
    %v4122 = vperm.slane %v3083, 0
    %v4124 = vadd.f32 %v4118, %v4122
    %v4125 = vadd.f32 %v4119, %v4122
    %v4126 = vadd.f32 %v4120, %v4122
    %v4127 = vsel %vm385, %v4124, 0.0
    %4128 = vadd.xlane.f32.xlu0 %v4127
    %v4129 = vpop.xlane.xlu0 %4128
    %v4130 = vsel %vm385, %v4125, 0.0
    %4131 = vadd.xlane.f32.xlu0 %v4130
    %v4132 = vpop.xlane.xlu0 %4131
    %v4133 = vsel %vm389, %v4126, 0.0
    %4134 = vadd.xlane.f32.xlu0 %v4133
    %v4135 = vpop.xlane.xlu0 %4134
    %v4136 = vmul.f32 %v4129, %v399
    %v4137 = vmul.f32 %v4132, %v399
    %v4138 = vmul.f32 %v4135, %v399
    %v4139 = vsub.f32 %v4124, %v4136
    %v4140 = vsub.f32 %v4125, %v4137
    %v4141 = vsub.f32 %v4126, %v4138
    %v4142 = vmul.f32 %v4139, %v4139
    %v4143 = vmul.f32 %v4140, %v4140
    %v4144 = vmul.f32 %v4141, %v4141
    %v4145 = vsel %vm385, %v4142, 0.0
    %4146 = vadd.xlane.f32.xlu0 %v4145
    %v4147 = vpop.xlane.xlu0 %4146
    %v4148 = vsel %vm385, %v4143, 0.0
    %4149 = vadd.xlane.f32.xlu0 %v4148
    %v4150 = vpop.xlane.xlu0 %4149
    %v4151 = vsel %vm389, %v4144, 0.0
    %4152 = vadd.xlane.f32.xlu0 %v4151
    %v4153 = vpop.xlane.xlu0 %4152
    %v4154 = vmul.f32 %v4147, %v399
    %v4155 = vmul.f32 %v4150, %v399
    %v4156 = vmul.f32 %v4153, %v399
    %v4157 = vadd.f32 %v4154, 1e-06
    %v4158 = vadd.f32 %v4155, 1e-06
    %v4159 = vadd.f32 %v4156, 1e-06
    %v4160 = vrsqrt.pop %v4157
    %v4161 = vmul.f32 %v4160, %v4157
    %v4162 = vmul.f32 %v4161, %v4160
    %v4163 = vmul.f32 0.5, %v4162
    %v4164 = vsub.f32 1.5, %v4163
    %v4165 = vmul.f32 %v4160, %v4164
    %vm4166 = vweird.f32 %v4157
    %vm4167 = vweird.f32 %v4160
    %vm4168 = vmor %vm4166, %vm4167
    %v4169 = vsel %vm4168, %v4160, %v4165
    %v4170 = vrsqrt.pop %v4158
    %v4171 = vmul.f32 %v4170, %v4158
    %v4172 = vmul.f32 %v4171, %v4170
    %v4173 = vmul.f32 0.5, %v4172
    %v4174 = vsub.f32 1.5, %v4173
    %v4175 = vmul.f32 %v4170, %v4174
    %vm4176 = vweird.f32 %v4158
    %vm4177 = vweird.f32 %v4170
    %vm4178 = vmor %vm4176, %vm4177
    %v4179 = vsel %vm4178, %v4170, %v4175
    %v4180 = vrsqrt.pop %v4159
    %v4181 = vmul.f32 %v4180, %v4159
    %v4182 = vmul.f32 %v4181, %v4180
    %v4183 = vmul.f32 0.5, %v4182
    %v4184 = vsub.f32 1.5, %v4183
    %v4185 = vmul.f32 %v4180, %v4184
    %vm4186 = vweird.f32 %v4159
    %vm4187 = vweird.f32 %v4180
    %vm4188 = vmor %vm4186, %vm4187
    %v4189 = vsel %vm4188, %v4180, %v4185
    %v4190 = vmul.f32 %v4139, %v4169
    %v4191 = vmul.f32 %v4140, %v4179
    %v4192 = vmul.f32 %v4141, %v4189
    %v4194 = vperm.slane %v3085, 0
    %v4196 = vmul.f32 %v4190, %v4194
    %v4197 = vmul.f32 %v4191, %v4194
    %v4198 = vmul.f32 %v4192, %v4194
    %v4200 = vperm.slane %v3087, 0
    %v4202 = vadd.f32 %v4196, %v4200
    %v4203 = vadd.f32 %v4197, %v4200
    %v4204 = vadd.f32 %v4198, %v4200
    %v4206 = vperm.slane %v3106, 0
    %v4207 = vperm.slane %v3106, 1
    %v4211 = vsel %vm385, %v4202, 0
    %v4214 = vsel %vm385, %v4203, 0
    %v4217 = vsel %vm385, %v4204, 0
    %4219 = vmatpush.msra.mxu0 0.0
    %4220 = vmatpush.msra.mxu0 0.0
    %4221 = vmatpush.msra.mxu0 0.0
    %4222 = vmatpush.msra.mxu0 0.0
    %4223 = vmatpush.msra.mxu0 0.0
    %4224 = vmatpush.msra.mxu0 0.0
    %4225 = vmatpush.msra.mxu0 0.0
    %4226 = vmatpush.msra.mxu0 0.0
    %4227 = vmatpush.msra.mxu0 %v3103
    %4228 = vmatpush.msra.mxu0 %v3101
    %4229 = vmatpush.msra.mxu0 %v3099
    %4230 = vmatpush.msra.mxu0 %v3097
    %4231 = vmatpush.msra.mxu0 %v3095
    %4232 = vmatpush.msra.mxu0 %v3093
    %4233 = vmatpush.msra.mxu0 %v3091
    %4234 = vmatpush.msra.mxu0 %v3089
    %4235 = vmatmul.f32.gmra.mxu0 %v4211
    %v4236 = vpop.f32.mrf.mxu0
    %v4237 = vadd.f32 %v4206, %v4236
    %4238 = vmatmul.f32.gmra.mxu0 %v4214
    %v4239 = vpop.f32.mrf.mxu0
    %v4240 = vadd.f32 %v4206, %v4239
    %4241 = vmatmul.f32.gmra.mxu0 %v4217
    %v4242 = vpop.f32.mrf.mxu0
    %v4243 = vadd.f32 %v4206, %v4242
    %4244 = vdwg.mxu0
    %4245 = vmatpush.msra.mxu0 0.0
    %4246 = vmatpush.msra.mxu0 0.0
    %4247 = vmatpush.msra.mxu0 0.0
    %4248 = vmatpush.msra.mxu0 0.0
    %4249 = vmatpush.msra.mxu0 0.0
    %4250 = vmatpush.msra.mxu0 0.0
    %4251 = vmatpush.msra.mxu0 0.0
    %4252 = vmatpush.msra.mxu0 0.0
    %4253 = vmatpush.msra.mxu0 %v3104
    %4254 = vmatpush.msra.mxu0 %v3102
    %4255 = vmatpush.msra.mxu0 %v3100
    %4256 = vmatpush.msra.mxu0 %v3098
    %4257 = vmatpush.msra.mxu0 %v3096
    %4258 = vmatpush.msra.mxu0 %v3094
    %4259 = vmatpush.msra.mxu0 %v3092
    %4260 = vmatpush.msra.mxu0 %v3090
    %4261 = vmatmul.f32.gmra.mxu0 %v4211
    %v4262 = vpop.f32.mrf.mxu0
    %v4263 = vadd.f32 %v4207, %v4262
    %4264 = vmatmul.f32.gmra.mxu0 %v4214
    %v4265 = vpop.f32.mrf.mxu0
    %v4266 = vadd.f32 %v4207, %v4265
    %4267 = vmatmul.f32.gmra.mxu0 %v4217
    %v4268 = vpop.f32.mrf.mxu0
    %v4269 = vadd.f32 %v4207, %v4268
    %4270 = vdwg.mxu0
    %v4271 = vmul.f32 %v4237, 0.5
    %v4272 = vmul.f32 %v4263, 0.5
    %v4273 = vmul.f32 %v4240, 0.5
    %v4274 = vmul.f32 %v4266, 0.5
    %v4275 = vmul.f32 %v4243, 0.5
    %v4276 = vmul.f32 %v4269, 0.5
    %v4277 = vmul.f32 %v4237, 0.70710677
    %v4278 = vmul.f32 %v4263, 0.70710677
    %v4279 = vmul.f32 %v4240, 0.70710677
    %v4280 = vmul.f32 %v4266, 0.70710677
    %v4281 = vmul.f32 %v4243, 0.70710677
    %v4282 = vmul.f32 %v4269, 0.70710677
    %v4283 = vmul.f32 %v4277, %v4277
    %v4284 = vmin.f32 16.0, %v4283
    %v4285 = vmul.f32 %v4284, 2.1237322e-06
    %v4286 = vadd.f32 %v4285, 0.00028619796
    %v4287 = vmul.f32 %v4284, %v4286
    %v4288 = vadd.f32 %v4287, 0.0036580483
    %v4289 = vmul.f32 %v4284, %v4288
    %v4290 = vadd.f32 %v4289, 0.05243302
    %v4291 = vmul.f32 %v4284, %v4290
    %v4292 = vadd.f32 %v4291, 0.18741608
    %v4293 = vmul.f32 %v4284, %v4292
    %v4294 = vadd.f32 %v4293, 1.1283791
    %v4295 = vmul.f32 %v4277, %v4294
    %v4296 = vmul.f32 %v4284, 3.8918573e-05
    %v4297 = vadd.f32 %v4296, 0.001143296
    %v4298 = vmul.f32 %v4284, %v4297
    %v4299 = vadd.f32 %v4298, 0.014752088
    %v4300 = vmul.f32 %v4284, %v4299
    %v4301 = vadd.f32 %v4300, 0.112945676
    %v4302 = vmul.f32 %v4284, %v4301
    %v4303 = vadd.f32 %v4302, 0.4994258
    %v4304 = vmul.f32 %v4284, %v4303
    %v4305 = vadd.f32 %v4304, 1.0
    %v4306 = vrcp.pop %v4305
    %v4307 = vmul.f32 %v4305, %v4306
    %v4308 = vsub.f32 1.0, %v4307
    %v4309 = vmul.f32 %v4306, %v4308
    %v4310 = vadd.f32 %v4306, %v4309
    %vm4311 = vweird.f32 %v4305
    %vm4312 = vweird.f32 %v4306
    %vm4313 = vmor %vm4311, %vm4312
    %v4314 = vsel %vm4313, %v4306, %v4310
    %v4315 = vand.u32 2147483647, %v4305
    %vm4316 = vcmp.eq.f32.partialorder %v4315, 8.507059e+37
    %v4317 = vand.u32 %v4305, 2147483648
    %v4318 = vor.u32 1.1754944e-38, %v4317
    %v4319 = vsel %vm4316, %v4318, %v4314
    %v4320 = vmul.f32 %v4295, %v4319
    %v4321 = vmin.f32 %v4320, 1.0
    %v4322 = vmax.f32 %v4321, -1.0
    %v4323 = vmul.f32 %v4278, %v4278
    %v4324 = vmin.f32 16.0, %v4323
    %v4325 = vmul.f32 %v4324, 2.1237322e-06
    %v4326 = vadd.f32 %v4325, 0.00028619796
    %v4327 = vmul.f32 %v4324, %v4326
    %v4328 = vadd.f32 %v4327, 0.0036580483
    %v4329 = vmul.f32 %v4324, %v4328
    %v4330 = vadd.f32 %v4329, 0.05243302
    %v4331 = vmul.f32 %v4324, %v4330
    %v4332 = vadd.f32 %v4331, 0.18741608
    %v4333 = vmul.f32 %v4324, %v4332
    %v4334 = vadd.f32 %v4333, 1.1283791
    %v4335 = vmul.f32 %v4278, %v4334
    %v4336 = vmul.f32 %v4324, 3.8918573e-05
    %v4337 = vadd.f32 %v4336, 0.001143296
    %v4338 = vmul.f32 %v4324, %v4337
    %v4339 = vadd.f32 %v4338, 0.014752088
    %v4340 = vmul.f32 %v4324, %v4339
    %v4341 = vadd.f32 %v4340, 0.112945676
    %v4342 = vmul.f32 %v4324, %v4341
    %v4343 = vadd.f32 %v4342, 0.4994258
    %v4344 = vmul.f32 %v4324, %v4343
    %v4345 = vadd.f32 %v4344, 1.0
    %v4346 = vrcp.pop %v4345
    %v4347 = vmul.f32 %v4345, %v4346
    %v4348 = vsub.f32 1.0, %v4347
    %v4349 = vmul.f32 %v4346, %v4348
    %v4350 = vadd.f32 %v4346, %v4349
    %vm4351 = vweird.f32 %v4345
    %vm4352 = vweird.f32 %v4346
    %vm4353 = vmor %vm4351, %vm4352
    %v4354 = vsel %vm4353, %v4346, %v4350
    %v4355 = vand.u32 2147483647, %v4345
    %vm4356 = vcmp.eq.f32.partialorder %v4355, 8.507059e+37
    %v4357 = vand.u32 %v4345, 2147483648
    %v4358 = vor.u32 1.1754944e-38, %v4357
    %v4359 = vsel %vm4356, %v4358, %v4354
    %v4360 = vmul.f32 %v4335, %v4359
    %v4361 = vmin.f32 %v4360, 1.0
    %v4362 = vmax.f32 %v4361, -1.0
    %v4363 = vmul.f32 %v4279, %v4279
    %v4364 = vmin.f32 16.0, %v4363
    %v4365 = vmul.f32 %v4364, 2.1237322e-06
    %v4366 = vadd.f32 %v4365, 0.00028619796
    %v4367 = vmul.f32 %v4364, %v4366
    %v4368 = vadd.f32 %v4367, 0.0036580483
    %v4369 = vmul.f32 %v4364, %v4368
    %v4370 = vadd.f32 %v4369, 0.05243302
    %v4371 = vmul.f32 %v4364, %v4370
    %v4372 = vadd.f32 %v4371, 0.18741608
    %v4373 = vmul.f32 %v4364, %v4372
    %v4374 = vadd.f32 %v4373, 1.1283791
    %v4375 = vmul.f32 %v4279, %v4374
    %v4376 = vmul.f32 %v4364, 3.8918573e-05
    %v4377 = vadd.f32 %v4376, 0.001143296
    %v4378 = vmul.f32 %v4364, %v4377
    %v4379 = vadd.f32 %v4378, 0.014752088
    %v4380 = vmul.f32 %v4364, %v4379
    %v4381 = vadd.f32 %v4380, 0.112945676
    %v4382 = vmul.f32 %v4364, %v4381
    %v4383 = vadd.f32 %v4382, 0.4994258
    %v4384 = vmul.f32 %v4364, %v4383
    %v4385 = vadd.f32 %v4384, 1.0
    %v4386 = vrcp.pop %v4385
    %v4387 = vmul.f32 %v4385, %v4386
    %v4388 = vsub.f32 1.0, %v4387
    %v4389 = vmul.f32 %v4386, %v4388
    %v4390 = vadd.f32 %v4386, %v4389
    %vm4391 = vweird.f32 %v4385
    %vm4392 = vweird.f32 %v4386
    %vm4393 = vmor %vm4391, %vm4392
    %v4394 = vsel %vm4393, %v4386, %v4390
    %v4395 = vand.u32 2147483647, %v4385
    %vm4396 = vcmp.eq.f32.partialorder %v4395, 8.507059e+37
    %v4397 = vand.u32 %v4385, 2147483648
    %v4398 = vor.u32 1.1754944e-38, %v4397
    %v4399 = vsel %vm4396, %v4398, %v4394
    %v4400 = vmul.f32 %v4375, %v4399
    %v4401 = vmin.f32 %v4400, 1.0
    %v4402 = vmax.f32 %v4401, -1.0
    %v4403 = vmul.f32 %v4280, %v4280
    %v4404 = vmin.f32 16.0, %v4403
    %v4405 = vmul.f32 %v4404, 2.1237322e-06
    %v4406 = vadd.f32 %v4405, 0.00028619796
    %v4407 = vmul.f32 %v4404, %v4406
    %v4408 = vadd.f32 %v4407, 0.0036580483
    %v4409 = vmul.f32 %v4404, %v4408
    %v4410 = vadd.f32 %v4409, 0.05243302
    %v4411 = vmul.f32 %v4404, %v4410
    %v4412 = vadd.f32 %v4411, 0.18741608
    %v4413 = vmul.f32 %v4404, %v4412
    %v4414 = vadd.f32 %v4413, 1.1283791
    %v4415 = vmul.f32 %v4280, %v4414
    %v4416 = vmul.f32 %v4404, 3.8918573e-05
    %v4417 = vadd.f32 %v4416, 0.001143296
    %v4418 = vmul.f32 %v4404, %v4417
    %v4419 = vadd.f32 %v4418, 0.014752088
    %v4420 = vmul.f32 %v4404, %v4419
    %v4421 = vadd.f32 %v4420, 0.112945676
    %v4422 = vmul.f32 %v4404, %v4421
    %v4423 = vadd.f32 %v4422, 0.4994258
    %v4424 = vmul.f32 %v4404, %v4423
    %v4425 = vadd.f32 %v4424, 1.0
    %v4426 = vrcp.pop %v4425
    %v4427 = vmul.f32 %v4425, %v4426
    %v4428 = vsub.f32 1.0, %v4427
    %v4429 = vmul.f32 %v4426, %v4428
    %v4430 = vadd.f32 %v4426, %v4429
    %vm4431 = vweird.f32 %v4425
    %vm4432 = vweird.f32 %v4426
    %vm4433 = vmor %vm4431, %vm4432
    %v4434 = vsel %vm4433, %v4426, %v4430
    %v4435 = vand.u32 2147483647, %v4425
    %vm4436 = vcmp.eq.f32.partialorder %v4435, 8.507059e+37
    %v4437 = vand.u32 %v4425, 2147483648
    %v4438 = vor.u32 1.1754944e-38, %v4437
    %v4439 = vsel %vm4436, %v4438, %v4434
    %v4440 = vmul.f32 %v4415, %v4439
    %v4441 = vmin.f32 %v4440, 1.0
    %v4442 = vmax.f32 %v4441, -1.0
    %v4443 = vmul.f32 %v4281, %v4281
    %v4444 = vmin.f32 16.0, %v4443
    %v4445 = vmul.f32 %v4444, 2.1237322e-06
    %v4446 = vadd.f32 %v4445, 0.00028619796
    %v4447 = vmul.f32 %v4444, %v4446
    %v4448 = vadd.f32 %v4447, 0.0036580483
    %v4449 = vmul.f32 %v4444, %v4448
    %v4450 = vadd.f32 %v4449, 0.05243302
    %v4451 = vmul.f32 %v4444, %v4450
    %v4452 = vadd.f32 %v4451, 0.18741608
    %v4453 = vmul.f32 %v4444, %v4452
    %v4454 = vadd.f32 %v4453, 1.1283791
    %v4455 = vmul.f32 %v4281, %v4454
    %v4456 = vmul.f32 %v4444, 3.8918573e-05
    %v4457 = vadd.f32 %v4456, 0.001143296
    %v4458 = vmul.f32 %v4444, %v4457
    %v4459 = vadd.f32 %v4458, 0.014752088
    %v4460 = vmul.f32 %v4444, %v4459
    %v4461 = vadd.f32 %v4460, 0.112945676
    %v4462 = vmul.f32 %v4444, %v4461
    %v4463 = vadd.f32 %v4462, 0.4994258
    %v4464 = vmul.f32 %v4444, %v4463
    %v4465 = vadd.f32 %v4464, 1.0
    %v4466 = vrcp.pop %v4465
    %v4467 = vmul.f32 %v4465, %v4466
    %v4468 = vsub.f32 1.0, %v4467
    %v4469 = vmul.f32 %v4466, %v4468
    %v4470 = vadd.f32 %v4466, %v4469
    %vm4471 = vweird.f32 %v4465
    %vm4472 = vweird.f32 %v4466
    %vm4473 = vmor %vm4471, %vm4472
    %v4474 = vsel %vm4473, %v4466, %v4470
    %v4475 = vand.u32 2147483647, %v4465
    %vm4476 = vcmp.eq.f32.partialorder %v4475, 8.507059e+37
    %v4477 = vand.u32 %v4465, 2147483648
    %v4478 = vor.u32 1.1754944e-38, %v4477
    %v4479 = vsel %vm4476, %v4478, %v4474
    %v4480 = vmul.f32 %v4455, %v4479
    %v4481 = vmin.f32 %v4480, 1.0
    %v4482 = vmax.f32 %v4481, -1.0
    %v4483 = vmul.f32 %v4282, %v4282
    %v4484 = vmin.f32 16.0, %v4483
    %v4485 = vmul.f32 %v4484, 2.1237322e-06
    %v4486 = vadd.f32 %v4485, 0.00028619796
    %v4487 = vmul.f32 %v4484, %v4486
    %v4488 = vadd.f32 %v4487, 0.0036580483
    %v4489 = vmul.f32 %v4484, %v4488
    %v4490 = vadd.f32 %v4489, 0.05243302
    %v4491 = vmul.f32 %v4484, %v4490
    %v4492 = vadd.f32 %v4491, 0.18741608
    %v4493 = vmul.f32 %v4484, %v4492
    %v4494 = vadd.f32 %v4493, 1.1283791
    %v4495 = vmul.f32 %v4282, %v4494
    %v4496 = vmul.f32 %v4484, 3.8918573e-05
    %v4497 = vadd.f32 %v4496, 0.001143296
    %v4498 = vmul.f32 %v4484, %v4497
    %v4499 = vadd.f32 %v4498, 0.014752088
    %v4500 = vmul.f32 %v4484, %v4499
    %v4501 = vadd.f32 %v4500, 0.112945676
    %v4502 = vmul.f32 %v4484, %v4501
    %v4503 = vadd.f32 %v4502, 0.4994258
    %v4504 = vmul.f32 %v4484, %v4503
    %v4505 = vadd.f32 %v4504, 1.0
    %v4506 = vrcp.pop %v4505
    %v4507 = vmul.f32 %v4505, %v4506
    %v4508 = vsub.f32 1.0, %v4507
    %v4509 = vmul.f32 %v4506, %v4508
    %v4510 = vadd.f32 %v4506, %v4509
    %vm4511 = vweird.f32 %v4505
    %vm4512 = vweird.f32 %v4506
    %vm4513 = vmor %vm4511, %vm4512
    %v4514 = vsel %vm4513, %v4506, %v4510
    %v4515 = vand.u32 2147483647, %v4505
    %vm4516 = vcmp.eq.f32.partialorder %v4515, 8.507059e+37
    %v4517 = vand.u32 %v4505, 2147483648
    %v4518 = vor.u32 1.1754944e-38, %v4517
    %v4519 = vsel %vm4516, %v4518, %v4514
    %v4520 = vmul.f32 %v4495, %v4519
    %v4521 = vmin.f32 %v4520, 1.0
    %v4522 = vmax.f32 %v4521, -1.0
    %v4523 = vadd.f32 %v4322, 1.0
    %v4524 = vadd.f32 %v4362, 1.0
    %v4525 = vadd.f32 %v4402, 1.0
    %v4526 = vadd.f32 %v4442, 1.0
    %v4527 = vadd.f32 %v4482, 1.0
    %v4528 = vadd.f32 %v4522, 1.0
    %v4529 = vmul.f32 %v4271, %v4523
    %v4530 = vmul.f32 %v4272, %v4524
    %v4531 = vmul.f32 %v4273, %v4525
    %v4532 = vmul.f32 %v4274, %v4526
    %v4533 = vmul.f32 %v4275, %v4527
    %v4534 = vmul.f32 %v4276, %v4528
    %v4536 = vperm.slane %v3141, 0
    %4538 = vmatpush.msra.mxu0 %v3123
    %4539 = vmatpush.msra.mxu0 %v3122
    %4540 = vmatpush.msra.mxu0 %v3121
    %4541 = vmatpush.msra.mxu0 %v3120
    %4542 = vmatpush.msra.mxu0 %v3119
    %4543 = vmatpush.msra.mxu0 %v3118
    %4544 = vmatpush.msra.mxu0 %v3117
    %4545 = vmatpush.msra.mxu0 %v3116
    %4546 = vmatpush.msra.mxu0 %v3115
    %4547 = vmatpush.msra.mxu0 %v3114
    %4548 = vmatpush.msra.mxu0 %v3113
    %4549 = vmatpush.msra.mxu0 %v3112
    %4550 = vmatpush.msra.mxu0 %v3111
    %4551 = vmatpush.msra.mxu0 %v3110
    %4552 = vmatpush.msra.mxu0 %v3109
    %4553 = vmatpush.msra.mxu0 %v3108
    %4554 = vmatmul.f32.gmra.mxu0 %v4529
    %v4555 = vpop.f32.mrf.mxu0
    %v4556 = vadd.f32 %v4536, %v4555
    %4557 = vmatmul.f32.gmra.mxu0 %v4531
    %v4558 = vpop.f32.mrf.mxu0
    %v4559 = vadd.f32 %v4536, %v4558
    %4560 = vmatmul.f32.gmra.mxu0 %v4533
    %v4561 = vpop.f32.mrf.mxu0
    %v4562 = vadd.f32 %v4536, %v4561
    %4563 = vdwg.mxu0
    %4564 = vmatpush.msra.mxu0 %v3139
    %4565 = vmatpush.msra.mxu0 %v3138
    %4566 = vmatpush.msra.mxu0 %v3137
    %4567 = vmatpush.msra.mxu0 %v3136
    %4568 = vmatpush.msra.mxu0 %v3135
    %4569 = vmatpush.msra.mxu0 %v3134
    %4570 = vmatpush.msra.mxu0 %v3133
    %4571 = vmatpush.msra.mxu0 %v3132
    %4572 = vmatpush.msra.mxu0 %v3131
    %4573 = vmatpush.msra.mxu0 %v3130
    %4574 = vmatpush.msra.mxu0 %v3129
    %4575 = vmatpush.msra.mxu0 %v3128
    %4576 = vmatpush.msra.mxu0 %v3127
    %4577 = vmatpush.msra.mxu0 %v3126
    %4578 = vmatpush.msra.mxu0 %v3125
    %4579 = vmatpush.msra.mxu0 %v3124
    %4580 = vmatmul.f32.gmra.mxu0 %v4530
    %v4581 = vpop.f32.mrf.mxu0
    %v4582 = vadd.f32 %v4556, %v4581
    %4583 = vmatmul.f32.gmra.mxu0 %v4532
    %v4584 = vpop.f32.mrf.mxu0
    %v4585 = vadd.f32 %v4559, %v4584
    %4586 = vmatmul.f32.gmra.mxu0 %v4534
    %v4587 = vpop.f32.mrf.mxu0
    %v4588 = vadd.f32 %v4562, %v4587
    %4589 = vdwg.mxu0
    %v4590 = vadd.f32 %v4124, %v4582
    %v4591 = vadd.f32 %v4125, %v4585
    %v4592 = vadd.f32 %v4126, %v4588
    %s4593 = scalar_lea.vmem %s29, 3
    %v4594 = vld [vmem:[%s4593] sm:$0x1]
    %s4595 = scalar_lea.vmem %s31, 3
    %v4596 = vld [vmem:[%s4595] sm:$0x1]
    %s4597 = scalar_lea.vmem %s33, 384
    %v4598 = vld [vmem:[%s4597] sm:$0xff]
    %v4599 = vld [vmem:[%s4597 + $0x8] sm:$0xff]
    %v4600 = vld [vmem:[%s4597 + $0x10] sm:$0xff]
    %v4601 = vld [vmem:[%s4597 + $0x18] sm:$0xff]
    %v4602 = vld [vmem:[%s4597 + $0x20] sm:$0xff]
    %v4603 = vld [vmem:[%s4597 + $0x28] sm:$0xff]
    %v4604 = vld [vmem:[%s4597 + $0x30] sm:$0xff]
    %v4605 = vld [vmem:[%s4597 + $0x38] sm:$0xff]
    %v4606 = vld [vmem:[%s4597 + $0x40] sm:$0xff]
    %v4607 = vld [vmem:[%s4597 + $0x48] sm:$0xff]
    %v4608 = vld [vmem:[%s4597 + $0x50] sm:$0xff]
    %v4609 = vld [vmem:[%s4597 + $0x58] sm:$0xff]
    %v4610 = vld [vmem:[%s4597 + $0x60] sm:$0xff]
    %v4611 = vld [vmem:[%s4597 + $0x68] sm:$0xff]
    %v4612 = vld [vmem:[%s4597 + $0x70] sm:$0xff]
    %v4613 = vld [vmem:[%s4597 + $0x78] sm:$0xff]
    %s4614 = scalar_lea.vmem %s35, 6
    %v4615 = vld [vmem:[%s4614] sm:$0x3]
    %s4616 = scalar_lea.vmem %s37, 192
    %v4617 = vld [vmem:[%s4616] sm:$0xff]
    %v4618 = vld [vmem:[%s4616 + $0x8] sm:$0xff]
    %v4619 = vld [vmem:[%s4616 + $0x10] sm:$0xff]
    %v4620 = vld [vmem:[%s4616 + $0x18] sm:$0xff]
    %v4621 = vld [vmem:[%s4616 + $0x20] sm:$0xff]
    %v4622 = vld [vmem:[%s4616 + $0x28] sm:$0xff]
    %v4623 = vld [vmem:[%s4616 + $0x30] sm:$0xff]
    %v4624 = vld [vmem:[%s4616 + $0x38] sm:$0xff]
    %s4625 = scalar_lea.vmem %s39, 3
    %v4626 = vld [vmem:[%s4625] sm:$0x1]
    %s4627 = scalar_lea.vmem %s41, 3
    %v4628 = vld [vmem:[%s4627] sm:$0x1]
    %s4629 = scalar_lea.vmem %s43, 3
    %v4630 = vld [vmem:[%s4629] sm:$0x1]
    %s4631 = scalar_lea.vmem %s45, 384
    %v4632 = vld [vmem:[%s4631] sm:$0xff]
    %v4633 = vld [vmem:[%s4631 + $0x8] sm:$0xff]
    %v4634 = vld [vmem:[%s4631 + $0x10] sm:$0xff]
    %v4635 = vld [vmem:[%s4631 + $0x18] sm:$0xff]
    %v4636 = vld [vmem:[%s4631 + $0x20] sm:$0xff]
    %v4637 = vld [vmem:[%s4631 + $0x28] sm:$0xff]
    %v4638 = vld [vmem:[%s4631 + $0x30] sm:$0xff]
    %v4639 = vld [vmem:[%s4631 + $0x38] sm:$0xff]
    %v4640 = vld [vmem:[%s4631 + $0x40] sm:$0xff]
    %v4641 = vld [vmem:[%s4631 + $0x48] sm:$0xff]
    %v4642 = vld [vmem:[%s4631 + $0x50] sm:$0xff]
    %v4643 = vld [vmem:[%s4631 + $0x58] sm:$0xff]
    %v4644 = vld [vmem:[%s4631 + $0x60] sm:$0xff]
    %v4645 = vld [vmem:[%s4631 + $0x68] sm:$0xff]
    %v4646 = vld [vmem:[%s4631 + $0x70] sm:$0xff]
    %v4647 = vld [vmem:[%s4631 + $0x78] sm:$0xff]
    %s4648 = scalar_lea.vmem %s47, 6
    %v4649 = vld [vmem:[%s4648] sm:$0x3]
    %s4650 = scalar_lea.vmem %s49, 768
    %v4651 = vld [vmem:[%s4650] sm:$0xff]
    %v4652 = vld [vmem:[%s4650 + $0x8] sm:$0xff]
    %v4653 = vld [vmem:[%s4650 + $0x10] sm:$0xff]
    %v4654 = vld [vmem:[%s4650 + $0x18] sm:$0xff]
    %v4655 = vld [vmem:[%s4650 + $0x20] sm:$0xff]
    %v4656 = vld [vmem:[%s4650 + $0x28] sm:$0xff]
    %v4657 = vld [vmem:[%s4650 + $0x30] sm:$0xff]
    %v4658 = vld [vmem:[%s4650 + $0x38] sm:$0xff]
    %v4659 = vld [vmem:[%s4650 + $0x40] sm:$0xff]
    %v4660 = vld [vmem:[%s4650 + $0x48] sm:$0xff]
    %v4661 = vld [vmem:[%s4650 + $0x50] sm:$0xff]
    %v4662 = vld [vmem:[%s4650 + $0x58] sm:$0xff]
    %v4663 = vld [vmem:[%s4650 + $0x60] sm:$0xff]
    %v4664 = vld [vmem:[%s4650 + $0x68] sm:$0xff]
    %v4665 = vld [vmem:[%s4650 + $0x70] sm:$0xff]
    %v4666 = vld [vmem:[%s4650 + $0x78] sm:$0xff]
    %v4667 = vld [vmem:[%s4650 + $0x80] sm:$0xff]
    %v4668 = vld [vmem:[%s4650 + $0x88] sm:$0xff]
    %v4669 = vld [vmem:[%s4650 + $0x90] sm:$0xff]
    %v4670 = vld [vmem:[%s4650 + $0x98] sm:$0xff]
    %v4671 = vld [vmem:[%s4650 + $0xa0] sm:$0xff]
    %v4672 = vld [vmem:[%s4650 + $0xa8] sm:$0xff]
    %v4673 = vld [vmem:[%s4650 + $0xb0] sm:$0xff]
    %v4674 = vld [vmem:[%s4650 + $0xb8] sm:$0xff]
    %v4675 = vld [vmem:[%s4650 + $0xc0] sm:$0xff]
    %v4676 = vld [vmem:[%s4650 + $0xc8] sm:$0xff]
    %v4677 = vld [vmem:[%s4650 + $0xd0] sm:$0xff]
    %v4678 = vld [vmem:[%s4650 + $0xd8] sm:$0xff]
    %v4679 = vld [vmem:[%s4650 + $0xe0] sm:$0xff]
    %v4680 = vld [vmem:[%s4650 + $0xe8] sm:$0xff]
    %v4681 = vld [vmem:[%s4650 + $0xf0] sm:$0xff]
    %v4682 = vld [vmem:[%s4650 + $0xf8] sm:$0xff]
    %s4683 = scalar_lea.vmem %s51, 3
    %v4684 = vld [vmem:[%s4683] sm:$0x1]
    %v4685 = vsel %vm385, %v4590, 0.0
    %4686 = vadd.xlane.f32.xlu0 %v4685
    %v4687 = vpop.xlane.xlu0 %4686
    %v4688 = vsel %vm385, %v4591, 0.0
    %4689 = vadd.xlane.f32.xlu0 %v4688
    %v4690 = vpop.xlane.xlu0 %4689
    %v4691 = vsel %vm389, %v4592, 0.0
    %4692 = vadd.xlane.f32.xlu0 %v4691
    %v4693 = vpop.xlane.xlu0 %4692
    %v4694 = vmul.f32 %v4687, %v399
    %v4695 = vmul.f32 %v4690, %v399
    %v4696 = vmul.f32 %v4693, %v399
    %v4697 = vsub.f32 %v4590, %v4694
    %v4698 = vsub.f32 %v4591, %v4695
    %v4699 = vsub.f32 %v4592, %v4696
    %v4700 = vmul.f32 %v4697, %v4697
    %v4701 = vmul.f32 %v4698, %v4698
    %v4702 = vmul.f32 %v4699, %v4699
    %v4703 = vsel %vm385, %v4700, 0.0
    %4704 = vadd.xlane.f32.xlu0 %v4703
    %v4705 = vpop.xlane.xlu0 %4704
    %v4706 = vsel %vm385, %v4701, 0.0
    %4707 = vadd.xlane.f32.xlu0 %v4706
    %v4708 = vpop.xlane.xlu0 %4707
    %v4709 = vsel %vm389, %v4702, 0.0
    %4710 = vadd.xlane.f32.xlu0 %v4709
    %v4711 = vpop.xlane.xlu0 %4710
    %v4712 = vmul.f32 %v4705, %v399
    %v4713 = vmul.f32 %v4708, %v399
    %v4714 = vmul.f32 %v4711, %v399
    %v4715 = vadd.f32 %v4712, 1e-06
    %v4716 = vadd.f32 %v4713, 1e-06
    %v4717 = vadd.f32 %v4714, 1e-06
    %v4718 = vrsqrt.pop %v4715
    %v4719 = vmul.f32 %v4718, %v4715
    %v4720 = vmul.f32 %v4719, %v4718
    %v4721 = vmul.f32 0.5, %v4720
    %v4722 = vsub.f32 1.5, %v4721
    %v4723 = vmul.f32 %v4718, %v4722
    %vm4724 = vweird.f32 %v4715
    %vm4725 = vweird.f32 %v4718
    %vm4726 = vmor %vm4724, %vm4725
    %v4727 = vsel %vm4726, %v4718, %v4723
    %v4728 = vrsqrt.pop %v4716
    %v4729 = vmul.f32 %v4728, %v4716
    %v4730 = vmul.f32 %v4729, %v4728
    %v4731 = vmul.f32 0.5, %v4730
    %v4732 = vsub.f32 1.5, %v4731
    %v4733 = vmul.f32 %v4728, %v4732
    %vm4734 = vweird.f32 %v4716
    %vm4735 = vweird.f32 %v4728
    %vm4736 = vmor %vm4734, %vm4735
    %v4737 = vsel %vm4736, %v4728, %v4733
    %v4738 = vrsqrt.pop %v4717
    %v4739 = vmul.f32 %v4738, %v4717
    %v4740 = vmul.f32 %v4739, %v4738
    %v4741 = vmul.f32 0.5, %v4740
    %v4742 = vsub.f32 1.5, %v4741
    %v4743 = vmul.f32 %v4738, %v4742
    %vm4744 = vweird.f32 %v4717
    %vm4745 = vweird.f32 %v4738
    %vm4746 = vmor %vm4744, %vm4745
    %v4747 = vsel %vm4746, %v4738, %v4743
    %v4748 = vmul.f32 %v4697, %v4727
    %v4749 = vmul.f32 %v4698, %v4737
    %v4750 = vmul.f32 %v4699, %v4747
    %v4752 = vperm.slane %v4594, 0
    %v4754 = vmul.f32 %v4748, %v4752
    %v4755 = vmul.f32 %v4749, %v4752
    %v4756 = vmul.f32 %v4750, %v4752
    %v4758 = vperm.slane %v4596, 0
    %v4760 = vadd.f32 %v4754, %v4758
    %v4761 = vadd.f32 %v4755, %v4758
    %v4762 = vadd.f32 %v4756, %v4758
    %v4764 = vperm.slane %v4615, 0
    %v4765 = vperm.slane %v4615, 1
    %v4769 = vsel %vm385, %v4760, 0
    %v4772 = vsel %vm385, %v4761, 0
    %v4775 = vsel %vm385, %v4762, 0
    %4777 = vmatpush.msra.mxu0 0.0
    %4778 = vmatpush.msra.mxu0 0.0
    %4779 = vmatpush.msra.mxu0 0.0
    %4780 = vmatpush.msra.mxu0 0.0
    %4781 = vmatpush.msra.mxu0 0.0
    %4782 = vmatpush.msra.mxu0 0.0
    %4783 = vmatpush.msra.mxu0 0.0
    %4784 = vmatpush.msra.mxu0 0.0
    %4785 = vmatpush.msra.mxu0 %v4612
    %4786 = vmatpush.msra.mxu0 %v4610
    %4787 = vmatpush.msra.mxu0 %v4608
    %4788 = vmatpush.msra.mxu0 %v4606
    %4789 = vmatpush.msra.mxu0 %v4604
    %4790 = vmatpush.msra.mxu0 %v4602
    %4791 = vmatpush.msra.mxu0 %v4600
    %4792 = vmatpush.msra.mxu0 %v4598
    %4793 = vmatmul.f32.gmra.mxu0 %v4769
    %v4794 = vpop.f32.mrf.mxu0
    %v4795 = vadd.f32 %v4764, %v4794
    %4796 = vmatmul.f32.gmra.mxu0 %v4772
    %v4797 = vpop.f32.mrf.mxu0
    %v4798 = vadd.f32 %v4764, %v4797
    %4799 = vmatmul.f32.gmra.mxu0 %v4775
    %v4800 = vpop.f32.mrf.mxu0
    %v4801 = vadd.f32 %v4764, %v4800
    %4802 = vdwg.mxu0
    %4803 = vmatpush.msra.mxu0 0.0
    %4804 = vmatpush.msra.mxu0 0.0
    %4805 = vmatpush.msra.mxu0 0.0
    %4806 = vmatpush.msra.mxu0 0.0
    %4807 = vmatpush.msra.mxu0 0.0
    %4808 = vmatpush.msra.mxu0 0.0
    %4809 = vmatpush.msra.mxu0 0.0
    %4810 = vmatpush.msra.mxu0 0.0
    %4811 = vmatpush.msra.mxu0 %v4613
    %4812 = vmatpush.msra.mxu0 %v4611
    %4813 = vmatpush.msra.mxu0 %v4609
    %4814 = vmatpush.msra.mxu0 %v4607
    %4815 = vmatpush.msra.mxu0 %v4605
    %4816 = vmatpush.msra.mxu0 %v4603
    %4817 = vmatpush.msra.mxu0 %v4601
    %4818 = vmatpush.msra.mxu0 %v4599
    %4819 = vmatmul.f32.gmra.mxu0 %v4769
    %v4820 = vpop.f32.mrf.mxu0
    %v4821 = vadd.f32 %v4765, %v4820
    %4822 = vmatmul.f32.gmra.mxu0 %v4772
    %v4823 = vpop.f32.mrf.mxu0
    %v4824 = vadd.f32 %v4765, %v4823
    %4825 = vmatmul.f32.gmra.mxu0 %v4775
    %v4826 = vpop.f32.mrf.mxu0
    %v4827 = vadd.f32 %v4765, %v4826
    %4828 = vdwg.mxu0
    %4832 = vrot.lane.b32.xlu0 %v4795, 112
    %v4833 = vpop.permute.xlu0 %4832
    %4834 = vrot.lane.b32.xlu0 %v4798, 112
    %v4835 = vpop.permute.xlu0 %4834
    %4836 = vrot.lane.b32.xlu0 %v4801, 112
    %v4837 = vpop.permute.xlu0 %4836
    %v4838 = vsel %vm511, %v4795, 0
    %v4840 = vsel %vm511, %v4798, 0
    %v4842 = vsel %vm511, %v4801, 0
    %v4844 = vsel %vm511, %v4833, 0
    %v4846 = vsel %vm511, %v4835, 0
    %v4848 = vsel %vm511, %v4837, 0
    %4850 = vmatpush.xpose.msra.mxu0 0.0
    %4851 = vmatpush.xpose.msra.mxu0 0.0
    %4852 = vmatpush.xpose.msra.mxu0 0.0
    %4853 = vmatpush.xpose.msra.mxu0 0.0
    %4854 = vmatpush.xpose.msra.mxu0 0.0
    %4855 = vmatpush.xpose.msra.mxu0 0.0
    %4856 = vmatpush.xpose.msra.mxu0 0.0
    %4857 = vmatpush.xpose.msra.mxu0 0.0
    %4858 = vmatpush.xpose.msra.mxu0 0.0
    %4859 = vmatpush.xpose.msra.mxu0 0.0
    %4860 = vmatpush.xpose.msra.mxu0 0.0
    %4861 = vmatpush.xpose.msra.mxu0 0.0
    %4862 = vmatpush.xpose.msra.mxu0 0.0
    %4863 = vmatpush.xpose.msra.mxu0 %v4848
    %4864 = vmatpush.xpose.msra.mxu0 %v4846
    %4865 = vmatpush.xpose.msra.mxu0 %v4844
    %4866 = vmatmul.f32.gmra.mxu0 %v4838
    %v4867 = vpop.f32.mrf.mxu0
    %v4868 = vadd.f32 0.0, %v4867
    %4869 = vmatmul.f32.gmra.mxu0 %v4840
    %v4870 = vpop.f32.mrf.mxu0
    %v4871 = vadd.f32 0.0, %v4870
    %4872 = vmatmul.f32.gmra.mxu0 %v4842
    %v4873 = vpop.f32.mrf.mxu0
    %v4874 = vadd.f32 0.0, %v4873
    %4875 = vdwg.mxu0
    %v4876 = vmul.f32 %v4868, 0.25
    %v4877 = vmul.f32 %v4871, 0.25
    %v4878 = vmul.f32 %v4874, 0.25
    %v4879 = vadd.f32 %v4876, %v3047
    %v4880 = vadd.f32 %v4877, %v3048
    %v4881 = vadd.f32 %v4878, %v3049
    %v4882 = vsel %vm3339, %v4879, -inf
    %4883 = vmax.xlane.f32.xlu0 %v4882
    %v4884 = vpop.xlane.xlu0 %4883
    %v4885 = vsel %vm3339, %v4880, -inf
    %4886 = vmax.xlane.f32.xlu0 %v4885
    %v4887 = vpop.xlane.xlu0 %4886
    %v4888 = vsel %vm3346, %v4881, -inf
    %4889 = vmax.xlane.f32.xlu0 %v4888
    %v4890 = vpop.xlane.xlu0 %4889
    %v4891 = vsub.f32 %v4879, %v4884
    %v4892 = vsub.f32 %v4880, %v4887
    %v4893 = vsub.f32 %v4881, %v4890
    %v4894 = vmul.f32 %v4891, 1.442695
    %v4895 = vpow.pop %v4894
    %v4896 = vmul.f32 %v4892, 1.442695
    %v4897 = vpow.pop %v4896
    %v4898 = vmul.f32 %v4893, 1.442695
    %v4899 = vpow.pop %v4898
    %v4900 = vsel %vm3339, %v4895, 0.0
    %4901 = vadd.xlane.f32.xlu0 %v4900
    %v4902 = vpop.xlane.xlu0 %4901
    %v4903 = vsel %vm3339, %v4897, 0.0
    %4904 = vadd.xlane.f32.xlu0 %v4903
    %v4905 = vpop.xlane.xlu0 %4904
    %v4906 = vsel %vm3346, %v4899, 0.0
    %4907 = vadd.xlane.f32.xlu0 %v4906
    %v4908 = vpop.xlane.xlu0 %4907
    %v4909 = vrcp.pop %v4902
    %v4910 = vmul.f32 %v4902, %v4909
    %v4911 = vsub.f32 1.0, %v4910
    %v4912 = vmul.f32 %v4909, %v4911
    %v4913 = vadd.f32 %v4909, %v4912
    %vm4914 = vweird.f32 %v4902
    %vm4915 = vweird.f32 %v4909
    %vm4916 = vmor %vm4914, %vm4915
    %v4917 = vsel %vm4916, %v4909, %v4913
    %v4918 = vand.u32 2147483647, %v4902
    %vm4919 = vcmp.eq.f32.partialorder %v4918, 8.507059e+37
    %v4920 = vand.u32 %v4902, 2147483648
    %v4921 = vor.u32 1.1754944e-38, %v4920
    %v4922 = vsel %vm4919, %v4921, %v4917
    %v4923 = vmul.f32 %v4895, %v4922
    %v4924 = vrcp.pop %v4905
    %v4925 = vmul.f32 %v4905, %v4924
    %v4926 = vsub.f32 1.0, %v4925
    %v4927 = vmul.f32 %v4924, %v4926
    %v4928 = vadd.f32 %v4924, %v4927
    %vm4929 = vweird.f32 %v4905
    %vm4930 = vweird.f32 %v4924
    %vm4931 = vmor %vm4929, %vm4930
    %v4932 = vsel %vm4931, %v4924, %v4928
    %v4933 = vand.u32 2147483647, %v4905
    %vm4934 = vcmp.eq.f32.partialorder %v4933, 8.507059e+37
    %v4935 = vand.u32 %v4905, 2147483648
    %v4936 = vor.u32 1.1754944e-38, %v4935
    %v4937 = vsel %vm4934, %v4936, %v4932
    %v4938 = vmul.f32 %v4897, %v4937
    %v4939 = vrcp.pop %v4908
    %v4940 = vmul.f32 %v4908, %v4939
    %v4941 = vsub.f32 1.0, %v4940
    %v4942 = vmul.f32 %v4939, %v4941
    %v4943 = vadd.f32 %v4939, %v4942
    %vm4944 = vweird.f32 %v4908
    %vm4945 = vweird.f32 %v4939
    %vm4946 = vmor %vm4944, %vm4945
    %v4947 = vsel %vm4946, %v4939, %v4943
    %v4948 = vand.u32 2147483647, %v4908
    %vm4949 = vcmp.eq.f32.partialorder %v4948, 8.507059e+37
    %v4950 = vand.u32 %v4908, 2147483648
    %v4951 = vor.u32 1.1754944e-38, %v4950
    %v4952 = vsel %vm4949, %v4951, %v4947
    %v4953 = vmul.f32 %v4899, %v4952
    %4954 = vrot.lane.b32.xlu0 %v4795, 96
    %v4955 = vpop.permute.xlu0 %4954
    %4956 = vrot.lane.b32.xlu0 %v4798, 96
    %v4957 = vpop.permute.xlu0 %4956
    %4958 = vrot.lane.b32.xlu0 %v4801, 96
    %v4959 = vpop.permute.xlu0 %4958
    %v4963 = vsel %vm3339, %v4923, 0
    %v4966 = vsel %vm3339, %v4938, 0
    %v4969 = vsel %vm3339, %v4953, 0
    %v4971 = vsel %vm608, %v4959, 0
    %4973 = vmatpush.msra.mxu0 0.0
    %4974 = vmatpush.msra.mxu0 0.0
    %4975 = vmatpush.msra.mxu0 0.0
    %4976 = vmatpush.msra.mxu0 0.0
    %4977 = vmatpush.msra.mxu0 0.0
    %4978 = vmatpush.msra.mxu0 0.0
    %4979 = vmatpush.msra.mxu0 0.0
    %4980 = vmatpush.msra.mxu0 0.0
    %4981 = vmatpush.msra.mxu0 0.0
    %4982 = vmatpush.msra.mxu0 0.0
    %4983 = vmatpush.msra.mxu0 0.0
    %4984 = vmatpush.msra.mxu0 0.0
    %4985 = vmatpush.msra.mxu0 0.0
    %4986 = vmatpush.msra.mxu0 %v4971
    %4987 = vmatpush.msra.mxu0 %v4957
    %4988 = vmatpush.msra.mxu0 %v4955
    %4989 = vmatmul.f32.gmra.mxu0 %v4963
    %v4990 = vpop.f32.mrf.mxu0
    %v4991 = vadd.f32 0.0, %v4990
    %4992 = vmatmul.f32.gmra.mxu0 %v4966
    %v4993 = vpop.f32.mrf.mxu0
    %v4994 = vadd.f32 0.0, %v4993
    %4995 = vmatmul.f32.gmra.mxu0 %v4969
    %v4996 = vpop.f32.mrf.mxu0
    %v4997 = vadd.f32 0.0, %v4996
    %4998 = vdwg.mxu0
    %4999 = vrot.lane.b32.xlu0 %v4795, 80
    %v5000 = vpop.permute.xlu0 %4999
    %5001 = vrot.lane.b32.xlu0 %v4798, 80
    %v5002 = vpop.permute.xlu0 %5001
    %5003 = vrot.lane.b32.xlu0 %v4801, 80
    %v5004 = vpop.permute.xlu0 %5003
    %5005 = vrot.lane.b32.xlu0 %v4795, 64
    %v5006 = vpop.permute.xlu0 %5005
    %5007 = vrot.lane.b32.xlu0 %v4798, 64
    %v5008 = vpop.permute.xlu0 %5007
    %5009 = vrot.lane.b32.xlu0 %v4801, 64
    %v5010 = vpop.permute.xlu0 %5009
    %v5011 = vsel %vm511, %v5000, 0
    %v5013 = vsel %vm511, %v5002, 0
    %v5015 = vsel %vm511, %v5004, 0
    %v5017 = vsel %vm511, %v5006, 0
    %v5019 = vsel %vm511, %v5008, 0
    %v5021 = vsel %vm511, %v5010, 0
    %5023 = vmatpush.xpose.msra.mxu0 0.0
    %5024 = vmatpush.xpose.msra.mxu0 0.0
    %5025 = vmatpush.xpose.msra.mxu0 0.0
    %5026 = vmatpush.xpose.msra.mxu0 0.0
    %5027 = vmatpush.xpose.msra.mxu0 0.0
    %5028 = vmatpush.xpose.msra.mxu0 0.0
    %5029 = vmatpush.xpose.msra.mxu0 0.0
    %5030 = vmatpush.xpose.msra.mxu0 0.0
    %5031 = vmatpush.xpose.msra.mxu0 0.0
    %5032 = vmatpush.xpose.msra.mxu0 0.0
    %5033 = vmatpush.xpose.msra.mxu0 0.0
    %5034 = vmatpush.xpose.msra.mxu0 0.0
    %5035 = vmatpush.xpose.msra.mxu0 0.0
    %5036 = vmatpush.xpose.msra.mxu0 %v5021
    %5037 = vmatpush.xpose.msra.mxu0 %v5019
    %5038 = vmatpush.xpose.msra.mxu0 %v5017
    %5039 = vmatmul.f32.gmra.mxu0 %v5011
    %v5040 = vpop.f32.mrf.mxu0
    %v5041 = vadd.f32 0.0, %v5040
    %5042 = vmatmul.f32.gmra.mxu0 %v5013
    %v5043 = vpop.f32.mrf.mxu0
    %v5044 = vadd.f32 0.0, %v5043
    %5045 = vmatmul.f32.gmra.mxu0 %v5015
    %v5046 = vpop.f32.mrf.mxu0
    %v5047 = vadd.f32 0.0, %v5046
    %5048 = vdwg.mxu0
    %v5049 = vmul.f32 %v5041, 0.25
    %v5050 = vmul.f32 %v5044, 0.25
    %v5051 = vmul.f32 %v5047, 0.25
    %v5052 = vadd.f32 %v5049, %v3047
    %v5053 = vadd.f32 %v5050, %v3048
    %v5054 = vadd.f32 %v5051, %v3049
    %v5055 = vsel %vm3339, %v5052, -inf
    %5056 = vmax.xlane.f32.xlu0 %v5055
    %v5057 = vpop.xlane.xlu0 %5056
    %v5058 = vsel %vm3339, %v5053, -inf
    %5059 = vmax.xlane.f32.xlu0 %v5058
    %v5060 = vpop.xlane.xlu0 %5059
    %v5061 = vsel %vm3346, %v5054, -inf
    %5062 = vmax.xlane.f32.xlu0 %v5061
    %v5063 = vpop.xlane.xlu0 %5062
    %v5064 = vsub.f32 %v5052, %v5057
    %v5065 = vsub.f32 %v5053, %v5060
    %v5066 = vsub.f32 %v5054, %v5063
    %v5067 = vmul.f32 %v5064, 1.442695
    %v5068 = vpow.pop %v5067
    %v5069 = vmul.f32 %v5065, 1.442695
    %v5070 = vpow.pop %v5069
    %v5071 = vmul.f32 %v5066, 1.442695
    %v5072 = vpow.pop %v5071
    %v5073 = vsel %vm3339, %v5068, 0.0
    %5074 = vadd.xlane.f32.xlu0 %v5073
    %v5075 = vpop.xlane.xlu0 %5074
    %v5076 = vsel %vm3339, %v5070, 0.0
    %5077 = vadd.xlane.f32.xlu0 %v5076
    %v5078 = vpop.xlane.xlu0 %5077
    %v5079 = vsel %vm3346, %v5072, 0.0
    %5080 = vadd.xlane.f32.xlu0 %v5079
    %v5081 = vpop.xlane.xlu0 %5080
    %v5082 = vrcp.pop %v5075
    %v5083 = vmul.f32 %v5075, %v5082
    %v5084 = vsub.f32 1.0, %v5083
    %v5085 = vmul.f32 %v5082, %v5084
    %v5086 = vadd.f32 %v5082, %v5085
    %vm5087 = vweird.f32 %v5075
    %vm5088 = vweird.f32 %v5082
    %vm5089 = vmor %vm5087, %vm5088
    %v5090 = vsel %vm5089, %v5082, %v5086
    %v5091 = vand.u32 2147483647, %v5075
    %vm5092 = vcmp.eq.f32.partialorder %v5091, 8.507059e+37
    %v5093 = vand.u32 %v5075, 2147483648
    %v5094 = vor.u32 1.1754944e-38, %v5093
    %v5095 = vsel %vm5092, %v5094, %v5090
    %v5096 = vmul.f32 %v5068, %v5095
    %v5097 = vrcp.pop %v5078
    %v5098 = vmul.f32 %v5078, %v5097
    %v5099 = vsub.f32 1.0, %v5098
    %v5100 = vmul.f32 %v5097, %v5099
    %v5101 = vadd.f32 %v5097, %v5100
    %vm5102 = vweird.f32 %v5078
    %vm5103 = vweird.f32 %v5097
    %vm5104 = vmor %vm5102, %vm5103
    %v5105 = vsel %vm5104, %v5097, %v5101
    %v5106 = vand.u32 2147483647, %v5078
    %vm5107 = vcmp.eq.f32.partialorder %v5106, 8.507059e+37
    %v5108 = vand.u32 %v5078, 2147483648
    %v5109 = vor.u32 1.1754944e-38, %v5108
    %v5110 = vsel %vm5107, %v5109, %v5105
    %v5111 = vmul.f32 %v5070, %v5110
    %v5112 = vrcp.pop %v5081
    %v5113 = vmul.f32 %v5081, %v5112
    %v5114 = vsub.f32 1.0, %v5113
    %v5115 = vmul.f32 %v5112, %v5114
    %v5116 = vadd.f32 %v5112, %v5115
    %vm5117 = vweird.f32 %v5081
    %vm5118 = vweird.f32 %v5112
    %vm5119 = vmor %vm5117, %vm5118
    %v5120 = vsel %vm5119, %v5112, %v5116
    %v5121 = vand.u32 2147483647, %v5081
    %vm5122 = vcmp.eq.f32.partialorder %v5121, 8.507059e+37
    %v5123 = vand.u32 %v5081, 2147483648
    %v5124 = vor.u32 1.1754944e-38, %v5123
    %v5125 = vsel %vm5122, %v5124, %v5120
    %v5126 = vmul.f32 %v5072, %v5125
    %5127 = vrot.lane.b32.xlu0 %v4795, 48
    %v5128 = vpop.permute.xlu0 %5127
    %5129 = vrot.lane.b32.xlu0 %v4798, 48
    %v5130 = vpop.permute.xlu0 %5129
    %5131 = vrot.lane.b32.xlu0 %v4801, 48
    %v5132 = vpop.permute.xlu0 %5131
    %v5136 = vsel %vm3339, %v5096, 0
    %v5139 = vsel %vm3339, %v5111, 0
    %v5142 = vsel %vm3339, %v5126, 0
    %v5144 = vsel %vm608, %v5132, 0
    %5146 = vmatpush.msra.mxu0 0.0
    %5147 = vmatpush.msra.mxu0 0.0
    %5148 = vmatpush.msra.mxu0 0.0
    %5149 = vmatpush.msra.mxu0 0.0
    %5150 = vmatpush.msra.mxu0 0.0
    %5151 = vmatpush.msra.mxu0 0.0
    %5152 = vmatpush.msra.mxu0 0.0
    %5153 = vmatpush.msra.mxu0 0.0
    %5154 = vmatpush.msra.mxu0 0.0
    %5155 = vmatpush.msra.mxu0 0.0
    %5156 = vmatpush.msra.mxu0 0.0
    %5157 = vmatpush.msra.mxu0 0.0
    %5158 = vmatpush.msra.mxu0 0.0
    %5159 = vmatpush.msra.mxu0 %v5144
    %5160 = vmatpush.msra.mxu0 %v5130
    %5161 = vmatpush.msra.mxu0 %v5128
    %5162 = vmatmul.f32.gmra.mxu0 %v5136
    %v5163 = vpop.f32.mrf.mxu0
    %v5164 = vadd.f32 0.0, %v5163
    %5165 = vmatmul.f32.gmra.mxu0 %v5139
    %v5166 = vpop.f32.mrf.mxu0
    %v5167 = vadd.f32 0.0, %v5166
    %5168 = vmatmul.f32.gmra.mxu0 %v5142
    %v5169 = vpop.f32.mrf.mxu0
    %v5170 = vadd.f32 0.0, %v5169
    %5171 = vdwg.mxu0
    %v5173 = vsel %vm511, %v5164, 0
    %v5176 = vsel %vm511, %v5167, 0
    %v5179 = vsel %vm511, %v5170, 0
    %5181 = vmatpush.msra.mxu0 0.0
    %5182 = vmatpush.msra.mxu0 0.0
    %5183 = vmatpush.msra.mxu0 0.0
    %5184 = vmatpush.msra.mxu0 0.0
    %5185 = vmatpush.msra.mxu0 0.0
    %5186 = vmatpush.msra.mxu0 0.0
    %5187 = vmatpush.msra.mxu0 0.0
    %5188 = vmatpush.msra.mxu0 0.0
    %5189 = vmatpush.msra.mxu0 0.0
    %5190 = vmatpush.msra.mxu0 0.0
    %5191 = vmatpush.msra.mxu0 0.0
    %5192 = vmatpush.msra.mxu0 0.0
    %5193 = vmatpush.msra.mxu0 0.0
    %5194 = vmatpush.msra.mxu0 0.0
    %5195 = vmatpush.msra.mxu0 %v4620
    %5196 = vmatpush.msra.mxu0 %v4619
    %5197 = vmatmul.f32.gmra.mxu0 %v5173
    %v5198 = vpop.f32.mrf.mxu0
    %v5199 = vadd.f32 0.0, %v5198
    %5200 = vmatmul.f32.gmra.mxu0 %v5176
    %v5201 = vpop.f32.mrf.mxu0
    %v5202 = vadd.f32 0.0, %v5201
    %5203 = vmatmul.f32.gmra.mxu0 %v5179
    %v5204 = vpop.f32.mrf.mxu0
    %v5205 = vadd.f32 0.0, %v5204
    %5206 = vdwg.mxu0
    %v5208 = vsel %vm511, %v4991, 0
    %v5211 = vsel %vm511, %v4994, 0
    %v5214 = vsel %vm511, %v4997, 0
    %5216 = vmatpush.msra.mxu0 0.0
    %5217 = vmatpush.msra.mxu0 0.0
    %5218 = vmatpush.msra.mxu0 0.0
    %5219 = vmatpush.msra.mxu0 0.0
    %5220 = vmatpush.msra.mxu0 0.0
    %5221 = vmatpush.msra.mxu0 0.0
    %5222 = vmatpush.msra.mxu0 0.0
    %5223 = vmatpush.msra.mxu0 0.0
    %5224 = vmatpush.msra.mxu0 0.0
    %5225 = vmatpush.msra.mxu0 0.0
    %5226 = vmatpush.msra.mxu0 0.0
    %5227 = vmatpush.msra.mxu0 0.0
    %5228 = vmatpush.msra.mxu0 0.0
    %5229 = vmatpush.msra.mxu0 0.0
    %5230 = vmatpush.msra.mxu0 %v4618
    %5231 = vmatpush.msra.mxu0 %v4617
    %5232 = vmatmul.f32.gmra.mxu0 %v5208
    %v5233 = vpop.f32.mrf.mxu0
    %v5234 = vadd.f32 %v5199, %v5233
    %5235 = vmatmul.f32.gmra.mxu0 %v5211
    %v5236 = vpop.f32.mrf.mxu0
    %v5237 = vadd.f32 %v5202, %v5236
    %5238 = vmatmul.f32.gmra.mxu0 %v5214
    %v5239 = vpop.f32.mrf.mxu0
    %v5240 = vadd.f32 %v5205, %v5239
    %5241 = vdwg.mxu0
    %5242 = vrot.lane.b32.xlu0 %v4795, 32
    %v5243 = vpop.permute.xlu0 %5242
    %5244 = vrot.lane.b32.xlu0 %v4798, 32
    %v5245 = vpop.permute.xlu0 %5244
    %5246 = vrot.lane.b32.xlu0 %v4801, 32
    %v5247 = vpop.permute.xlu0 %5246
    %5248 = vrot.lane.b32.xlu0 %v4795, 16
    %v5249 = vpop.permute.xlu0 %5248
    %5250 = vrot.lane.b32.xlu0 %v4798, 16
    %v5251 = vpop.permute.xlu0 %5250
    %5252 = vrot.lane.b32.xlu0 %v4801, 16
    %v5253 = vpop.permute.xlu0 %5252
    %v5254 = vsel %vm511, %v5243, 0
    %v5256 = vsel %vm511, %v5245, 0
    %v5258 = vsel %vm511, %v5247, 0
    %v5260 = vsel %vm511, %v5249, 0
    %v5262 = vsel %vm511, %v5251, 0
    %v5264 = vsel %vm511, %v5253, 0
    %5266 = vmatpush.xpose.msra.mxu0 0.0
    %5267 = vmatpush.xpose.msra.mxu0 0.0
    %5268 = vmatpush.xpose.msra.mxu0 0.0
    %5269 = vmatpush.xpose.msra.mxu0 0.0
    %5270 = vmatpush.xpose.msra.mxu0 0.0
    %5271 = vmatpush.xpose.msra.mxu0 0.0
    %5272 = vmatpush.xpose.msra.mxu0 0.0
    %5273 = vmatpush.xpose.msra.mxu0 0.0
    %5274 = vmatpush.xpose.msra.mxu0 0.0
    %5275 = vmatpush.xpose.msra.mxu0 0.0
    %5276 = vmatpush.xpose.msra.mxu0 0.0
    %5277 = vmatpush.xpose.msra.mxu0 0.0
    %5278 = vmatpush.xpose.msra.mxu0 0.0
    %5279 = vmatpush.xpose.msra.mxu0 %v5264
    %5280 = vmatpush.xpose.msra.mxu0 %v5262
    %5281 = vmatpush.xpose.msra.mxu0 %v5260
    %5282 = vmatmul.f32.gmra.mxu0 %v5254
    %v5283 = vpop.f32.mrf.mxu0
    %v5284 = vadd.f32 0.0, %v5283
    %5285 = vmatmul.f32.gmra.mxu0 %v5256
    %v5286 = vpop.f32.mrf.mxu0
    %v5287 = vadd.f32 0.0, %v5286
    %5288 = vmatmul.f32.gmra.mxu0 %v5258
    %v5289 = vpop.f32.mrf.mxu0
    %v5290 = vadd.f32 0.0, %v5289
    %5291 = vdwg.mxu0
    %v5292 = vmul.f32 %v5284, 0.25
    %v5293 = vmul.f32 %v5287, 0.25
    %v5294 = vmul.f32 %v5290, 0.25
    %v5295 = vadd.f32 %v5292, %v3047
    %v5296 = vadd.f32 %v5293, %v3048
    %v5297 = vadd.f32 %v5294, %v3049
    %v5298 = vsel %vm3339, %v5295, -inf
    %5299 = vmax.xlane.f32.xlu0 %v5298
    %v5300 = vpop.xlane.xlu0 %5299
    %v5301 = vsel %vm3339, %v5296, -inf
    %5302 = vmax.xlane.f32.xlu0 %v5301
    %v5303 = vpop.xlane.xlu0 %5302
    %v5304 = vsel %vm3346, %v5297, -inf
    %5305 = vmax.xlane.f32.xlu0 %v5304
    %v5306 = vpop.xlane.xlu0 %5305
    %v5307 = vsub.f32 %v5295, %v5300
    %v5308 = vsub.f32 %v5296, %v5303
    %v5309 = vsub.f32 %v5297, %v5306
    %v5310 = vmul.f32 %v5307, 1.442695
    %v5311 = vpow.pop %v5310
    %v5312 = vmul.f32 %v5308, 1.442695
    %v5313 = vpow.pop %v5312
    %v5314 = vmul.f32 %v5309, 1.442695
    %v5315 = vpow.pop %v5314
    %v5316 = vsel %vm3339, %v5311, 0.0
    %5317 = vadd.xlane.f32.xlu0 %v5316
    %v5318 = vpop.xlane.xlu0 %5317
    %v5319 = vsel %vm3339, %v5313, 0.0
    %5320 = vadd.xlane.f32.xlu0 %v5319
    %v5321 = vpop.xlane.xlu0 %5320
    %v5322 = vsel %vm3346, %v5315, 0.0
    %5323 = vadd.xlane.f32.xlu0 %v5322
    %v5324 = vpop.xlane.xlu0 %5323
    %v5325 = vrcp.pop %v5318
    %v5326 = vmul.f32 %v5318, %v5325
    %v5327 = vsub.f32 1.0, %v5326
    %v5328 = vmul.f32 %v5325, %v5327
    %v5329 = vadd.f32 %v5325, %v5328
    %vm5330 = vweird.f32 %v5318
    %vm5331 = vweird.f32 %v5325
    %vm5332 = vmor %vm5330, %vm5331
    %v5333 = vsel %vm5332, %v5325, %v5329
    %v5334 = vand.u32 2147483647, %v5318
    %vm5335 = vcmp.eq.f32.partialorder %v5334, 8.507059e+37
    %v5336 = vand.u32 %v5318, 2147483648
    %v5337 = vor.u32 1.1754944e-38, %v5336
    %v5338 = vsel %vm5335, %v5337, %v5333
    %v5339 = vmul.f32 %v5311, %v5338
    %v5340 = vrcp.pop %v5321
    %v5341 = vmul.f32 %v5321, %v5340
    %v5342 = vsub.f32 1.0, %v5341
    %v5343 = vmul.f32 %v5340, %v5342
    %v5344 = vadd.f32 %v5340, %v5343
    %vm5345 = vweird.f32 %v5321
    %vm5346 = vweird.f32 %v5340
    %vm5347 = vmor %vm5345, %vm5346
    %v5348 = vsel %vm5347, %v5340, %v5344
    %v5349 = vand.u32 2147483647, %v5321
    %vm5350 = vcmp.eq.f32.partialorder %v5349, 8.507059e+37
    %v5351 = vand.u32 %v5321, 2147483648
    %v5352 = vor.u32 1.1754944e-38, %v5351
    %v5353 = vsel %vm5350, %v5352, %v5348
    %v5354 = vmul.f32 %v5313, %v5353
    %v5355 = vrcp.pop %v5324
    %v5356 = vmul.f32 %v5324, %v5355
    %v5357 = vsub.f32 1.0, %v5356
    %v5358 = vmul.f32 %v5355, %v5357
    %v5359 = vadd.f32 %v5355, %v5358
    %vm5360 = vweird.f32 %v5324
    %vm5361 = vweird.f32 %v5355
    %vm5362 = vmor %vm5360, %vm5361
    %v5363 = vsel %vm5362, %v5355, %v5359
    %v5364 = vand.u32 2147483647, %v5324
    %vm5365 = vcmp.eq.f32.partialorder %v5364, 8.507059e+37
    %v5366 = vand.u32 %v5324, 2147483648
    %v5367 = vor.u32 1.1754944e-38, %v5366
    %v5368 = vsel %vm5365, %v5367, %v5363
    %v5369 = vmul.f32 %v5315, %v5368
    %v5371 = vsel %vm3339, %v5339, 0
    %v5374 = vsel %vm3339, %v5354, 0
    %v5377 = vsel %vm3339, %v5369, 0
    %v5380 = vsel %vm608, %v4827, 0
    %5382 = vmatpush.msra.mxu0 0.0
    %5383 = vmatpush.msra.mxu0 0.0
    %5384 = vmatpush.msra.mxu0 0.0
    %5385 = vmatpush.msra.mxu0 0.0
    %5386 = vmatpush.msra.mxu0 0.0
    %5387 = vmatpush.msra.mxu0 0.0
    %5388 = vmatpush.msra.mxu0 0.0
    %5389 = vmatpush.msra.mxu0 0.0
    %5390 = vmatpush.msra.mxu0 0.0
    %5391 = vmatpush.msra.mxu0 0.0
    %5392 = vmatpush.msra.mxu0 0.0
    %5393 = vmatpush.msra.mxu0 0.0
    %5394 = vmatpush.msra.mxu0 0.0
    %5395 = vmatpush.msra.mxu0 %v5380
    %5396 = vmatpush.msra.mxu0 %v4824
    %5397 = vmatpush.msra.mxu0 %v4821
    %5398 = vmatmul.f32.gmra.mxu0 %v5371
    %v5399 = vpop.f32.mrf.mxu0
    %v5400 = vadd.f32 0.0, %v5399
    %5401 = vmatmul.f32.gmra.mxu0 %v5374
    %v5402 = vpop.f32.mrf.mxu0
    %v5403 = vadd.f32 0.0, %v5402
    %5404 = vmatmul.f32.gmra.mxu0 %v5377
    %v5405 = vpop.f32.mrf.mxu0
    %v5406 = vadd.f32 0.0, %v5405
    %5407 = vdwg.mxu0
    %v5409 = vsel %vm511, %v5400, 0
    %v5412 = vsel %vm511, %v5403, 0
    %v5415 = vsel %vm511, %v5406, 0
    %5417 = vmatpush.msra.mxu0 0.0
    %5418 = vmatpush.msra.mxu0 0.0
    %5419 = vmatpush.msra.mxu0 0.0
    %5420 = vmatpush.msra.mxu0 0.0
    %5421 = vmatpush.msra.mxu0 0.0
    %5422 = vmatpush.msra.mxu0 0.0
    %5423 = vmatpush.msra.mxu0 0.0
    %5424 = vmatpush.msra.mxu0 0.0
    %5425 = vmatpush.msra.mxu0 0.0
    %5426 = vmatpush.msra.mxu0 0.0
    %5427 = vmatpush.msra.mxu0 0.0
    %5428 = vmatpush.msra.mxu0 0.0
    %5429 = vmatpush.msra.mxu0 0.0
    %5430 = vmatpush.msra.mxu0 0.0
    %5431 = vmatpush.msra.mxu0 %v4622
    %5432 = vmatpush.msra.mxu0 %v4621
    %5433 = vmatmul.f32.gmra.mxu0 %v5409
    %v5434 = vpop.f32.mrf.mxu0
    %v5435 = vadd.f32 0.0, %v5434
    %5436 = vmatmul.f32.gmra.mxu0 %v5412
    %v5437 = vpop.f32.mrf.mxu0
    %v5438 = vadd.f32 0.0, %v5437
    %5439 = vmatmul.f32.gmra.mxu0 %v5415
    %v5440 = vpop.f32.mrf.mxu0
    %v5441 = vadd.f32 0.0, %v5440
    %5442 = vdwg.mxu0
    %v5443 = vadd.f32 %v5234, %v5435
    %v5444 = vadd.f32 %v5237, %v5438
    %v5445 = vadd.f32 %v5240, %v5441
    %5448 = vrot.lane.b32.xlu0 %v4821, 112
    %v5449 = vpop.permute.xlu0 %5448
    %5450 = vrot.lane.b32.xlu0 %v4824, 112
    %v5451 = vpop.permute.xlu0 %5450
    %5452 = vrot.lane.b32.xlu0 %v4827, 112
    %v5453 = vpop.permute.xlu0 %5452
    %5454 = vrot.lane.b32.xlu0 %v4821, 96
    %v5455 = vpop.permute.xlu0 %5454
    %5456 = vrot.lane.b32.xlu0 %v4824, 96
    %v5457 = vpop.permute.xlu0 %5456
    %5458 = vrot.lane.b32.xlu0 %v4827, 96
    %v5459 = vpop.permute.xlu0 %5458
    %v5460 = vsel %vm511, %v5449, 0
    %v5462 = vsel %vm511, %v5451, 0
    %v5464 = vsel %vm511, %v5453, 0
    %v5466 = vsel %vm511, %v5455, 0
    %v5468 = vsel %vm511, %v5457, 0
    %v5470 = vsel %vm511, %v5459, 0
    %5472 = vmatpush.xpose.msra.mxu0 0.0
    %5473 = vmatpush.xpose.msra.mxu0 0.0
    %5474 = vmatpush.xpose.msra.mxu0 0.0
    %5475 = vmatpush.xpose.msra.mxu0 0.0
    %5476 = vmatpush.xpose.msra.mxu0 0.0
    %5477 = vmatpush.xpose.msra.mxu0 0.0
    %5478 = vmatpush.xpose.msra.mxu0 0.0
    %5479 = vmatpush.xpose.msra.mxu0 0.0
    %5480 = vmatpush.xpose.msra.mxu0 0.0
    %5481 = vmatpush.xpose.msra.mxu0 0.0
    %5482 = vmatpush.xpose.msra.mxu0 0.0
    %5483 = vmatpush.xpose.msra.mxu0 0.0
    %5484 = vmatpush.xpose.msra.mxu0 0.0
    %5485 = vmatpush.xpose.msra.mxu0 %v5470
    %5486 = vmatpush.xpose.msra.mxu0 %v5468
    %5487 = vmatpush.xpose.msra.mxu0 %v5466
    %5488 = vmatmul.f32.gmra.mxu0 %v5460
    %v5489 = vpop.f32.mrf.mxu0
    %v5490 = vadd.f32 0.0, %v5489
    %5491 = vmatmul.f32.gmra.mxu0 %v5462
    %v5492 = vpop.f32.mrf.mxu0
    %v5493 = vadd.f32 0.0, %v5492
    %5494 = vmatmul.f32.gmra.mxu0 %v5464
    %v5495 = vpop.f32.mrf.mxu0
    %v5496 = vadd.f32 0.0, %v5495
    %5497 = vdwg.mxu0
    %v5498 = vmul.f32 %v5490, 0.25
    %v5499 = vmul.f32 %v5493, 0.25
    %v5500 = vmul.f32 %v5496, 0.25
    %v5501 = vadd.f32 %v5498, %v3047
    %v5502 = vadd.f32 %v5499, %v3048
    %v5503 = vadd.f32 %v5500, %v3049
    %v5504 = vsel %vm3339, %v5501, -inf
    %5505 = vmax.xlane.f32.xlu0 %v5504
    %v5506 = vpop.xlane.xlu0 %5505
    %v5507 = vsel %vm3339, %v5502, -inf
    %5508 = vmax.xlane.f32.xlu0 %v5507
    %v5509 = vpop.xlane.xlu0 %5508
    %v5510 = vsel %vm3346, %v5503, -inf
    %5511 = vmax.xlane.f32.xlu0 %v5510
    %v5512 = vpop.xlane.xlu0 %5511
    %v5513 = vsub.f32 %v5501, %v5506
    %v5514 = vsub.f32 %v5502, %v5509
    %v5515 = vsub.f32 %v5503, %v5512
    %v5516 = vmul.f32 %v5513, 1.442695
    %v5517 = vpow.pop %v5516
    %v5518 = vmul.f32 %v5514, 1.442695
    %v5519 = vpow.pop %v5518
    %v5520 = vmul.f32 %v5515, 1.442695
    %v5521 = vpow.pop %v5520
    %v5522 = vsel %vm3339, %v5517, 0.0
    %5523 = vadd.xlane.f32.xlu0 %v5522
    %v5524 = vpop.xlane.xlu0 %5523
    %v5525 = vsel %vm3339, %v5519, 0.0
    %5526 = vadd.xlane.f32.xlu0 %v5525
    %v5527 = vpop.xlane.xlu0 %5526
    %v5528 = vsel %vm3346, %v5521, 0.0
    %5529 = vadd.xlane.f32.xlu0 %v5528
    %v5530 = vpop.xlane.xlu0 %5529
    %v5531 = vrcp.pop %v5524
    %v5532 = vmul.f32 %v5524, %v5531
    %v5533 = vsub.f32 1.0, %v5532
    %v5534 = vmul.f32 %v5531, %v5533
    %v5535 = vadd.f32 %v5531, %v5534
    %vm5536 = vweird.f32 %v5524
    %vm5537 = vweird.f32 %v5531
    %vm5538 = vmor %vm5536, %vm5537
    %v5539 = vsel %vm5538, %v5531, %v5535
    %v5540 = vand.u32 2147483647, %v5524
    %vm5541 = vcmp.eq.f32.partialorder %v5540, 8.507059e+37
    %v5542 = vand.u32 %v5524, 2147483648
    %v5543 = vor.u32 1.1754944e-38, %v5542
    %v5544 = vsel %vm5541, %v5543, %v5539
    %v5545 = vmul.f32 %v5517, %v5544
    %v5546 = vrcp.pop %v5527
    %v5547 = vmul.f32 %v5527, %v5546
    %v5548 = vsub.f32 1.0, %v5547
    %v5549 = vmul.f32 %v5546, %v5548
    %v5550 = vadd.f32 %v5546, %v5549
    %vm5551 = vweird.f32 %v5527
    %vm5552 = vweird.f32 %v5546
    %vm5553 = vmor %vm5551, %vm5552
    %v5554 = vsel %vm5553, %v5546, %v5550
    %v5555 = vand.u32 2147483647, %v5527
    %vm5556 = vcmp.eq.f32.partialorder %v5555, 8.507059e+37
    %v5557 = vand.u32 %v5527, 2147483648
    %v5558 = vor.u32 1.1754944e-38, %v5557
    %v5559 = vsel %vm5556, %v5558, %v5554
    %v5560 = vmul.f32 %v5519, %v5559
    %v5561 = vrcp.pop %v5530
    %v5562 = vmul.f32 %v5530, %v5561
    %v5563 = vsub.f32 1.0, %v5562
    %v5564 = vmul.f32 %v5561, %v5563
    %v5565 = vadd.f32 %v5561, %v5564
    %vm5566 = vweird.f32 %v5530
    %vm5567 = vweird.f32 %v5561
    %vm5568 = vmor %vm5566, %vm5567
    %v5569 = vsel %vm5568, %v5561, %v5565
    %v5570 = vand.u32 2147483647, %v5530
    %vm5571 = vcmp.eq.f32.partialorder %v5570, 8.507059e+37
    %v5572 = vand.u32 %v5530, 2147483648
    %v5573 = vor.u32 1.1754944e-38, %v5572
    %v5574 = vsel %vm5571, %v5573, %v5569
    %v5575 = vmul.f32 %v5521, %v5574
    %5576 = vrot.lane.b32.xlu0 %v4821, 80
    %v5577 = vpop.permute.xlu0 %5576
    %5578 = vrot.lane.b32.xlu0 %v4824, 80
    %v5579 = vpop.permute.xlu0 %5578
    %5580 = vrot.lane.b32.xlu0 %v4827, 80
    %v5581 = vpop.permute.xlu0 %5580
    %v5585 = vsel %vm3339, %v5545, 0
    %v5588 = vsel %vm3339, %v5560, 0
    %v5591 = vsel %vm3339, %v5575, 0
    %v5593 = vsel %vm608, %v5581, 0
    %5595 = vmatpush.msra.mxu0 0.0
    %5596 = vmatpush.msra.mxu0 0.0
    %5597 = vmatpush.msra.mxu0 0.0
    %5598 = vmatpush.msra.mxu0 0.0
    %5599 = vmatpush.msra.mxu0 0.0
    %5600 = vmatpush.msra.mxu0 0.0
    %5601 = vmatpush.msra.mxu0 0.0
    %5602 = vmatpush.msra.mxu0 0.0
    %5603 = vmatpush.msra.mxu0 0.0
    %5604 = vmatpush.msra.mxu0 0.0
    %5605 = vmatpush.msra.mxu0 0.0
    %5606 = vmatpush.msra.mxu0 0.0
    %5607 = vmatpush.msra.mxu0 0.0
    %5608 = vmatpush.msra.mxu0 %v5593
    %5609 = vmatpush.msra.mxu0 %v5579
    %5610 = vmatpush.msra.mxu0 %v5577
    %5611 = vmatmul.f32.gmra.mxu0 %v5585
    %v5612 = vpop.f32.mrf.mxu0
    %v5613 = vadd.f32 0.0, %v5612
    %5614 = vmatmul.f32.gmra.mxu0 %v5588
    %v5615 = vpop.f32.mrf.mxu0
    %v5616 = vadd.f32 0.0, %v5615
    %5617 = vmatmul.f32.gmra.mxu0 %v5591
    %v5618 = vpop.f32.mrf.mxu0
    %v5619 = vadd.f32 0.0, %v5618
    %5620 = vdwg.mxu0
    %v5622 = vsel %vm511, %v5613, 0
    %v5625 = vsel %vm511, %v5616, 0
    %v5628 = vsel %vm511, %v5619, 0
    %5630 = vmatpush.msra.mxu0 0.0
    %5631 = vmatpush.msra.mxu0 0.0
    %5632 = vmatpush.msra.mxu0 0.0
    %5633 = vmatpush.msra.mxu0 0.0
    %5634 = vmatpush.msra.mxu0 0.0
    %5635 = vmatpush.msra.mxu0 0.0
    %5636 = vmatpush.msra.mxu0 0.0
    %5637 = vmatpush.msra.mxu0 0.0
    %5638 = vmatpush.msra.mxu0 0.0
    %5639 = vmatpush.msra.mxu0 0.0
    %5640 = vmatpush.msra.mxu0 0.0
    %5641 = vmatpush.msra.mxu0 0.0
    %5642 = vmatpush.msra.mxu0 0.0
    %5643 = vmatpush.msra.mxu0 0.0
    %5644 = vmatpush.msra.mxu0 %v4624
    %5645 = vmatpush.msra.mxu0 %v4623
    %5646 = vmatmul.f32.gmra.mxu0 %v5622
    %v5647 = vpop.f32.mrf.mxu0
    %v5648 = vadd.f32 0.0, %v5647
    %5649 = vmatmul.f32.gmra.mxu0 %v5625
    %v5650 = vpop.f32.mrf.mxu0
    %v5651 = vadd.f32 0.0, %v5650
    %5652 = vmatmul.f32.gmra.mxu0 %v5628
    %v5653 = vpop.f32.mrf.mxu0
    %v5654 = vadd.f32 0.0, %v5653
    %5655 = vdwg.mxu0
    %v5656 = vadd.f32 %v5443, %v5648
    %v5657 = vadd.f32 %v5444, %v5651
    %v5658 = vadd.f32 %v5445, %v5654
    %v5659 = vadd.f32 %v4590, %v5656
    %v5660 = vadd.f32 %v4591, %v5657
    %v5661 = vadd.f32 %v4592, %v5658
    %v5663 = vperm.slane %v4626, 0
    %v5665 = vadd.f32 %v5659, %v5663
    %v5666 = vadd.f32 %v5660, %v5663
    %v5667 = vadd.f32 %v5661, %v5663
    %v5668 = vsel %vm385, %v5665, 0.0
    %5669 = vadd.xlane.f32.xlu0 %v5668
    %v5670 = vpop.xlane.xlu0 %5669
    %v5671 = vsel %vm385, %v5666, 0.0
    %5672 = vadd.xlane.f32.xlu0 %v5671
    %v5673 = vpop.xlane.xlu0 %5672
    %v5674 = vsel %vm389, %v5667, 0.0
    %5675 = vadd.xlane.f32.xlu0 %v5674
    %v5676 = vpop.xlane.xlu0 %5675
    %v5677 = vmul.f32 %v5670, %v399
    %v5678 = vmul.f32 %v5673, %v399
    %v5679 = vmul.f32 %v5676, %v399
    %v5680 = vsub.f32 %v5665, %v5677
    %v5681 = vsub.f32 %v5666, %v5678
    %v5682 = vsub.f32 %v5667, %v5679
    %v5683 = vmul.f32 %v5680, %v5680
    %v5684 = vmul.f32 %v5681, %v5681
    %v5685 = vmul.f32 %v5682, %v5682
    %v5686 = vsel %vm385, %v5683, 0.0
    %5687 = vadd.xlane.f32.xlu0 %v5686
    %v5688 = vpop.xlane.xlu0 %5687
    %v5689 = vsel %vm385, %v5684, 0.0
    %5690 = vadd.xlane.f32.xlu0 %v5689
    %v5691 = vpop.xlane.xlu0 %5690
    %v5692 = vsel %vm389, %v5685, 0.0
    %5693 = vadd.xlane.f32.xlu0 %v5692
    %v5694 = vpop.xlane.xlu0 %5693
    %v5695 = vmul.f32 %v5688, %v399
    %v5696 = vmul.f32 %v5691, %v399
    %v5697 = vmul.f32 %v5694, %v399
    %v5698 = vadd.f32 %v5695, 1e-06
    %v5699 = vadd.f32 %v5696, 1e-06
    %v5700 = vadd.f32 %v5697, 1e-06
    %v5701 = vrsqrt.pop %v5698
    %v5702 = vmul.f32 %v5701, %v5698
    %v5703 = vmul.f32 %v5702, %v5701
    %v5704 = vmul.f32 0.5, %v5703
    %v5705 = vsub.f32 1.5, %v5704
    %v5706 = vmul.f32 %v5701, %v5705
    %vm5707 = vweird.f32 %v5698
    %vm5708 = vweird.f32 %v5701
    %vm5709 = vmor %vm5707, %vm5708
    %v5710 = vsel %vm5709, %v5701, %v5706
    %v5711 = vrsqrt.pop %v5699
    %v5712 = vmul.f32 %v5711, %v5699
    %v5713 = vmul.f32 %v5712, %v5711
    %v5714 = vmul.f32 0.5, %v5713
    %v5715 = vsub.f32 1.5, %v5714
    %v5716 = vmul.f32 %v5711, %v5715
    %vm5717 = vweird.f32 %v5699
    %vm5718 = vweird.f32 %v5711
    %vm5719 = vmor %vm5717, %vm5718
    %v5720 = vsel %vm5719, %v5711, %v5716
    %v5721 = vrsqrt.pop %v5700
    %v5722 = vmul.f32 %v5721, %v5700
    %v5723 = vmul.f32 %v5722, %v5721
    %v5724 = vmul.f32 0.5, %v5723
    %v5725 = vsub.f32 1.5, %v5724
    %v5726 = vmul.f32 %v5721, %v5725
    %vm5727 = vweird.f32 %v5700
    %vm5728 = vweird.f32 %v5721
    %vm5729 = vmor %vm5727, %vm5728
    %v5730 = vsel %vm5729, %v5721, %v5726
    %v5731 = vmul.f32 %v5680, %v5710
    %v5732 = vmul.f32 %v5681, %v5720
    %v5733 = vmul.f32 %v5682, %v5730
    %v5735 = vperm.slane %v4628, 0
    %v5737 = vmul.f32 %v5731, %v5735
    %v5738 = vmul.f32 %v5732, %v5735
    %v5739 = vmul.f32 %v5733, %v5735
    %v5741 = vperm.slane %v4630, 0
    %v5743 = vadd.f32 %v5737, %v5741
    %v5744 = vadd.f32 %v5738, %v5741
    %v5745 = vadd.f32 %v5739, %v5741
    %v5747 = vperm.slane %v4649, 0
    %v5748 = vperm.slane %v4649, 1
    %v5752 = vsel %vm385, %v5743, 0
    %v5755 = vsel %vm385, %v5744, 0
    %v5758 = vsel %vm385, %v5745, 0
    %5760 = vmatpush.msra.mxu0 0.0
    %5761 = vmatpush.msra.mxu0 0.0
    %5762 = vmatpush.msra.mxu0 0.0
    %5763 = vmatpush.msra.mxu0 0.0
    %5764 = vmatpush.msra.mxu0 0.0
    %5765 = vmatpush.msra.mxu0 0.0
    %5766 = vmatpush.msra.mxu0 0.0
    %5767 = vmatpush.msra.mxu0 0.0
    %5768 = vmatpush.msra.mxu0 %v4646
    %5769 = vmatpush.msra.mxu0 %v4644
    %5770 = vmatpush.msra.mxu0 %v4642
    %5771 = vmatpush.msra.mxu0 %v4640
    %5772 = vmatpush.msra.mxu0 %v4638
    %5773 = vmatpush.msra.mxu0 %v4636
    %5774 = vmatpush.msra.mxu0 %v4634
    %5775 = vmatpush.msra.mxu0 %v4632
    %5776 = vmatmul.f32.gmra.mxu0 %v5752
    %v5777 = vpop.f32.mrf.mxu0
    %v5778 = vadd.f32 %v5747, %v5777
    %5779 = vmatmul.f32.gmra.mxu0 %v5755
    %v5780 = vpop.f32.mrf.mxu0
    %v5781 = vadd.f32 %v5747, %v5780
    %5782 = vmatmul.f32.gmra.mxu0 %v5758
    %v5783 = vpop.f32.mrf.mxu0
    %v5784 = vadd.f32 %v5747, %v5783
    %5785 = vdwg.mxu0
    %5786 = vmatpush.msra.mxu0 0.0
    %5787 = vmatpush.msra.mxu0 0.0
    %5788 = vmatpush.msra.mxu0 0.0
    %5789 = vmatpush.msra.mxu0 0.0
    %5790 = vmatpush.msra.mxu0 0.0
    %5791 = vmatpush.msra.mxu0 0.0
    %5792 = vmatpush.msra.mxu0 0.0
    %5793 = vmatpush.msra.mxu0 0.0
    %5794 = vmatpush.msra.mxu0 %v4647
    %5795 = vmatpush.msra.mxu0 %v4645
    %5796 = vmatpush.msra.mxu0 %v4643
    %5797 = vmatpush.msra.mxu0 %v4641
    %5798 = vmatpush.msra.mxu0 %v4639
    %5799 = vmatpush.msra.mxu0 %v4637
    %5800 = vmatpush.msra.mxu0 %v4635
    %5801 = vmatpush.msra.mxu0 %v4633
    %5802 = vmatmul.f32.gmra.mxu0 %v5752
    %v5803 = vpop.f32.mrf.mxu0
    %v5804 = vadd.f32 %v5748, %v5803
    %5805 = vmatmul.f32.gmra.mxu0 %v5755
    %v5806 = vpop.f32.mrf.mxu0
    %v5807 = vadd.f32 %v5748, %v5806
    %5808 = vmatmul.f32.gmra.mxu0 %v5758
    %v5809 = vpop.f32.mrf.mxu0
    %v5810 = vadd.f32 %v5748, %v5809
    %5811 = vdwg.mxu0
    %v5812 = vmul.f32 %v5778, 0.5
    %v5813 = vmul.f32 %v5804, 0.5
    %v5814 = vmul.f32 %v5781, 0.5
    %v5815 = vmul.f32 %v5807, 0.5
    %v5816 = vmul.f32 %v5784, 0.5
    %v5817 = vmul.f32 %v5810, 0.5
    %v5818 = vmul.f32 %v5778, 0.70710677
    %v5819 = vmul.f32 %v5804, 0.70710677
    %v5820 = vmul.f32 %v5781, 0.70710677
    %v5821 = vmul.f32 %v5807, 0.70710677
    %v5822 = vmul.f32 %v5784, 0.70710677
    %v5823 = vmul.f32 %v5810, 0.70710677
    %v5824 = vmul.f32 %v5818, %v5818
    %v5825 = vmin.f32 16.0, %v5824
    %v5826 = vmul.f32 %v5825, 2.1237322e-06
    %v5827 = vadd.f32 %v5826, 0.00028619796
    %v5828 = vmul.f32 %v5825, %v5827
    %v5829 = vadd.f32 %v5828, 0.0036580483
    %v5830 = vmul.f32 %v5825, %v5829
    %v5831 = vadd.f32 %v5830, 0.05243302
    %v5832 = vmul.f32 %v5825, %v5831
    %v5833 = vadd.f32 %v5832, 0.18741608
    %v5834 = vmul.f32 %v5825, %v5833
    %v5835 = vadd.f32 %v5834, 1.1283791
    %v5836 = vmul.f32 %v5818, %v5835
    %v5837 = vmul.f32 %v5825, 3.8918573e-05
    %v5838 = vadd.f32 %v5837, 0.001143296
    %v5839 = vmul.f32 %v5825, %v5838
    %v5840 = vadd.f32 %v5839, 0.014752088
    %v5841 = vmul.f32 %v5825, %v5840
    %v5842 = vadd.f32 %v5841, 0.112945676
    %v5843 = vmul.f32 %v5825, %v5842
    %v5844 = vadd.f32 %v5843, 0.4994258
    %v5845 = vmul.f32 %v5825, %v5844
    %v5846 = vadd.f32 %v5845, 1.0
    %v5847 = vrcp.pop %v5846
    %v5848 = vmul.f32 %v5846, %v5847
    %v5849 = vsub.f32 1.0, %v5848
    %v5850 = vmul.f32 %v5847, %v5849
    %v5851 = vadd.f32 %v5847, %v5850
    %vm5852 = vweird.f32 %v5846
    %vm5853 = vweird.f32 %v5847
    %vm5854 = vmor %vm5852, %vm5853
    %v5855 = vsel %vm5854, %v5847, %v5851
    %v5856 = vand.u32 2147483647, %v5846
    %vm5857 = vcmp.eq.f32.partialorder %v5856, 8.507059e+37
    %v5858 = vand.u32 %v5846, 2147483648
    %v5859 = vor.u32 1.1754944e-38, %v5858
    %v5860 = vsel %vm5857, %v5859, %v5855
    %v5861 = vmul.f32 %v5836, %v5860
    %v5862 = vmin.f32 %v5861, 1.0
    %v5863 = vmax.f32 %v5862, -1.0
    %v5864 = vmul.f32 %v5819, %v5819
    %v5865 = vmin.f32 16.0, %v5864
    %v5866 = vmul.f32 %v5865, 2.1237322e-06
    %v5867 = vadd.f32 %v5866, 0.00028619796
    %v5868 = vmul.f32 %v5865, %v5867
    %v5869 = vadd.f32 %v5868, 0.0036580483
    %v5870 = vmul.f32 %v5865, %v5869
    %v5871 = vadd.f32 %v5870, 0.05243302
    %v5872 = vmul.f32 %v5865, %v5871
    %v5873 = vadd.f32 %v5872, 0.18741608
    %v5874 = vmul.f32 %v5865, %v5873
    %v5875 = vadd.f32 %v5874, 1.1283791
    %v5876 = vmul.f32 %v5819, %v5875
    %v5877 = vmul.f32 %v5865, 3.8918573e-05
    %v5878 = vadd.f32 %v5877, 0.001143296
    %v5879 = vmul.f32 %v5865, %v5878
    %v5880 = vadd.f32 %v5879, 0.014752088
    %v5881 = vmul.f32 %v5865, %v5880
    %v5882 = vadd.f32 %v5881, 0.112945676
    %v5883 = vmul.f32 %v5865, %v5882
    %v5884 = vadd.f32 %v5883, 0.4994258
    %v5885 = vmul.f32 %v5865, %v5884
    %v5886 = vadd.f32 %v5885, 1.0
    %v5887 = vrcp.pop %v5886
    %v5888 = vmul.f32 %v5886, %v5887
    %v5889 = vsub.f32 1.0, %v5888
    %v5890 = vmul.f32 %v5887, %v5889
    %v5891 = vadd.f32 %v5887, %v5890
    %vm5892 = vweird.f32 %v5886
    %vm5893 = vweird.f32 %v5887
    %vm5894 = vmor %vm5892, %vm5893
    %v5895 = vsel %vm5894, %v5887, %v5891
    %v5896 = vand.u32 2147483647, %v5886
    %vm5897 = vcmp.eq.f32.partialorder %v5896, 8.507059e+37
    %v5898 = vand.u32 %v5886, 2147483648
    %v5899 = vor.u32 1.1754944e-38, %v5898
    %v5900 = vsel %vm5897, %v5899, %v5895
    %v5901 = vmul.f32 %v5876, %v5900
    %v5902 = vmin.f32 %v5901, 1.0
    %v5903 = vmax.f32 %v5902, -1.0
    %v5904 = vmul.f32 %v5820, %v5820
    %v5905 = vmin.f32 16.0, %v5904
    %v5906 = vmul.f32 %v5905, 2.1237322e-06
    %v5907 = vadd.f32 %v5906, 0.00028619796
    %v5908 = vmul.f32 %v5905, %v5907
    %v5909 = vadd.f32 %v5908, 0.0036580483
    %v5910 = vmul.f32 %v5905, %v5909
    %v5911 = vadd.f32 %v5910, 0.05243302
    %v5912 = vmul.f32 %v5905, %v5911
    %v5913 = vadd.f32 %v5912, 0.18741608
    %v5914 = vmul.f32 %v5905, %v5913
    %v5915 = vadd.f32 %v5914, 1.1283791
    %v5916 = vmul.f32 %v5820, %v5915
    %v5917 = vmul.f32 %v5905, 3.8918573e-05
    %v5918 = vadd.f32 %v5917, 0.001143296
    %v5919 = vmul.f32 %v5905, %v5918
    %v5920 = vadd.f32 %v5919, 0.014752088
    %v5921 = vmul.f32 %v5905, %v5920
    %v5922 = vadd.f32 %v5921, 0.112945676
    %v5923 = vmul.f32 %v5905, %v5922
    %v5924 = vadd.f32 %v5923, 0.4994258
    %v5925 = vmul.f32 %v5905, %v5924
    %v5926 = vadd.f32 %v5925, 1.0
    %v5927 = vrcp.pop %v5926
    %v5928 = vmul.f32 %v5926, %v5927
    %v5929 = vsub.f32 1.0, %v5928
    %v5930 = vmul.f32 %v5927, %v5929
    %v5931 = vadd.f32 %v5927, %v5930
    %vm5932 = vweird.f32 %v5926
    %vm5933 = vweird.f32 %v5927
    %vm5934 = vmor %vm5932, %vm5933
    %v5935 = vsel %vm5934, %v5927, %v5931
    %v5936 = vand.u32 2147483647, %v5926
    %vm5937 = vcmp.eq.f32.partialorder %v5936, 8.507059e+37
    %v5938 = vand.u32 %v5926, 2147483648
    %v5939 = vor.u32 1.1754944e-38, %v5938
    %v5940 = vsel %vm5937, %v5939, %v5935
    %v5941 = vmul.f32 %v5916, %v5940
    %v5942 = vmin.f32 %v5941, 1.0
    %v5943 = vmax.f32 %v5942, -1.0
    %v5944 = vmul.f32 %v5821, %v5821
    %v5945 = vmin.f32 16.0, %v5944
    %v5946 = vmul.f32 %v5945, 2.1237322e-06
    %v5947 = vadd.f32 %v5946, 0.00028619796
    %v5948 = vmul.f32 %v5945, %v5947
    %v5949 = vadd.f32 %v5948, 0.0036580483
    %v5950 = vmul.f32 %v5945, %v5949
    %v5951 = vadd.f32 %v5950, 0.05243302
    %v5952 = vmul.f32 %v5945, %v5951
    %v5953 = vadd.f32 %v5952, 0.18741608
    %v5954 = vmul.f32 %v5945, %v5953
    %v5955 = vadd.f32 %v5954, 1.1283791
    %v5956 = vmul.f32 %v5821, %v5955
    %v5957 = vmul.f32 %v5945, 3.8918573e-05
    %v5958 = vadd.f32 %v5957, 0.001143296
    %v5959 = vmul.f32 %v5945, %v5958
    %v5960 = vadd.f32 %v5959, 0.014752088
    %v5961 = vmul.f32 %v5945, %v5960
    %v5962 = vadd.f32 %v5961, 0.112945676
    %v5963 = vmul.f32 %v5945, %v5962
    %v5964 = vadd.f32 %v5963, 0.4994258
    %v5965 = vmul.f32 %v5945, %v5964
    %v5966 = vadd.f32 %v5965, 1.0
    %v5967 = vrcp.pop %v5966
    %v5968 = vmul.f32 %v5966, %v5967
    %v5969 = vsub.f32 1.0, %v5968
    %v5970 = vmul.f32 %v5967, %v5969
    %v5971 = vadd.f32 %v5967, %v5970
    %vm5972 = vweird.f32 %v5966
    %vm5973 = vweird.f32 %v5967
    %vm5974 = vmor %vm5972, %vm5973
    %v5975 = vsel %vm5974, %v5967, %v5971
    %v5976 = vand.u32 2147483647, %v5966
    %vm5977 = vcmp.eq.f32.partialorder %v5976, 8.507059e+37
    %v5978 = vand.u32 %v5966, 2147483648
    %v5979 = vor.u32 1.1754944e-38, %v5978
    %v5980 = vsel %vm5977, %v5979, %v5975
    %v5981 = vmul.f32 %v5956, %v5980
    %v5982 = vmin.f32 %v5981, 1.0
    %v5983 = vmax.f32 %v5982, -1.0
    %v5984 = vmul.f32 %v5822, %v5822
    %v5985 = vmin.f32 16.0, %v5984
    %v5986 = vmul.f32 %v5985, 2.1237322e-06
    %v5987 = vadd.f32 %v5986, 0.00028619796
    %v5988 = vmul.f32 %v5985, %v5987
    %v5989 = vadd.f32 %v5988, 0.0036580483
    %v5990 = vmul.f32 %v5985, %v5989
    %v5991 = vadd.f32 %v5990, 0.05243302
    %v5992 = vmul.f32 %v5985, %v5991
    %v5993 = vadd.f32 %v5992, 0.18741608
    %v5994 = vmul.f32 %v5985, %v5993
    %v5995 = vadd.f32 %v5994, 1.1283791
    %v5996 = vmul.f32 %v5822, %v5995
    %v5997 = vmul.f32 %v5985, 3.8918573e-05
    %v5998 = vadd.f32 %v5997, 0.001143296
    %v5999 = vmul.f32 %v5985, %v5998
    %v6000 = vadd.f32 %v5999, 0.014752088
    %v6001 = vmul.f32 %v5985, %v6000
    %v6002 = vadd.f32 %v6001, 0.112945676
    %v6003 = vmul.f32 %v5985, %v6002
    %v6004 = vadd.f32 %v6003, 0.4994258
    %v6005 = vmul.f32 %v5985, %v6004
    %v6006 = vadd.f32 %v6005, 1.0
    %v6007 = vrcp.pop %v6006
    %v6008 = vmul.f32 %v6006, %v6007
    %v6009 = vsub.f32 1.0, %v6008
    %v6010 = vmul.f32 %v6007, %v6009
    %v6011 = vadd.f32 %v6007, %v6010
    %vm6012 = vweird.f32 %v6006
    %vm6013 = vweird.f32 %v6007
    %vm6014 = vmor %vm6012, %vm6013
    %v6015 = vsel %vm6014, %v6007, %v6011
    %v6016 = vand.u32 2147483647, %v6006
    %vm6017 = vcmp.eq.f32.partialorder %v6016, 8.507059e+37
    %v6018 = vand.u32 %v6006, 2147483648
    %v6019 = vor.u32 1.1754944e-38, %v6018
    %v6020 = vsel %vm6017, %v6019, %v6015
    %v6021 = vmul.f32 %v5996, %v6020
    %v6022 = vmin.f32 %v6021, 1.0
    %v6023 = vmax.f32 %v6022, -1.0
    %v6024 = vmul.f32 %v5823, %v5823
    %v6025 = vmin.f32 16.0, %v6024
    %v6026 = vmul.f32 %v6025, 2.1237322e-06
    %v6027 = vadd.f32 %v6026, 0.00028619796
    %v6028 = vmul.f32 %v6025, %v6027
    %v6029 = vadd.f32 %v6028, 0.0036580483
    %v6030 = vmul.f32 %v6025, %v6029
    %v6031 = vadd.f32 %v6030, 0.05243302
    %v6032 = vmul.f32 %v6025, %v6031
    %v6033 = vadd.f32 %v6032, 0.18741608
    %v6034 = vmul.f32 %v6025, %v6033
    %v6035 = vadd.f32 %v6034, 1.1283791
    %v6036 = vmul.f32 %v5823, %v6035
    %v6037 = vmul.f32 %v6025, 3.8918573e-05
    %v6038 = vadd.f32 %v6037, 0.001143296
    %v6039 = vmul.f32 %v6025, %v6038
    %v6040 = vadd.f32 %v6039, 0.014752088
    %v6041 = vmul.f32 %v6025, %v6040
    %v6042 = vadd.f32 %v6041, 0.112945676
    %v6043 = vmul.f32 %v6025, %v6042
    %v6044 = vadd.f32 %v6043, 0.4994258
    %v6045 = vmul.f32 %v6025, %v6044
    %v6046 = vadd.f32 %v6045, 1.0
    %v6047 = vrcp.pop %v6046
    %v6048 = vmul.f32 %v6046, %v6047
    %v6049 = vsub.f32 1.0, %v6048
    %v6050 = vmul.f32 %v6047, %v6049
    %v6051 = vadd.f32 %v6047, %v6050
    %vm6052 = vweird.f32 %v6046
    %vm6053 = vweird.f32 %v6047
    %vm6054 = vmor %vm6052, %vm6053
    %v6055 = vsel %vm6054, %v6047, %v6051
    %v6056 = vand.u32 2147483647, %v6046
    %vm6057 = vcmp.eq.f32.partialorder %v6056, 8.507059e+37
    %v6058 = vand.u32 %v6046, 2147483648
    %v6059 = vor.u32 1.1754944e-38, %v6058
    %v6060 = vsel %vm6057, %v6059, %v6055
    %v6061 = vmul.f32 %v6036, %v6060
    %v6062 = vmin.f32 %v6061, 1.0
    %v6063 = vmax.f32 %v6062, -1.0
    %v6064 = vadd.f32 %v5863, 1.0
    %v6065 = vadd.f32 %v5903, 1.0
    %v6066 = vadd.f32 %v5943, 1.0
    %v6067 = vadd.f32 %v5983, 1.0
    %v6068 = vadd.f32 %v6023, 1.0
    %v6069 = vadd.f32 %v6063, 1.0
    %v6070 = vmul.f32 %v5812, %v6064
    %v6071 = vmul.f32 %v5813, %v6065
    %v6072 = vmul.f32 %v5814, %v6066
    %v6073 = vmul.f32 %v5815, %v6067
    %v6074 = vmul.f32 %v5816, %v6068
    %v6075 = vmul.f32 %v5817, %v6069
    %v6077 = vperm.slane %v4684, 0
    %6079 = vmatpush.msra.mxu0 %v4666
    %6080 = vmatpush.msra.mxu0 %v4665
    %6081 = vmatpush.msra.mxu0 %v4664
    %6082 = vmatpush.msra.mxu0 %v4663
    %6083 = vmatpush.msra.mxu0 %v4662
    %6084 = vmatpush.msra.mxu0 %v4661
    %6085 = vmatpush.msra.mxu0 %v4660
    %6086 = vmatpush.msra.mxu0 %v4659
    %6087 = vmatpush.msra.mxu0 %v4658
    %6088 = vmatpush.msra.mxu0 %v4657
    %6089 = vmatpush.msra.mxu0 %v4656
    %6090 = vmatpush.msra.mxu0 %v4655
    %6091 = vmatpush.msra.mxu0 %v4654
    %6092 = vmatpush.msra.mxu0 %v4653
    %6093 = vmatpush.msra.mxu0 %v4652
    %6094 = vmatpush.msra.mxu0 %v4651
    %6095 = vmatmul.f32.gmra.mxu0 %v6070
    %v6096 = vpop.f32.mrf.mxu0
    %v6097 = vadd.f32 %v6077, %v6096
    %6098 = vmatmul.f32.gmra.mxu0 %v6072
    %v6099 = vpop.f32.mrf.mxu0
    %v6100 = vadd.f32 %v6077, %v6099
    %6101 = vmatmul.f32.gmra.mxu0 %v6074
    %v6102 = vpop.f32.mrf.mxu0
    %v6103 = vadd.f32 %v6077, %v6102
    %6104 = vdwg.mxu0
    %6105 = vmatpush.msra.mxu0 %v4682
    %6106 = vmatpush.msra.mxu0 %v4681
    %6107 = vmatpush.msra.mxu0 %v4680
    %6108 = vmatpush.msra.mxu0 %v4679
    %6109 = vmatpush.msra.mxu0 %v4678
    %6110 = vmatpush.msra.mxu0 %v4677
    %6111 = vmatpush.msra.mxu0 %v4676
    %6112 = vmatpush.msra.mxu0 %v4675
    %6113 = vmatpush.msra.mxu0 %v4674
    %6114 = vmatpush.msra.mxu0 %v4673
    %6115 = vmatpush.msra.mxu0 %v4672
    %6116 = vmatpush.msra.mxu0 %v4671
    %6117 = vmatpush.msra.mxu0 %v4670
    %6118 = vmatpush.msra.mxu0 %v4669
    %6119 = vmatpush.msra.mxu0 %v4668
    %6120 = vmatpush.msra.mxu0 %v4667
    %6121 = vmatmul.f32.gmra.mxu0 %v6071
    %v6122 = vpop.f32.mrf.mxu0
    %v6123 = vadd.f32 %v6097, %v6122
    %6124 = vmatmul.f32.gmra.mxu0 %v6073
    %v6125 = vpop.f32.mrf.mxu0
    %v6126 = vadd.f32 %v6100, %v6125
    %6127 = vmatmul.f32.gmra.mxu0 %v6075
    %v6128 = vpop.f32.mrf.mxu0
    %v6129 = vadd.f32 %v6103, %v6128
    %6130 = vdwg.mxu0
    %v6131 = vadd.f32 %v5665, %v6123
    %v6132 = vadd.f32 %v5666, %v6126
    %v6133 = vadd.f32 %v5667, %v6129
    %v6134 = vld [vmem:[%s61] sm:$0x1]
    %v6135 = vld [vmem:[%s63] sm:$0x1]
    %v6136 = vsel %vm385, %v6131, 0.0
    %6137 = vadd.xlane.f32.xlu0 %v6136
    %v6138 = vpop.xlane.xlu0 %6137
    %v6139 = vsel %vm385, %v6132, 0.0
    %6140 = vadd.xlane.f32.xlu0 %v6139
    %v6141 = vpop.xlane.xlu0 %6140
    %v6142 = vsel %vm389, %v6133, 0.0
    %6143 = vadd.xlane.f32.xlu0 %v6142
    %v6144 = vpop.xlane.xlu0 %6143
    %v6145 = vmul.f32 %v6138, %v399
    %v6146 = vmul.f32 %v6141, %v399
    %v6147 = vmul.f32 %v6144, %v399
    %v6148 = vsub.f32 %v6131, %v6145
    %v6149 = vsub.f32 %v6132, %v6146
    %v6150 = vsub.f32 %v6133, %v6147
    %v6151 = vmul.f32 %v6148, %v6148
    %v6152 = vmul.f32 %v6149, %v6149
    %v6153 = vmul.f32 %v6150, %v6150
    %v6154 = vsel %vm385, %v6151, 0.0
    %6155 = vadd.xlane.f32.xlu0 %v6154
    %v6156 = vpop.xlane.xlu0 %6155
    %v6157 = vsel %vm385, %v6152, 0.0
    %6158 = vadd.xlane.f32.xlu0 %v6157
    %v6159 = vpop.xlane.xlu0 %6158
    %v6160 = vsel %vm389, %v6153, 0.0
    %6161 = vadd.xlane.f32.xlu0 %v6160
    %v6162 = vpop.xlane.xlu0 %6161
    %v6163 = vmul.f32 %v6156, %v399
    %v6164 = vmul.f32 %v6159, %v399
    %v6165 = vmul.f32 %v6162, %v399
    %v6166 = vadd.f32 %v6163, 1e-06
    %v6167 = vadd.f32 %v6164, 1e-06
    %v6168 = vadd.f32 %v6165, 1e-06
    %v6169 = vrsqrt.pop %v6166
    %v6170 = vmul.f32 %v6169, %v6166
    %v6171 = vmul.f32 %v6170, %v6169
    %v6172 = vmul.f32 0.5, %v6171
    %v6173 = vsub.f32 1.5, %v6172
    %v6174 = vmul.f32 %v6169, %v6173
    %vm6175 = vweird.f32 %v6166
    %vm6176 = vweird.f32 %v6169
    %vm6177 = vmor %vm6175, %vm6176
    %v6178 = vsel %vm6177, %v6169, %v6174
    %v6179 = vrsqrt.pop %v6167
    %v6180 = vmul.f32 %v6179, %v6167
    %v6181 = vmul.f32 %v6180, %v6179
    %v6182 = vmul.f32 0.5, %v6181
    %v6183 = vsub.f32 1.5, %v6182
    %v6184 = vmul.f32 %v6179, %v6183
    %vm6185 = vweird.f32 %v6167
    %vm6186 = vweird.f32 %v6179
    %vm6187 = vmor %vm6185, %vm6186
    %v6188 = vsel %vm6187, %v6179, %v6184
    %v6189 = vrsqrt.pop %v6168
    %v6190 = vmul.f32 %v6189, %v6168
    %v6191 = vmul.f32 %v6190, %v6189
    %v6192 = vmul.f32 0.5, %v6191
    %v6193 = vsub.f32 1.5, %v6192
    %v6194 = vmul.f32 %v6189, %v6193
    %vm6195 = vweird.f32 %v6168
    %vm6196 = vweird.f32 %v6189
    %vm6197 = vmor %vm6195, %vm6196
    %v6198 = vsel %vm6197, %v6189, %v6194
    %v6199 = vmul.f32 %v6148, %v6178
    %v6200 = vmul.f32 %v6149, %v6188
    %v6201 = vmul.f32 %v6150, %v6198
    %v6203 = vperm.slane %v6134, 0
    %v6205 = vmul.f32 %v6199, %v6203
    %v6206 = vmul.f32 %v6200, %v6203
    %v6207 = vmul.f32 %v6201, %v6203
    %v6209 = vperm.slane %v6135, 0
    %v6211 = vadd.f32 %v6205, %v6209
    %v6212 = vadd.f32 %v6206, %v6209
    %v6213 = vadd.f32 %v6207, %v6209
    %v6214 = vld [vmem:[%s65] sm:$0x1]
    %vm6217 = vcmask 1046528
    %v6218 = vrot.slane %v6211, 1
    %v6219 = vrot.slane %v6212, 1
    %v6220 = vsel %vm6217, %v6218, %v6219
    %v6222 = vsel %vm385, %v6214, 0
    %v6224 = vsel %vm385, %v6220, 0
    %6226 = vmatpush.xpose.msra.mxu0 0.0
    %6227 = vmatpush.xpose.msra.mxu0 0.0
    %6228 = vmatpush.xpose.msra.mxu0 0.0
    %6229 = vmatpush.xpose.msra.mxu0 0.0
    %6230 = vmatpush.xpose.msra.mxu0 0.0
    %6231 = vmatpush.xpose.msra.mxu0 0.0
    %6232 = vmatpush.xpose.msra.mxu0 0.0
    %6233 = vmatpush.xpose.msra.mxu0 0.0
    %6234 = vmatpush.xpose.msra.mxu0 0.0
    %6235 = vmatpush.xpose.msra.mxu0 0.0
    %6236 = vmatpush.xpose.msra.mxu0 0.0
    %6237 = vmatpush.xpose.msra.mxu0 0.0
    %6238 = vmatpush.xpose.msra.mxu0 0.0
    %6239 = vmatpush.xpose.msra.mxu0 0.0
    %6240 = vmatpush.xpose.msra.mxu0 0.0
    %6241 = vmatpush.xpose.msra.mxu0 %v6224
    %6242 = vmatmul.f32.gmra.mxu0 %v6222
    %v6243 = vpop.f32.mrf.mxu0
    %v6244 = vadd.f32 0.0, %v6243
    %6245 = vdwg.mxu0
    %vm6247 = vcmask 1045504
    %v6248 = vrot.slane %v6212, 2
    %v6249 = vrot.slane %v6213, 2
    %v6250 = vsel %vm6247, %v6248, %v6249
    %v6251 = vsel %vm385, %v6250, 0
    %6253 = vmatpush.xpose.msra.mxu0 0.0
    %6254 = vmatpush.xpose.msra.mxu0 0.0
    %6255 = vmatpush.xpose.msra.mxu0 0.0
    %6256 = vmatpush.xpose.msra.mxu0 0.0
    %6257 = vmatpush.xpose.msra.mxu0 0.0
    %6258 = vmatpush.xpose.msra.mxu0 0.0
    %6259 = vmatpush.xpose.msra.mxu0 0.0
    %6260 = vmatpush.xpose.msra.mxu0 0.0
    %6261 = vmatpush.xpose.msra.mxu0 0.0
    %6262 = vmatpush.xpose.msra.mxu0 0.0
    %6263 = vmatpush.xpose.msra.mxu0 0.0
    %6264 = vmatpush.xpose.msra.mxu0 0.0
    %6265 = vmatpush.xpose.msra.mxu0 0.0
    %6266 = vmatpush.xpose.msra.mxu0 0.0
    %6267 = vmatpush.xpose.msra.mxu0 0.0
    %6268 = vmatpush.xpose.msra.mxu0 %v6251
    %6269 = vmatmul.f32.gmra.mxu0 %v6222
    %v6270 = vpop.f32.mrf.mxu0
    %v6271 = vadd.f32 0.0, %v6270
    %6272 = vdwg.mxu0
    %v6274 = vrot.slane %v6271, 7
    %vm6276 = vcmask 1040384
    %v6277 = vsel %vm6276, %v6244, %v6274
    %v6278 = vld [vmem:[#allocation4] sm:$0x1]
    %v6280 = vperm.slane %v6278, 0
    %6281 = vset.pattern.permute.xlu0 0
    %6282 = vperm.xlu0 %6281, %v6280
    %v6283 = vpop.permute.xlu0 %6282
    %v6285 = vadd.f32 %v6277, %v6283
    %v6286 = vtanh.pop %v6285
    %v6287 = vmul.f32 %v6286, 0.5
    %v6288 = vadd.f32 %v6287, 0.5
    %vm6289 = vcmask 58368
    %6290 = vst.msk [vmem:[#allocation12] sm:$0x3] %vm6289, %v6288
    %v6291 = vld [vmem:[%s7] sm:$0x3]
    %v6292 = vsub.f32 %v6288, %v6291
    %v6293 = vmul.f32 %v6292, %v6292
    %v6294 = vld [vmem:[%s9] sm:$0x3]
    %v6295 = vld [vmem:[%s11] sm:$0x3]
    %v6296 = vmul.f32 %v6293, %v6294
    %v6297 = vsel %vm6289, %v6296, 0.0
    %6298 = vadd.xlane.f32.xlu0 %v6297
    %v6299 = vpop.xlane.xlu0 %6298
    %v6300 = vrot.slane %v6299, 4
    %v6301 = vadd.f32 %v6299, %v6300
    %v6302 = vrot.slane %v6301, 2
    %v6303 = vadd.f32 %v6301, %v6302
    %v6304 = vrot.slane %v6303, 1
    %v6305 = vadd.f32 %v6303, %v6304
    %s6306 = vtos %v6305
    %v6307 = vsel %vm6289, %v6294, 0.0
    %6308 = vadd.xlane.f32.xlu0 %v6307
    %v6309 = vpop.xlane.xlu0 %6308
    %v6310 = vrot.slane %v6309, 4
    %v6311 = vadd.f32 %v6309, %v6310
    %v6312 = vrot.slane %v6311, 2
    %v6313 = vadd.f32 %v6311, %v6312
    %v6314 = vrot.slane %v6313, 1
    %v6315 = vadd.f32 %v6313, %v6314
    %s6316 = vtos %v6315
    %v6317 = vstv %s6316
    %v6318 = vrcp.pop %v6317
    %v6319 = vmul.f32 %v6317, %v6318
    %v6320 = vsub.f32 1.0, %v6319
    %v6321 = vmul.f32 %v6318, %v6320
    %v6322 = vadd.f32 %v6318, %v6321
    %vm6323 = vweird.f32 %v6317
    %vm6324 = vweird.f32 %v6318
    %vm6325 = vmor %vm6323, %vm6324
    %v6326 = vsel %vm6325, %v6318, %v6322
    %v6327 = vand.u32 2147483647, %v6317
    %vm6328 = vcmp.eq.f32.partialorder %v6327, 8.507059e+37
    %v6329 = vand.u32 %v6317, 2147483648
    %v6330 = vor.u32 1.1754944e-38, %v6329
    %v6331 = vsel %vm6328, %v6330, %v6326
    %s6332 = vtos %v6331
    %s6333 = smul.f32 %s6306, %s6332
    %v6334 = vmul.f32 %v6293, %v6295
    %v6335 = vsel %vm6289, %v6334, 0.0
    %6336 = vadd.xlane.f32.xlu0 %v6335
    %v6337 = vpop.xlane.xlu0 %6336
    %v6338 = vrot.slane %v6337, 4
    %v6339 = vadd.f32 %v6337, %v6338
    %v6340 = vrot.slane %v6339, 2
    %v6341 = vadd.f32 %v6339, %v6340
    %v6342 = vrot.slane %v6341, 1
    %v6343 = vadd.f32 %v6341, %v6342
    %s6344 = vtos %v6343
    %v6345 = vsel %vm6289, %v6295, 0.0
    %6346 = vadd.xlane.f32.xlu0 %v6345
    %v6347 = vpop.xlane.xlu0 %6346
    %v6348 = vrot.slane %v6347, 4
    %v6349 = vadd.f32 %v6347, %v6348
    %v6350 = vrot.slane %v6349, 2
    %v6351 = vadd.f32 %v6349, %v6350
    %v6352 = vrot.slane %v6351, 1
    %v6353 = vadd.f32 %v6351, %v6352
    %s6354 = vtos %v6353
    %v6355 = vstv %s6354
    %v6356 = vrcp.pop %v6355
    %v6357 = vmul.f32 %v6355, %v6356
    %v6358 = vsub.f32 1.0, %v6357
    %v6359 = vmul.f32 %v6356, %v6358
    %v6360 = vadd.f32 %v6356, %v6359
    %vm6361 = vweird.f32 %v6355
    %vm6362 = vweird.f32 %v6356
    %vm6363 = vmor %vm6361, %vm6362
    %v6364 = vsel %vm6363, %v6356, %v6360
    %v6365 = vand.u32 2147483647, %v6355
    %vm6366 = vcmp.eq.f32.partialorder %v6365, 8.507059e+37
    %v6367 = vand.u32 %v6355, 2147483648
    %v6368 = vor.u32 1.1754944e-38, %v6367
    %v6369 = vsel %vm6366, %v6368, %v6364
    %s6370 = vtos %v6369
    %s6371 = smul.f32 %s6344, %s6370
    %s6372 = sadd.f32 %s6333, %s6371
    %s6373 = scalar_lea.smem [#allocation13], 0
    %6374 = sst [smem:[%s6373]] %s6372
    // Predicated region
    $region150: #{remasker_forward.1} parent=1 // pred_check
      _
    $region151: #{remasker_forward.1} parent=1 // pred_check_branch
      %6376 = sbr.rel (0) target = $region153
    $region152: #{remasker_forward.1} parent=1 // pred_region
      %6378 = vsyncadd [#allocation6], 0
      %s6380 = sshll.u32 [#allocation12], 4
      %s6381 = int_to_ptr.vmem [resolvable:$true] %s6380
      %s6382 = sshll.u32 %s69, 4
      %s6383 = int_to_ptr.hbm [resolvable:$true] %s6382
      %6385 = dma.vmem_to_hbm [thread:$0]  %s6381, 32, %s6383, [#allocation6]
    $region153: #{remasker_forward.1} parent=1 // pred_fallthru
      _
    // Predicated region
    $region154: #{remasker_forward.1} parent=1 // pred_check
      _
    $region155: #{remasker_forward.1} parent=1 // pred_check_branch
      %6387 = sbr.rel (0) target = $region157
    $region156: #{remasker_forward.1} parent=1 // pred_region
      %6389 = vsyncadd [#allocation7], 0
      %s6391 = sshll.u32 %s71, 4
      %s6392 = int_to_ptr.hbm [resolvable:$true] %s6391
      %6394 = dma.smem_to_hbm [#allocation13], 16, %s6392, [#allocation7]
    $region157: #{remasker_forward.1} parent=1 // pred_fallthru
      _
    // Predicated region
    $region158: #{remasker_forward.1} parent=1 // pred_check
      _
    $region159: #{remasker_forward.1} parent=1 // pred_check_branch
      %6396 = sbr.rel (0) target = $region161
    $region160: #{remasker_forward.1} parent=1 // pred_region
      %6398 = dma.done [#allocation6], 32
    $region161: #{remasker_forward.1} parent=1 // pred_fallthru
      _
    // Predicated region
    $region162: #{remasker_forward.1} parent=1 // pred_check
      _
    $region163: #{remasker_forward.1} parent=1 // pred_check_branch
      %6400 = sbr.rel (0) target = $region165
    $region164: #{remasker_forward.1} parent=1 // pred_region
      %6402 = dma.done [#allocation7], 16
    $region165: #{remasker_forward.1} parent=1 // pred_fallthru
      _
    %6403 = sfence
    %6404 = vsyncpa [#allocation6], 1
    %6405 = vsyncpa [#allocation7], 1
    %6406 = vsyncpa [#allocation8], 1
    %6407 = vsyncpa [#allocation10], 1

</llo_original>
